<compile_context>
chip_gen: v7x
topology: tpu7x:2x2x1
jax: 0.10.0
libtpu: 0.0.40
codegen_flags: <defaults>
</compile_context>

<pallas_src>
import functools

import jax
import jax.numpy as jnp
from jax.experimental import pallas as pl
from jax.experimental.pallas import tpu as pltpu


def _round_up(x, m):
    return (x + m - 1) // m * m


def _choose_tiling(B, block_b):
    """Balanced batch tiles: pick the tile COUNT first, then a 16-aligned tile.

    Returns (block, tiles, num_subtiles). Caps pad waste at <=15 rows per tile
    (vs up to block-1 with round_up(B, block)) and keeps >=2 grid steps so
    v7x's two TensorCores both get work; on v5e/v6e the extra step is ~0.35us.
    """
    if B < 32:
        return B, 1, 1                      # single full-extent tile, no sub-tiling
    tiles = max(pl.cdiv(B, max(block_b, 32)), 2)
    block = _round_up(pl.cdiv(B, tiles), 16)   # 16: bf16 sublane packing + 2 sub-tiles of >=8 rows
    tiles = pl.cdiv(B, block)
    return block, tiles, 2


# --------------------------------------------------------------------------
# Fused 4-layer path: weights resident in VMEM, batch-only grid.
# --------------------------------------------------------------------------
def _mlp_kernel(x_ref, w1_ref, b1_ref, w2_ref, b2_ref, w3_ref, b3_ref,
                w4_ref, b4_ref, o_ref, *, compute_dtype, num_subtiles,
                total_rows, mask_rows):
    """(Linear -> ReLU) x 4 on one batch tile.

    MXU matmuls use `compute_dtype` inputs with f32 accumulation; bias+ReLU
    stay in f32. The tile is processed as `num_subtiles` independent row
    chains so the scheduler can overlap one chain's VPU epilogue with the
    other chain's MXU matmul.
    """
    layers = ((w1_ref, b1_ref), (w2_ref, b2_ref),
              (w3_ref, b3_ref), (w4_ref, b4_ref))
    # Hoist the (VMEM-resident) weight/bias reads out of the sub-tile loop.
    wvals = [w_ref[...] for w_ref, _ in layers]
    bvals = [b_ref[...] for _, b_ref in layers]

    block = x_ref.shape[0]
    sub = block // num_subtiles

    x = x_ref[...]
    if mask_rows:
        # Ragged last tile: zero rows past the true batch so pad rows are
        # deterministic (out-of-bounds output rows are dropped on write-back).
        rows = (jax.lax.broadcasted_iota(jnp.int32, (block, 1), 0)
                + pl.program_id(0) * block)
        x = jnp.where(rows < total_rows, x, 0)
    x = x.astype(compute_dtype)

    for s in range(num_subtiles):
        h = x[s * sub:(s + 1) * sub, :]
        acc = None
        for li in range(4):
            acc = jnp.dot(h, wvals[li], preferred_element_type=jnp.float32)
            acc = jnp.maximum(acc + bvals[li], 0.0)        # bias + ReLU in f32
            if li < 3:
                h = acc.astype(compute_dtype)
        o_ref[s * sub:(s + 1) * sub, :] = acc.astype(o_ref.dtype)


# --------------------------------------------------------------------------
# Large-D fallback: per-layer K-tiled Linear+ReLU (weights don't fit in VMEM).
# --------------------------------------------------------------------------
def _linear_relu_kernel(x_ref, w_ref, b_ref, o_ref, acc_ref):
    @pl.when(pl.program_id(1) == 0)
    def _():
        acc_ref[...] = jnp.zeros_like(acc_ref)

    acc_ref[...] += jnp.dot(x_ref[...], w_ref[...],
                            preferred_element_type=jnp.float32)

    @pl.when(pl.program_id(1) == pl.num_programs(1) - 1)
    def _():
        o_ref[...] = jnp.maximum(acc_ref[...] + b_ref[...],
                                 0.0).astype(o_ref.dtype)


def _linear_relu(x, w, b, out_dtype, *, block_m):
    M = x.shape[0]
    K, N = w.shape
    tk = K
    for cand in (512, 256, 128):
        if K % cand == 0:
            tk = cand
            break
    # TODO(synk): also tile N for very large layers (full-N f32 accumulator is
    # fine up to N ~ 8k; revisit beyond that).
    grid = (pl.cdiv(M, block_m), K // tk)
    return pl.pallas_call(
        _linear_relu_kernel,
        out_shape=jax.ShapeDtypeStruct((M, N), out_dtype),
        grid_spec=pltpu.PrefetchScalarGridSpec(
            num_scalar_prefetch=0,
            grid=grid,
            in_specs=[
                pl.BlockSpec((block_m, tk), lambda m, k: (m, k)),
                pl.BlockSpec((tk, N), lambda m, k: (k, 0)),
                pl.BlockSpec(memory_space=pltpu.MemorySpace.VMEM),  # bias resident
            ],
            out_specs=pl.BlockSpec((block_m, N), lambda m, k: (m, 0)),
            scratch_shapes=[pltpu.VMEM((block_m, N), jnp.float32)],
        ),
        compiler_params=pltpu.CompilerParams(
            dimension_semantics=("parallel", "arbitrary"),
            vmem_limit_bytes=48 * 1024 * 1024),
    )(x, w, b)


def _mlp_encoder_fallback(x, ws, bs, *, compute_dtype):
    """Per-layer K-tiled path; intermediates round-trip HBM in compute_dtype."""
    B = x.shape[0]
    block_m, _, _ = _choose_tiling(B, 256)
    h = x.astype(compute_dtype)
    for li in range(4):
        out_dtype = x.dtype if li == 3 else compute_dtype
        h = _linear_relu(h, ws[li], bs[li], out_dtype, block_m=block_m)
    return h


# --------------------------------------------------------------------------
# Public wrapper
# --------------------------------------------------------------------------
@functools.partial(jax.jit, static_argnames=("block_b", "compute_dtype",
                                             "resident_budget_bytes"))
def mlp_encoder(x, params, *, block_b=512, compute_dtype=jnp.bfloat16,
                resident_budget_bytes=24 * 1024 * 1024):
    """x: (B, D) float32. params: list of 4 (W (in,out), b) tuples.

    Pass params through prepare_params() once so the dtype/layout conversion
    is hoisted out of the per-call path (the casts below are then no-ops).
    """
    B, D = x.shape
    ws = [w.astype(compute_dtype) for (w, _) in params]
    bs = [b.reshape(1, -1).astype(jnp.float32) for (_, b) in params]

    weight_bytes = sum(int(w.size) for w in ws) * jnp.dtype(compute_dtype).itemsize
    if weight_bytes > resident_budget_bytes:
        # Whole-weights-in-VMEM would not fit (e.g. img_size >= ~32 on v7x's
        # 64 MiB VMEM) -> per-layer K-tiled fallback.
        return _mlp_encoder_fallback(x, ws, bs, compute_dtype=compute_dtype)

    block, tiles, num_subtiles = _choose_tiling(B, block_b)
    mask_rows = (tiles * block != B)
    Bp = tiles * block

    # Whole-array resident in VMEM for the entire grid: single placement, no
    # per-step re-DMA, no pipeline double-buffering of the constants.
    resident = pl.BlockSpec(memory_space=pltpu.MemorySpace.VMEM)

    flops = 2 * Bp * 20 * D * D                       # 4 layers: 20*D^2 MACs/row
    bytes_accessed = (B * D * x.dtype.itemsize * 2    # x in + out
                      + weight_bytes
                      + sum(int(b.size) for b in bs) * 4)

    kernel = functools.partial(_mlp_kernel, compute_dtype=compute_dtype,
                               num_subtiles=num_subtiles, total_rows=B,
                               mask_rows=mask_rows)

    return pl.pallas_call(
        kernel,
        out_shape=jax.ShapeDtypeStruct((B, D), x.dtype),
        grid_spec=pltpu.PrefetchScalarGridSpec(
            num_scalar_prefetch=0,
            grid=(tiles,),
            in_specs=[
                pl.BlockSpec((block, D), lambda i: (i, 0)),   # x tile (pipelined)
                resident, resident,    # w1, b1
                resident, resident,    # w2, b2
                resident, resident,    # w3, b3
                resident, resident,    # w4, b4
            ],
            out_specs=pl.BlockSpec((block, D), lambda i: (i, 0)),
        ),
        compiler_params=pltpu.CompilerParams(
            dimension_semantics=("parallel",),        # batch tiles shard across v7x's 2 TCs
            vmem_limit_bytes=48 * 1024 * 1024),       # headroom for block_b<=1024; < v7x's 64MiB physical
        cost_estimate=pl.CostEstimate(
            flops=flops, transcendentals=0, bytes_accessed=bytes_accessed),
    )(x, ws[0], bs[0], ws[1], bs[1], ws[2], bs[2], ws[3], bs[3])


def prepare_params(params, compute_dtype=jnp.bfloat16):
    """One-time conversion: W -> (in,out) compute_dtype, b -> f32 (1,out) row."""
    return [(jnp.asarray(w, compute_dtype),
             jnp.asarray(b, jnp.float32).reshape(1, -1)) for (w, b) in params]


def init_params(key, img_size):
    """Deterministic init matching the PyTorch layer shapes.

    nn.Linear(in, out) stores weight (out, in), bias (out,); we keep the
    weight pre-transposed as (in, out) since the kernel computes x @ W + b.
    PyTorch default init: U(-1/sqrt(in), 1/sqrt(in)) for both W and b.
    """
    d = img_size ** 2
    dims = [d, 2 * d, 4 * d, 2 * d, d]
    params = []
    for li in range(4):
        fan_in, fan_out = dims[li], dims[li + 1]
        key, kw, kb = jax.random.split(key, 3)
        bound = 1.0 / jnp.sqrt(jnp.float32(fan_in))
        w = jax.random.uniform(kw, (fan_in, fan_out), jnp.float32,
                               minval=-bound, maxval=bound)
        b = jax.random.uniform(kb, (fan_out,), jnp.float32,
                               minval=-bound, maxval=bound)
        params.append((w, b))
    return params


def mlp_encoder_ref(x, params, compute_dtype=jnp.float32):
    """Pure-JAX reference of MLPEncoder.forward (optionally bf16 matmul inputs)."""
    h = x
    for w, b in params:
        acc = jnp.dot(h.astype(compute_dtype), w.astype(compute_dtype),
                      preferred_element_type=jnp.float32)
        h = jnp.maximum(acc + b, 0.0)
    return h


if __name__ == "__main__":
    img_size = 16            # D = 256
    batch = 300              # not a tile multiple -> exercises ragged last tile

    key = jax.random.PRNGKey(0)
    key, kx = jax.random.split(key)
    x = jax.random.normal(kx, (batch, img_size ** 2), jnp.float32)
    raw_params = init_params(key, img_size)
    params = prepare_params(raw_params)      # hoisted one-time dtype/layout conversion

    out = jax.block_until_ready(mlp_encoder(x, params))
    assert out.shape == (batch, img_size ** 2)

    # Tight check vs a reference mirroring the kernel's bf16-input matmuls.
    ref_bf16 = mlp_encoder_ref(x, raw_params, compute_dtype=jnp.bfloat16)
    assert jnp.allclose(out, ref_bf16, atol=2e-3, rtol=2e-3), \
        "mismatch vs bf16-matched reference"
    # Loose check vs the full-f32 PyTorch-equivalent forward.
    ref_f32 = mlp_encoder_ref(x, raw_params, compute_dtype=jnp.float32)
    assert jnp.allclose(out, ref_f32, atol=2e-2, rtol=2e-2), \
        "mismatch vs f32 reference"

    # Exercise the large-D (weights-don't-fit-VMEM) fallback path, forced.
    out_fb = jax.block_until_ready(
        mlp_encoder(x, params, resident_budget_bytes=0))
    assert jnp.allclose(out_fb, ref_bf16, atol=2e-3, rtol=2e-3), \
        "fallback mismatch vs bf16-matched reference"

    print("KERNEL_OK")
</pallas_src>

<mosaic_0001>
module attributes {stable_mosaic.version = 11 : i64} {
  func.func @_mlp_kernel(%arg0: i32, %arg1: memref<160x256xf32, #tpu.memory_space<vmem>>, %arg2: memref<256x512xbf16, #tpu.memory_space<vmem>>, %arg3: memref<1x512xf32, #tpu.memory_space<vmem>>, %arg4: memref<512x1024xbf16, #tpu.memory_space<vmem>>, %arg5: memref<1x1024xf32, #tpu.memory_space<vmem>>, %arg6: memref<1024x512xbf16, #tpu.memory_space<vmem>>, %arg7: memref<1x512xf32, #tpu.memory_space<vmem>>, %arg8: memref<512x256xbf16, #tpu.memory_space<vmem>>, %arg9: memref<1x256xf32, #tpu.memory_space<vmem>>, %arg10: memref<160x256xf32, #tpu.memory_space<vmem>>) attributes {dimension_semantics = [#tpu.dimension_semantics<parallel>], iteration_bounds = array<i64: 2>, scalar_prefetch = 0 : i64, scratch_operands = 0 : i64, tpu.core_type = #tpu.core_type<tc>, window_params = [{transform_indices = @transform_0, window_bounds = array<i64: 160, 256>}, {pipeline_mode = #tpu.pipeline_mode<synchronous>, transform_indices = @transform_1, window_bounds = array<i64: 256, 512>}, {pipeline_mode = #tpu.pipeline_mode<synchronous>, transform_indices = @transform_2, window_bounds = array<i64: 1, 512>}, {pipeline_mode = #tpu.pipeline_mode<synchronous>, transform_indices = @transform_3, window_bounds = array<i64: 512, 1024>}, {pipeline_mode = #tpu.pipeline_mode<synchronous>, transform_indices = @transform_4, window_bounds = array<i64: 1, 1024>}, {pipeline_mode = #tpu.pipeline_mode<synchronous>, transform_indices = @transform_5, window_bounds = array<i64: 1024, 512>}, {pipeline_mode = #tpu.pipeline_mode<synchronous>, transform_indices = @transform_6, window_bounds = array<i64: 1, 512>}, {pipeline_mode = #tpu.pipeline_mode<synchronous>, transform_indices = @transform_7, window_bounds = array<i64: 512, 256>}, {pipeline_mode = #tpu.pipeline_mode<synchronous>, transform_indices = @transform_8, window_bounds = array<i64: 1, 256>}, {transform_indices = @transform_9, window_bounds = array<i64: 160, 256>}]} {
    %c0 = arith.constant 0 : index
    %c0_0 = arith.constant 0 : index
    %0 = vector.load %arg2[%c0, %c0_0] : memref<256x512xbf16, #tpu.memory_space<vmem>>, vector<256x512xbf16>
    %c0_1 = arith.constant 0 : index
    %c0_2 = arith.constant 0 : index
    %1 = vector.load %arg4[%c0_1, %c0_2] : memref<512x1024xbf16, #tpu.memory_space<vmem>>, vector<512x1024xbf16>
    %c0_3 = arith.constant 0 : index
    %c0_4 = arith.constant 0 : index
    %2 = vector.load %arg6[%c0_3, %c0_4] : memref<1024x512xbf16, #tpu.memory_space<vmem>>, vector<1024x512xbf16>
    %c0_5 = arith.constant 0 : index
    %c0_6 = arith.constant 0 : index
    %3 = vector.load %arg8[%c0_5, %c0_6] : memref<512x256xbf16, #tpu.memory_space<vmem>>, vector<512x256xbf16>
    %c0_7 = arith.constant 0 : index
    %c0_8 = arith.constant 0 : index
    %4 = vector.load %arg3[%c0_7, %c0_8] : memref<1x512xf32, #tpu.memory_space<vmem>>, vector<1x512xf32>
    %c0_9 = arith.constant 0 : index
    %c0_10 = arith.constant 0 : index
    %5 = vector.load %arg5[%c0_9, %c0_10] : memref<1x1024xf32, #tpu.memory_space<vmem>>, vector<1x1024xf32>
    %c0_11 = arith.constant 0 : index
    %c0_12 = arith.constant 0 : index
    %6 = vector.load %arg7[%c0_11, %c0_12] : memref<1x512xf32, #tpu.memory_space<vmem>>, vector<1x512xf32>
    %c0_13 = arith.constant 0 : index
    %c0_14 = arith.constant 0 : index
    %7 = vector.load %arg9[%c0_13, %c0_14] : memref<1x256xf32, #tpu.memory_space<vmem>>, vector<1x256xf32>
    %c0_15 = arith.constant 0 : index
    %c0_16 = arith.constant 0 : index
    %8 = vector.load %arg1[%c0_15, %c0_16] : memref<160x256xf32, #tpu.memory_space<vmem>>, vector<160x256xf32>
    %9 = tpu.iota {dimensions = array<i32: 0>} : vector<160x1xi32>
    %c160_i32 = arith.constant 160 : i32
    %10 = arith.muli %arg0, %c160_i32 : i32
    %11 = vector.broadcast %10 : i32 to vector<160x1xi32>
    %12 = arith.addi %9, %11 : vector<160x1xi32>
    %c300_i32 = arith.constant 300 : i32
    %13 = vector.broadcast %c300_i32 : i32 to vector<160x1xi32>
    %14 = arith.cmpi slt, %12, %13 : vector<160x1xi32>
    %c0_i32 = arith.constant 0 : i32
    %15 = arith.sitofp %c0_i32 : i32 to f32
    %16 = vector.shape_cast %14 : vector<160x1xi1> to vector<160x1xi1>
    %17 = vector.broadcast %16 : vector<160x1xi1> to vector<160x256xi1>
    %18 = vector.broadcast %15 : f32 to vector<160x256xf32>
    %19 = arith.select %17, %8, %18 : vector<160x256xi1>, vector<160x256xf32>
    %20 = arith.truncf %19 : vector<160x256xf32> to vector<160x256xbf16>
    %21 = vector.extract_strided_slice %20 {offsets = [0, 0], sizes = [80, 256], strides = [1, 1]} : vector<160x256xbf16> to vector<80x256xbf16>
    %cst = arith.constant dense<0.000000e+00> : vector<80x512xf32>
    %22 = tpu.matmul %21, %0, %cst {dimension_numbers = #tpu.dot_dimension_numbers<[1], [0], [0], [1], [0, 0, 1, 1], [], []>} : vector<80x256xbf16>, vector<256x512xbf16>, vector<80x512xf32> -> vector<80x512xf32>
    %23 = vector.broadcast %4 : vector<1x512xf32> to vector<80x512xf32>
    %24 = arith.addf %22, %23 : vector<80x512xf32>
    %cst_17 = arith.constant 0.000000e+00 : f32
    %25 = vector.broadcast %cst_17 : f32 to vector<80x512xf32>
    %26 = arith.maximumf %24, %25 : vector<80x512xf32>
    %27 = arith.truncf %26 : vector<80x512xf32> to vector<80x512xbf16>
    %cst_18 = arith.constant dense<0.000000e+00> : vector<80x1024xf32>
    %28 = tpu.matmul %27, %1, %cst_18 {dimension_numbers = #tpu.dot_dimension_numbers<[1], [0], [0], [1], [0, 0, 1, 1], [], []>} : vector<80x512xbf16>, vector<512x1024xbf16>, vector<80x1024xf32> -> vector<80x1024xf32>
    %29 = vector.broadcast %5 : vector<1x1024xf32> to vector<80x1024xf32>
    %30 = arith.addf %28, %29 : vector<80x1024xf32>
    %cst_19 = arith.constant 0.000000e+00 : f32
    %31 = vector.broadcast %cst_19 : f32 to vector<80x1024xf32>
    %32 = arith.maximumf %30, %31 : vector<80x1024xf32>
    %33 = arith.truncf %32 : vector<80x1024xf32> to vector<80x1024xbf16>
    %cst_20 = arith.constant dense<0.000000e+00> : vector<80x512xf32>
    %34 = tpu.matmul %33, %2, %cst_20 {dimension_numbers = #tpu.dot_dimension_numbers<[1], [0], [0], [1], [0, 0, 1, 1], [], []>} : vector<80x1024xbf16>, vector<1024x512xbf16>, vector<80x512xf32> -> vector<80x512xf32>
    %35 = vector.broadcast %6 : vector<1x512xf32> to vector<80x512xf32>
    %36 = arith.addf %34, %35 : vector<80x512xf32>
    %cst_21 = arith.constant 0.000000e+00 : f32
    %37 = vector.broadcast %cst_21 : f32 to vector<80x512xf32>
    %38 = arith.maximumf %36, %37 : vector<80x512xf32>
    %39 = arith.truncf %38 : vector<80x512xf32> to vector<80x512xbf16>
    %cst_22 = arith.constant dense<0.000000e+00> : vector<80x256xf32>
    %40 = tpu.matmul %39, %3, %cst_22 {dimension_numbers = #tpu.dot_dimension_numbers<[1], [0], [0], [1], [0, 0, 1, 1], [], []>} : vector<80x512xbf16>, vector<512x256xbf16>, vector<80x256xf32> -> vector<80x256xf32>
    %41 = vector.broadcast %7 : vector<1x256xf32> to vector<80x256xf32>
    %42 = arith.addf %40, %41 : vector<80x256xf32>
    %cst_23 = arith.constant 0.000000e+00 : f32
    %43 = vector.broadcast %cst_23 : f32 to vector<80x256xf32>
    %44 = arith.maximumf %42, %43 : vector<80x256xf32>
    %c0_24 = arith.constant 0 : index
    %c0_25 = arith.constant 0 : index
    %45 = vector.load %arg10[%c0_24, %c0_25] : memref<160x256xf32, #tpu.memory_space<vmem>>, vector<80x256xf32>
    tpu.vector_store %arg10[%c0_24, %c0_25], %44 {strides = array<i32>} : memref<160x256xf32, #tpu.memory_space<vmem>>, vector<80x256xf32>,
    %46 = vector.extract_strided_slice %20 {offsets = [80, 0], sizes = [80, 256], strides = [1, 1]} : vector<160x256xbf16> to vector<80x256xbf16>
    %cst_26 = arith.constant dense<0.000000e+00> : vector<80x512xf32>
    %47 = tpu.matmul %46, %0, %cst_26 {dimension_numbers = #tpu.dot_dimension_numbers<[1], [0], [0], [1], [0, 0, 1, 1], [], []>} : vector<80x256xbf16>, vector<256x512xbf16>, vector<80x512xf32> -> vector<80x512xf32>
    %48 = vector.broadcast %4 : vector<1x512xf32> to vector<80x512xf32>
    %49 = arith.addf %47, %48 : vector<80x512xf32>
    %cst_27 = arith.constant 0.000000e+00 : f32
    %50 = vector.broadcast %cst_27 : f32 to vector<80x512xf32>
    %51 = arith.maximumf %49, %50 : vector<80x512xf32>
    %52 = arith.truncf %51 : vector<80x512xf32> to vector<80x512xbf16>
    %cst_28 = arith.constant dense<0.000000e+00> : vector<80x1024xf32>
    %53 = tpu.matmul %52, %1, %cst_28 {dimension_numbers = #tpu.dot_dimension_numbers<[1], [0], [0], [1], [0, 0, 1, 1], [], []>} : vector<80x512xbf16>, vector<512x1024xbf16>, vector<80x1024xf32> -> vector<80x1024xf32>
    %54 = vector.broadcast %5 : vector<1x1024xf32> to vector<80x1024xf32>
    %55 = arith.addf %53, %54 : vector<80x1024xf32>
    %cst_29 = arith.constant 0.000000e+00 : f32
    %56 = vector.broadcast %cst_29 : f32 to vector<80x1024xf32>
    %57 = arith.maximumf %55, %56 : vector<80x1024xf32>
    %58 = arith.truncf %57 : vector<80x1024xf32> to vector<80x1024xbf16>
    %cst_30 = arith.constant dense<0.000000e+00> : vector<80x512xf32>
    %59 = tpu.matmul %58, %2, %cst_30 {dimension_numbers = #tpu.dot_dimension_numbers<[1], [0], [0], [1], [0, 0, 1, 1], [], []>} : vector<80x1024xbf16>, vector<1024x512xbf16>, vector<80x512xf32> -> vector<80x512xf32>
    %60 = vector.broadcast %6 : vector<1x512xf32> to vector<80x512xf32>
    %61 = arith.addf %59, %60 : vector<80x512xf32>
    %cst_31 = arith.constant 0.000000e+00 : f32
    %62 = vector.broadcast %cst_31 : f32 to vector<80x512xf32>
    %63 = arith.maximumf %61, %62 : vector<80x512xf32>
    %64 = arith.truncf %63 : vector<80x512xf32> to vector<80x512xbf16>
    %cst_32 = arith.constant dense<0.000000e+00> : vector<80x256xf32>
    %65 = tpu.matmul %64, %3, %cst_32 {dimension_numbers = #tpu.dot_dimension_numbers<[1], [0], [0], [1], [0, 0, 1, 1], [], []>} : vector<80x512xbf16>, vector<512x256xbf16>, vector<80x256xf32> -> vector<80x256xf32>
    %66 = vector.broadcast %7 : vector<1x256xf32> to vector<80x256xf32>
    %67 = arith.addf %65, %66 : vector<80x256xf32>
    %cst_33 = arith.constant 0.000000e+00 : f32
    %68 = vector.broadcast %cst_33 : f32 to vector<80x256xf32>
    %69 = arith.maximumf %67, %68 : vector<80x256xf32>
    %c80 = arith.constant 80 : index
    %c0_34 = arith.constant 0 : index
    %70 = vector.load %arg10[%c80, %c0_34] : memref<160x256xf32, #tpu.memory_space<vmem>>, vector<80x256xf32>
    tpu.vector_store %arg10[%c80, %c0_34], %69 {strides = array<i32>} : memref<160x256xf32, #tpu.memory_space<vmem>>, vector<80x256xf32>,
    return
  }
  func.func @transform_0(%arg0: i32) -> (i32, i32) {
    %c0_i32 = arith.constant 0 : i32
    %c0_i32_0 = arith.constant 0 : i32
    return %arg0, %c0_i32 : i32, i32
  }
  func.func @transform_1(%arg0: i32) -> (i32, i32) {
    %c0_i32 = arith.constant 0 : i32
    %c0_i32_0 = arith.constant 0 : i32
    %c0_i32_1 = arith.constant 0 : i32
    return %c0_i32, %c0_i32_0 : i32, i32
  }
  func.func @transform_2(%arg0: i32) -> (i32, i32) {
    %c0_i32 = arith.constant 0 : i32
    %c0_i32_0 = arith.constant 0 : i32
    %c0_i32_1 = arith.constant 0 : i32
    return %c0_i32, %c0_i32_0 : i32, i32
  }
  func.func @transform_3(%arg0: i32) -> (i32, i32) {
    %c0_i32 = arith.constant 0 : i32
    %c0_i32_0 = arith.constant 0 : i32
    %c0_i32_1 = arith.constant 0 : i32
    return %c0_i32, %c0_i32_0 : i32, i32
  }
  func.func @transform_4(%arg0: i32) -> (i32, i32) {
    %c0_i32 = arith.constant 0 : i32
    %c0_i32_0 = arith.constant 0 : i32
    %c0_i32_1 = arith.constant 0 : i32
    return %c0_i32, %c0_i32_0 : i32, i32
  }
  func.func @transform_5(%arg0: i32) -> (i32, i32) {
    %c0_i32 = arith.constant 0 : i32
    %c0_i32_0 = arith.constant 0 : i32
    %c0_i32_1 = arith.constant 0 : i32
    return %c0_i32, %c0_i32_0 : i32, i32
  }
  func.func @transform_6(%arg0: i32) -> (i32, i32) {
    %c0_i32 = arith.constant 0 : i32
    %c0_i32_0 = arith.constant 0 : i32
    %c0_i32_1 = arith.constant 0 : i32
    return %c0_i32, %c0_i32_0 : i32, i32
  }
  func.func @transform_7(%arg0: i32) -> (i32, i32) {
    %c0_i32 = arith.constant 0 : i32
    %c0_i32_0 = arith.constant 0 : i32
    %c0_i32_1 = arith.constant 0 : i32
    return %c0_i32, %c0_i32_0 : i32, i32
  }
  func.func @transform_8(%arg0: i32) -> (i32, i32) {
    %c0_i32 = arith.constant 0 : i32
    %c0_i32_0 = arith.constant 0 : i32
    %c0_i32_1 = arith.constant 0 : i32
    return %c0_i32, %c0_i32_0 : i32, i32
  }
  func.func @transform_9(%arg0: i32) -> (i32, i32) {
    %c0_i32 = arith.constant 0 : i32
    %c0_i32_0 = arith.constant 0 : i32
    return %arg0, %c0_i32 : i32, i32
  }
}

</mosaic_0001>

<llo_original>
// kernel: mlp_encoder.1
$region0: #{mlp_encoder.1}
  #allocation0 [shape = 'u32[]', space=smem, size = 0x4, offset = 0x4, fixed_abs, tag = 'smem constant byte address 0x4 - core index']
  #allocation1 [shape = 'u32[144,128]{1,0:T(1,128)}', space=vmem, size = 0x12000, scoped, tag = 'internal scratch']
  %s0 = inlined_call_operand.hbm [shape: f32[300,256], index: 0, kind: input, shape index: {}]
  %s1 = inlined_call_operand.hbm [shape: bf16[256,512], index: 1, kind: input, shape index: {}]
  %s2 = inlined_call_operand.vmem [shape: f32[1,512], index: 2, kind: input, shape index: {}]
  %s3 = inlined_call_operand.hbm [shape: bf16[512,1024], index: 3, kind: input, shape index: {}]
  %s4 = inlined_call_operand.vmem [shape: f32[1,1024], index: 4, kind: input, shape index: {}]
  %s5 = inlined_call_operand.hbm [shape: bf16[1024,512], index: 5, kind: input, shape index: {}]
  %s6 = inlined_call_operand.vmem [shape: f32[1,512], index: 6, kind: input, shape index: {}]
  %s7 = inlined_call_operand.hbm [shape: bf16[512,256], index: 7, kind: input, shape index: {}]
  %s8 = inlined_call_operand.vmem [shape: f32[1,256], index: 8, kind: input, shape index: {}]
  %s9 = inlined_call_operand.hbm [shape: f32[300,256], index: 9, kind: output, shape index: {}]
  %s10 = sld [smem:[#allocation0]]
  $region89: #{mlp_encoder.1} parent=0
    _
  %s12 = ssub.s32 1, %s10
  %s13 = scalar_select 0, %s12, %s10
  $region1: #{mlp_encoder.1} parent=0
    #allocation2 [shape = 'u8[327680]{0}', space=vmem, size = 0x50000, scoped, tag = 'input window, operand 0']
    #allocation3 [shape = 's32[2]{0}', space=sflag, size = 0x8, scoped, tag = 'scoped memory for mlp_encoder.1']
    #allocation4 [shape = 's32[2]{0}', space=sflag, size = 0x8, scoped, tag = 'scoped memory for mlp_encoder.1']
    #allocation5 [shape = 'u8[262144]{0}', space=vmem, size = 0x40000, scoped, tag = 'input window, operand 1, single buffered']
    #allocation6 [shape = 's32[1]{0}', space=sflag, size = 0x4, scoped, tag = 'scoped memory for mlp_encoder.1']
    #allocation7 [shape = 'u8[1048576]{0}', space=vmem, size = 0x100000, scoped, tag = 'input window, operand 3, single buffered']
    #allocation8 [shape = 'u8[1048576]{0}', space=vmem, size = 0x100000, scoped, tag = 'input window, operand 5, single buffered']
    #allocation9 [shape = 's32[1]{0}', space=sflag, size = 0x4, scoped, tag = 'scoped memory for mlp_encoder.1']
    #allocation10 [shape = 'u8[262144]{0}', space=vmem, size = 0x40000, scoped, tag = 'input window, operand 7, single buffered']
    #allocation11 [shape = 'u8[327680]{0}', space=vmem, size = 0x50000, scoped, tag = 'output window, operand 0']
    %14 = vsyncpa [#allocation3], 0
    %s15 = scalar_lea.sflag [#allocation3], 1
    %16 = vsyncpa %s15, 0
    %17 = vsyncpa [#allocation6], 0
    %18 = vsyncpa [#allocation9], 0
    %19 = vsyncpa [#allocation4], 0
    %s20 = scalar_lea.sflag [#allocation4], 1
    %21 = vsyncpa %s20, 0
    loop: start=0, step=1, limit=4
    $region2: #{mlp_encoder.1} parent=1 // loop_pre_header
      _
    $region3: #{mlp_encoder.1} parent=1 // loop_header
      %s23 = sphi 0, %s27
      %p24 = scmp.ge.s32.totalorder %s23, 4
      %s33 = sphi 0, %s35
      %s36 = sphi 0, %s33
      %s37 = sphi 0, %s36
      %s53 = sphi 0, %s37
      %s57 = sphi 0, %s57
      %s59 = sphi 0, %s57
      %s60 = sphi 0, %s59
      %s74 = sphi 0, %s60
      %s78 = sphi 0, %s78
      %s80 = sphi 0, %s78
      %s81 = sphi 0, %s80
      %s95 = sphi 0, %s81
      %s99 = sphi 0, %s99
      %s101 = sphi 0, %s99
      %s102 = sphi 0, %s101
      %s116 = sphi 0, %s102
      %s120 = sphi 0, %s120
      %s122 = sphi 0, %s120
      %s123 = sphi 0, %s122
      %s137 = sphi 0, %s123
      %s141 = sphi 0, %s141
      %s143 = sphi 0, %s141
      %s144 = sphi 0, %s143
      %s158 = sphi 0, %s144
      %s162 = sphi 0, %s162
      %s164 = sphi 0, %s162
      %s165 = sphi 0, %s164
      %s179 = sphi 0, %s165
      %s183 = sphi 0, %s183
      %s185 = sphi 0, %s183
      %s186 = sphi 0, %s185
      %s200 = sphi 0, %s186
      %s204 = sphi 0, %s204
      %s206 = sphi 0, %s204
      %s207 = sphi 0, %s206
      %s221 = sphi 0, %s207
      %s227 = sphi 0, %s229
      %s230 = sphi 0, %s227
      %s231 = sphi 0, %s230
      %s247 = sphi 0, %s231
    $region4: #{mlp_encoder.1} parent=1 // loop_header_branch
      %26 = sbr.rel (%p24) target = $region8
    $region5: #{mlp_encoder.1} parent=1 // loop_body
      %s28 = ssub.s32 %s23, 1
      %s29 = ssub.s32 %s23, 2
      %s30 = sadd.s32 %s23, 1
      %s31 = ssub.s32 %s23, %s30
      %p32 = scmp.eq.s32.totalorder %s31, 0
      %s34 = sadd.s32 %s33, 1
      %s35 = scalar_select %p32, %s33, %s34
      %p38 = pneg %p32
      %p39 = scmp.eq.s32.totalorder %s23, 1
      %p40 = por %p38, %p39
      %p41 = scmp.ne.s32.totalorder %s33, %s36
      %p42 = scmp.eq.s32.totalorder %s23, 0
      %p43 = por %p41, %p42
      %p44 = scmp.ne.s32.totalorder %s33, %s36
      %p45 = scmp.eq.s32.totalorder %s28, 1
      %p46 = por %p44, %p45
      %p47 = scmp.ne.s32.totalorder %s36, %s37
      %p48 = scmp.eq.s32.totalorder %s28, 0
      %p49 = por %p47, %p48
      %p50 = scmp.ne.s32.totalorder %s36, %s37
      %p51 = scmp.eq.s32.totalorder %s29, 1
      %p52 = por %p50, %p51
      %p54 = scmp.ne.s32.totalorder %s37, %s53
      %p55 = scmp.eq.s32.totalorder %s29, 0
      %p56 = por %p54, %p55
      %s58 = sadd.s32 %s57, 1
      %p61 = scmp.eq.s32.totalorder %s23, 1
      %p62 = scmp.ne.s32.totalorder %s57, %s59
      %p63 = scmp.eq.s32.totalorder %s23, 0
      %p64 = por %p62, %p63
      %p65 = scmp.ne.s32.totalorder %s57, %s59
      %p66 = scmp.eq.s32.totalorder %s28, 1
      %p67 = por %p65, %p66
      %p68 = scmp.ne.s32.totalorder %s59, %s60
      %p69 = scmp.eq.s32.totalorder %s28, 0
      %p70 = por %p68, %p69
      %p71 = scmp.ne.s32.totalorder %s59, %s60
      %p72 = scmp.eq.s32.totalorder %s29, 1
      %p73 = por %p71, %p72
      %p75 = scmp.ne.s32.totalorder %s60, %s74
      %p76 = scmp.eq.s32.totalorder %s29, 0
      %p77 = por %p75, %p76
      %s79 = sadd.s32 %s78, 1
      %p82 = scmp.eq.s32.totalorder %s23, 1
      %p83 = scmp.ne.s32.totalorder %s78, %s80
      %p84 = scmp.eq.s32.totalorder %s23, 0
      %p85 = por %p83, %p84
      %p86 = scmp.ne.s32.totalorder %s78, %s80
      %p87 = scmp.eq.s32.totalorder %s28, 1
      %p88 = por %p86, %p87
      %p89 = scmp.ne.s32.totalorder %s80, %s81
      %p90 = scmp.eq.s32.totalorder %s28, 0
      %p91 = por %p89, %p90
      %p92 = scmp.ne.s32.totalorder %s80, %s81
      %p93 = scmp.eq.s32.totalorder %s29, 1
      %p94 = por %p92, %p93
      %p96 = scmp.ne.s32.totalorder %s81, %s95
      %p97 = scmp.eq.s32.totalorder %s29, 0
      %p98 = por %p96, %p97
      %s100 = sadd.s32 %s99, 1
      %p103 = scmp.eq.s32.totalorder %s23, 1
      %p104 = scmp.ne.s32.totalorder %s99, %s101
      %p105 = scmp.eq.s32.totalorder %s23, 0
      %p106 = por %p104, %p105
      %p107 = scmp.ne.s32.totalorder %s99, %s101
      %p108 = scmp.eq.s32.totalorder %s28, 1
      %p109 = por %p107, %p108
      %p110 = scmp.ne.s32.totalorder %s101, %s102
      %p111 = scmp.eq.s32.totalorder %s28, 0
      %p112 = por %p110, %p111
      %p113 = scmp.ne.s32.totalorder %s101, %s102
      %p114 = scmp.eq.s32.totalorder %s29, 1
      %p115 = por %p113, %p114
      %p117 = scmp.ne.s32.totalorder %s102, %s116
      %p118 = scmp.eq.s32.totalorder %s29, 0
      %p119 = por %p117, %p118
      %s121 = sadd.s32 %s120, 1
      %p124 = scmp.eq.s32.totalorder %s23, 1
      %p125 = scmp.ne.s32.totalorder %s120, %s122
      %p126 = scmp.eq.s32.totalorder %s23, 0
      %p127 = por %p125, %p126
      %p128 = scmp.ne.s32.totalorder %s120, %s122
      %p129 = scmp.eq.s32.totalorder %s28, 1
      %p130 = por %p128, %p129
      %p131 = scmp.ne.s32.totalorder %s122, %s123
      %p132 = scmp.eq.s32.totalorder %s28, 0
      %p133 = por %p131, %p132
      %p134 = scmp.ne.s32.totalorder %s122, %s123
      %p135 = scmp.eq.s32.totalorder %s29, 1
      %p136 = por %p134, %p135
      %p138 = scmp.ne.s32.totalorder %s123, %s137
      %p139 = scmp.eq.s32.totalorder %s29, 0
      %p140 = por %p138, %p139
      %s142 = sadd.s32 %s141, 1
      %p145 = scmp.eq.s32.totalorder %s23, 1
      %p146 = scmp.ne.s32.totalorder %s141, %s143
      %p147 = scmp.eq.s32.totalorder %s23, 0
      %p148 = por %p146, %p147
      %p149 = scmp.ne.s32.totalorder %s141, %s143
      %p150 = scmp.eq.s32.totalorder %s28, 1
      %p151 = por %p149, %p150
      %p152 = scmp.ne.s32.totalorder %s143, %s144
      %p153 = scmp.eq.s32.totalorder %s28, 0
      %p154 = por %p152, %p153
      %p155 = scmp.ne.s32.totalorder %s143, %s144
      %p156 = scmp.eq.s32.totalorder %s29, 1
      %p157 = por %p155, %p156
      %p159 = scmp.ne.s32.totalorder %s144, %s158
      %p160 = scmp.eq.s32.totalorder %s29, 0
      %p161 = por %p159, %p160
      %s163 = sadd.s32 %s162, 1
      %p166 = scmp.eq.s32.totalorder %s23, 1
      %p167 = scmp.ne.s32.totalorder %s162, %s164
      %p168 = scmp.eq.s32.totalorder %s23, 0
      %p169 = por %p167, %p168
      %p170 = scmp.ne.s32.totalorder %s162, %s164
      %p171 = scmp.eq.s32.totalorder %s28, 1
      %p172 = por %p170, %p171
      %p173 = scmp.ne.s32.totalorder %s164, %s165
      %p174 = scmp.eq.s32.totalorder %s28, 0
      %p175 = por %p173, %p174
      %p176 = scmp.ne.s32.totalorder %s164, %s165
      %p177 = scmp.eq.s32.totalorder %s29, 1
      %p178 = por %p176, %p177
      %p180 = scmp.ne.s32.totalorder %s165, %s179
      %p181 = scmp.eq.s32.totalorder %s29, 0
      %p182 = por %p180, %p181
      %s184 = sadd.s32 %s183, 1
      %p187 = scmp.eq.s32.totalorder %s23, 1
      %p188 = scmp.ne.s32.totalorder %s183, %s185
      %p189 = scmp.eq.s32.totalorder %s23, 0
      %p190 = por %p188, %p189
      %p191 = scmp.ne.s32.totalorder %s183, %s185
      %p192 = scmp.eq.s32.totalorder %s28, 1
      %p193 = por %p191, %p192
      %p194 = scmp.ne.s32.totalorder %s185, %s186
      %p195 = scmp.eq.s32.totalorder %s28, 0
      %p196 = por %p194, %p195
      %p197 = scmp.ne.s32.totalorder %s185, %s186
      %p198 = scmp.eq.s32.totalorder %s29, 1
      %p199 = por %p197, %p198
      %p201 = scmp.ne.s32.totalorder %s186, %s200
      %p202 = scmp.eq.s32.totalorder %s29, 0
      %p203 = por %p201, %p202
      %s205 = sadd.s32 %s204, 1
      %p208 = scmp.eq.s32.totalorder %s23, 1
      %p209 = scmp.ne.s32.totalorder %s204, %s206
      %p210 = scmp.eq.s32.totalorder %s23, 0
      %p211 = por %p209, %p210
      %p212 = scmp.ne.s32.totalorder %s204, %s206
      %p213 = scmp.eq.s32.totalorder %s28, 1
      %p214 = por %p212, %p213
      %p215 = scmp.ne.s32.totalorder %s206, %s207
      %p216 = scmp.eq.s32.totalorder %s28, 0
      %p217 = por %p215, %p216
      %p218 = scmp.ne.s32.totalorder %s206, %s207
      %p219 = scmp.eq.s32.totalorder %s29, 1
      %p220 = por %p218, %p219
      %p222 = scmp.ne.s32.totalorder %s207, %s221
      %p223 = scmp.eq.s32.totalorder %s29, 0
      %p224 = por %p222, %p223
      %s225 = ssub.s32 %s23, %s30
      %p226 = scmp.eq.s32.totalorder %s225, 0
      %s228 = sadd.s32 %s227, 1
      %s229 = scalar_select %p226, %s227, %s228
      %p232 = pneg %p226
      %p233 = scmp.eq.s32.totalorder %s23, 1
      %p234 = por %p232, %p233
      %p235 = scmp.ne.s32.totalorder %s227, %s230
      %p236 = scmp.eq.s32.totalorder %s23, 0
      %p237 = por %p235, %p236
      %p238 = scmp.ne.s32.totalorder %s227, %s230
      %p239 = scmp.eq.s32.totalorder %s28, 1
      %p240 = por %p238, %p239
      %p241 = scmp.ne.s32.totalorder %s230, %s231
      %p242 = scmp.eq.s32.totalorder %s28, 0
      %p243 = por %p241, %p242
      %p244 = scmp.ne.s32.totalorder %s230, %s231
      %p245 = scmp.eq.s32.totalorder %s29, 1
      %p246 = por %p244, %p245
      %p248 = scmp.ne.s32.totalorder %s231, %s247
      %p249 = scmp.eq.s32.totalorder %s29, 0
      %p250 = por %p248, %p249
      %p251 = scmp.le.s32.totalorder 1, %s23
      %p252 = scmp.lt.s32.totalorder %s23, 3
      %p253 = pnand %p251, %p252
      %p254 = pneg %p253
      // Predicated region
      $region9: #{mlp_encoder.1} parent=5 // pred_check
        _
      $region10: #{mlp_encoder.1} parent=5 // pred_check_branch
        %256 = sbr.rel (%p253) target = $region12
      $region11: #{mlp_encoder.1} parent=5 // pred_region
        %s257 = ssub.s32 %s23, 1
        // Predicated region
        $region13: #{mlp_encoder.1} parent=11 // pred_check
          %p258 = pneg %p70
        $region14: #{mlp_encoder.1} parent=11 // pred_check_branch
          %260 = sbr.rel (%p258) target = $region16
        $region15: #{mlp_encoder.1} parent=11 // pred_region
          %s262 = ssub.s32 8192, 8192
          %263 = vsyncadd [#allocation6], %s262
          %s264 = sshll.u32 [#allocation5], 4
          %s265 = int_to_ptr.vmem [resolvable:$true] %s264
          %270 = dma.hbm_to_vmem [thread:$0]  %s1, 8192, %s265, [#allocation6], 256, 256, 16
        $region16: #{mlp_encoder.1} parent=11 // pred_fallthru
          _
        // Predicated region
        $region17: #{mlp_encoder.1} parent=11 // pred_check
          %p271 = pneg %p91
        $region18: #{mlp_encoder.1} parent=11 // pred_check_branch
          %273 = sbr.rel (%p271) target = $region20
        $region19: #{mlp_encoder.1} parent=11 // pred_region
          _
        $region20: #{mlp_encoder.1} parent=11 // pred_fallthru
          _
        // Predicated region
        $region21: #{mlp_encoder.1} parent=11 // pred_check
          %p274 = pneg %p112
        $region22: #{mlp_encoder.1} parent=11 // pred_check_branch
          %276 = sbr.rel (%p274) target = $region24
        $region23: #{mlp_encoder.1} parent=11 // pred_region
          %s278 = ssub.s32 32768, 32768
          %279 = vsyncadd [#allocation6], %s278
          %s280 = sshll.u32 [#allocation7], 4
          %s281 = int_to_ptr.vmem [resolvable:$true] %s280
          %286 = dma.hbm_to_vmem [thread:$0]  %s3, 32768, %s281, [#allocation6], 512, 512, 32
        $region24: #{mlp_encoder.1} parent=11 // pred_fallthru
          _
        // Predicated region
        $region25: #{mlp_encoder.1} parent=11 // pred_check
          %p287 = pneg %p133
        $region26: #{mlp_encoder.1} parent=11 // pred_check_branch
          %289 = sbr.rel (%p287) target = $region28
        $region27: #{mlp_encoder.1} parent=11 // pred_region
          _
        $region28: #{mlp_encoder.1} parent=11 // pred_fallthru
          _
        // Predicated region
        $region29: #{mlp_encoder.1} parent=11 // pred_check
          %p290 = pneg %p154
        $region30: #{mlp_encoder.1} parent=11 // pred_check_branch
          %292 = sbr.rel (%p290) target = $region32
        $region31: #{mlp_encoder.1} parent=11 // pred_region
          %s294 = ssub.s32 32768, 32768
          %295 = vsyncadd [#allocation9], %s294
          %s296 = sshll.u32 [#allocation8], 4
          %s297 = int_to_ptr.vmem [resolvable:$true] %s296
          %302 = dma.hbm_to_vmem [thread:$0]  %s5, 32768, %s297, [#allocation9], 256, 256, 16
        $region32: #{mlp_encoder.1} parent=11 // pred_fallthru
          _
        // Predicated region
        $region33: #{mlp_encoder.1} parent=11 // pred_check
          %p303 = pneg %p175
        $region34: #{mlp_encoder.1} parent=11 // pred_check_branch
          %305 = sbr.rel (%p303) target = $region36
        $region35: #{mlp_encoder.1} parent=11 // pred_region
          _
        $region36: #{mlp_encoder.1} parent=11 // pred_fallthru
          _
        // Predicated region
        $region37: #{mlp_encoder.1} parent=11 // pred_check
          %p306 = pneg %p196
        $region38: #{mlp_encoder.1} parent=11 // pred_check_branch
          %308 = sbr.rel (%p306) target = $region40
        $region39: #{mlp_encoder.1} parent=11 // pred_region
          %s310 = ssub.s32 8192, 8192
          %311 = vsyncadd [#allocation9], %s310
          %s312 = sshll.u32 [#allocation10], 4
          %s313 = int_to_ptr.vmem [resolvable:$true] %s312
          %318 = dma.hbm_to_vmem [thread:$0]  %s7, 8192, %s313, [#allocation9], 128, 128, 8
        $region40: #{mlp_encoder.1} parent=11 // pred_fallthru
          _
        // Predicated region
        $region41: #{mlp_encoder.1} parent=11 // pred_check
          %p319 = pneg %p217
        $region42: #{mlp_encoder.1} parent=11 // pred_check_branch
          %321 = sbr.rel (%p319) target = $region44
        $region43: #{mlp_encoder.1} parent=11 // pred_region
          _
        $region44: #{mlp_encoder.1} parent=11 // pred_fallthru
          _
      $region12: #{mlp_encoder.1} parent=5 // pred_fallthru
        _
      %p322 = scmp.lt.s32.totalorder %s23, 2
      // Predicated region
      $region45: #{mlp_encoder.1} parent=5 // pred_check
        %p323 = pneg %p322
      $region46: #{mlp_encoder.1} parent=5 // pred_check_branch
        %325 = sbr.rel (%p323) target = $region48
      $region47: #{mlp_encoder.1} parent=5 // pred_region
        // Predicated region
        $region49: #{mlp_encoder.1} parent=47 // pred_check
          %p326 = pneg %p43
        $region50: #{mlp_encoder.1} parent=47 // pred_check_branch
          %328 = sbr.rel (%p326) target = $region52
        $region51: #{mlp_encoder.1} parent=47 // pred_region
          %s329 = sand.u32 %s33, 1
          %s330 = scalar_lea.sflag [#allocation3], %s329
          %s331 = sand.u32 %s33, 1
          %s332 = smul.addr %s331, 320
          %s333 = scalar_lea.vmem [#allocation2], %s332
          %s334 = smul.u32 20, %s23
          %s335 = ssub.s32 38, %s334
          %p336 = scmp.lt.s32.totalorder %s335, 20
          %s337 = scalar_select %p336, %s335, 20
          %s338 = smul.u32 128, %s337
          %s339 = smul.u32 %s338, 2
          %s341 = ssub.s32 5120, %s339
          %342 = vsyncadd %s330, %s341
          %p343 = scmp.ne.s32.totalorder 0, %s339
          %s344 = smul.addr %s334, 2
          %s345 = smul.addr %s344, 128
          %s346 = scalar_lea.hbm %s0, %s345
          %s347 = smul.u32 16, %s337
          %s348 = sshll.u32 %s333, 4
          %s349 = int_to_ptr.vmem [resolvable:$true] %s348
          %s350 = sshll.u32 %s347, 4
          %354 = dma.hbm_to_vmem [thread:$0]  (%p343), %s346, %s350, %s349, %s330, 256, 256, 16
        $region52: #{mlp_encoder.1} parent=47 // pred_fallthru
          _
      $region48: #{mlp_encoder.1} parent=5 // pred_fallthru
        _
      %p355 = scmp.le.s32.totalorder 1, %s23
      %p356 = scmp.lt.s32.totalorder %s23, 3
      %p357 = pnand %p355, %p356
      %p358 = pneg %p357
      // Predicated region
      $region53: #{mlp_encoder.1} parent=5 // pred_check
        _
      $region54: #{mlp_encoder.1} parent=5 // pred_check_branch
        %360 = sbr.rel (%p357) target = $region56
      $region55: #{mlp_encoder.1} parent=5 // pred_region
        %s361 = ssub.s32 %s23, 1
        %s362 = sand.u32 %s36, 1
        %s363 = scalar_lea.sflag [#allocation3], %s362
        %s364 = sand.u32 %s36, 1
        %s365 = smul.addr %s364, 320
        %s366 = scalar_lea.vmem [#allocation2], %s365
        // Predicated region
        $region57: #{mlp_encoder.1} parent=55 // pred_check
          %p367 = pneg %p49
        $region58: #{mlp_encoder.1} parent=55 // pred_check_branch
          %369 = sbr.rel (%p367) target = $region60
        $region59: #{mlp_encoder.1} parent=55 // pred_region
          %370 = dma.done %s363, 5120
        $region60: #{mlp_encoder.1} parent=55 // pred_fallthru
          _
        // Predicated region
        $region61: #{mlp_encoder.1} parent=55 // pred_check
          %p371 = pneg %p70
        $region62: #{mlp_encoder.1} parent=55 // pred_check_branch
          %373 = sbr.rel (%p371) target = $region64
        $region63: #{mlp_encoder.1} parent=55 // pred_region
          %374 = dma.done [#allocation6], 8192
        $region64: #{mlp_encoder.1} parent=55 // pred_fallthru
          _
        // Predicated region
        $region65: #{mlp_encoder.1} parent=55 // pred_check
          %p375 = pneg %p112
        $region66: #{mlp_encoder.1} parent=55 // pred_check_branch
          %377 = sbr.rel (%p375) target = $region68
        $region67: #{mlp_encoder.1} parent=55 // pred_region
          %378 = dma.done [#allocation6], 32768
        $region68: #{mlp_encoder.1} parent=55 // pred_fallthru
          _
        // Predicated region
        $region69: #{mlp_encoder.1} parent=55 // pred_check
          %p379 = pneg %p154
        $region70: #{mlp_encoder.1} parent=55 // pred_check_branch
          %381 = sbr.rel (%p379) target = $region72
        $region71: #{mlp_encoder.1} parent=55 // pred_region
          %382 = dma.done [#allocation9], 32768
        $region72: #{mlp_encoder.1} parent=55 // pred_fallthru
          _
        // Predicated region
        $region73: #{mlp_encoder.1} parent=55 // pred_check
          %p383 = pneg %p196
        $region74: #{mlp_encoder.1} parent=55 // pred_check_branch
          %385 = sbr.rel (%p383) target = $region76
        $region75: #{mlp_encoder.1} parent=55 // pred_region
          %386 = dma.done [#allocation9], 8192
        $region76: #{mlp_encoder.1} parent=55 // pred_fallthru
          _
        %s387 = sand.u32 %s36, 1
        %s388 = scalar_lea.sflag [#allocation3], %s387
        %s389 = sand.u32 %s36, 1
        %s390 = smul.addr %s389, 320
        %s391 = scalar_lea.vmem [#allocation2], %s390
        %p392 = pneg %p49
        %p393 = pneg %p46
        %p394 = pneg %p70
        %p395 = pneg %p67
        %p396 = pneg %p91
        %p397 = pneg %p88
        %p398 = pneg %p112
        %p399 = pneg %p109
        %p400 = pneg %p133
        %p401 = pneg %p130
        %p402 = pneg %p154
        %p403 = pneg %p151
        %p404 = pneg %p175
        %p405 = pneg %p172
        %p406 = pneg %p196
        %p407 = pneg %p193
        %p408 = pneg %p217
        %p409 = pneg %p214
        %p410 = pneg %p243
        %p411 = pneg %p240
        %s412 = sand.u32 %s230, 1
        %s413 = scalar_lea.sflag [#allocation4], %s412
        %s414 = sand.u32 %s230, 1
        %s415 = smul.addr %s414, 320
        %s416 = scalar_lea.vmem [#allocation11], %s415
        %s417 = smul.u32 20, %s28
        %s418 = ssub.s32 38, %s417
        %p419 = scmp.lt.s32.totalorder %s418, 20
        %s420 = scalar_select %p419, %s418, 20
        %s421 = smul.u32 128, %s420
        %s422 = smul.u32 %s421, 2
        %s423 = smul.u32 20, %s28
        %s424 = ssub.s32 38, %s423
        %p425 = scmp.lt.s32.totalorder %s424, 20
        %s426 = scalar_select %p425, %s424, 20
        %s427 = smul.u32 128, %s426
        %s428 = smul.u32 %s427, 2
        %v429 = vld [vmem:[#allocation5] sm:$0xff]
        %v430 = vld [vmem:[#allocation5 + $0x8] sm:$0xff]
        %v431 = vld [vmem:[#allocation5 + $0x10] sm:$0xff]
        %v432 = vld [vmem:[#allocation5 + $0x18] sm:$0xff]
        %v433 = vld [vmem:[#allocation5 + $0x20] sm:$0xff]
        %v434 = vld [vmem:[#allocation5 + $0x28] sm:$0xff]
        %v435 = vld [vmem:[#allocation5 + $0x30] sm:$0xff]
        %v436 = vld [vmem:[#allocation5 + $0x38] sm:$0xff]
        %v437 = vld [vmem:[#allocation5 + $0x40] sm:$0xff]
        %v438 = vld [vmem:[#allocation5 + $0x48] sm:$0xff]
        %v439 = vld [vmem:[#allocation5 + $0x50] sm:$0xff]
        %v440 = vld [vmem:[#allocation5 + $0x58] sm:$0xff]
        %v441 = vld [vmem:[#allocation5 + $0x60] sm:$0xff]
        %v442 = vld [vmem:[#allocation5 + $0x68] sm:$0xff]
        %v443 = vld [vmem:[#allocation5 + $0x70] sm:$0xff]
        %v444 = vld [vmem:[#allocation5 + $0x78] sm:$0xff]
        %v445 = vld [vmem:[#allocation5 + $0x80] sm:$0xff]
        %v446 = vld [vmem:[#allocation5 + $0x88] sm:$0xff]
        %v447 = vld [vmem:[#allocation5 + $0x90] sm:$0xff]
        %v448 = vld [vmem:[#allocation5 + $0x98] sm:$0xff]
        %v449 = vld [vmem:[#allocation5 + $0xa0] sm:$0xff]
        %v450 = vld [vmem:[#allocation5 + $0xa8] sm:$0xff]
        %v451 = vld [vmem:[#allocation5 + $0xb0] sm:$0xff]
        %v452 = vld [vmem:[#allocation5 + $0xb8] sm:$0xff]
        %v453 = vld [vmem:[#allocation5 + $0xc0] sm:$0xff]
        %v454 = vld [vmem:[#allocation5 + $0xc8] sm:$0xff]
        %v455 = vld [vmem:[#allocation5 + $0xd0] sm:$0xff]
        %v456 = vld [vmem:[#allocation5 + $0xd8] sm:$0xff]
        %v457 = vld [vmem:[#allocation5 + $0xe0] sm:$0xff]
        %v458 = vld [vmem:[#allocation5 + $0xe8] sm:$0xff]
        %v459 = vld [vmem:[#allocation5 + $0xf0] sm:$0xff]
        %v460 = vld [vmem:[#allocation5 + $0xf8] sm:$0xff]
        %v461 = vld [vmem:[#allocation5 + $0x100] sm:$0xff]
        %v462 = vld [vmem:[#allocation5 + $0x108] sm:$0xff]
        %v463 = vld [vmem:[#allocation5 + $0x110] sm:$0xff]
        %v464 = vld [vmem:[#allocation5 + $0x118] sm:$0xff]
        %v465 = vld [vmem:[#allocation5 + $0x120] sm:$0xff]
        %v466 = vld [vmem:[#allocation5 + $0x128] sm:$0xff]
        %v467 = vld [vmem:[#allocation5 + $0x130] sm:$0xff]
        %v468 = vld [vmem:[#allocation5 + $0x138] sm:$0xff]
        %v469 = vld [vmem:[#allocation5 + $0x140] sm:$0xff]
        %v470 = vld [vmem:[#allocation5 + $0x148] sm:$0xff]
        %v471 = vld [vmem:[#allocation5 + $0x150] sm:$0xff]
        %v472 = vld [vmem:[#allocation5 + $0x158] sm:$0xff]
        %v473 = vld [vmem:[#allocation5 + $0x160] sm:$0xff]
        %v474 = vld [vmem:[#allocation5 + $0x168] sm:$0xff]
        %v475 = vld [vmem:[#allocation5 + $0x170] sm:$0xff]
        %v476 = vld [vmem:[#allocation5 + $0x178] sm:$0xff]
        %v477 = vld [vmem:[#allocation5 + $0x180] sm:$0xff]
        %v478 = vld [vmem:[#allocation5 + $0x188] sm:$0xff]
        %v479 = vld [vmem:[#allocation5 + $0x190] sm:$0xff]
        %v480 = vld [vmem:[#allocation5 + $0x198] sm:$0xff]
        %v481 = vld [vmem:[#allocation5 + $0x1a0] sm:$0xff]
        %v482 = vld [vmem:[#allocation5 + $0x1a8] sm:$0xff]
        %v483 = vld [vmem:[#allocation5 + $0x1b0] sm:$0xff]
        %v484 = vld [vmem:[#allocation5 + $0x1b8] sm:$0xff]
        %v485 = vld [vmem:[#allocation5 + $0x1c0] sm:$0xff]
        %v486 = vld [vmem:[#allocation5 + $0x1c8] sm:$0xff]
        %v487 = vld [vmem:[#allocation5 + $0x1d0] sm:$0xff]
        %v488 = vld [vmem:[#allocation5 + $0x1d8] sm:$0xff]
        %v489 = vld [vmem:[#allocation5 + $0x1e0] sm:$0xff]
        %v490 = vld [vmem:[#allocation5 + $0x1e8] sm:$0xff]
        %v491 = vld [vmem:[#allocation5 + $0x1f0] sm:$0xff]
        %v492 = vld [vmem:[#allocation5 + $0x1f8] sm:$0xff]
        %v493 = vld [vmem:[#allocation7] sm:$0xff]
        %v494 = vld [vmem:[#allocation7 + $0x8] sm:$0xff]
        %v495 = vld [vmem:[#allocation7 + $0x10] sm:$0xff]
        %v496 = vld [vmem:[#allocation7 + $0x18] sm:$0xff]
        %v497 = vld [vmem:[#allocation7 + $0x20] sm:$0xff]
        %v498 = vld [vmem:[#allocation7 + $0x28] sm:$0xff]
        %v499 = vld [vmem:[#allocation7 + $0x30] sm:$0xff]
        %v500 = vld [vmem:[#allocation7 + $0x38] sm:$0xff]
        %v501 = vld [vmem:[#allocation7 + $0x40] sm:$0xff]
        %v502 = vld [vmem:[#allocation7 + $0x48] sm:$0xff]
        %v503 = vld [vmem:[#allocation7 + $0x50] sm:$0xff]
        %v504 = vld [vmem:[#allocation7 + $0x58] sm:$0xff]
        %v505 = vld [vmem:[#allocation7 + $0x60] sm:$0xff]
        %v506 = vld [vmem:[#allocation7 + $0x68] sm:$0xff]
        %v507 = vld [vmem:[#allocation7 + $0x70] sm:$0xff]
        %v508 = vld [vmem:[#allocation7 + $0x78] sm:$0xff]
        %v509 = vld [vmem:[#allocation7 + $0x80] sm:$0xff]
        %v510 = vld [vmem:[#allocation7 + $0x88] sm:$0xff]
        %v511 = vld [vmem:[#allocation7 + $0x90] sm:$0xff]
        %v512 = vld [vmem:[#allocation7 + $0x98] sm:$0xff]
        %v513 = vld [vmem:[#allocation7 + $0xa0] sm:$0xff]
        %v514 = vld [vmem:[#allocation7 + $0xa8] sm:$0xff]
        %v515 = vld [vmem:[#allocation7 + $0xb0] sm:$0xff]
        %v516 = vld [vmem:[#allocation7 + $0xb8] sm:$0xff]
        %v517 = vld [vmem:[#allocation7 + $0xc0] sm:$0xff]
        %v518 = vld [vmem:[#allocation7 + $0xc8] sm:$0xff]
        %v519 = vld [vmem:[#allocation7 + $0xd0] sm:$0xff]
        %v520 = vld [vmem:[#allocation7 + $0xd8] sm:$0xff]
        %v521 = vld [vmem:[#allocation7 + $0xe0] sm:$0xff]
        %v522 = vld [vmem:[#allocation7 + $0xe8] sm:$0xff]
        %v523 = vld [vmem:[#allocation7 + $0xf0] sm:$0xff]
        %v524 = vld [vmem:[#allocation7 + $0xf8] sm:$0xff]
        %v525 = vld [vmem:[#allocation7 + $0x100] sm:$0xff]
        %v526 = vld [vmem:[#allocation7 + $0x108] sm:$0xff]
        %v527 = vld [vmem:[#allocation7 + $0x110] sm:$0xff]
        %v528 = vld [vmem:[#allocation7 + $0x118] sm:$0xff]
        %v529 = vld [vmem:[#allocation7 + $0x120] sm:$0xff]
        %v530 = vld [vmem:[#allocation7 + $0x128] sm:$0xff]
        %v531 = vld [vmem:[#allocation7 + $0x130] sm:$0xff]
        %v532 = vld [vmem:[#allocation7 + $0x138] sm:$0xff]
        %v533 = vld [vmem:[#allocation7 + $0x140] sm:$0xff]
        %v534 = vld [vmem:[#allocation7 + $0x148] sm:$0xff]
        %v535 = vld [vmem:[#allocation7 + $0x150] sm:$0xff]
        %v536 = vld [vmem:[#allocation7 + $0x158] sm:$0xff]
        %v537 = vld [vmem:[#allocation7 + $0x160] sm:$0xff]
        %v538 = vld [vmem:[#allocation7 + $0x168] sm:$0xff]
        %v539 = vld [vmem:[#allocation7 + $0x170] sm:$0xff]
        %v540 = vld [vmem:[#allocation7 + $0x178] sm:$0xff]
        %v541 = vld [vmem:[#allocation7 + $0x180] sm:$0xff]
        %v542 = vld [vmem:[#allocation7 + $0x188] sm:$0xff]
        %v543 = vld [vmem:[#allocation7 + $0x190] sm:$0xff]
        %v544 = vld [vmem:[#allocation7 + $0x198] sm:$0xff]
        %v545 = vld [vmem:[#allocation7 + $0x1a0] sm:$0xff]
        %v546 = vld [vmem:[#allocation7 + $0x1a8] sm:$0xff]
        %v547 = vld [vmem:[#allocation7 + $0x1b0] sm:$0xff]
        %v548 = vld [vmem:[#allocation7 + $0x1b8] sm:$0xff]
        %v549 = vld [vmem:[#allocation7 + $0x1c0] sm:$0xff]
        %v550 = vld [vmem:[#allocation7 + $0x1c8] sm:$0xff]
        %v551 = vld [vmem:[#allocation7 + $0x1d0] sm:$0xff]
        %v552 = vld [vmem:[#allocation7 + $0x1d8] sm:$0xff]
        %v553 = vld [vmem:[#allocation7 + $0x1e0] sm:$0xff]
        %v554 = vld [vmem:[#allocation7 + $0x1e8] sm:$0xff]
        %v555 = vld [vmem:[#allocation7 + $0x1f0] sm:$0xff]
        %v556 = vld [vmem:[#allocation7 + $0x1f8] sm:$0xff]
        %v557 = vld [vmem:[#allocation7 + $0x200] sm:$0xff]
        %v558 = vld [vmem:[#allocation7 + $0x208] sm:$0xff]
        %v559 = vld [vmem:[#allocation7 + $0x210] sm:$0xff]
        %v560 = vld [vmem:[#allocation7 + $0x218] sm:$0xff]
        %v561 = vld [vmem:[#allocation7 + $0x220] sm:$0xff]
        %v562 = vld [vmem:[#allocation7 + $0x228] sm:$0xff]
        %v563 = vld [vmem:[#allocation7 + $0x230] sm:$0xff]
        %v564 = vld [vmem:[#allocation7 + $0x238] sm:$0xff]
        %v565 = vld [vmem:[#allocation7 + $0x240] sm:$0xff]
        %v566 = vld [vmem:[#allocation7 + $0x248] sm:$0xff]
        %v567 = vld [vmem:[#allocation7 + $0x250] sm:$0xff]
        %v568 = vld [vmem:[#allocation7 + $0x258] sm:$0xff]
        %v569 = vld [vmem:[#allocation7 + $0x260] sm:$0xff]
        %v570 = vld [vmem:[#allocation7 + $0x268] sm:$0xff]
        %v571 = vld [vmem:[#allocation7 + $0x270] sm:$0xff]
        %v572 = vld [vmem:[#allocation7 + $0x278] sm:$0xff]
        %v573 = vld [vmem:[#allocation7 + $0x280] sm:$0xff]
        %v574 = vld [vmem:[#allocation7 + $0x288] sm:$0xff]
        %v575 = vld [vmem:[#allocation7 + $0x290] sm:$0xff]
        %v576 = vld [vmem:[#allocation7 + $0x298] sm:$0xff]
        %v577 = vld [vmem:[#allocation7 + $0x2a0] sm:$0xff]
        %v578 = vld [vmem:[#allocation7 + $0x2a8] sm:$0xff]
        %v579 = vld [vmem:[#allocation7 + $0x2b0] sm:$0xff]
        %v580 = vld [vmem:[#allocation7 + $0x2b8] sm:$0xff]
        %v581 = vld [vmem:[#allocation7 + $0x2c0] sm:$0xff]
        %v582 = vld [vmem:[#allocation7 + $0x2c8] sm:$0xff]
        %v583 = vld [vmem:[#allocation7 + $0x2d0] sm:$0xff]
        %v584 = vld [vmem:[#allocation7 + $0x2d8] sm:$0xff]
        %v585 = vld [vmem:[#allocation7 + $0x2e0] sm:$0xff]
        %v586 = vld [vmem:[#allocation7 + $0x2e8] sm:$0xff]
        %v587 = vld [vmem:[#allocation7 + $0x2f0] sm:$0xff]
        %v588 = vld [vmem:[#allocation7 + $0x2f8] sm:$0xff]
        %v589 = vld [vmem:[#allocation7 + $0x300] sm:$0xff]
        %v590 = vld [vmem:[#allocation7 + $0x308] sm:$0xff]
        %v591 = vld [vmem:[#allocation7 + $0x310] sm:$0xff]
        %v592 = vld [vmem:[#allocation7 + $0x318] sm:$0xff]
        %v593 = vld [vmem:[#allocation7 + $0x320] sm:$0xff]
        %v594 = vld [vmem:[#allocation7 + $0x328] sm:$0xff]
        %v595 = vld [vmem:[#allocation7 + $0x330] sm:$0xff]
        %v596 = vld [vmem:[#allocation7 + $0x338] sm:$0xff]
        %v597 = vld [vmem:[#allocation7 + $0x340] sm:$0xff]
        %v598 = vld [vmem:[#allocation7 + $0x348] sm:$0xff]
        %v599 = vld [vmem:[#allocation7 + $0x350] sm:$0xff]
        %v600 = vld [vmem:[#allocation7 + $0x358] sm:$0xff]
        %v601 = vld [vmem:[#allocation7 + $0x360] sm:$0xff]
        %v602 = vld [vmem:[#allocation7 + $0x368] sm:$0xff]
        %v603 = vld [vmem:[#allocation7 + $0x370] sm:$0xff]
        %v604 = vld [vmem:[#allocation7 + $0x378] sm:$0xff]
        %v605 = vld [vmem:[#allocation7 + $0x380] sm:$0xff]
        %v606 = vld [vmem:[#allocation7 + $0x388] sm:$0xff]
        %v607 = vld [vmem:[#allocation7 + $0x390] sm:$0xff]
        %v608 = vld [vmem:[#allocation7 + $0x398] sm:$0xff]
        %v609 = vld [vmem:[#allocation7 + $0x3a0] sm:$0xff]
        %v610 = vld [vmem:[#allocation7 + $0x3a8] sm:$0xff]
        %v611 = vld [vmem:[#allocation7 + $0x3b0] sm:$0xff]
        %v612 = vld [vmem:[#allocation7 + $0x3b8] sm:$0xff]
        %v613 = vld [vmem:[#allocation7 + $0x3c0] sm:$0xff]
        %v614 = vld [vmem:[#allocation7 + $0x3c8] sm:$0xff]
        %v615 = vld [vmem:[#allocation7 + $0x3d0] sm:$0xff]
        %v616 = vld [vmem:[#allocation7 + $0x3d8] sm:$0xff]
        %v617 = vld [vmem:[#allocation7 + $0x3e0] sm:$0xff]
        %v618 = vld [vmem:[#allocation7 + $0x3e8] sm:$0xff]
        %v619 = vld [vmem:[#allocation7 + $0x3f0] sm:$0xff]
        %v620 = vld [vmem:[#allocation7 + $0x3f8] sm:$0xff]
        %v621 = vld [vmem:[#allocation7 + $0x400] sm:$0xff]
        %v622 = vld [vmem:[#allocation7 + $0x408] sm:$0xff]
        %v623 = vld [vmem:[#allocation7 + $0x410] sm:$0xff]
        %v624 = vld [vmem:[#allocation7 + $0x418] sm:$0xff]
        %v625 = vld [vmem:[#allocation7 + $0x420] sm:$0xff]
        %v626 = vld [vmem:[#allocation7 + $0x428] sm:$0xff]
        %v627 = vld [vmem:[#allocation7 + $0x430] sm:$0xff]
        %v628 = vld [vmem:[#allocation7 + $0x438] sm:$0xff]
        %v629 = vld [vmem:[#allocation7 + $0x440] sm:$0xff]
        %v630 = vld [vmem:[#allocation7 + $0x448] sm:$0xff]
        %v631 = vld [vmem:[#allocation7 + $0x450] sm:$0xff]
        %v632 = vld [vmem:[#allocation7 + $0x458] sm:$0xff]
        %v633 = vld [vmem:[#allocation7 + $0x460] sm:$0xff]
        %v634 = vld [vmem:[#allocation7 + $0x468] sm:$0xff]
        %v635 = vld [vmem:[#allocation7 + $0x470] sm:$0xff]
        %v636 = vld [vmem:[#allocation7 + $0x478] sm:$0xff]
        %v637 = vld [vmem:[#allocation7 + $0x480] sm:$0xff]
        %v638 = vld [vmem:[#allocation7 + $0x488] sm:$0xff]
        %v639 = vld [vmem:[#allocation7 + $0x490] sm:$0xff]
        %v640 = vld [vmem:[#allocation7 + $0x498] sm:$0xff]
        %v641 = vld [vmem:[#allocation7 + $0x4a0] sm:$0xff]
        %v642 = vld [vmem:[#allocation7 + $0x4a8] sm:$0xff]
        %v643 = vld [vmem:[#allocation7 + $0x4b0] sm:$0xff]
        %v644 = vld [vmem:[#allocation7 + $0x4b8] sm:$0xff]
        %v645 = vld [vmem:[#allocation7 + $0x4c0] sm:$0xff]
        %v646 = vld [vmem:[#allocation7 + $0x4c8] sm:$0xff]
        %v647 = vld [vmem:[#allocation7 + $0x4d0] sm:$0xff]
        %v648 = vld [vmem:[#allocation7 + $0x4d8] sm:$0xff]
        %v649 = vld [vmem:[#allocation7 + $0x4e0] sm:$0xff]
        %v650 = vld [vmem:[#allocation7 + $0x4e8] sm:$0xff]
        %v651 = vld [vmem:[#allocation7 + $0x4f0] sm:$0xff]
        %v652 = vld [vmem:[#allocation7 + $0x4f8] sm:$0xff]
        %v653 = vld [vmem:[#allocation7 + $0x500] sm:$0xff]
        %v654 = vld [vmem:[#allocation7 + $0x508] sm:$0xff]
        %v655 = vld [vmem:[#allocation7 + $0x510] sm:$0xff]
        %v656 = vld [vmem:[#allocation7 + $0x518] sm:$0xff]
        %v657 = vld [vmem:[#allocation7 + $0x520] sm:$0xff]
        %v658 = vld [vmem:[#allocation7 + $0x528] sm:$0xff]
        %v659 = vld [vmem:[#allocation7 + $0x530] sm:$0xff]
        %v660 = vld [vmem:[#allocation7 + $0x538] sm:$0xff]
        %v661 = vld [vmem:[#allocation7 + $0x540] sm:$0xff]
        %v662 = vld [vmem:[#allocation7 + $0x548] sm:$0xff]
        %v663 = vld [vmem:[#allocation7 + $0x550] sm:$0xff]
        %v664 = vld [vmem:[#allocation7 + $0x558] sm:$0xff]
        %v665 = vld [vmem:[#allocation7 + $0x560] sm:$0xff]
        %v666 = vld [vmem:[#allocation7 + $0x568] sm:$0xff]
        %v667 = vld [vmem:[#allocation7 + $0x570] sm:$0xff]
        %v668 = vld [vmem:[#allocation7 + $0x578] sm:$0xff]
        %v669 = vld [vmem:[#allocation7 + $0x580] sm:$0xff]
        %v670 = vld [vmem:[#allocation7 + $0x588] sm:$0xff]
        %v671 = vld [vmem:[#allocation7 + $0x590] sm:$0xff]
        %v672 = vld [vmem:[#allocation7 + $0x598] sm:$0xff]
        %v673 = vld [vmem:[#allocation7 + $0x5a0] sm:$0xff]
        %v674 = vld [vmem:[#allocation7 + $0x5a8] sm:$0xff]
        %v675 = vld [vmem:[#allocation7 + $0x5b0] sm:$0xff]
        %v676 = vld [vmem:[#allocation7 + $0x5b8] sm:$0xff]
        %v677 = vld [vmem:[#allocation7 + $0x5c0] sm:$0xff]
        %v678 = vld [vmem:[#allocation7 + $0x5c8] sm:$0xff]
        %v679 = vld [vmem:[#allocation7 + $0x5d0] sm:$0xff]
        %v680 = vld [vmem:[#allocation7 + $0x5d8] sm:$0xff]
        %v681 = vld [vmem:[#allocation7 + $0x5e0] sm:$0xff]
        %v682 = vld [vmem:[#allocation7 + $0x5e8] sm:$0xff]
        %v683 = vld [vmem:[#allocation7 + $0x5f0] sm:$0xff]
        %v684 = vld [vmem:[#allocation7 + $0x5f8] sm:$0xff]
        %v685 = vld [vmem:[#allocation7 + $0x600] sm:$0xff]
        %v686 = vld [vmem:[#allocation7 + $0x608] sm:$0xff]
        %v687 = vld [vmem:[#allocation7 + $0x610] sm:$0xff]
        %v688 = vld [vmem:[#allocation7 + $0x618] sm:$0xff]
        %v689 = vld [vmem:[#allocation7 + $0x620] sm:$0xff]
        %v690 = vld [vmem:[#allocation7 + $0x628] sm:$0xff]
        %v691 = vld [vmem:[#allocation7 + $0x630] sm:$0xff]
        %v692 = vld [vmem:[#allocation7 + $0x638] sm:$0xff]
        %v693 = vld [vmem:[#allocation7 + $0x640] sm:$0xff]
        %v694 = vld [vmem:[#allocation7 + $0x648] sm:$0xff]
        %v695 = vld [vmem:[#allocation7 + $0x650] sm:$0xff]
        %v696 = vld [vmem:[#allocation7 + $0x658] sm:$0xff]
        %v697 = vld [vmem:[#allocation7 + $0x660] sm:$0xff]
        %v698 = vld [vmem:[#allocation7 + $0x668] sm:$0xff]
        %v699 = vld [vmem:[#allocation7 + $0x670] sm:$0xff]
        %v700 = vld [vmem:[#allocation7 + $0x678] sm:$0xff]
        %v701 = vld [vmem:[#allocation7 + $0x680] sm:$0xff]
        %v702 = vld [vmem:[#allocation7 + $0x688] sm:$0xff]
        %v703 = vld [vmem:[#allocation7 + $0x690] sm:$0xff]
        %v704 = vld [vmem:[#allocation7 + $0x698] sm:$0xff]
        %v705 = vld [vmem:[#allocation7 + $0x6a0] sm:$0xff]
        %v706 = vld [vmem:[#allocation7 + $0x6a8] sm:$0xff]
        %v707 = vld [vmem:[#allocation7 + $0x6b0] sm:$0xff]
        %v708 = vld [vmem:[#allocation7 + $0x6b8] sm:$0xff]
        %v709 = vld [vmem:[#allocation7 + $0x6c0] sm:$0xff]
        %v710 = vld [vmem:[#allocation7 + $0x6c8] sm:$0xff]
        %v711 = vld [vmem:[#allocation7 + $0x6d0] sm:$0xff]
        %v712 = vld [vmem:[#allocation7 + $0x6d8] sm:$0xff]
        %v713 = vld [vmem:[#allocation7 + $0x6e0] sm:$0xff]
        %v714 = vld [vmem:[#allocation7 + $0x6e8] sm:$0xff]
        %v715 = vld [vmem:[#allocation7 + $0x6f0] sm:$0xff]
        %v716 = vld [vmem:[#allocation7 + $0x6f8] sm:$0xff]
        %v717 = vld [vmem:[#allocation7 + $0x700] sm:$0xff]
        %v718 = vld [vmem:[#allocation7 + $0x708] sm:$0xff]
        %v719 = vld [vmem:[#allocation7 + $0x710] sm:$0xff]
        %v720 = vld [vmem:[#allocation7 + $0x718] sm:$0xff]
        %v721 = vld [vmem:[#allocation7 + $0x720] sm:$0xff]
        %v722 = vld [vmem:[#allocation7 + $0x728] sm:$0xff]
        %v723 = vld [vmem:[#allocation7 + $0x730] sm:$0xff]
        %v724 = vld [vmem:[#allocation7 + $0x738] sm:$0xff]
        %v725 = vld [vmem:[#allocation7 + $0x740] sm:$0xff]
        %v726 = vld [vmem:[#allocation7 + $0x748] sm:$0xff]
        %v727 = vld [vmem:[#allocation7 + $0x750] sm:$0xff]
        %v728 = vld [vmem:[#allocation7 + $0x758] sm:$0xff]
        %v729 = vld [vmem:[#allocation7 + $0x760] sm:$0xff]
        %v730 = vld [vmem:[#allocation7 + $0x768] sm:$0xff]
        %v731 = vld [vmem:[#allocation7 + $0x770] sm:$0xff]
        %v732 = vld [vmem:[#allocation7 + $0x778] sm:$0xff]
        %v733 = vld [vmem:[#allocation7 + $0x780] sm:$0xff]
        %v734 = vld [vmem:[#allocation7 + $0x788] sm:$0xff]
        %v735 = vld [vmem:[#allocation7 + $0x790] sm:$0xff]
        %v736 = vld [vmem:[#allocation7 + $0x798] sm:$0xff]
        %v737 = vld [vmem:[#allocation7 + $0x7a0] sm:$0xff]
        %v738 = vld [vmem:[#allocation7 + $0x7a8] sm:$0xff]
        %v739 = vld [vmem:[#allocation7 + $0x7b0] sm:$0xff]
        %v740 = vld [vmem:[#allocation7 + $0x7b8] sm:$0xff]
        %v741 = vld [vmem:[#allocation7 + $0x7c0] sm:$0xff]
        %v742 = vld [vmem:[#allocation7 + $0x7c8] sm:$0xff]
        %v743 = vld [vmem:[#allocation7 + $0x7d0] sm:$0xff]
        %v744 = vld [vmem:[#allocation7 + $0x7d8] sm:$0xff]
        %v745 = vld [vmem:[#allocation7 + $0x7e0] sm:$0xff]
        %v746 = vld [vmem:[#allocation7 + $0x7e8] sm:$0xff]
        %v747 = vld [vmem:[#allocation7 + $0x7f0] sm:$0xff]
        %v748 = vld [vmem:[#allocation7 + $0x7f8] sm:$0xff]
        %v749 = vld [vmem:[#allocation8] sm:$0xff]
        %v750 = vld [vmem:[#allocation8 + $0x8] sm:$0xff]
        %v751 = vld [vmem:[#allocation8 + $0x10] sm:$0xff]
        %v752 = vld [vmem:[#allocation8 + $0x18] sm:$0xff]
        %v753 = vld [vmem:[#allocation8 + $0x20] sm:$0xff]
        %v754 = vld [vmem:[#allocation8 + $0x28] sm:$0xff]
        %v755 = vld [vmem:[#allocation8 + $0x30] sm:$0xff]
        %v756 = vld [vmem:[#allocation8 + $0x38] sm:$0xff]
        %v757 = vld [vmem:[#allocation8 + $0x40] sm:$0xff]
        %v758 = vld [vmem:[#allocation8 + $0x48] sm:$0xff]
        %v759 = vld [vmem:[#allocation8 + $0x50] sm:$0xff]
        %v760 = vld [vmem:[#allocation8 + $0x58] sm:$0xff]
        %v761 = vld [vmem:[#allocation8 + $0x60] sm:$0xff]
        %v762 = vld [vmem:[#allocation8 + $0x68] sm:$0xff]
        %v763 = vld [vmem:[#allocation8 + $0x70] sm:$0xff]
        %v764 = vld [vmem:[#allocation8 + $0x78] sm:$0xff]
        %v765 = vld [vmem:[#allocation8 + $0x80] sm:$0xff]
        %v766 = vld [vmem:[#allocation8 + $0x88] sm:$0xff]
        %v767 = vld [vmem:[#allocation8 + $0x90] sm:$0xff]
        %v768 = vld [vmem:[#allocation8 + $0x98] sm:$0xff]
        %v769 = vld [vmem:[#allocation8 + $0xa0] sm:$0xff]
        %v770 = vld [vmem:[#allocation8 + $0xa8] sm:$0xff]
        %v771 = vld [vmem:[#allocation8 + $0xb0] sm:$0xff]
        %v772 = vld [vmem:[#allocation8 + $0xb8] sm:$0xff]
        %v773 = vld [vmem:[#allocation8 + $0xc0] sm:$0xff]
        %v774 = vld [vmem:[#allocation8 + $0xc8] sm:$0xff]
        %v775 = vld [vmem:[#allocation8 + $0xd0] sm:$0xff]
        %v776 = vld [vmem:[#allocation8 + $0xd8] sm:$0xff]
        %v777 = vld [vmem:[#allocation8 + $0xe0] sm:$0xff]
        %v778 = vld [vmem:[#allocation8 + $0xe8] sm:$0xff]
        %v779 = vld [vmem:[#allocation8 + $0xf0] sm:$0xff]
        %v780 = vld [vmem:[#allocation8 + $0xf8] sm:$0xff]
        %v781 = vld [vmem:[#allocation8 + $0x100] sm:$0xff]
        %v782 = vld [vmem:[#allocation8 + $0x108] sm:$0xff]
        %v783 = vld [vmem:[#allocation8 + $0x110] sm:$0xff]
        %v784 = vld [vmem:[#allocation8 + $0x118] sm:$0xff]
        %v785 = vld [vmem:[#allocation8 + $0x120] sm:$0xff]
        %v786 = vld [vmem:[#allocation8 + $0x128] sm:$0xff]
        %v787 = vld [vmem:[#allocation8 + $0x130] sm:$0xff]
        %v788 = vld [vmem:[#allocation8 + $0x138] sm:$0xff]
        %v789 = vld [vmem:[#allocation8 + $0x140] sm:$0xff]
        %v790 = vld [vmem:[#allocation8 + $0x148] sm:$0xff]
        %v791 = vld [vmem:[#allocation8 + $0x150] sm:$0xff]
        %v792 = vld [vmem:[#allocation8 + $0x158] sm:$0xff]
        %v793 = vld [vmem:[#allocation8 + $0x160] sm:$0xff]
        %v794 = vld [vmem:[#allocation8 + $0x168] sm:$0xff]
        %v795 = vld [vmem:[#allocation8 + $0x170] sm:$0xff]
        %v796 = vld [vmem:[#allocation8 + $0x178] sm:$0xff]
        %v797 = vld [vmem:[#allocation8 + $0x180] sm:$0xff]
        %v798 = vld [vmem:[#allocation8 + $0x188] sm:$0xff]
        %v799 = vld [vmem:[#allocation8 + $0x190] sm:$0xff]
        %v800 = vld [vmem:[#allocation8 + $0x198] sm:$0xff]
        %v801 = vld [vmem:[#allocation8 + $0x1a0] sm:$0xff]
        %v802 = vld [vmem:[#allocation8 + $0x1a8] sm:$0xff]
        %v803 = vld [vmem:[#allocation8 + $0x1b0] sm:$0xff]
        %v804 = vld [vmem:[#allocation8 + $0x1b8] sm:$0xff]
        %v805 = vld [vmem:[#allocation8 + $0x1c0] sm:$0xff]
        %v806 = vld [vmem:[#allocation8 + $0x1c8] sm:$0xff]
        %v807 = vld [vmem:[#allocation8 + $0x1d0] sm:$0xff]
        %v808 = vld [vmem:[#allocation8 + $0x1d8] sm:$0xff]
        %v809 = vld [vmem:[#allocation8 + $0x1e0] sm:$0xff]
        %v810 = vld [vmem:[#allocation8 + $0x1e8] sm:$0xff]
        %v811 = vld [vmem:[#allocation8 + $0x1f0] sm:$0xff]
        %v812 = vld [vmem:[#allocation8 + $0x1f8] sm:$0xff]
        %v813 = vld [vmem:[#allocation8 + $0x200] sm:$0xff]
        %v814 = vld [vmem:[#allocation8 + $0x208] sm:$0xff]
        %v815 = vld [vmem:[#allocation8 + $0x210] sm:$0xff]
        %v816 = vld [vmem:[#allocation8 + $0x218] sm:$0xff]
        %v817 = vld [vmem:[#allocation8 + $0x220] sm:$0xff]
        %v818 = vld [vmem:[#allocation8 + $0x228] sm:$0xff]
        %v819 = vld [vmem:[#allocation8 + $0x230] sm:$0xff]
        %v820 = vld [vmem:[#allocation8 + $0x238] sm:$0xff]
        %v821 = vld [vmem:[#allocation8 + $0x240] sm:$0xff]
        %v822 = vld [vmem:[#allocation8 + $0x248] sm:$0xff]
        %v823 = vld [vmem:[#allocation8 + $0x250] sm:$0xff]
        %v824 = vld [vmem:[#allocation8 + $0x258] sm:$0xff]
        %v825 = vld [vmem:[#allocation8 + $0x260] sm:$0xff]
        %v826 = vld [vmem:[#allocation8 + $0x268] sm:$0xff]
        %v827 = vld [vmem:[#allocation8 + $0x270] sm:$0xff]
        %v828 = vld [vmem:[#allocation8 + $0x278] sm:$0xff]
        %v829 = vld [vmem:[#allocation8 + $0x280] sm:$0xff]
        %v830 = vld [vmem:[#allocation8 + $0x288] sm:$0xff]
        %v831 = vld [vmem:[#allocation8 + $0x290] sm:$0xff]
        %v832 = vld [vmem:[#allocation8 + $0x298] sm:$0xff]
        %v833 = vld [vmem:[#allocation8 + $0x2a0] sm:$0xff]
        %v834 = vld [vmem:[#allocation8 + $0x2a8] sm:$0xff]
        %v835 = vld [vmem:[#allocation8 + $0x2b0] sm:$0xff]
        %v836 = vld [vmem:[#allocation8 + $0x2b8] sm:$0xff]
        %v837 = vld [vmem:[#allocation8 + $0x2c0] sm:$0xff]
        %v838 = vld [vmem:[#allocation8 + $0x2c8] sm:$0xff]
        %v839 = vld [vmem:[#allocation8 + $0x2d0] sm:$0xff]
        %v840 = vld [vmem:[#allocation8 + $0x2d8] sm:$0xff]
        %v841 = vld [vmem:[#allocation8 + $0x2e0] sm:$0xff]
        %v842 = vld [vmem:[#allocation8 + $0x2e8] sm:$0xff]
        %v843 = vld [vmem:[#allocation8 + $0x2f0] sm:$0xff]
        %v844 = vld [vmem:[#allocation8 + $0x2f8] sm:$0xff]
        %v845 = vld [vmem:[#allocation8 + $0x300] sm:$0xff]
        %v846 = vld [vmem:[#allocation8 + $0x308] sm:$0xff]
        %v847 = vld [vmem:[#allocation8 + $0x310] sm:$0xff]
        %v848 = vld [vmem:[#allocation8 + $0x318] sm:$0xff]
        %v849 = vld [vmem:[#allocation8 + $0x320] sm:$0xff]
        %v850 = vld [vmem:[#allocation8 + $0x328] sm:$0xff]
        %v851 = vld [vmem:[#allocation8 + $0x330] sm:$0xff]
        %v852 = vld [vmem:[#allocation8 + $0x338] sm:$0xff]
        %v853 = vld [vmem:[#allocation8 + $0x340] sm:$0xff]
        %v854 = vld [vmem:[#allocation8 + $0x348] sm:$0xff]
        %v855 = vld [vmem:[#allocation8 + $0x350] sm:$0xff]
        %v856 = vld [vmem:[#allocation8 + $0x358] sm:$0xff]
        %v857 = vld [vmem:[#allocation8 + $0x360] sm:$0xff]
        %v858 = vld [vmem:[#allocation8 + $0x368] sm:$0xff]
        %v859 = vld [vmem:[#allocation8 + $0x370] sm:$0xff]
        %v860 = vld [vmem:[#allocation8 + $0x378] sm:$0xff]
        %v861 = vld [vmem:[#allocation8 + $0x380] sm:$0xff]
        %v862 = vld [vmem:[#allocation8 + $0x388] sm:$0xff]
        %v863 = vld [vmem:[#allocation8 + $0x390] sm:$0xff]
        %v864 = vld [vmem:[#allocation8 + $0x398] sm:$0xff]
        %v865 = vld [vmem:[#allocation8 + $0x3a0] sm:$0xff]
        %v866 = vld [vmem:[#allocation8 + $0x3a8] sm:$0xff]
        %v867 = vld [vmem:[#allocation8 + $0x3b0] sm:$0xff]
        %v868 = vld [vmem:[#allocation8 + $0x3b8] sm:$0xff]
        %v869 = vld [vmem:[#allocation8 + $0x3c0] sm:$0xff]
        %v870 = vld [vmem:[#allocation8 + $0x3c8] sm:$0xff]
        %v871 = vld [vmem:[#allocation8 + $0x3d0] sm:$0xff]
        %v872 = vld [vmem:[#allocation8 + $0x3d8] sm:$0xff]
        %v873 = vld [vmem:[#allocation8 + $0x3e0] sm:$0xff]
        %v874 = vld [vmem:[#allocation8 + $0x3e8] sm:$0xff]
        %v875 = vld [vmem:[#allocation8 + $0x3f0] sm:$0xff]
        %v876 = vld [vmem:[#allocation8 + $0x3f8] sm:$0xff]
        %v877 = vld [vmem:[#allocation8 + $0x400] sm:$0xff]
        %v878 = vld [vmem:[#allocation8 + $0x408] sm:$0xff]
        %v879 = vld [vmem:[#allocation8 + $0x410] sm:$0xff]
        %v880 = vld [vmem:[#allocation8 + $0x418] sm:$0xff]
        %v881 = vld [vmem:[#allocation8 + $0x420] sm:$0xff]
        %v882 = vld [vmem:[#allocation8 + $0x428] sm:$0xff]
        %v883 = vld [vmem:[#allocation8 + $0x430] sm:$0xff]
        %v884 = vld [vmem:[#allocation8 + $0x438] sm:$0xff]
        %v885 = vld [vmem:[#allocation8 + $0x440] sm:$0xff]
        %v886 = vld [vmem:[#allocation8 + $0x448] sm:$0xff]
        %v887 = vld [vmem:[#allocation8 + $0x450] sm:$0xff]
        %v888 = vld [vmem:[#allocation8 + $0x458] sm:$0xff]
        %v889 = vld [vmem:[#allocation8 + $0x460] sm:$0xff]
        %v890 = vld [vmem:[#allocation8 + $0x468] sm:$0xff]
        %v891 = vld [vmem:[#allocation8 + $0x470] sm:$0xff]
        %v892 = vld [vmem:[#allocation8 + $0x478] sm:$0xff]
        %v893 = vld [vmem:[#allocation8 + $0x480] sm:$0xff]
        %v894 = vld [vmem:[#allocation8 + $0x488] sm:$0xff]
        %v895 = vld [vmem:[#allocation8 + $0x490] sm:$0xff]
        %v896 = vld [vmem:[#allocation8 + $0x498] sm:$0xff]
        %v897 = vld [vmem:[#allocation8 + $0x4a0] sm:$0xff]
        %v898 = vld [vmem:[#allocation8 + $0x4a8] sm:$0xff]
        %v899 = vld [vmem:[#allocation8 + $0x4b0] sm:$0xff]
        %v900 = vld [vmem:[#allocation8 + $0x4b8] sm:$0xff]
        %v901 = vld [vmem:[#allocation8 + $0x4c0] sm:$0xff]
        %v902 = vld [vmem:[#allocation8 + $0x4c8] sm:$0xff]
        %v903 = vld [vmem:[#allocation8 + $0x4d0] sm:$0xff]
        %v904 = vld [vmem:[#allocation8 + $0x4d8] sm:$0xff]
        %v905 = vld [vmem:[#allocation8 + $0x4e0] sm:$0xff]
        %v906 = vld [vmem:[#allocation8 + $0x4e8] sm:$0xff]
        %v907 = vld [vmem:[#allocation8 + $0x4f0] sm:$0xff]
        %v908 = vld [vmem:[#allocation8 + $0x4f8] sm:$0xff]
        %v909 = vld [vmem:[#allocation8 + $0x500] sm:$0xff]
        %v910 = vld [vmem:[#allocation8 + $0x508] sm:$0xff]
        %v911 = vld [vmem:[#allocation8 + $0x510] sm:$0xff]
        %v912 = vld [vmem:[#allocation8 + $0x518] sm:$0xff]
        %v913 = vld [vmem:[#allocation8 + $0x520] sm:$0xff]
        %v914 = vld [vmem:[#allocation8 + $0x528] sm:$0xff]
        %v915 = vld [vmem:[#allocation8 + $0x530] sm:$0xff]
        %v916 = vld [vmem:[#allocation8 + $0x538] sm:$0xff]
        %v917 = vld [vmem:[#allocation8 + $0x540] sm:$0xff]
        %v918 = vld [vmem:[#allocation8 + $0x548] sm:$0xff]
        %v919 = vld [vmem:[#allocation8 + $0x550] sm:$0xff]
        %v920 = vld [vmem:[#allocation8 + $0x558] sm:$0xff]
        %v921 = vld [vmem:[#allocation8 + $0x560] sm:$0xff]
        %v922 = vld [vmem:[#allocation8 + $0x568] sm:$0xff]
        %v923 = vld [vmem:[#allocation8 + $0x570] sm:$0xff]
        %v924 = vld [vmem:[#allocation8 + $0x578] sm:$0xff]
        %v925 = vld [vmem:[#allocation8 + $0x580] sm:$0xff]
        %v926 = vld [vmem:[#allocation8 + $0x588] sm:$0xff]
        %v927 = vld [vmem:[#allocation8 + $0x590] sm:$0xff]
        %v928 = vld [vmem:[#allocation8 + $0x598] sm:$0xff]
        %v929 = vld [vmem:[#allocation8 + $0x5a0] sm:$0xff]
        %v930 = vld [vmem:[#allocation8 + $0x5a8] sm:$0xff]
        %v931 = vld [vmem:[#allocation8 + $0x5b0] sm:$0xff]
        %v932 = vld [vmem:[#allocation8 + $0x5b8] sm:$0xff]
        %v933 = vld [vmem:[#allocation8 + $0x5c0] sm:$0xff]
        %v934 = vld [vmem:[#allocation8 + $0x5c8] sm:$0xff]
        %v935 = vld [vmem:[#allocation8 + $0x5d0] sm:$0xff]
        %v936 = vld [vmem:[#allocation8 + $0x5d8] sm:$0xff]
        %v937 = vld [vmem:[#allocation8 + $0x5e0] sm:$0xff]
        %v938 = vld [vmem:[#allocation8 + $0x5e8] sm:$0xff]
        %v939 = vld [vmem:[#allocation8 + $0x5f0] sm:$0xff]
        %v940 = vld [vmem:[#allocation8 + $0x5f8] sm:$0xff]
        %v941 = vld [vmem:[#allocation8 + $0x600] sm:$0xff]
        %v942 = vld [vmem:[#allocation8 + $0x608] sm:$0xff]
        %v943 = vld [vmem:[#allocation8 + $0x610] sm:$0xff]
        %v944 = vld [vmem:[#allocation8 + $0x618] sm:$0xff]
        %v945 = vld [vmem:[#allocation8 + $0x620] sm:$0xff]
        %v946 = vld [vmem:[#allocation8 + $0x628] sm:$0xff]
        %v947 = vld [vmem:[#allocation8 + $0x630] sm:$0xff]
        %v948 = vld [vmem:[#allocation8 + $0x638] sm:$0xff]
        %v949 = vld [vmem:[#allocation8 + $0x640] sm:$0xff]
        %v950 = vld [vmem:[#allocation8 + $0x648] sm:$0xff]
        %v951 = vld [vmem:[#allocation8 + $0x650] sm:$0xff]
        %v952 = vld [vmem:[#allocation8 + $0x658] sm:$0xff]
        %v953 = vld [vmem:[#allocation8 + $0x660] sm:$0xff]
        %v954 = vld [vmem:[#allocation8 + $0x668] sm:$0xff]
        %v955 = vld [vmem:[#allocation8 + $0x670] sm:$0xff]
        %v956 = vld [vmem:[#allocation8 + $0x678] sm:$0xff]
        %v957 = vld [vmem:[#allocation8 + $0x680] sm:$0xff]
        %v958 = vld [vmem:[#allocation8 + $0x688] sm:$0xff]
        %v959 = vld [vmem:[#allocation8 + $0x690] sm:$0xff]
        %v960 = vld [vmem:[#allocation8 + $0x698] sm:$0xff]
        %v961 = vld [vmem:[#allocation8 + $0x6a0] sm:$0xff]
        %v962 = vld [vmem:[#allocation8 + $0x6a8] sm:$0xff]
        %v963 = vld [vmem:[#allocation8 + $0x6b0] sm:$0xff]
        %v964 = vld [vmem:[#allocation8 + $0x6b8] sm:$0xff]
        %v965 = vld [vmem:[#allocation8 + $0x6c0] sm:$0xff]
        %v966 = vld [vmem:[#allocation8 + $0x6c8] sm:$0xff]
        %v967 = vld [vmem:[#allocation8 + $0x6d0] sm:$0xff]
        %v968 = vld [vmem:[#allocation8 + $0x6d8] sm:$0xff]
        %v969 = vld [vmem:[#allocation8 + $0x6e0] sm:$0xff]
        %v970 = vld [vmem:[#allocation8 + $0x6e8] sm:$0xff]
        %v971 = vld [vmem:[#allocation8 + $0x6f0] sm:$0xff]
        %v972 = vld [vmem:[#allocation8 + $0x6f8] sm:$0xff]
        %v973 = vld [vmem:[#allocation8 + $0x700] sm:$0xff]
        %v974 = vld [vmem:[#allocation8 + $0x708] sm:$0xff]
        %v975 = vld [vmem:[#allocation8 + $0x710] sm:$0xff]
        %v976 = vld [vmem:[#allocation8 + $0x718] sm:$0xff]
        %v977 = vld [vmem:[#allocation8 + $0x720] sm:$0xff]
        %v978 = vld [vmem:[#allocation8 + $0x728] sm:$0xff]
        %v979 = vld [vmem:[#allocation8 + $0x730] sm:$0xff]
        %v980 = vld [vmem:[#allocation8 + $0x738] sm:$0xff]
        %v981 = vld [vmem:[#allocation8 + $0x740] sm:$0xff]
        %v982 = vld [vmem:[#allocation8 + $0x748] sm:$0xff]
        %v983 = vld [vmem:[#allocation8 + $0x750] sm:$0xff]
        %v984 = vld [vmem:[#allocation8 + $0x758] sm:$0xff]
        %v985 = vld [vmem:[#allocation8 + $0x760] sm:$0xff]
        %v986 = vld [vmem:[#allocation8 + $0x768] sm:$0xff]
        %v987 = vld [vmem:[#allocation8 + $0x770] sm:$0xff]
        %v988 = vld [vmem:[#allocation8 + $0x778] sm:$0xff]
        %v989 = vld [vmem:[#allocation8 + $0x780] sm:$0xff]
        %v990 = vld [vmem:[#allocation8 + $0x788] sm:$0xff]
        %v991 = vld [vmem:[#allocation8 + $0x790] sm:$0xff]
        %v992 = vld [vmem:[#allocation8 + $0x798] sm:$0xff]
        %v993 = vld [vmem:[#allocation8 + $0x7a0] sm:$0xff]
        %v994 = vld [vmem:[#allocation8 + $0x7a8] sm:$0xff]
        %v995 = vld [vmem:[#allocation8 + $0x7b0] sm:$0xff]
        %v996 = vld [vmem:[#allocation8 + $0x7b8] sm:$0xff]
        %v997 = vld [vmem:[#allocation8 + $0x7c0] sm:$0xff]
        %v998 = vld [vmem:[#allocation8 + $0x7c8] sm:$0xff]
        %v999 = vld [vmem:[#allocation8 + $0x7d0] sm:$0xff]
        %v1000 = vld [vmem:[#allocation8 + $0x7d8] sm:$0xff]
        %v1001 = vld [vmem:[#allocation8 + $0x7e0] sm:$0xff]
        %v1002 = vld [vmem:[#allocation8 + $0x7e8] sm:$0xff]
        %v1003 = vld [vmem:[#allocation8 + $0x7f0] sm:$0xff]
        %v1004 = vld [vmem:[#allocation8 + $0x7f8] sm:$0xff]
        %v1005 = vld [vmem:[#allocation10] sm:$0xff]
        %v1006 = vld [vmem:[#allocation10 + $0x8] sm:$0xff]
        %v1007 = vld [vmem:[#allocation10 + $0x10] sm:$0xff]
        %v1008 = vld [vmem:[#allocation10 + $0x18] sm:$0xff]
        %v1009 = vld [vmem:[#allocation10 + $0x20] sm:$0xff]
        %v1010 = vld [vmem:[#allocation10 + $0x28] sm:$0xff]
        %v1011 = vld [vmem:[#allocation10 + $0x30] sm:$0xff]
        %v1012 = vld [vmem:[#allocation10 + $0x38] sm:$0xff]
        %v1013 = vld [vmem:[#allocation10 + $0x40] sm:$0xff]
        %v1014 = vld [vmem:[#allocation10 + $0x48] sm:$0xff]
        %v1015 = vld [vmem:[#allocation10 + $0x50] sm:$0xff]
        %v1016 = vld [vmem:[#allocation10 + $0x58] sm:$0xff]
        %v1017 = vld [vmem:[#allocation10 + $0x60] sm:$0xff]
        %v1018 = vld [vmem:[#allocation10 + $0x68] sm:$0xff]
        %v1019 = vld [vmem:[#allocation10 + $0x70] sm:$0xff]
        %v1020 = vld [vmem:[#allocation10 + $0x78] sm:$0xff]
        %v1021 = vld [vmem:[#allocation10 + $0x80] sm:$0xff]
        %v1022 = vld [vmem:[#allocation10 + $0x88] sm:$0xff]
        %v1023 = vld [vmem:[#allocation10 + $0x90] sm:$0xff]
        %v1024 = vld [vmem:[#allocation10 + $0x98] sm:$0xff]
        %v1025 = vld [vmem:[#allocation10 + $0xa0] sm:$0xff]
        %v1026 = vld [vmem:[#allocation10 + $0xa8] sm:$0xff]
        %v1027 = vld [vmem:[#allocation10 + $0xb0] sm:$0xff]
        %v1028 = vld [vmem:[#allocation10 + $0xb8] sm:$0xff]
        %v1029 = vld [vmem:[#allocation10 + $0xc0] sm:$0xff]
        %v1030 = vld [vmem:[#allocation10 + $0xc8] sm:$0xff]
        %v1031 = vld [vmem:[#allocation10 + $0xd0] sm:$0xff]
        %v1032 = vld [vmem:[#allocation10 + $0xd8] sm:$0xff]
        %v1033 = vld [vmem:[#allocation10 + $0xe0] sm:$0xff]
        %v1034 = vld [vmem:[#allocation10 + $0xe8] sm:$0xff]
        %v1035 = vld [vmem:[#allocation10 + $0xf0] sm:$0xff]
        %v1036 = vld [vmem:[#allocation10 + $0xf8] sm:$0xff]
        %v1037 = vld [vmem:[#allocation10 + $0x100] sm:$0xff]
        %v1038 = vld [vmem:[#allocation10 + $0x108] sm:$0xff]
        %v1039 = vld [vmem:[#allocation10 + $0x110] sm:$0xff]
        %v1040 = vld [vmem:[#allocation10 + $0x118] sm:$0xff]
        %v1041 = vld [vmem:[#allocation10 + $0x120] sm:$0xff]
        %v1042 = vld [vmem:[#allocation10 + $0x128] sm:$0xff]
        %v1043 = vld [vmem:[#allocation10 + $0x130] sm:$0xff]
        %v1044 = vld [vmem:[#allocation10 + $0x138] sm:$0xff]
        %v1045 = vld [vmem:[#allocation10 + $0x140] sm:$0xff]
        %v1046 = vld [vmem:[#allocation10 + $0x148] sm:$0xff]
        %v1047 = vld [vmem:[#allocation10 + $0x150] sm:$0xff]
        %v1048 = vld [vmem:[#allocation10 + $0x158] sm:$0xff]
        %v1049 = vld [vmem:[#allocation10 + $0x160] sm:$0xff]
        %v1050 = vld [vmem:[#allocation10 + $0x168] sm:$0xff]
        %v1051 = vld [vmem:[#allocation10 + $0x170] sm:$0xff]
        %v1052 = vld [vmem:[#allocation10 + $0x178] sm:$0xff]
        %v1053 = vld [vmem:[#allocation10 + $0x180] sm:$0xff]
        %v1054 = vld [vmem:[#allocation10 + $0x188] sm:$0xff]
        %v1055 = vld [vmem:[#allocation10 + $0x190] sm:$0xff]
        %v1056 = vld [vmem:[#allocation10 + $0x198] sm:$0xff]
        %v1057 = vld [vmem:[#allocation10 + $0x1a0] sm:$0xff]
        %v1058 = vld [vmem:[#allocation10 + $0x1a8] sm:$0xff]
        %v1059 = vld [vmem:[#allocation10 + $0x1b0] sm:$0xff]
        %v1060 = vld [vmem:[#allocation10 + $0x1b8] sm:$0xff]
        %v1061 = vld [vmem:[#allocation10 + $0x1c0] sm:$0xff]
        %v1062 = vld [vmem:[#allocation10 + $0x1c8] sm:$0xff]
        %v1063 = vld [vmem:[#allocation10 + $0x1d0] sm:$0xff]
        %v1064 = vld [vmem:[#allocation10 + $0x1d8] sm:$0xff]
        %v1065 = vld [vmem:[#allocation10 + $0x1e0] sm:$0xff]
        %v1066 = vld [vmem:[#allocation10 + $0x1e8] sm:$0xff]
        %v1067 = vld [vmem:[#allocation10 + $0x1f0] sm:$0xff]
        %v1068 = vld [vmem:[#allocation10 + $0x1f8] sm:$0xff]
        %v1069 = vld [vmem:[%s2] sm:$0xf]
        %v1070 = vld [vmem:[%s4] sm:$0xff]
        %v1071 = vld [vmem:[%s6] sm:$0xf]
        %v1072 = vld [vmem:[%s8] sm:$0x3]
        %v1073 = vld [vmem:[%s366] sm:$0xff]
        %v1074 = vld [vmem:[%s366 + $0x8] sm:$0xff]
        %v1075 = vld [vmem:[%s366 + $0x10] sm:$0xff]
        %v1076 = vld [vmem:[%s366 + $0x18] sm:$0xff]
        %v1077 = vld [vmem:[%s366 + $0x20] sm:$0xff]
        %v1078 = vld [vmem:[%s366 + $0x28] sm:$0xff]
        %v1079 = vld [vmem:[%s366 + $0x30] sm:$0xff]
        %v1080 = vld [vmem:[%s366 + $0x38] sm:$0xff]
        %v1081 = vld [vmem:[%s366 + $0x40] sm:$0xff]
        %v1082 = vld [vmem:[%s366 + $0x48] sm:$0xff]
        %v1083 = vld [vmem:[%s366 + $0x50] sm:$0xff]
        %v1084 = vld [vmem:[%s366 + $0x58] sm:$0xff]
        %v1085 = vld [vmem:[%s366 + $0x60] sm:$0xff]
        %v1086 = vld [vmem:[%s366 + $0x68] sm:$0xff]
        %v1087 = vld [vmem:[%s366 + $0x70] sm:$0xff]
        %v1088 = vld [vmem:[%s366 + $0x78] sm:$0xff]
        %v1089 = vld [vmem:[%s366 + $0x80] sm:$0xff]
        %v1090 = vld [vmem:[%s366 + $0x88] sm:$0xff]
        %v1091 = vld [vmem:[%s366 + $0x90] sm:$0xff]
        %v1092 = vld [vmem:[%s366 + $0x98] sm:$0xff]
        %v1093 = vld [vmem:[%s366 + $0xa0] sm:$0xff]
        %v1094 = vld [vmem:[%s366 + $0xa8] sm:$0xff]
        %v1095 = vld [vmem:[%s366 + $0xb0] sm:$0xff]
        %v1096 = vld [vmem:[%s366 + $0xb8] sm:$0xff]
        %v1097 = vld [vmem:[%s366 + $0xc0] sm:$0xff]
        %v1098 = vld [vmem:[%s366 + $0xc8] sm:$0xff]
        %v1099 = vld [vmem:[%s366 + $0xd0] sm:$0xff]
        %v1100 = vld [vmem:[%s366 + $0xd8] sm:$0xff]
        %v1101 = vld [vmem:[%s366 + $0xe0] sm:$0xff]
        %v1102 = vld [vmem:[%s366 + $0xe8] sm:$0xff]
        %v1103 = vld [vmem:[%s366 + $0xf0] sm:$0xff]
        %v1104 = vld [vmem:[%s366 + $0xf8] sm:$0xff]
        %v1105 = vld [vmem:[%s366 + $0x100] sm:$0xff]
        %v1106 = vld [vmem:[%s366 + $0x108] sm:$0xff]
        %v1107 = vld [vmem:[%s366 + $0x110] sm:$0xff]
        %v1108 = vld [vmem:[%s366 + $0x118] sm:$0xff]
        %v1109 = vld [vmem:[%s366 + $0x120] sm:$0xff]
        %v1110 = vld [vmem:[%s366 + $0x128] sm:$0xff]
        %v1111 = vld [vmem:[%s366 + $0x130] sm:$0xff]
        %v1112 = vld [vmem:[%s366 + $0x138] sm:$0xff]
        %v1113 = vlaneseq
        %v1114 = vshrl.u32 %v1113, 7
        %v1115 = vadd.s32 %v1114, 8
        %v1116 = vadd.s32 %v1114, 16
        %v1117 = vadd.s32 %v1114, 24
        %v1118 = vadd.s32 %v1114, 32
        %v1119 = vadd.s32 %v1114, 40
        %v1120 = vadd.s32 %v1114, 48
        %v1121 = vadd.s32 %v1114, 56
        %v1122 = vadd.s32 %v1114, 64
        %v1123 = vadd.s32 %v1114, 72
        %v1124 = vadd.s32 %v1114, 80
        %v1125 = vadd.s32 %v1114, 88
        %v1126 = vadd.s32 %v1114, 96
        %v1127 = vadd.s32 %v1114, 104
        %v1128 = vadd.s32 %v1114, 112
        %v1129 = vadd.s32 %v1114, 120
        %v1130 = vadd.s32 %v1114, 128
        %v1131 = vadd.s32 %v1114, 136
        %v1132 = vadd.s32 %v1114, 144
        %v1133 = vadd.s32 %v1114, 152
        %s1134 = smul.u32 %s28, 160
        %v1135 = vstv %s1134
        %v1136 = vadd.s32 %v1114, %v1135
        %v1137 = vadd.s32 %v1115, %v1135
        %v1138 = vadd.s32 %v1116, %v1135
        %v1139 = vadd.s32 %v1117, %v1135
        %v1140 = vadd.s32 %v1118, %v1135
        %v1141 = vadd.s32 %v1119, %v1135
        %v1142 = vadd.s32 %v1120, %v1135
        %v1143 = vadd.s32 %v1121, %v1135
        %v1144 = vadd.s32 %v1122, %v1135
        %v1145 = vadd.s32 %v1123, %v1135
        %v1146 = vadd.s32 %v1124, %v1135
        %v1147 = vadd.s32 %v1125, %v1135
        %v1148 = vadd.s32 %v1126, %v1135
        %v1149 = vadd.s32 %v1127, %v1135
        %v1150 = vadd.s32 %v1128, %v1135
        %v1151 = vadd.s32 %v1129, %v1135
        %v1152 = vadd.s32 %v1130, %v1135
        %v1153 = vadd.s32 %v1131, %v1135
        %v1154 = vadd.s32 %v1132, %v1135
        %v1155 = vadd.s32 %v1133, %v1135
        %vm1156 = vcmp.lt.s32.totalorder %v1136, 300
        %vm1157 = vcmp.lt.s32.totalorder %v1137, 300
        %vm1158 = vcmp.lt.s32.totalorder %v1138, 300
        %vm1159 = vcmp.lt.s32.totalorder %v1139, 300
        %vm1160 = vcmp.lt.s32.totalorder %v1140, 300
        %vm1161 = vcmp.lt.s32.totalorder %v1141, 300
        %vm1162 = vcmp.lt.s32.totalorder %v1142, 300
        %vm1163 = vcmp.lt.s32.totalorder %v1143, 300
        %vm1164 = vcmp.lt.s32.totalorder %v1144, 300
        %vm1165 = vcmp.lt.s32.totalorder %v1145, 300
        %vm1166 = vcmp.lt.s32.totalorder %v1146, 300
        %vm1167 = vcmp.lt.s32.totalorder %v1147, 300
        %vm1168 = vcmp.lt.s32.totalorder %v1148, 300
        %vm1169 = vcmp.lt.s32.totalorder %v1149, 300
        %vm1170 = vcmp.lt.s32.totalorder %v1150, 300
        %vm1171 = vcmp.lt.s32.totalorder %v1151, 300
        %vm1172 = vcmp.lt.s32.totalorder %v1152, 300
        %vm1173 = vcmp.lt.s32.totalorder %v1153, 300
        %vm1174 = vcmp.lt.s32.totalorder %v1154, 300
        %vm1175 = vcmp.lt.s32.totalorder %v1155, 300
        %v1176 = vsel %vm1156, 1, 0
        %v1177 = vsel %vm1157, 1, 0
        %v1178 = vsel %vm1158, 1, 0
        %v1179 = vsel %vm1159, 1, 0
        %v1180 = vsel %vm1160, 1, 0
        %v1181 = vsel %vm1161, 1, 0
        %v1182 = vsel %vm1162, 1, 0
        %v1183 = vsel %vm1163, 1, 0
        %v1184 = vsel %vm1164, 1, 0
        %v1185 = vsel %vm1165, 1, 0
        %v1186 = vsel %vm1166, 1, 0
        %v1187 = vsel %vm1167, 1, 0
        %v1188 = vsel %vm1168, 1, 0
        %v1189 = vsel %vm1169, 1, 0
        %v1190 = vsel %vm1170, 1, 0
        %v1191 = vsel %vm1171, 1, 0
        %v1192 = vsel %vm1172, 1, 0
        %v1193 = vsel %vm1173, 1, 0
        %v1194 = vsel %vm1174, 1, 0
        %v1195 = vsel %vm1175, 1, 0
        %vm1196 = vcmp.eq.s32.totalorder %v1176, 1
        %vm1197 = vcmp.eq.s32.totalorder %v1177, 1
        %vm1198 = vcmp.eq.s32.totalorder %v1178, 1
        %vm1199 = vcmp.eq.s32.totalorder %v1179, 1
        %vm1200 = vcmp.eq.s32.totalorder %v1180, 1
        %vm1201 = vcmp.eq.s32.totalorder %v1181, 1
        %vm1202 = vcmp.eq.s32.totalorder %v1182, 1
        %vm1203 = vcmp.eq.s32.totalorder %v1183, 1
        %vm1204 = vcmp.eq.s32.totalorder %v1184, 1
        %vm1205 = vcmp.eq.s32.totalorder %v1185, 1
        %vm1206 = vcmp.eq.s32.totalorder %v1186, 1
        %vm1207 = vcmp.eq.s32.totalorder %v1187, 1
        %vm1208 = vcmp.eq.s32.totalorder %v1188, 1
        %vm1209 = vcmp.eq.s32.totalorder %v1189, 1
        %vm1210 = vcmp.eq.s32.totalorder %v1190, 1
        %vm1211 = vcmp.eq.s32.totalorder %v1191, 1
        %vm1212 = vcmp.eq.s32.totalorder %v1192, 1
        %vm1213 = vcmp.eq.s32.totalorder %v1193, 1
        %vm1214 = vcmp.eq.s32.totalorder %v1194, 1
        %vm1215 = vcmp.eq.s32.totalorder %v1195, 1
        %v1216 = vsel %vm1196, %v1073, 0.0
        %v1217 = vsel %vm1196, %v1074, 0.0
        %v1218 = vsel %vm1197, %v1075, 0.0
        %v1219 = vsel %vm1197, %v1076, 0.0
        %v1220 = vsel %vm1198, %v1077, 0.0
        %v1221 = vsel %vm1198, %v1078, 0.0
        %v1222 = vsel %vm1199, %v1079, 0.0
        %v1223 = vsel %vm1199, %v1080, 0.0
        %v1224 = vsel %vm1200, %v1081, 0.0
        %v1225 = vsel %vm1200, %v1082, 0.0
        %v1226 = vsel %vm1201, %v1083, 0.0
        %v1227 = vsel %vm1201, %v1084, 0.0
        %v1228 = vsel %vm1202, %v1085, 0.0
        %v1229 = vsel %vm1202, %v1086, 0.0
        %v1230 = vsel %vm1203, %v1087, 0.0
        %v1231 = vsel %vm1203, %v1088, 0.0
        %v1232 = vsel %vm1204, %v1089, 0.0
        %v1233 = vsel %vm1204, %v1090, 0.0
        %v1234 = vsel %vm1205, %v1091, 0.0
        %v1235 = vsel %vm1205, %v1092, 0.0
        %v1236 = vsel %vm1206, %v1093, 0.0
        %v1237 = vsel %vm1206, %v1094, 0.0
        %v1238 = vsel %vm1207, %v1095, 0.0
        %v1239 = vsel %vm1207, %v1096, 0.0
        %v1240 = vsel %vm1208, %v1097, 0.0
        %v1241 = vsel %vm1208, %v1098, 0.0
        %v1242 = vsel %vm1209, %v1099, 0.0
        %v1243 = vsel %vm1209, %v1100, 0.0
        %v1244 = vsel %vm1210, %v1101, 0.0
        %v1245 = vsel %vm1210, %v1102, 0.0
        %v1246 = vsel %vm1211, %v1103, 0.0
        %v1247 = vsel %vm1211, %v1104, 0.0
        %v1248 = vsel %vm1212, %v1105, 0.0
        %v1249 = vsel %vm1212, %v1106, 0.0
        %v1250 = vsel %vm1213, %v1107, 0.0
        %v1251 = vsel %vm1213, %v1108, 0.0
        %v1252 = vsel %vm1214, %v1109, 0.0
        %v1253 = vsel %vm1214, %v1110, 0.0
        %v1254 = vsel %vm1215, %v1111, 0.0
        %v1255 = vsel %vm1215, %v1112, 0.0
        %v1256 = vpack.c.bf16 %v1218, %v1216
        %v1257 = vpack.c.bf16 %v1219, %v1217
        %v1258 = vpack.c.bf16 %v1222, %v1220
        %v1259 = vpack.c.bf16 %v1223, %v1221
        %v1260 = vpack.c.bf16 %v1226, %v1224
        %v1261 = vpack.c.bf16 %v1227, %v1225
        %v1262 = vpack.c.bf16 %v1230, %v1228
        %v1263 = vpack.c.bf16 %v1231, %v1229
        %v1264 = vpack.c.bf16 %v1234, %v1232
        %v1265 = vpack.c.bf16 %v1235, %v1233
        %v1266 = vpack.c.bf16 %v1238, %v1236
        %v1267 = vpack.c.bf16 %v1239, %v1237
        %v1268 = vpack.c.bf16 %v1242, %v1240
        %v1269 = vpack.c.bf16 %v1243, %v1241
        %v1270 = vpack.c.bf16 %v1246, %v1244
        %v1271 = vpack.c.bf16 %v1247, %v1245
        %v1272 = vpack.c.bf16 %v1250, %v1248
        %v1273 = vpack.c.bf16 %v1251, %v1249
        %v1274 = vpack.c.bf16 %v1254, %v1252
        %v1275 = vpack.c.bf16 %v1255, %v1253
        %v1277 = vlaneseq
        %v1278 = vshrl.u32 %v1277, 7
        %v1279 = vsub.s32 0, %v1278
        %v1280 = vrot.slane %v1069, %v1279
        %v1281 = vlaneseq
        %v1282 = vshrl.u32 %v1281, 7
        %v1283 = vsub.s32 1, %v1282
        %v1284 = vrot.slane %v1069, %v1283
        %v1285 = vlaneseq
        %v1286 = vshrl.u32 %v1285, 7
        %v1287 = vsub.s32 2, %v1286
        %v1288 = vrot.slane %v1069, %v1287
        %v1289 = vlaneseq
        %v1290 = vshrl.u32 %v1289, 7
        %v1291 = vsub.s32 3, %v1290
        %v1292 = vrot.slane %v1069, %v1291
        %v1361 = vunpack.c.l.b16 %v429
        %v1362 = vunpack.c.h.b16 %v429
        %v1363 = vunpack.c.l.b16 %v430
        %v1364 = vunpack.c.h.b16 %v430
        %v1365 = vunpack.c.l.b16 %v431
        %v1366 = vunpack.c.h.b16 %v431
        %v1367 = vunpack.c.l.b16 %v432
        %v1368 = vunpack.c.h.b16 %v432
        %v1369 = vunpack.c.l.b16 %v433
        %v1370 = vunpack.c.h.b16 %v433
        %v1371 = vunpack.c.l.b16 %v434
        %v1372 = vunpack.c.h.b16 %v434
        %v1373 = vunpack.c.l.b16 %v435
        %v1374 = vunpack.c.h.b16 %v435
        %v1375 = vunpack.c.l.b16 %v436
        %v1376 = vunpack.c.h.b16 %v436
        %v1377 = vunpack.c.l.b16 %v437
        %v1378 = vunpack.c.h.b16 %v437
        %v1379 = vunpack.c.l.b16 %v438
        %v1380 = vunpack.c.h.b16 %v438
        %v1381 = vunpack.c.l.b16 %v439
        %v1382 = vunpack.c.h.b16 %v439
        %v1383 = vunpack.c.l.b16 %v440
        %v1384 = vunpack.c.h.b16 %v440
        %v1385 = vunpack.c.l.b16 %v441
        %v1386 = vunpack.c.h.b16 %v441
        %v1387 = vunpack.c.l.b16 %v442
        %v1388 = vunpack.c.h.b16 %v442
        %v1389 = vunpack.c.l.b16 %v443
        %v1390 = vunpack.c.h.b16 %v443
        %v1391 = vunpack.c.l.b16 %v444
        %v1392 = vunpack.c.h.b16 %v444
        %v1393 = vunpack.c.l.b16 %v445
        %v1394 = vunpack.c.h.b16 %v445
        %v1395 = vunpack.c.l.b16 %v446
        %v1396 = vunpack.c.h.b16 %v446
        %v1397 = vunpack.c.l.b16 %v447
        %v1398 = vunpack.c.h.b16 %v447
        %v1399 = vunpack.c.l.b16 %v448
        %v1400 = vunpack.c.h.b16 %v448
        %v1401 = vunpack.c.l.b16 %v449
        %v1402 = vunpack.c.h.b16 %v449
        %v1403 = vunpack.c.l.b16 %v450
        %v1404 = vunpack.c.h.b16 %v450
        %v1405 = vunpack.c.l.b16 %v451
        %v1406 = vunpack.c.h.b16 %v451
        %v1407 = vunpack.c.l.b16 %v452
        %v1408 = vunpack.c.h.b16 %v452
        %v1409 = vunpack.c.l.b16 %v453
        %v1410 = vunpack.c.h.b16 %v453
        %v1411 = vunpack.c.l.b16 %v454
        %v1412 = vunpack.c.h.b16 %v454
        %v1413 = vunpack.c.l.b16 %v455
        %v1414 = vunpack.c.h.b16 %v455
        %v1415 = vunpack.c.l.b16 %v456
        %v1416 = vunpack.c.h.b16 %v456
        %v1417 = vunpack.c.l.b16 %v457
        %v1418 = vunpack.c.h.b16 %v457
        %v1419 = vunpack.c.l.b16 %v458
        %v1420 = vunpack.c.h.b16 %v458
        %v1421 = vunpack.c.l.b16 %v459
        %v1422 = vunpack.c.h.b16 %v459
        %v1423 = vunpack.c.l.b16 %v460
        %v1424 = vunpack.c.h.b16 %v460
        %v1425 = vunpack.c.l.b16 %v461
        %v1426 = vunpack.c.h.b16 %v461
        %v1427 = vunpack.c.l.b16 %v462
        %v1428 = vunpack.c.h.b16 %v462
        %v1429 = vunpack.c.l.b16 %v463
        %v1430 = vunpack.c.h.b16 %v463
        %v1431 = vunpack.c.l.b16 %v464
        %v1432 = vunpack.c.h.b16 %v464
        %v1433 = vunpack.c.l.b16 %v465
        %v1434 = vunpack.c.h.b16 %v465
        %v1435 = vunpack.c.l.b16 %v466
        %v1436 = vunpack.c.h.b16 %v466
        %v1437 = vunpack.c.l.b16 %v467
        %v1438 = vunpack.c.h.b16 %v467
        %v1439 = vunpack.c.l.b16 %v468
        %v1440 = vunpack.c.h.b16 %v468
        %v1441 = vunpack.c.l.b16 %v469
        %v1442 = vunpack.c.h.b16 %v469
        %v1443 = vunpack.c.l.b16 %v470
        %v1444 = vunpack.c.h.b16 %v470
        %v1445 = vunpack.c.l.b16 %v471
        %v1446 = vunpack.c.h.b16 %v471
        %v1447 = vunpack.c.l.b16 %v472
        %v1448 = vunpack.c.h.b16 %v472
        %v1449 = vunpack.c.l.b16 %v473
        %v1450 = vunpack.c.h.b16 %v473
        %v1451 = vunpack.c.l.b16 %v474
        %v1452 = vunpack.c.h.b16 %v474
        %v1453 = vunpack.c.l.b16 %v475
        %v1454 = vunpack.c.h.b16 %v475
        %v1455 = vunpack.c.l.b16 %v476
        %v1456 = vunpack.c.h.b16 %v476
        %v1457 = vunpack.c.l.b16 %v477
        %v1458 = vunpack.c.h.b16 %v477
        %v1459 = vunpack.c.l.b16 %v478
        %v1460 = vunpack.c.h.b16 %v478
        %v1461 = vunpack.c.l.b16 %v479
        %v1462 = vunpack.c.h.b16 %v479
        %v1463 = vunpack.c.l.b16 %v480
        %v1464 = vunpack.c.h.b16 %v480
        %v1465 = vunpack.c.l.b16 %v481
        %v1466 = vunpack.c.h.b16 %v481
        %v1467 = vunpack.c.l.b16 %v482
        %v1468 = vunpack.c.h.b16 %v482
        %v1469 = vunpack.c.l.b16 %v483
        %v1470 = vunpack.c.h.b16 %v483
        %v1471 = vunpack.c.l.b16 %v484
        %v1472 = vunpack.c.h.b16 %v484
        %v1473 = vunpack.c.l.b16 %v485
        %v1474 = vunpack.c.h.b16 %v485
        %v1475 = vunpack.c.l.b16 %v486
        %v1476 = vunpack.c.h.b16 %v486
        %v1477 = vunpack.c.l.b16 %v487
        %v1478 = vunpack.c.h.b16 %v487
        %v1479 = vunpack.c.l.b16 %v488
        %v1480 = vunpack.c.h.b16 %v488
        %v1481 = vunpack.c.l.b16 %v489
        %v1482 = vunpack.c.h.b16 %v489
        %v1483 = vunpack.c.l.b16 %v490
        %v1484 = vunpack.c.h.b16 %v490
        %v1485 = vunpack.c.l.b16 %v491
        %v1486 = vunpack.c.h.b16 %v491
        %v1487 = vunpack.c.l.b16 %v492
        %v1488 = vunpack.c.h.b16 %v492
        %v1489 = vpack.c.b16 %v1365, %v1361
        %v1490 = vpack.c.b16 %v1366, %v1362
        %v1491 = vpack.c.b16 %v1367, %v1363
        %v1492 = vpack.c.b16 %v1368, %v1364
        %v1493 = vpack.c.b16 %v1373, %v1369
        %v1494 = vpack.c.b16 %v1374, %v1370
        %v1495 = vpack.c.b16 %v1375, %v1371
        %v1496 = vpack.c.b16 %v1376, %v1372
        %v1497 = vpack.c.b16 %v1381, %v1377
        %v1498 = vpack.c.b16 %v1382, %v1378
        %v1499 = vpack.c.b16 %v1383, %v1379
        %v1500 = vpack.c.b16 %v1384, %v1380
        %v1501 = vpack.c.b16 %v1389, %v1385
        %v1502 = vpack.c.b16 %v1390, %v1386
        %v1503 = vpack.c.b16 %v1391, %v1387
        %v1504 = vpack.c.b16 %v1392, %v1388
        %v1505 = vpack.c.b16 %v1397, %v1393
        %v1506 = vpack.c.b16 %v1398, %v1394
        %v1507 = vpack.c.b16 %v1399, %v1395
        %v1508 = vpack.c.b16 %v1400, %v1396
        %v1509 = vpack.c.b16 %v1405, %v1401
        %v1510 = vpack.c.b16 %v1406, %v1402
        %v1511 = vpack.c.b16 %v1407, %v1403
        %v1512 = vpack.c.b16 %v1408, %v1404
        %v1513 = vpack.c.b16 %v1413, %v1409
        %v1514 = vpack.c.b16 %v1414, %v1410
        %v1515 = vpack.c.b16 %v1415, %v1411
        %v1516 = vpack.c.b16 %v1416, %v1412
        %v1517 = vpack.c.b16 %v1421, %v1417
        %v1518 = vpack.c.b16 %v1422, %v1418
        %v1519 = vpack.c.b16 %v1423, %v1419
        %v1520 = vpack.c.b16 %v1424, %v1420
        %v1521 = vpack.c.b16 %v1429, %v1425
        %v1522 = vpack.c.b16 %v1430, %v1426
        %v1523 = vpack.c.b16 %v1431, %v1427
        %v1524 = vpack.c.b16 %v1432, %v1428
        %v1525 = vpack.c.b16 %v1437, %v1433
        %v1526 = vpack.c.b16 %v1438, %v1434
        %v1527 = vpack.c.b16 %v1439, %v1435
        %v1528 = vpack.c.b16 %v1440, %v1436
        %v1529 = vpack.c.b16 %v1445, %v1441
        %v1530 = vpack.c.b16 %v1446, %v1442
        %v1531 = vpack.c.b16 %v1447, %v1443
        %v1532 = vpack.c.b16 %v1448, %v1444
        %v1533 = vpack.c.b16 %v1453, %v1449
        %v1534 = vpack.c.b16 %v1454, %v1450
        %v1535 = vpack.c.b16 %v1455, %v1451
        %v1536 = vpack.c.b16 %v1456, %v1452
        %v1537 = vpack.c.b16 %v1461, %v1457
        %v1538 = vpack.c.b16 %v1462, %v1458
        %v1539 = vpack.c.b16 %v1463, %v1459
        %v1540 = vpack.c.b16 %v1464, %v1460
        %v1541 = vpack.c.b16 %v1469, %v1465
        %v1542 = vpack.c.b16 %v1470, %v1466
        %v1543 = vpack.c.b16 %v1471, %v1467
        %v1544 = vpack.c.b16 %v1472, %v1468
        %v1545 = vpack.c.b16 %v1477, %v1473
        %v1546 = vpack.c.b16 %v1478, %v1474
        %v1547 = vpack.c.b16 %v1479, %v1475
        %v1548 = vpack.c.b16 %v1480, %v1476
        %v1549 = vpack.c.b16 %v1485, %v1481
        %v1550 = vpack.c.b16 %v1486, %v1482
        %v1551 = vpack.c.b16 %v1487, %v1483
        %v1552 = vpack.c.b16 %v1488, %v1484
        %1617 = vmatprep.subr.bf16.mxu0 %v1490
        %1618 = vmatpush1.bf16.msra.mxu0 %v1489
        %1619 = vmatprep.subr.bf16.mxu0 %v1494
        %1620 = vmatpush1.bf16.msra.mxu0 %v1493
        %1621 = vmatprep.subr.bf16.mxu0 %v1498
        %1622 = vmatpush1.bf16.msra.mxu0 %v1497
        %1623 = vmatprep.subr.bf16.mxu0 %v1502
        %1624 = vmatpush1.bf16.msra.mxu0 %v1501
        %1625 = vmatprep.subr.bf16.mxu0 %v1506
        %1626 = vmatpush1.bf16.msra.mxu0 %v1505
        %1627 = vmatprep.subr.bf16.mxu0 %v1510
        %1628 = vmatpush1.bf16.msra.mxu0 %v1509
        %1629 = vmatprep.subr.bf16.mxu0 %v1514
        %1630 = vmatpush1.bf16.msra.mxu0 %v1513
        %1631 = vmatprep.subr.bf16.mxu0 %v1518
        %1632 = vmatpush1.bf16.msra.mxu0 %v1517
        %1633 = vmatprep.subr.bf16.mxu0 %v1522
        %1634 = vmatpush1.bf16.msra.mxu0 %v1521
        %1635 = vmatprep.subr.bf16.mxu0 %v1526
        %1636 = vmatpush1.bf16.msra.mxu0 %v1525
        %1637 = vmatprep.subr.bf16.mxu0 %v1530
        %1638 = vmatpush1.bf16.msra.mxu0 %v1529
        %1639 = vmatprep.subr.bf16.mxu0 %v1534
        %1640 = vmatpush1.bf16.msra.mxu0 %v1533
        %1641 = vmatprep.subr.bf16.mxu0 %v1538
        %1642 = vmatpush1.bf16.msra.mxu0 %v1537
        %1643 = vmatprep.subr.bf16.mxu0 %v1542
        %1644 = vmatpush1.bf16.msra.mxu0 %v1541
        %1645 = vmatprep.subr.bf16.mxu0 %v1546
        %1646 = vmatpush1.bf16.msra.mxu0 %v1545
        %1647 = vmatprep.subr.bf16.mxu0 %v1550
        %1648 = vmatpush1.bf16.msra.mxu0 %v1549
        %1649 = vmatprep.mubr.bf16.mxu0 %v1257
        %1650 = vmatmul.mubr.bf16.gmra.mrb[0].mxu0 %v1256
        %v1651 = vpop.f32.mrb[0].mxu0
        %v1652 = vadd.f32 %v1280, %v1651
        %v1653 = vpop.f32.mrb[0].mxu0
        %v1654 = vadd.f32 %v1284, %v1653
        %v1655 = vpop.f32.mrb[0].mxu0
        %v1656 = vadd.f32 %v1280, %v1655
        %v1657 = vpop.f32.mrb[0].mxu0
        %v1658 = vadd.f32 %v1284, %v1657
        %1659 = vmatprep.mubr.bf16.mxu0 %v1259
        %1660 = vmatmul.mubr.bf16.gmra.mrb[0].mxu0 %v1258
        %v1661 = vpop.f32.mrb[0].mxu0
        %v1662 = vadd.f32 %v1280, %v1661
        %v1663 = vpop.f32.mrb[0].mxu0
        %v1664 = vadd.f32 %v1284, %v1663
        %v1665 = vpop.f32.mrb[0].mxu0
        %v1666 = vadd.f32 %v1280, %v1665
        %v1667 = vpop.f32.mrb[0].mxu0
        %v1668 = vadd.f32 %v1284, %v1667
        %1669 = vmatprep.mubr.bf16.mxu0 %v1261
        %1670 = vmatmul.mubr.bf16.gmra.mrb[0].mxu0 %v1260
        %v1671 = vpop.f32.mrb[0].mxu0
        %v1672 = vadd.f32 %v1280, %v1671
        %v1673 = vpop.f32.mrb[0].mxu0
        %v1674 = vadd.f32 %v1284, %v1673
        %v1675 = vpop.f32.mrb[0].mxu0
        %v1676 = vadd.f32 %v1280, %v1675
        %v1677 = vpop.f32.mrb[0].mxu0
        %v1678 = vadd.f32 %v1284, %v1677
        %1679 = vmatprep.mubr.bf16.mxu0 %v1263
        %1680 = vmatmul.mubr.bf16.gmra.mrb[0].mxu0 %v1262
        %v1681 = vpop.f32.mrb[0].mxu0
        %v1682 = vadd.f32 %v1280, %v1681
        %v1683 = vpop.f32.mrb[0].mxu0
        %v1684 = vadd.f32 %v1284, %v1683
        %v1685 = vpop.f32.mrb[0].mxu0
        %v1686 = vadd.f32 %v1280, %v1685
        %v1687 = vpop.f32.mrb[0].mxu0
        %v1688 = vadd.f32 %v1284, %v1687
        %1689 = vmatprep.mubr.bf16.mxu0 %v1265
        %1690 = vmatmul.mubr.bf16.gmra.mrb[0].mxu0 %v1264
        %v1691 = vpop.f32.mrb[0].mxu0
        %v1692 = vadd.f32 %v1280, %v1691
        %v1693 = vpop.f32.mrb[0].mxu0
        %v1694 = vadd.f32 %v1284, %v1693
        %v1695 = vpop.f32.mrb[0].mxu0
        %v1696 = vadd.f32 %v1280, %v1695
        %v1697 = vpop.f32.mrb[0].mxu0
        %v1698 = vadd.f32 %v1284, %v1697
        %1699 = vdwg.mxu0
        %1700 = vmatprep.subr.bf16.mxu0 %v1492
        %1701 = vmatpush1.bf16.msra.mxu0 %v1491
        %1702 = vmatprep.subr.bf16.mxu0 %v1496
        %1703 = vmatpush1.bf16.msra.mxu0 %v1495
        %1704 = vmatprep.subr.bf16.mxu0 %v1500
        %1705 = vmatpush1.bf16.msra.mxu0 %v1499
        %1706 = vmatprep.subr.bf16.mxu0 %v1504
        %1707 = vmatpush1.bf16.msra.mxu0 %v1503
        %1708 = vmatprep.subr.bf16.mxu0 %v1508
        %1709 = vmatpush1.bf16.msra.mxu0 %v1507
        %1710 = vmatprep.subr.bf16.mxu0 %v1512
        %1711 = vmatpush1.bf16.msra.mxu0 %v1511
        %1712 = vmatprep.subr.bf16.mxu0 %v1516
        %1713 = vmatpush1.bf16.msra.mxu0 %v1515
        %1714 = vmatprep.subr.bf16.mxu0 %v1520
        %1715 = vmatpush1.bf16.msra.mxu0 %v1519
        %1716 = vmatprep.subr.bf16.mxu0 %v1524
        %1717 = vmatpush1.bf16.msra.mxu0 %v1523
        %1718 = vmatprep.subr.bf16.mxu0 %v1528
        %1719 = vmatpush1.bf16.msra.mxu0 %v1527
        %1720 = vmatprep.subr.bf16.mxu0 %v1532
        %1721 = vmatpush1.bf16.msra.mxu0 %v1531
        %1722 = vmatprep.subr.bf16.mxu0 %v1536
        %1723 = vmatpush1.bf16.msra.mxu0 %v1535
        %1724 = vmatprep.subr.bf16.mxu0 %v1540
        %1725 = vmatpush1.bf16.msra.mxu0 %v1539
        %1726 = vmatprep.subr.bf16.mxu0 %v1544
        %1727 = vmatpush1.bf16.msra.mxu0 %v1543
        %1728 = vmatprep.subr.bf16.mxu0 %v1548
        %1729 = vmatpush1.bf16.msra.mxu0 %v1547
        %1730 = vmatprep.subr.bf16.mxu0 %v1552
        %1731 = vmatpush1.bf16.msra.mxu0 %v1551
        %1732 = vmatprep.mubr.bf16.mxu0 %v1257
        %1733 = vmatmul.mubr.bf16.gmra.mrb[0].mxu0 %v1256
        %v1734 = vpop.f32.mrb[0].mxu0
        %v1735 = vadd.f32 %v1288, %v1734
        %v1736 = vpop.f32.mrb[0].mxu0
        %v1737 = vadd.f32 %v1292, %v1736
        %v1738 = vpop.f32.mrb[0].mxu0
        %v1739 = vadd.f32 %v1288, %v1738
        %v1740 = vpop.f32.mrb[0].mxu0
        %v1741 = vadd.f32 %v1292, %v1740
        %1742 = vmatprep.mubr.bf16.mxu0 %v1259
        %1743 = vmatmul.mubr.bf16.gmra.mrb[0].mxu0 %v1258
        %v1744 = vpop.f32.mrb[0].mxu0
        %v1745 = vadd.f32 %v1288, %v1744
        %v1746 = vpop.f32.mrb[0].mxu0
        %v1747 = vadd.f32 %v1292, %v1746
        %v1748 = vpop.f32.mrb[0].mxu0
        %v1749 = vadd.f32 %v1288, %v1748
        %v1750 = vpop.f32.mrb[0].mxu0
        %v1751 = vadd.f32 %v1292, %v1750
        %1752 = vmatprep.mubr.bf16.mxu0 %v1261
        %1753 = vmatmul.mubr.bf16.gmra.mrb[0].mxu0 %v1260
        %v1754 = vpop.f32.mrb[0].mxu0
        %v1755 = vadd.f32 %v1288, %v1754
        %v1756 = vpop.f32.mrb[0].mxu0
        %v1757 = vadd.f32 %v1292, %v1756
        %v1758 = vpop.f32.mrb[0].mxu0
        %v1759 = vadd.f32 %v1288, %v1758
        %v1760 = vpop.f32.mrb[0].mxu0
        %v1761 = vadd.f32 %v1292, %v1760
        %1762 = vmatprep.mubr.bf16.mxu0 %v1263
        %1763 = vmatmul.mubr.bf16.gmra.mrb[0].mxu0 %v1262
        %v1764 = vpop.f32.mrb[0].mxu0
        %v1765 = vadd.f32 %v1288, %v1764
        %v1766 = vpop.f32.mrb[0].mxu0
        %v1767 = vadd.f32 %v1292, %v1766
        %v1768 = vpop.f32.mrb[0].mxu0
        %v1769 = vadd.f32 %v1288, %v1768
        %v1770 = vpop.f32.mrb[0].mxu0
        %v1771 = vadd.f32 %v1292, %v1770
        %1772 = vmatprep.mubr.bf16.mxu0 %v1265
        %1773 = vmatmul.mubr.bf16.gmra.mrb[0].mxu0 %v1264
        %v1774 = vpop.f32.mrb[0].mxu0
        %v1775 = vadd.f32 %v1288, %v1774
        %v1776 = vpop.f32.mrb[0].mxu0
        %v1777 = vadd.f32 %v1292, %v1776
        %v1778 = vpop.f32.mrb[0].mxu0
        %v1779 = vadd.f32 %v1288, %v1778
        %v1780 = vpop.f32.mrb[0].mxu0
        %v1781 = vadd.f32 %v1292, %v1780
        %1782 = vdwg.mxu0
        %v1783 = vmax.f32 %v1652, 0.0
        %v1784 = vmax.f32 %v1654, 0.0
        %v1785 = vmax.f32 %v1735, 0.0
        %v1786 = vmax.f32 %v1737, 0.0
        %v1787 = vmax.f32 %v1656, 0.0
        %v1788 = vmax.f32 %v1658, 0.0
        %v1789 = vmax.f32 %v1739, 0.0
        %v1790 = vmax.f32 %v1741, 0.0
        %v1791 = vmax.f32 %v1662, 0.0
        %v1792 = vmax.f32 %v1664, 0.0
        %v1793 = vmax.f32 %v1745, 0.0
        %v1794 = vmax.f32 %v1747, 0.0
        %v1795 = vmax.f32 %v1666, 0.0
        %v1796 = vmax.f32 %v1668, 0.0
        %v1797 = vmax.f32 %v1749, 0.0
        %v1798 = vmax.f32 %v1751, 0.0
        %v1799 = vmax.f32 %v1672, 0.0
        %v1800 = vmax.f32 %v1674, 0.0
        %v1801 = vmax.f32 %v1755, 0.0
        %v1802 = vmax.f32 %v1757, 0.0
        %v1803 = vmax.f32 %v1676, 0.0
        %v1804 = vmax.f32 %v1678, 0.0
        %v1805 = vmax.f32 %v1759, 0.0
        %v1806 = vmax.f32 %v1761, 0.0
        %v1807 = vmax.f32 %v1682, 0.0
        %v1808 = vmax.f32 %v1684, 0.0
        %v1809 = vmax.f32 %v1765, 0.0
        %v1810 = vmax.f32 %v1767, 0.0
        %v1811 = vmax.f32 %v1686, 0.0
        %v1812 = vmax.f32 %v1688, 0.0
        %v1813 = vmax.f32 %v1769, 0.0
        %v1814 = vmax.f32 %v1771, 0.0
        %v1815 = vmax.f32 %v1692, 0.0
        %v1816 = vmax.f32 %v1694, 0.0
        %v1817 = vmax.f32 %v1775, 0.0
        %v1818 = vmax.f32 %v1777, 0.0
        %v1819 = vmax.f32 %v1696, 0.0
        %v1820 = vmax.f32 %v1698, 0.0
        %v1821 = vmax.f32 %v1779, 0.0
        %v1822 = vmax.f32 %v1781, 0.0
        %v1823 = vpack.c.bf16 %v1787, %v1783
        %v1824 = vpack.c.bf16 %v1788, %v1784
        %v1825 = vpack.c.bf16 %v1789, %v1785
        %v1826 = vpack.c.bf16 %v1790, %v1786
        %v1827 = vpack.c.bf16 %v1795, %v1791
        %v1828 = vpack.c.bf16 %v1796, %v1792
        %v1829 = vpack.c.bf16 %v1797, %v1793
        %v1830 = vpack.c.bf16 %v1798, %v1794
        %v1831 = vpack.c.bf16 %v1803, %v1799
        %v1832 = vpack.c.bf16 %v1804, %v1800
        %v1833 = vpack.c.bf16 %v1805, %v1801
        %v1834 = vpack.c.bf16 %v1806, %v1802
        %v1835 = vpack.c.bf16 %v1811, %v1807
        %v1836 = vpack.c.bf16 %v1812, %v1808
        %v1837 = vpack.c.bf16 %v1813, %v1809
        %v1838 = vpack.c.bf16 %v1814, %v1810
        %v1839 = vpack.c.bf16 %v1819, %v1815
        %v1840 = vpack.c.bf16 %v1820, %v1816
        %v1841 = vpack.c.bf16 %v1821, %v1817
        %v1842 = vpack.c.bf16 %v1822, %v1818
        %v1844 = vlaneseq
        %v1845 = vshrl.u32 %v1844, 7
        %v1846 = vsub.s32 0, %v1845
        %v1847 = vrot.slane %v1070, %v1846
        %v1848 = vlaneseq
        %v1849 = vshrl.u32 %v1848, 7
        %v1850 = vsub.s32 1, %v1849
        %v1851 = vrot.slane %v1070, %v1850
        %v1852 = vlaneseq
        %v1853 = vshrl.u32 %v1852, 7
        %v1854 = vsub.s32 2, %v1853
        %v1855 = vrot.slane %v1070, %v1854
        %v1856 = vlaneseq
        %v1857 = vshrl.u32 %v1856, 7
        %v1858 = vsub.s32 3, %v1857
        %v1859 = vrot.slane %v1070, %v1858
        %v1860 = vlaneseq
        %v1861 = vshrl.u32 %v1860, 7
        %v1862 = vsub.s32 4, %v1861
        %v1863 = vrot.slane %v1070, %v1862
        %v1864 = vlaneseq
        %v1865 = vshrl.u32 %v1864, 7
        %v1866 = vsub.s32 5, %v1865
        %v1867 = vrot.slane %v1070, %v1866
        %v1868 = vlaneseq
        %v1869 = vshrl.u32 %v1868, 7
        %v1870 = vsub.s32 6, %v1869
        %v1871 = vrot.slane %v1070, %v1870
        %v1872 = vlaneseq
        %v1873 = vshrl.u32 %v1872, 7
        %v1874 = vsub.s32 7, %v1873
        %v1875 = vrot.slane %v1070, %v1874
        %v2140 = vunpack.c.l.b16 %v493
        %v2141 = vunpack.c.h.b16 %v493
        %v2142 = vunpack.c.l.b16 %v494
        %v2143 = vunpack.c.h.b16 %v494
        %v2144 = vunpack.c.l.b16 %v495
        %v2145 = vunpack.c.h.b16 %v495
        %v2146 = vunpack.c.l.b16 %v496
        %v2147 = vunpack.c.h.b16 %v496
        %v2148 = vunpack.c.l.b16 %v497
        %v2149 = vunpack.c.h.b16 %v497
        %v2150 = vunpack.c.l.b16 %v498
        %v2151 = vunpack.c.h.b16 %v498
        %v2152 = vunpack.c.l.b16 %v499
        %v2153 = vunpack.c.h.b16 %v499
        %v2154 = vunpack.c.l.b16 %v500
        %v2155 = vunpack.c.h.b16 %v500
        %v2156 = vunpack.c.l.b16 %v501
        %v2157 = vunpack.c.h.b16 %v501
        %v2158 = vunpack.c.l.b16 %v502
        %v2159 = vunpack.c.h.b16 %v502
        %v2160 = vunpack.c.l.b16 %v503
        %v2161 = vunpack.c.h.b16 %v503
        %v2162 = vunpack.c.l.b16 %v504
        %v2163 = vunpack.c.h.b16 %v504
        %v2164 = vunpack.c.l.b16 %v505
        %v2165 = vunpack.c.h.b16 %v505
        %v2166 = vunpack.c.l.b16 %v506
        %v2167 = vunpack.c.h.b16 %v506
        %v2168 = vunpack.c.l.b16 %v507
        %v2169 = vunpack.c.h.b16 %v507
        %v2170 = vunpack.c.l.b16 %v508
        %v2171 = vunpack.c.h.b16 %v508
        %v2172 = vunpack.c.l.b16 %v509
        %v2173 = vunpack.c.h.b16 %v509
        %v2174 = vunpack.c.l.b16 %v510
        %v2175 = vunpack.c.h.b16 %v510
        %v2176 = vunpack.c.l.b16 %v511
        %v2177 = vunpack.c.h.b16 %v511
        %v2178 = vunpack.c.l.b16 %v512
        %v2179 = vunpack.c.h.b16 %v512
        %v2180 = vunpack.c.l.b16 %v513
        %v2181 = vunpack.c.h.b16 %v513
        %v2182 = vunpack.c.l.b16 %v514
        %v2183 = vunpack.c.h.b16 %v514
        %v2184 = vunpack.c.l.b16 %v515
        %v2185 = vunpack.c.h.b16 %v515
        %v2186 = vunpack.c.l.b16 %v516
        %v2187 = vunpack.c.h.b16 %v516
        %v2188 = vunpack.c.l.b16 %v517
        %v2189 = vunpack.c.h.b16 %v517
        %v2190 = vunpack.c.l.b16 %v518
        %v2191 = vunpack.c.h.b16 %v518
        %v2192 = vunpack.c.l.b16 %v519
        %v2193 = vunpack.c.h.b16 %v519
        %v2194 = vunpack.c.l.b16 %v520
        %v2195 = vunpack.c.h.b16 %v520
        %v2196 = vunpack.c.l.b16 %v521
        %v2197 = vunpack.c.h.b16 %v521
        %v2198 = vunpack.c.l.b16 %v522
        %v2199 = vunpack.c.h.b16 %v522
        %v2200 = vunpack.c.l.b16 %v523
        %v2201 = vunpack.c.h.b16 %v523
        %v2202 = vunpack.c.l.b16 %v524
        %v2203 = vunpack.c.h.b16 %v524
        %v2204 = vunpack.c.l.b16 %v525
        %v2205 = vunpack.c.h.b16 %v525
        %v2206 = vunpack.c.l.b16 %v526
        %v2207 = vunpack.c.h.b16 %v526
        %v2208 = vunpack.c.l.b16 %v527
        %v2209 = vunpack.c.h.b16 %v527
        %v2210 = vunpack.c.l.b16 %v528
        %v2211 = vunpack.c.h.b16 %v528
        %v2212 = vunpack.c.l.b16 %v529
        %v2213 = vunpack.c.h.b16 %v529
        %v2214 = vunpack.c.l.b16 %v530
        %v2215 = vunpack.c.h.b16 %v530
        %v2216 = vunpack.c.l.b16 %v531
        %v2217 = vunpack.c.h.b16 %v531
        %v2218 = vunpack.c.l.b16 %v532
        %v2219 = vunpack.c.h.b16 %v532
        %v2220 = vunpack.c.l.b16 %v533
        %v2221 = vunpack.c.h.b16 %v533
        %v2222 = vunpack.c.l.b16 %v534
        %v2223 = vunpack.c.h.b16 %v534
        %v2224 = vunpack.c.l.b16 %v535
        %v2225 = vunpack.c.h.b16 %v535
        %v2226 = vunpack.c.l.b16 %v536
        %v2227 = vunpack.c.h.b16 %v536
        %v2228 = vunpack.c.l.b16 %v537
        %v2229 = vunpack.c.h.b16 %v537
        %v2230 = vunpack.c.l.b16 %v538
        %v2231 = vunpack.c.h.b16 %v538
        %v2232 = vunpack.c.l.b16 %v539
        %v2233 = vunpack.c.h.b16 %v539
        %v2234 = vunpack.c.l.b16 %v540
        %v2235 = vunpack.c.h.b16 %v540
        %v2236 = vunpack.c.l.b16 %v541
        %v2237 = vunpack.c.h.b16 %v541
        %v2238 = vunpack.c.l.b16 %v542
        %v2239 = vunpack.c.h.b16 %v542
        %v2240 = vunpack.c.l.b16 %v543
        %v2241 = vunpack.c.h.b16 %v543
        %v2242 = vunpack.c.l.b16 %v544
        %v2243 = vunpack.c.h.b16 %v544
        %v2244 = vunpack.c.l.b16 %v545
        %v2245 = vunpack.c.h.b16 %v545
        %v2246 = vunpack.c.l.b16 %v546
        %v2247 = vunpack.c.h.b16 %v546
        %v2248 = vunpack.c.l.b16 %v547
        %v2249 = vunpack.c.h.b16 %v547
        %v2250 = vunpack.c.l.b16 %v548
        %v2251 = vunpack.c.h.b16 %v548
        %v2252 = vunpack.c.l.b16 %v549
        %v2253 = vunpack.c.h.b16 %v549
        %v2254 = vunpack.c.l.b16 %v550
        %v2255 = vunpack.c.h.b16 %v550
        %v2256 = vunpack.c.l.b16 %v551
        %v2257 = vunpack.c.h.b16 %v551
        %v2258 = vunpack.c.l.b16 %v552
        %v2259 = vunpack.c.h.b16 %v552
        %v2260 = vunpack.c.l.b16 %v553
        %v2261 = vunpack.c.h.b16 %v553
        %v2262 = vunpack.c.l.b16 %v554
        %v2263 = vunpack.c.h.b16 %v554
        %v2264 = vunpack.c.l.b16 %v555
        %v2265 = vunpack.c.h.b16 %v555
        %v2266 = vunpack.c.l.b16 %v556
        %v2267 = vunpack.c.h.b16 %v556
        %v2268 = vunpack.c.l.b16 %v557
        %v2269 = vunpack.c.h.b16 %v557
        %v2270 = vunpack.c.l.b16 %v558
        %v2271 = vunpack.c.h.b16 %v558
        %v2272 = vunpack.c.l.b16 %v559
        %v2273 = vunpack.c.h.b16 %v559
        %v2274 = vunpack.c.l.b16 %v560
        %v2275 = vunpack.c.h.b16 %v560
        %v2276 = vunpack.c.l.b16 %v561
        %v2277 = vunpack.c.h.b16 %v561
        %v2278 = vunpack.c.l.b16 %v562
        %v2279 = vunpack.c.h.b16 %v562
        %v2280 = vunpack.c.l.b16 %v563
        %v2281 = vunpack.c.h.b16 %v563
        %v2282 = vunpack.c.l.b16 %v564
        %v2283 = vunpack.c.h.b16 %v564
        %v2284 = vunpack.c.l.b16 %v565
        %v2285 = vunpack.c.h.b16 %v565
        %v2286 = vunpack.c.l.b16 %v566
        %v2287 = vunpack.c.h.b16 %v566
        %v2288 = vunpack.c.l.b16 %v567
        %v2289 = vunpack.c.h.b16 %v567
        %v2290 = vunpack.c.l.b16 %v568
        %v2291 = vunpack.c.h.b16 %v568
        %v2292 = vunpack.c.l.b16 %v569
        %v2293 = vunpack.c.h.b16 %v569
        %v2294 = vunpack.c.l.b16 %v570
        %v2295 = vunpack.c.h.b16 %v570
        %v2296 = vunpack.c.l.b16 %v571
        %v2297 = vunpack.c.h.b16 %v571
        %v2298 = vunpack.c.l.b16 %v572
        %v2299 = vunpack.c.h.b16 %v572
        %v2300 = vunpack.c.l.b16 %v573
        %v2301 = vunpack.c.h.b16 %v573
        %v2302 = vunpack.c.l.b16 %v574
        %v2303 = vunpack.c.h.b16 %v574
        %v2304 = vunpack.c.l.b16 %v575
        %v2305 = vunpack.c.h.b16 %v575
        %v2306 = vunpack.c.l.b16 %v576
        %v2307 = vunpack.c.h.b16 %v576
        %v2308 = vunpack.c.l.b16 %v577
        %v2309 = vunpack.c.h.b16 %v577
        %v2310 = vunpack.c.l.b16 %v578
        %v2311 = vunpack.c.h.b16 %v578
        %v2312 = vunpack.c.l.b16 %v579
        %v2313 = vunpack.c.h.b16 %v579
        %v2314 = vunpack.c.l.b16 %v580
        %v2315 = vunpack.c.h.b16 %v580
        %v2316 = vunpack.c.l.b16 %v581
        %v2317 = vunpack.c.h.b16 %v581
        %v2318 = vunpack.c.l.b16 %v582
        %v2319 = vunpack.c.h.b16 %v582
        %v2320 = vunpack.c.l.b16 %v583
        %v2321 = vunpack.c.h.b16 %v583
        %v2322 = vunpack.c.l.b16 %v584
        %v2323 = vunpack.c.h.b16 %v584
        %v2324 = vunpack.c.l.b16 %v585
        %v2325 = vunpack.c.h.b16 %v585
        %v2326 = vunpack.c.l.b16 %v586
        %v2327 = vunpack.c.h.b16 %v586
        %v2328 = vunpack.c.l.b16 %v587
        %v2329 = vunpack.c.h.b16 %v587
        %v2330 = vunpack.c.l.b16 %v588
        %v2331 = vunpack.c.h.b16 %v588
        %v2332 = vunpack.c.l.b16 %v589
        %v2333 = vunpack.c.h.b16 %v589
        %v2334 = vunpack.c.l.b16 %v590
        %v2335 = vunpack.c.h.b16 %v590
        %v2336 = vunpack.c.l.b16 %v591
        %v2337 = vunpack.c.h.b16 %v591
        %v2338 = vunpack.c.l.b16 %v592
        %v2339 = vunpack.c.h.b16 %v592
        %v2340 = vunpack.c.l.b16 %v593
        %v2341 = vunpack.c.h.b16 %v593
        %v2342 = vunpack.c.l.b16 %v594
        %v2343 = vunpack.c.h.b16 %v594
        %v2344 = vunpack.c.l.b16 %v595
        %v2345 = vunpack.c.h.b16 %v595
        %v2346 = vunpack.c.l.b16 %v596
        %v2347 = vunpack.c.h.b16 %v596
        %v2348 = vunpack.c.l.b16 %v597
        %v2349 = vunpack.c.h.b16 %v597
        %v2350 = vunpack.c.l.b16 %v598
        %v2351 = vunpack.c.h.b16 %v598
        %v2352 = vunpack.c.l.b16 %v599
        %v2353 = vunpack.c.h.b16 %v599
        %v2354 = vunpack.c.l.b16 %v600
        %v2355 = vunpack.c.h.b16 %v600
        %v2356 = vunpack.c.l.b16 %v601
        %v2357 = vunpack.c.h.b16 %v601
        %v2358 = vunpack.c.l.b16 %v602
        %v2359 = vunpack.c.h.b16 %v602
        %v2360 = vunpack.c.l.b16 %v603
        %v2361 = vunpack.c.h.b16 %v603
        %v2362 = vunpack.c.l.b16 %v604
        %v2363 = vunpack.c.h.b16 %v604
        %v2364 = vunpack.c.l.b16 %v605
        %v2365 = vunpack.c.h.b16 %v605
        %v2366 = vunpack.c.l.b16 %v606
        %v2367 = vunpack.c.h.b16 %v606
        %v2368 = vunpack.c.l.b16 %v607
        %v2369 = vunpack.c.h.b16 %v607
        %v2370 = vunpack.c.l.b16 %v608
        %v2371 = vunpack.c.h.b16 %v608
        %v2372 = vunpack.c.l.b16 %v609
        %v2373 = vunpack.c.h.b16 %v609
        %v2374 = vunpack.c.l.b16 %v610
        %v2375 = vunpack.c.h.b16 %v610
        %v2376 = vunpack.c.l.b16 %v611
        %v2377 = vunpack.c.h.b16 %v611
        %v2378 = vunpack.c.l.b16 %v612
        %v2379 = vunpack.c.h.b16 %v612
        %v2380 = vunpack.c.l.b16 %v613
        %v2381 = vunpack.c.h.b16 %v613
        %v2382 = vunpack.c.l.b16 %v614
        %v2383 = vunpack.c.h.b16 %v614
        %v2384 = vunpack.c.l.b16 %v615
        %v2385 = vunpack.c.h.b16 %v615
        %v2386 = vunpack.c.l.b16 %v616
        %v2387 = vunpack.c.h.b16 %v616
        %v2388 = vunpack.c.l.b16 %v617
        %v2389 = vunpack.c.h.b16 %v617
        %v2390 = vunpack.c.l.b16 %v618
        %v2391 = vunpack.c.h.b16 %v618
        %v2392 = vunpack.c.l.b16 %v619
        %v2393 = vunpack.c.h.b16 %v619
        %v2394 = vunpack.c.l.b16 %v620
        %v2395 = vunpack.c.h.b16 %v620
        %v2396 = vunpack.c.l.b16 %v621
        %v2397 = vunpack.c.h.b16 %v621
        %v2398 = vunpack.c.l.b16 %v622
        %v2399 = vunpack.c.h.b16 %v622
        %v2400 = vunpack.c.l.b16 %v623
        %v2401 = vunpack.c.h.b16 %v623
        %v2402 = vunpack.c.l.b16 %v624
        %v2403 = vunpack.c.h.b16 %v624
        %v2404 = vunpack.c.l.b16 %v625
        %v2405 = vunpack.c.h.b16 %v625
        %v2406 = vunpack.c.l.b16 %v626
        %v2407 = vunpack.c.h.b16 %v626
        %v2408 = vunpack.c.l.b16 %v627
        %v2409 = vunpack.c.h.b16 %v627
        %v2410 = vunpack.c.l.b16 %v628
        %v2411 = vunpack.c.h.b16 %v628
        %v2412 = vunpack.c.l.b16 %v629
        %v2413 = vunpack.c.h.b16 %v629
        %v2414 = vunpack.c.l.b16 %v630
        %v2415 = vunpack.c.h.b16 %v630
        %v2416 = vunpack.c.l.b16 %v631
        %v2417 = vunpack.c.h.b16 %v631
        %v2418 = vunpack.c.l.b16 %v632
        %v2419 = vunpack.c.h.b16 %v632
        %v2420 = vunpack.c.l.b16 %v633
        %v2421 = vunpack.c.h.b16 %v633
        %v2422 = vunpack.c.l.b16 %v634
        %v2423 = vunpack.c.h.b16 %v634
        %v2424 = vunpack.c.l.b16 %v635
        %v2425 = vunpack.c.h.b16 %v635
        %v2426 = vunpack.c.l.b16 %v636
        %v2427 = vunpack.c.h.b16 %v636
        %v2428 = vunpack.c.l.b16 %v637
        %v2429 = vunpack.c.h.b16 %v637
        %v2430 = vunpack.c.l.b16 %v638
        %v2431 = vunpack.c.h.b16 %v638
        %v2432 = vunpack.c.l.b16 %v639
        %v2433 = vunpack.c.h.b16 %v639
        %v2434 = vunpack.c.l.b16 %v640
        %v2435 = vunpack.c.h.b16 %v640
        %v2436 = vunpack.c.l.b16 %v641
        %v2437 = vunpack.c.h.b16 %v641
        %v2438 = vunpack.c.l.b16 %v642
        %v2439 = vunpack.c.h.b16 %v642
        %v2440 = vunpack.c.l.b16 %v643
        %v2441 = vunpack.c.h.b16 %v643
        %v2442 = vunpack.c.l.b16 %v644
        %v2443 = vunpack.c.h.b16 %v644
        %v2444 = vunpack.c.l.b16 %v645
        %v2445 = vunpack.c.h.b16 %v645
        %v2446 = vunpack.c.l.b16 %v646
        %v2447 = vunpack.c.h.b16 %v646
        %v2448 = vunpack.c.l.b16 %v647
        %v2449 = vunpack.c.h.b16 %v647
        %v2450 = vunpack.c.l.b16 %v648
        %v2451 = vunpack.c.h.b16 %v648
        %v2452 = vunpack.c.l.b16 %v649
        %v2453 = vunpack.c.h.b16 %v649
        %v2454 = vunpack.c.l.b16 %v650
        %v2455 = vunpack.c.h.b16 %v650
        %v2456 = vunpack.c.l.b16 %v651
        %v2457 = vunpack.c.h.b16 %v651
        %v2458 = vunpack.c.l.b16 %v652
        %v2459 = vunpack.c.h.b16 %v652
        %v2460 = vunpack.c.l.b16 %v653
        %v2461 = vunpack.c.h.b16 %v653
        %v2462 = vunpack.c.l.b16 %v654
        %v2463 = vunpack.c.h.b16 %v654
        %v2464 = vunpack.c.l.b16 %v655
        %v2465 = vunpack.c.h.b16 %v655
        %v2466 = vunpack.c.l.b16 %v656
        %v2467 = vunpack.c.h.b16 %v656
        %v2468 = vunpack.c.l.b16 %v657
        %v2469 = vunpack.c.h.b16 %v657
        %v2470 = vunpack.c.l.b16 %v658
        %v2471 = vunpack.c.h.b16 %v658
        %v2472 = vunpack.c.l.b16 %v659
        %v2473 = vunpack.c.h.b16 %v659
        %v2474 = vunpack.c.l.b16 %v660
        %v2475 = vunpack.c.h.b16 %v660
        %v2476 = vunpack.c.l.b16 %v661
        %v2477 = vunpack.c.h.b16 %v661
        %v2478 = vunpack.c.l.b16 %v662
        %v2479 = vunpack.c.h.b16 %v662
        %v2480 = vunpack.c.l.b16 %v663
        %v2481 = vunpack.c.h.b16 %v663
        %v2482 = vunpack.c.l.b16 %v664
        %v2483 = vunpack.c.h.b16 %v664
        %v2484 = vunpack.c.l.b16 %v665
        %v2485 = vunpack.c.h.b16 %v665
        %v2486 = vunpack.c.l.b16 %v666
        %v2487 = vunpack.c.h.b16 %v666
        %v2488 = vunpack.c.l.b16 %v667
        %v2489 = vunpack.c.h.b16 %v667
        %v2490 = vunpack.c.l.b16 %v668
        %v2491 = vunpack.c.h.b16 %v668
        %v2492 = vunpack.c.l.b16 %v669
        %v2493 = vunpack.c.h.b16 %v669
        %v2494 = vunpack.c.l.b16 %v670
        %v2495 = vunpack.c.h.b16 %v670
        %v2496 = vunpack.c.l.b16 %v671
        %v2497 = vunpack.c.h.b16 %v671
        %v2498 = vunpack.c.l.b16 %v672
        %v2499 = vunpack.c.h.b16 %v672
        %v2500 = vunpack.c.l.b16 %v673
        %v2501 = vunpack.c.h.b16 %v673
        %v2502 = vunpack.c.l.b16 %v674
        %v2503 = vunpack.c.h.b16 %v674
        %v2504 = vunpack.c.l.b16 %v675
        %v2505 = vunpack.c.h.b16 %v675
        %v2506 = vunpack.c.l.b16 %v676
        %v2507 = vunpack.c.h.b16 %v676
        %v2508 = vunpack.c.l.b16 %v677
        %v2509 = vunpack.c.h.b16 %v677
        %v2510 = vunpack.c.l.b16 %v678
        %v2511 = vunpack.c.h.b16 %v678
        %v2512 = vunpack.c.l.b16 %v679
        %v2513 = vunpack.c.h.b16 %v679
        %v2514 = vunpack.c.l.b16 %v680
        %v2515 = vunpack.c.h.b16 %v680
        %v2516 = vunpack.c.l.b16 %v681
        %v2517 = vunpack.c.h.b16 %v681
        %v2518 = vunpack.c.l.b16 %v682
        %v2519 = vunpack.c.h.b16 %v682
        %v2520 = vunpack.c.l.b16 %v683
        %v2521 = vunpack.c.h.b16 %v683
        %v2522 = vunpack.c.l.b16 %v684
        %v2523 = vunpack.c.h.b16 %v684
        %v2524 = vunpack.c.l.b16 %v685
        %v2525 = vunpack.c.h.b16 %v685
        %v2526 = vunpack.c.l.b16 %v686
        %v2527 = vunpack.c.h.b16 %v686
        %v2528 = vunpack.c.l.b16 %v687
        %v2529 = vunpack.c.h.b16 %v687
        %v2530 = vunpack.c.l.b16 %v688
        %v2531 = vunpack.c.h.b16 %v688
        %v2532 = vunpack.c.l.b16 %v689
        %v2533 = vunpack.c.h.b16 %v689
        %v2534 = vunpack.c.l.b16 %v690
        %v2535 = vunpack.c.h.b16 %v690
        %v2536 = vunpack.c.l.b16 %v691
        %v2537 = vunpack.c.h.b16 %v691
        %v2538 = vunpack.c.l.b16 %v692
        %v2539 = vunpack.c.h.b16 %v692
        %v2540 = vunpack.c.l.b16 %v693
        %v2541 = vunpack.c.h.b16 %v693
        %v2542 = vunpack.c.l.b16 %v694
        %v2543 = vunpack.c.h.b16 %v694
        %v2544 = vunpack.c.l.b16 %v695
        %v2545 = vunpack.c.h.b16 %v695
        %v2546 = vunpack.c.l.b16 %v696
        %v2547 = vunpack.c.h.b16 %v696
        %v2548 = vunpack.c.l.b16 %v697
        %v2549 = vunpack.c.h.b16 %v697
        %v2550 = vunpack.c.l.b16 %v698
        %v2551 = vunpack.c.h.b16 %v698
        %v2552 = vunpack.c.l.b16 %v699
        %v2553 = vunpack.c.h.b16 %v699
        %v2554 = vunpack.c.l.b16 %v700
        %v2555 = vunpack.c.h.b16 %v700
        %v2556 = vunpack.c.l.b16 %v701
        %v2557 = vunpack.c.h.b16 %v701
        %v2558 = vunpack.c.l.b16 %v702
        %v2559 = vunpack.c.h.b16 %v702
        %v2560 = vunpack.c.l.b16 %v703
        %v2561 = vunpack.c.h.b16 %v703
        %v2562 = vunpack.c.l.b16 %v704
        %v2563 = vunpack.c.h.b16 %v704
        %v2564 = vunpack.c.l.b16 %v705
        %v2565 = vunpack.c.h.b16 %v705
        %v2566 = vunpack.c.l.b16 %v706
        %v2567 = vunpack.c.h.b16 %v706
        %v2568 = vunpack.c.l.b16 %v707
        %v2569 = vunpack.c.h.b16 %v707
        %v2570 = vunpack.c.l.b16 %v708
        %v2571 = vunpack.c.h.b16 %v708
        %v2572 = vunpack.c.l.b16 %v709
        %v2573 = vunpack.c.h.b16 %v709
        %v2574 = vunpack.c.l.b16 %v710
        %v2575 = vunpack.c.h.b16 %v710
        %v2576 = vunpack.c.l.b16 %v711
        %v2577 = vunpack.c.h.b16 %v711
        %v2578 = vunpack.c.l.b16 %v712
        %v2579 = vunpack.c.h.b16 %v712
        %v2580 = vunpack.c.l.b16 %v713
        %v2581 = vunpack.c.h.b16 %v713
        %v2582 = vunpack.c.l.b16 %v714
        %v2583 = vunpack.c.h.b16 %v714
        %v2584 = vunpack.c.l.b16 %v715
        %v2585 = vunpack.c.h.b16 %v715
        %v2586 = vunpack.c.l.b16 %v716
        %v2587 = vunpack.c.h.b16 %v716
        %v2588 = vunpack.c.l.b16 %v717
        %v2589 = vunpack.c.h.b16 %v717
        %v2590 = vunpack.c.l.b16 %v718
        %v2591 = vunpack.c.h.b16 %v718
        %v2592 = vunpack.c.l.b16 %v719
        %v2593 = vunpack.c.h.b16 %v719
        %v2594 = vunpack.c.l.b16 %v720
        %v2595 = vunpack.c.h.b16 %v720
        %v2596 = vunpack.c.l.b16 %v721
        %v2597 = vunpack.c.h.b16 %v721
        %v2598 = vunpack.c.l.b16 %v722
        %v2599 = vunpack.c.h.b16 %v722
        %v2600 = vunpack.c.l.b16 %v723
        %v2601 = vunpack.c.h.b16 %v723
        %v2602 = vunpack.c.l.b16 %v724
        %v2603 = vunpack.c.h.b16 %v724
        %v2604 = vunpack.c.l.b16 %v725
        %v2605 = vunpack.c.h.b16 %v725
        %v2606 = vunpack.c.l.b16 %v726
        %v2607 = vunpack.c.h.b16 %v726
        %v2608 = vunpack.c.l.b16 %v727
        %v2609 = vunpack.c.h.b16 %v727
        %v2610 = vunpack.c.l.b16 %v728
        %v2611 = vunpack.c.h.b16 %v728
        %v2612 = vunpack.c.l.b16 %v729
        %v2613 = vunpack.c.h.b16 %v729
        %v2614 = vunpack.c.l.b16 %v730
        %v2615 = vunpack.c.h.b16 %v730
        %v2616 = vunpack.c.l.b16 %v731
        %v2617 = vunpack.c.h.b16 %v731
        %v2618 = vunpack.c.l.b16 %v732
        %v2619 = vunpack.c.h.b16 %v732
        %v2620 = vunpack.c.l.b16 %v733
        %v2621 = vunpack.c.h.b16 %v733
        %v2622 = vunpack.c.l.b16 %v734
        %v2623 = vunpack.c.h.b16 %v734
        %v2624 = vunpack.c.l.b16 %v735
        %v2625 = vunpack.c.h.b16 %v735
        %v2626 = vunpack.c.l.b16 %v736
        %v2627 = vunpack.c.h.b16 %v736
        %v2628 = vunpack.c.l.b16 %v737
        %v2629 = vunpack.c.h.b16 %v737
        %v2630 = vunpack.c.l.b16 %v738
        %v2631 = vunpack.c.h.b16 %v738
        %v2632 = vunpack.c.l.b16 %v739
        %v2633 = vunpack.c.h.b16 %v739
        %v2634 = vunpack.c.l.b16 %v740
        %v2635 = vunpack.c.h.b16 %v740
        %v2636 = vunpack.c.l.b16 %v741
        %v2637 = vunpack.c.h.b16 %v741
        %v2638 = vunpack.c.l.b16 %v742
        %v2639 = vunpack.c.h.b16 %v742
        %v2640 = vunpack.c.l.b16 %v743
        %v2641 = vunpack.c.h.b16 %v743
        %v2642 = vunpack.c.l.b16 %v744
        %v2643 = vunpack.c.h.b16 %v744
        %v2644 = vunpack.c.l.b16 %v745
        %v2645 = vunpack.c.h.b16 %v745
        %v2646 = vunpack.c.l.b16 %v746
        %v2647 = vunpack.c.h.b16 %v746
        %v2648 = vunpack.c.l.b16 %v747
        %v2649 = vunpack.c.h.b16 %v747
        %v2650 = vunpack.c.l.b16 %v748
        %v2651 = vunpack.c.h.b16 %v748
        %v2652 = vpack.c.b16 %v2148, %v2140
        %v2653 = vpack.c.b16 %v2149, %v2141
        %v2654 = vpack.c.b16 %v2150, %v2142
        %v2655 = vpack.c.b16 %v2151, %v2143
        %v2656 = vpack.c.b16 %v2152, %v2144
        %v2657 = vpack.c.b16 %v2153, %v2145
        %v2658 = vpack.c.b16 %v2154, %v2146
        %v2659 = vpack.c.b16 %v2155, %v2147
        %v2660 = vpack.c.b16 %v2164, %v2156
        %v2661 = vpack.c.b16 %v2165, %v2157
        %v2662 = vpack.c.b16 %v2166, %v2158
        %v2663 = vpack.c.b16 %v2167, %v2159
        %v2664 = vpack.c.b16 %v2168, %v2160
        %v2665 = vpack.c.b16 %v2169, %v2161
        %v2666 = vpack.c.b16 %v2170, %v2162
        %v2667 = vpack.c.b16 %v2171, %v2163
        %v2668 = vpack.c.b16 %v2180, %v2172
        %v2669 = vpack.c.b16 %v2181, %v2173
        %v2670 = vpack.c.b16 %v2182, %v2174
        %v2671 = vpack.c.b16 %v2183, %v2175
        %v2672 = vpack.c.b16 %v2184, %v2176
        %v2673 = vpack.c.b16 %v2185, %v2177
        %v2674 = vpack.c.b16 %v2186, %v2178
        %v2675 = vpack.c.b16 %v2187, %v2179
        %v2676 = vpack.c.b16 %v2196, %v2188
        %v2677 = vpack.c.b16 %v2197, %v2189
        %v2678 = vpack.c.b16 %v2198, %v2190
        %v2679 = vpack.c.b16 %v2199, %v2191
        %v2680 = vpack.c.b16 %v2200, %v2192
        %v2681 = vpack.c.b16 %v2201, %v2193
        %v2682 = vpack.c.b16 %v2202, %v2194
        %v2683 = vpack.c.b16 %v2203, %v2195
        %v2684 = vpack.c.b16 %v2212, %v2204
        %v2685 = vpack.c.b16 %v2213, %v2205
        %v2686 = vpack.c.b16 %v2214, %v2206
        %v2687 = vpack.c.b16 %v2215, %v2207
        %v2688 = vpack.c.b16 %v2216, %v2208
        %v2689 = vpack.c.b16 %v2217, %v2209
        %v2690 = vpack.c.b16 %v2218, %v2210
        %v2691 = vpack.c.b16 %v2219, %v2211
        %v2692 = vpack.c.b16 %v2228, %v2220
        %v2693 = vpack.c.b16 %v2229, %v2221
        %v2694 = vpack.c.b16 %v2230, %v2222
        %v2695 = vpack.c.b16 %v2231, %v2223
        %v2696 = vpack.c.b16 %v2232, %v2224
        %v2697 = vpack.c.b16 %v2233, %v2225
        %v2698 = vpack.c.b16 %v2234, %v2226
        %v2699 = vpack.c.b16 %v2235, %v2227
        %v2700 = vpack.c.b16 %v2244, %v2236
        %v2701 = vpack.c.b16 %v2245, %v2237
        %v2702 = vpack.c.b16 %v2246, %v2238
        %v2703 = vpack.c.b16 %v2247, %v2239
        %v2704 = vpack.c.b16 %v2248, %v2240
        %v2705 = vpack.c.b16 %v2249, %v2241
        %v2706 = vpack.c.b16 %v2250, %v2242
        %v2707 = vpack.c.b16 %v2251, %v2243
        %v2708 = vpack.c.b16 %v2260, %v2252
        %v2709 = vpack.c.b16 %v2261, %v2253
        %v2710 = vpack.c.b16 %v2262, %v2254
        %v2711 = vpack.c.b16 %v2263, %v2255
        %v2712 = vpack.c.b16 %v2264, %v2256
        %v2713 = vpack.c.b16 %v2265, %v2257
        %v2714 = vpack.c.b16 %v2266, %v2258
        %v2715 = vpack.c.b16 %v2267, %v2259
        %v2716 = vpack.c.b16 %v2276, %v2268
        %v2717 = vpack.c.b16 %v2277, %v2269
        %v2718 = vpack.c.b16 %v2278, %v2270
        %v2719 = vpack.c.b16 %v2279, %v2271
        %v2720 = vpack.c.b16 %v2280, %v2272
        %v2721 = vpack.c.b16 %v2281, %v2273
        %v2722 = vpack.c.b16 %v2282, %v2274
        %v2723 = vpack.c.b16 %v2283, %v2275
        %v2724 = vpack.c.b16 %v2292, %v2284
        %v2725 = vpack.c.b16 %v2293, %v2285
        %v2726 = vpack.c.b16 %v2294, %v2286
        %v2727 = vpack.c.b16 %v2295, %v2287
        %v2728 = vpack.c.b16 %v2296, %v2288
        %v2729 = vpack.c.b16 %v2297, %v2289
        %v2730 = vpack.c.b16 %v2298, %v2290
        %v2731 = vpack.c.b16 %v2299, %v2291
        %v2732 = vpack.c.b16 %v2308, %v2300
        %v2733 = vpack.c.b16 %v2309, %v2301
        %v2734 = vpack.c.b16 %v2310, %v2302
        %v2735 = vpack.c.b16 %v2311, %v2303
        %v2736 = vpack.c.b16 %v2312, %v2304
        %v2737 = vpack.c.b16 %v2313, %v2305
        %v2738 = vpack.c.b16 %v2314, %v2306
        %v2739 = vpack.c.b16 %v2315, %v2307
        %v2740 = vpack.c.b16 %v2324, %v2316
        %v2741 = vpack.c.b16 %v2325, %v2317
        %v2742 = vpack.c.b16 %v2326, %v2318
        %v2743 = vpack.c.b16 %v2327, %v2319
        %v2744 = vpack.c.b16 %v2328, %v2320
        %v2745 = vpack.c.b16 %v2329, %v2321
        %v2746 = vpack.c.b16 %v2330, %v2322
        %v2747 = vpack.c.b16 %v2331, %v2323
        %v2748 = vpack.c.b16 %v2340, %v2332
        %v2749 = vpack.c.b16 %v2341, %v2333
        %v2750 = vpack.c.b16 %v2342, %v2334
        %v2751 = vpack.c.b16 %v2343, %v2335
        %v2752 = vpack.c.b16 %v2344, %v2336
        %v2753 = vpack.c.b16 %v2345, %v2337
        %v2754 = vpack.c.b16 %v2346, %v2338
        %v2755 = vpack.c.b16 %v2347, %v2339
        %v2756 = vpack.c.b16 %v2356, %v2348
        %v2757 = vpack.c.b16 %v2357, %v2349
        %v2758 = vpack.c.b16 %v2358, %v2350
        %v2759 = vpack.c.b16 %v2359, %v2351
        %v2760 = vpack.c.b16 %v2360, %v2352
        %v2761 = vpack.c.b16 %v2361, %v2353
        %v2762 = vpack.c.b16 %v2362, %v2354
        %v2763 = vpack.c.b16 %v2363, %v2355
        %v2764 = vpack.c.b16 %v2372, %v2364
        %v2765 = vpack.c.b16 %v2373, %v2365
        %v2766 = vpack.c.b16 %v2374, %v2366
        %v2767 = vpack.c.b16 %v2375, %v2367
        %v2768 = vpack.c.b16 %v2376, %v2368
        %v2769 = vpack.c.b16 %v2377, %v2369
        %v2770 = vpack.c.b16 %v2378, %v2370
        %v2771 = vpack.c.b16 %v2379, %v2371
        %v2772 = vpack.c.b16 %v2388, %v2380
        %v2773 = vpack.c.b16 %v2389, %v2381
        %v2774 = vpack.c.b16 %v2390, %v2382
        %v2775 = vpack.c.b16 %v2391, %v2383
        %v2776 = vpack.c.b16 %v2392, %v2384
        %v2777 = vpack.c.b16 %v2393, %v2385
        %v2778 = vpack.c.b16 %v2394, %v2386
        %v2779 = vpack.c.b16 %v2395, %v2387
        %v2780 = vpack.c.b16 %v2404, %v2396
        %v2781 = vpack.c.b16 %v2405, %v2397
        %v2782 = vpack.c.b16 %v2406, %v2398
        %v2783 = vpack.c.b16 %v2407, %v2399
        %v2784 = vpack.c.b16 %v2408, %v2400
        %v2785 = vpack.c.b16 %v2409, %v2401
        %v2786 = vpack.c.b16 %v2410, %v2402
        %v2787 = vpack.c.b16 %v2411, %v2403
        %v2788 = vpack.c.b16 %v2420, %v2412
        %v2789 = vpack.c.b16 %v2421, %v2413
        %v2790 = vpack.c.b16 %v2422, %v2414
        %v2791 = vpack.c.b16 %v2423, %v2415
        %v2792 = vpack.c.b16 %v2424, %v2416
        %v2793 = vpack.c.b16 %v2425, %v2417
        %v2794 = vpack.c.b16 %v2426, %v2418
        %v2795 = vpack.c.b16 %v2427, %v2419
        %v2796 = vpack.c.b16 %v2436, %v2428
        %v2797 = vpack.c.b16 %v2437, %v2429
        %v2798 = vpack.c.b16 %v2438, %v2430
        %v2799 = vpack.c.b16 %v2439, %v2431
        %v2800 = vpack.c.b16 %v2440, %v2432
        %v2801 = vpack.c.b16 %v2441, %v2433
        %v2802 = vpack.c.b16 %v2442, %v2434
        %v2803 = vpack.c.b16 %v2443, %v2435
        %v2804 = vpack.c.b16 %v2452, %v2444
        %v2805 = vpack.c.b16 %v2453, %v2445
        %v2806 = vpack.c.b16 %v2454, %v2446
        %v2807 = vpack.c.b16 %v2455, %v2447
        %v2808 = vpack.c.b16 %v2456, %v2448
        %v2809 = vpack.c.b16 %v2457, %v2449
        %v2810 = vpack.c.b16 %v2458, %v2450
        %v2811 = vpack.c.b16 %v2459, %v2451
        %v2812 = vpack.c.b16 %v2468, %v2460
        %v2813 = vpack.c.b16 %v2469, %v2461
        %v2814 = vpack.c.b16 %v2470, %v2462
        %v2815 = vpack.c.b16 %v2471, %v2463
        %v2816 = vpack.c.b16 %v2472, %v2464
        %v2817 = vpack.c.b16 %v2473, %v2465
        %v2818 = vpack.c.b16 %v2474, %v2466
        %v2819 = vpack.c.b16 %v2475, %v2467
        %v2820 = vpack.c.b16 %v2484, %v2476
        %v2821 = vpack.c.b16 %v2485, %v2477
        %v2822 = vpack.c.b16 %v2486, %v2478
        %v2823 = vpack.c.b16 %v2487, %v2479
        %v2824 = vpack.c.b16 %v2488, %v2480
        %v2825 = vpack.c.b16 %v2489, %v2481
        %v2826 = vpack.c.b16 %v2490, %v2482
        %v2827 = vpack.c.b16 %v2491, %v2483
        %v2828 = vpack.c.b16 %v2500, %v2492
        %v2829 = vpack.c.b16 %v2501, %v2493
        %v2830 = vpack.c.b16 %v2502, %v2494
        %v2831 = vpack.c.b16 %v2503, %v2495
        %v2832 = vpack.c.b16 %v2504, %v2496
        %v2833 = vpack.c.b16 %v2505, %v2497
        %v2834 = vpack.c.b16 %v2506, %v2498
        %v2835 = vpack.c.b16 %v2507, %v2499
        %v2836 = vpack.c.b16 %v2516, %v2508
        %v2837 = vpack.c.b16 %v2517, %v2509
        %v2838 = vpack.c.b16 %v2518, %v2510
        %v2839 = vpack.c.b16 %v2519, %v2511
        %v2840 = vpack.c.b16 %v2520, %v2512
        %v2841 = vpack.c.b16 %v2521, %v2513
        %v2842 = vpack.c.b16 %v2522, %v2514
        %v2843 = vpack.c.b16 %v2523, %v2515
        %v2844 = vpack.c.b16 %v2532, %v2524
        %v2845 = vpack.c.b16 %v2533, %v2525
        %v2846 = vpack.c.b16 %v2534, %v2526
        %v2847 = vpack.c.b16 %v2535, %v2527
        %v2848 = vpack.c.b16 %v2536, %v2528
        %v2849 = vpack.c.b16 %v2537, %v2529
        %v2850 = vpack.c.b16 %v2538, %v2530
        %v2851 = vpack.c.b16 %v2539, %v2531
        %v2852 = vpack.c.b16 %v2548, %v2540
        %v2853 = vpack.c.b16 %v2549, %v2541
        %v2854 = vpack.c.b16 %v2550, %v2542
        %v2855 = vpack.c.b16 %v2551, %v2543
        %v2856 = vpack.c.b16 %v2552, %v2544
        %v2857 = vpack.c.b16 %v2553, %v2545
        %v2858 = vpack.c.b16 %v2554, %v2546
        %v2859 = vpack.c.b16 %v2555, %v2547
        %v2860 = vpack.c.b16 %v2564, %v2556
        %v2861 = vpack.c.b16 %v2565, %v2557
        %v2862 = vpack.c.b16 %v2566, %v2558
        %v2863 = vpack.c.b16 %v2567, %v2559
        %v2864 = vpack.c.b16 %v2568, %v2560
        %v2865 = vpack.c.b16 %v2569, %v2561
        %v2866 = vpack.c.b16 %v2570, %v2562
        %v2867 = vpack.c.b16 %v2571, %v2563
        %v2868 = vpack.c.b16 %v2580, %v2572
        %v2869 = vpack.c.b16 %v2581, %v2573
        %v2870 = vpack.c.b16 %v2582, %v2574
        %v2871 = vpack.c.b16 %v2583, %v2575
        %v2872 = vpack.c.b16 %v2584, %v2576
        %v2873 = vpack.c.b16 %v2585, %v2577
        %v2874 = vpack.c.b16 %v2586, %v2578
        %v2875 = vpack.c.b16 %v2587, %v2579
        %v2876 = vpack.c.b16 %v2596, %v2588
        %v2877 = vpack.c.b16 %v2597, %v2589
        %v2878 = vpack.c.b16 %v2598, %v2590
        %v2879 = vpack.c.b16 %v2599, %v2591
        %v2880 = vpack.c.b16 %v2600, %v2592
        %v2881 = vpack.c.b16 %v2601, %v2593
        %v2882 = vpack.c.b16 %v2602, %v2594
        %v2883 = vpack.c.b16 %v2603, %v2595
        %v2884 = vpack.c.b16 %v2612, %v2604
        %v2885 = vpack.c.b16 %v2613, %v2605
        %v2886 = vpack.c.b16 %v2614, %v2606
        %v2887 = vpack.c.b16 %v2615, %v2607
        %v2888 = vpack.c.b16 %v2616, %v2608
        %v2889 = vpack.c.b16 %v2617, %v2609
        %v2890 = vpack.c.b16 %v2618, %v2610
        %v2891 = vpack.c.b16 %v2619, %v2611
        %v2892 = vpack.c.b16 %v2628, %v2620
        %v2893 = vpack.c.b16 %v2629, %v2621
        %v2894 = vpack.c.b16 %v2630, %v2622
        %v2895 = vpack.c.b16 %v2631, %v2623
        %v2896 = vpack.c.b16 %v2632, %v2624
        %v2897 = vpack.c.b16 %v2633, %v2625
        %v2898 = vpack.c.b16 %v2634, %v2626
        %v2899 = vpack.c.b16 %v2635, %v2627
        %v2900 = vpack.c.b16 %v2644, %v2636
        %v2901 = vpack.c.b16 %v2645, %v2637
        %v2902 = vpack.c.b16 %v2646, %v2638
        %v2903 = vpack.c.b16 %v2647, %v2639
        %v2904 = vpack.c.b16 %v2648, %v2640
        %v2905 = vpack.c.b16 %v2649, %v2641
        %v2906 = vpack.c.b16 %v2650, %v2642
        %v2907 = vpack.c.b16 %v2651, %v2643
        %3164 = vmatprep.subr.bf16.mxu0 %v2653
        %3165 = vmatpush1.bf16.msra.mxu0 %v2652
        %3166 = vmatprep.subr.bf16.mxu0 %v2661
        %3167 = vmatpush1.bf16.msra.mxu0 %v2660
        %3168 = vmatprep.subr.bf16.mxu0 %v2669
        %3169 = vmatpush1.bf16.msra.mxu0 %v2668
        %3170 = vmatprep.subr.bf16.mxu0 %v2677
        %3171 = vmatpush1.bf16.msra.mxu0 %v2676
        %3172 = vmatprep.subr.bf16.mxu0 %v2685
        %3173 = vmatpush1.bf16.msra.mxu0 %v2684
        %3174 = vmatprep.subr.bf16.mxu0 %v2693
        %3175 = vmatpush1.bf16.msra.mxu0 %v2692
        %3176 = vmatprep.subr.bf16.mxu0 %v2701
        %3177 = vmatpush1.bf16.msra.mxu0 %v2700
        %3178 = vmatprep.subr.bf16.mxu0 %v2709
        %3179 = vmatpush1.bf16.msra.mxu0 %v2708
        %3180 = vmatprep.subr.bf16.mxu0 %v2717
        %3181 = vmatpush1.bf16.msra.mxu0 %v2716
        %3182 = vmatprep.subr.bf16.mxu0 %v2725
        %3183 = vmatpush1.bf16.msra.mxu0 %v2724
        %3184 = vmatprep.subr.bf16.mxu0 %v2733
        %3185 = vmatpush1.bf16.msra.mxu0 %v2732
        %3186 = vmatprep.subr.bf16.mxu0 %v2741
        %3187 = vmatpush1.bf16.msra.mxu0 %v2740
        %3188 = vmatprep.subr.bf16.mxu0 %v2749
        %3189 = vmatpush1.bf16.msra.mxu0 %v2748
        %3190 = vmatprep.subr.bf16.mxu0 %v2757
        %3191 = vmatpush1.bf16.msra.mxu0 %v2756
        %3192 = vmatprep.subr.bf16.mxu0 %v2765
        %3193 = vmatpush1.bf16.msra.mxu0 %v2764
        %3194 = vmatprep.subr.bf16.mxu0 %v2773
        %3195 = vmatpush1.bf16.msra.mxu0 %v2772
        %3196 = vmatprep.mubr.bf16.mxu0 %v1824
        %3197 = vmatmul.mubr.bf16.gmra.mrb[0].mxu0 %v1823
        %v3198 = vpop.f32.mrb[0].mxu0
        %v3199 = vadd.f32 %v1847, %v3198
        %v3200 = vpop.f32.mrb[0].mxu0
        %v3201 = vadd.f32 %v1851, %v3200
        %v3202 = vpop.f32.mrb[0].mxu0
        %v3203 = vadd.f32 %v1847, %v3202
        %v3204 = vpop.f32.mrb[0].mxu0
        %v3205 = vadd.f32 %v1851, %v3204
        %3206 = vmatprep.mubr.bf16.mxu0 %v1828
        %3207 = vmatmul.mubr.bf16.gmra.mrb[0].mxu0 %v1827
        %v3208 = vpop.f32.mrb[0].mxu0
        %v3209 = vadd.f32 %v1847, %v3208
        %v3210 = vpop.f32.mrb[0].mxu0
        %v3211 = vadd.f32 %v1851, %v3210
        %v3212 = vpop.f32.mrb[0].mxu0
        %v3213 = vadd.f32 %v1847, %v3212
        %v3214 = vpop.f32.mrb[0].mxu0
        %v3215 = vadd.f32 %v1851, %v3214
        %3216 = vmatprep.mubr.bf16.mxu0 %v1832
        %3217 = vmatmul.mubr.bf16.gmra.mrb[0].mxu0 %v1831
        %v3218 = vpop.f32.mrb[0].mxu0
        %v3219 = vadd.f32 %v1847, %v3218
        %v3220 = vpop.f32.mrb[0].mxu0
        %v3221 = vadd.f32 %v1851, %v3220
        %v3222 = vpop.f32.mrb[0].mxu0
        %v3223 = vadd.f32 %v1847, %v3222
        %v3224 = vpop.f32.mrb[0].mxu0
        %v3225 = vadd.f32 %v1851, %v3224
        %3226 = vmatprep.mubr.bf16.mxu0 %v1836
        %3227 = vmatmul.mubr.bf16.gmra.mrb[0].mxu0 %v1835
        %v3228 = vpop.f32.mrb[0].mxu0
        %v3229 = vadd.f32 %v1847, %v3228
        %v3230 = vpop.f32.mrb[0].mxu0
        %v3231 = vadd.f32 %v1851, %v3230
        %v3232 = vpop.f32.mrb[0].mxu0
        %v3233 = vadd.f32 %v1847, %v3232
        %v3234 = vpop.f32.mrb[0].mxu0
        %v3235 = vadd.f32 %v1851, %v3234
        %3236 = vmatprep.mubr.bf16.mxu0 %v1840
        %3237 = vmatmul.mubr.bf16.gmra.mrb[0].mxu0 %v1839
        %v3238 = vpop.f32.mrb[0].mxu0
        %v3239 = vadd.f32 %v1847, %v3238
        %v3240 = vpop.f32.mrb[0].mxu0
        %v3241 = vadd.f32 %v1851, %v3240
        %v3242 = vpop.f32.mrb[0].mxu0
        %v3243 = vadd.f32 %v1847, %v3242
        %v3244 = vpop.f32.mrb[0].mxu0
        %v3245 = vadd.f32 %v1851, %v3244
        %3246 = vdwg.mxu0
        %3247 = vmatprep.subr.bf16.mxu0 %v2781
        %3248 = vmatpush1.bf16.msra.mxu0 %v2780
        %3249 = vmatprep.subr.bf16.mxu0 %v2789
        %3250 = vmatpush1.bf16.msra.mxu0 %v2788
        %3251 = vmatprep.subr.bf16.mxu0 %v2797
        %3252 = vmatpush1.bf16.msra.mxu0 %v2796
        %3253 = vmatprep.subr.bf16.mxu0 %v2805
        %3254 = vmatpush1.bf16.msra.mxu0 %v2804
        %3255 = vmatprep.subr.bf16.mxu0 %v2813
        %3256 = vmatpush1.bf16.msra.mxu0 %v2812
        %3257 = vmatprep.subr.bf16.mxu0 %v2821
        %3258 = vmatpush1.bf16.msra.mxu0 %v2820
        %3259 = vmatprep.subr.bf16.mxu0 %v2829
        %3260 = vmatpush1.bf16.msra.mxu0 %v2828
        %3261 = vmatprep.subr.bf16.mxu0 %v2837
        %3262 = vmatpush1.bf16.msra.mxu0 %v2836
        %3263 = vmatprep.subr.bf16.mxu0 %v2845
        %3264 = vmatpush1.bf16.msra.mxu0 %v2844
        %3265 = vmatprep.subr.bf16.mxu0 %v2853
        %3266 = vmatpush1.bf16.msra.mxu0 %v2852
        %3267 = vmatprep.subr.bf16.mxu0 %v2861
        %3268 = vmatpush1.bf16.msra.mxu0 %v2860
        %3269 = vmatprep.subr.bf16.mxu0 %v2869
        %3270 = vmatpush1.bf16.msra.mxu0 %v2868
        %3271 = vmatprep.subr.bf16.mxu0 %v2877
        %3272 = vmatpush1.bf16.msra.mxu0 %v2876
        %3273 = vmatprep.subr.bf16.mxu0 %v2885
        %3274 = vmatpush1.bf16.msra.mxu0 %v2884
        %3275 = vmatprep.subr.bf16.mxu0 %v2893
        %3276 = vmatpush1.bf16.msra.mxu0 %v2892
        %3277 = vmatprep.subr.bf16.mxu0 %v2901
        %3278 = vmatpush1.bf16.msra.mxu0 %v2900
        %3279 = vmatprep.mubr.bf16.mxu0 %v1826
        %3280 = vmatmul.mubr.bf16.gmra.mrb[0].mxu0 %v1825
        %v3281 = vpop.f32.mrb[0].mxu0
        %v3282 = vadd.f32 %v3199, %v3281
        %v3283 = vpop.f32.mrb[0].mxu0
        %v3284 = vadd.f32 %v3201, %v3283
        %v3285 = vpop.f32.mrb[0].mxu0
        %v3286 = vadd.f32 %v3203, %v3285
        %v3287 = vpop.f32.mrb[0].mxu0
        %v3288 = vadd.f32 %v3205, %v3287
        %3289 = vmatprep.mubr.bf16.mxu0 %v1830
        %3290 = vmatmul.mubr.bf16.gmra.mrb[0].mxu0 %v1829
        %v3291 = vpop.f32.mrb[0].mxu0
        %v3292 = vadd.f32 %v3209, %v3291
        %v3293 = vpop.f32.mrb[0].mxu0
        %v3294 = vadd.f32 %v3211, %v3293
        %v3295 = vpop.f32.mrb[0].mxu0
        %v3296 = vadd.f32 %v3213, %v3295
        %v3297 = vpop.f32.mrb[0].mxu0
        %v3298 = vadd.f32 %v3215, %v3297
        %3299 = vmatprep.mubr.bf16.mxu0 %v1834
        %3300 = vmatmul.mubr.bf16.gmra.mrb[0].mxu0 %v1833
        %v3301 = vpop.f32.mrb[0].mxu0
        %v3302 = vadd.f32 %v3219, %v3301
        %v3303 = vpop.f32.mrb[0].mxu0
        %v3304 = vadd.f32 %v3221, %v3303
        %v3305 = vpop.f32.mrb[0].mxu0
        %v3306 = vadd.f32 %v3223, %v3305
        %v3307 = vpop.f32.mrb[0].mxu0
        %v3308 = vadd.f32 %v3225, %v3307
        %3309 = vmatprep.mubr.bf16.mxu0 %v1838
        %3310 = vmatmul.mubr.bf16.gmra.mrb[0].mxu0 %v1837
        %v3311 = vpop.f32.mrb[0].mxu0
        %v3312 = vadd.f32 %v3229, %v3311
        %v3313 = vpop.f32.mrb[0].mxu0
        %v3314 = vadd.f32 %v3231, %v3313
        %v3315 = vpop.f32.mrb[0].mxu0
        %v3316 = vadd.f32 %v3233, %v3315
        %v3317 = vpop.f32.mrb[0].mxu0
        %v3318 = vadd.f32 %v3235, %v3317
        %3319 = vmatprep.mubr.bf16.mxu0 %v1842
        %3320 = vmatmul.mubr.bf16.gmra.mrb[0].mxu0 %v1841
        %v3321 = vpop.f32.mrb[0].mxu0
        %v3322 = vadd.f32 %v3239, %v3321
        %v3323 = vpop.f32.mrb[0].mxu0
        %v3324 = vadd.f32 %v3241, %v3323
        %v3325 = vpop.f32.mrb[0].mxu0
        %v3326 = vadd.f32 %v3243, %v3325
        %v3327 = vpop.f32.mrb[0].mxu0
        %v3328 = vadd.f32 %v3245, %v3327
        %3329 = vdwg.mxu0
        %3330 = vmatprep.subr.bf16.mxu0 %v2655
        %3331 = vmatpush1.bf16.msra.mxu0 %v2654
        %3332 = vmatprep.subr.bf16.mxu0 %v2663
        %3333 = vmatpush1.bf16.msra.mxu0 %v2662
        %3334 = vmatprep.subr.bf16.mxu0 %v2671
        %3335 = vmatpush1.bf16.msra.mxu0 %v2670
        %3336 = vmatprep.subr.bf16.mxu0 %v2679
        %3337 = vmatpush1.bf16.msra.mxu0 %v2678
        %3338 = vmatprep.subr.bf16.mxu0 %v2687
        %3339 = vmatpush1.bf16.msra.mxu0 %v2686
        %3340 = vmatprep.subr.bf16.mxu0 %v2695
        %3341 = vmatpush1.bf16.msra.mxu0 %v2694
        %3342 = vmatprep.subr.bf16.mxu0 %v2703
        %3343 = vmatpush1.bf16.msra.mxu0 %v2702
        %3344 = vmatprep.subr.bf16.mxu0 %v2711
        %3345 = vmatpush1.bf16.msra.mxu0 %v2710
        %3346 = vmatprep.subr.bf16.mxu0 %v2719
        %3347 = vmatpush1.bf16.msra.mxu0 %v2718
        %3348 = vmatprep.subr.bf16.mxu0 %v2727
        %3349 = vmatpush1.bf16.msra.mxu0 %v2726
        %3350 = vmatprep.subr.bf16.mxu0 %v2735
        %3351 = vmatpush1.bf16.msra.mxu0 %v2734
        %3352 = vmatprep.subr.bf16.mxu0 %v2743
        %3353 = vmatpush1.bf16.msra.mxu0 %v2742
        %3354 = vmatprep.subr.bf16.mxu0 %v2751
        %3355 = vmatpush1.bf16.msra.mxu0 %v2750
        %3356 = vmatprep.subr.bf16.mxu0 %v2759
        %3357 = vmatpush1.bf16.msra.mxu0 %v2758
        %3358 = vmatprep.subr.bf16.mxu0 %v2767
        %3359 = vmatpush1.bf16.msra.mxu0 %v2766
        %3360 = vmatprep.subr.bf16.mxu0 %v2775
        %3361 = vmatpush1.bf16.msra.mxu0 %v2774
        %3362 = vmatprep.mubr.bf16.mxu0 %v1824
        %3363 = vmatmul.mubr.bf16.gmra.mrb[0].mxu0 %v1823
        %v3364 = vpop.f32.mrb[0].mxu0
        %v3365 = vadd.f32 %v1855, %v3364
        %v3366 = vpop.f32.mrb[0].mxu0
        %v3367 = vadd.f32 %v1859, %v3366
        %v3368 = vpop.f32.mrb[0].mxu0
        %v3369 = vadd.f32 %v1855, %v3368
        %v3370 = vpop.f32.mrb[0].mxu0
        %v3371 = vadd.f32 %v1859, %v3370
        %3372 = vmatprep.mubr.bf16.mxu0 %v1828
        %3373 = vmatmul.mubr.bf16.gmra.mrb[0].mxu0 %v1827
        %v3374 = vpop.f32.mrb[0].mxu0
        %v3375 = vadd.f32 %v1855, %v3374
        %v3376 = vpop.f32.mrb[0].mxu0
        %v3377 = vadd.f32 %v1859, %v3376
        %v3378 = vpop.f32.mrb[0].mxu0
        %v3379 = vadd.f32 %v1855, %v3378
        %v3380 = vpop.f32.mrb[0].mxu0
        %v3381 = vadd.f32 %v1859, %v3380
        %3382 = vmatprep.mubr.bf16.mxu0 %v1832
        %3383 = vmatmul.mubr.bf16.gmra.mrb[0].mxu0 %v1831
        %v3384 = vpop.f32.mrb[0].mxu0
        %v3385 = vadd.f32 %v1855, %v3384
        %v3386 = vpop.f32.mrb[0].mxu0
        %v3387 = vadd.f32 %v1859, %v3386
        %v3388 = vpop.f32.mrb[0].mxu0
        %v3389 = vadd.f32 %v1855, %v3388
        %v3390 = vpop.f32.mrb[0].mxu0
        %v3391 = vadd.f32 %v1859, %v3390
        %3392 = vmatprep.mubr.bf16.mxu0 %v1836
        %3393 = vmatmul.mubr.bf16.gmra.mrb[0].mxu0 %v1835
        %v3394 = vpop.f32.mrb[0].mxu0
        %v3395 = vadd.f32 %v1855, %v3394
        %v3396 = vpop.f32.mrb[0].mxu0
        %v3397 = vadd.f32 %v1859, %v3396
        %v3398 = vpop.f32.mrb[0].mxu0
        %v3399 = vadd.f32 %v1855, %v3398
        %v3400 = vpop.f32.mrb[0].mxu0
        %v3401 = vadd.f32 %v1859, %v3400
        %3402 = vmatprep.mubr.bf16.mxu0 %v1840
        %3403 = vmatmul.mubr.bf16.gmra.mrb[0].mxu0 %v1839
        %v3404 = vpop.f32.mrb[0].mxu0
        %v3405 = vadd.f32 %v1855, %v3404
        %v3406 = vpop.f32.mrb[0].mxu0
        %v3407 = vadd.f32 %v1859, %v3406
        %v3408 = vpop.f32.mrb[0].mxu0
        %v3409 = vadd.f32 %v1855, %v3408
        %v3410 = vpop.f32.mrb[0].mxu0
        %v3411 = vadd.f32 %v1859, %v3410
        %3412 = vdwg.mxu0
        %3413 = vmatprep.subr.bf16.mxu0 %v2783
        %3414 = vmatpush1.bf16.msra.mxu0 %v2782
        %3415 = vmatprep.subr.bf16.mxu0 %v2791
        %3416 = vmatpush1.bf16.msra.mxu0 %v2790
        %3417 = vmatprep.subr.bf16.mxu0 %v2799
        %3418 = vmatpush1.bf16.msra.mxu0 %v2798
        %3419 = vmatprep.subr.bf16.mxu0 %v2807
        %3420 = vmatpush1.bf16.msra.mxu0 %v2806
        %3421 = vmatprep.subr.bf16.mxu0 %v2815
        %3422 = vmatpush1.bf16.msra.mxu0 %v2814
        %3423 = vmatprep.subr.bf16.mxu0 %v2823
        %3424 = vmatpush1.bf16.msra.mxu0 %v2822
        %3425 = vmatprep.subr.bf16.mxu0 %v2831
        %3426 = vmatpush1.bf16.msra.mxu0 %v2830
        %3427 = vmatprep.subr.bf16.mxu0 %v2839
        %3428 = vmatpush1.bf16.msra.mxu0 %v2838
        %3429 = vmatprep.subr.bf16.mxu0 %v2847
        %3430 = vmatpush1.bf16.msra.mxu0 %v2846
        %3431 = vmatprep.subr.bf16.mxu0 %v2855
        %3432 = vmatpush1.bf16.msra.mxu0 %v2854
        %3433 = vmatprep.subr.bf16.mxu0 %v2863
        %3434 = vmatpush1.bf16.msra.mxu0 %v2862
        %3435 = vmatprep.subr.bf16.mxu0 %v2871
        %3436 = vmatpush1.bf16.msra.mxu0 %v2870
        %3437 = vmatprep.subr.bf16.mxu0 %v2879
        %3438 = vmatpush1.bf16.msra.mxu0 %v2878
        %3439 = vmatprep.subr.bf16.mxu0 %v2887
        %3440 = vmatpush1.bf16.msra.mxu0 %v2886
        %3441 = vmatprep.subr.bf16.mxu0 %v2895
        %3442 = vmatpush1.bf16.msra.mxu0 %v2894
        %3443 = vmatprep.subr.bf16.mxu0 %v2903
        %3444 = vmatpush1.bf16.msra.mxu0 %v2902
        %3445 = vmatprep.mubr.bf16.mxu0 %v1826
        %3446 = vmatmul.mubr.bf16.gmra.mrb[0].mxu0 %v1825
        %v3447 = vpop.f32.mrb[0].mxu0
        %v3448 = vadd.f32 %v3365, %v3447
        %v3449 = vpop.f32.mrb[0].mxu0
        %v3450 = vadd.f32 %v3367, %v3449
        %v3451 = vpop.f32.mrb[0].mxu0
        %v3452 = vadd.f32 %v3369, %v3451
        %v3453 = vpop.f32.mrb[0].mxu0
        %v3454 = vadd.f32 %v3371, %v3453
        %3455 = vmatprep.mubr.bf16.mxu0 %v1830
        %3456 = vmatmul.mubr.bf16.gmra.mrb[0].mxu0 %v1829
        %v3457 = vpop.f32.mrb[0].mxu0
        %v3458 = vadd.f32 %v3375, %v3457
        %v3459 = vpop.f32.mrb[0].mxu0
        %v3460 = vadd.f32 %v3377, %v3459
        %v3461 = vpop.f32.mrb[0].mxu0
        %v3462 = vadd.f32 %v3379, %v3461
        %v3463 = vpop.f32.mrb[0].mxu0
        %v3464 = vadd.f32 %v3381, %v3463
        %3465 = vmatprep.mubr.bf16.mxu0 %v1834
        %3466 = vmatmul.mubr.bf16.gmra.mrb[0].mxu0 %v1833
        %v3467 = vpop.f32.mrb[0].mxu0
        %v3468 = vadd.f32 %v3385, %v3467
        %v3469 = vpop.f32.mrb[0].mxu0
        %v3470 = vadd.f32 %v3387, %v3469
        %v3471 = vpop.f32.mrb[0].mxu0
        %v3472 = vadd.f32 %v3389, %v3471
        %v3473 = vpop.f32.mrb[0].mxu0
        %v3474 = vadd.f32 %v3391, %v3473
        %3475 = vmatprep.mubr.bf16.mxu0 %v1838
        %3476 = vmatmul.mubr.bf16.gmra.mrb[0].mxu0 %v1837
        %v3477 = vpop.f32.mrb[0].mxu0
        %v3478 = vadd.f32 %v3395, %v3477
        %v3479 = vpop.f32.mrb[0].mxu0
        %v3480 = vadd.f32 %v3397, %v3479
        %v3481 = vpop.f32.mrb[0].mxu0
        %v3482 = vadd.f32 %v3399, %v3481
        %v3483 = vpop.f32.mrb[0].mxu0
        %v3484 = vadd.f32 %v3401, %v3483
        %3485 = vmatprep.mubr.bf16.mxu0 %v1842
        %3486 = vmatmul.mubr.bf16.gmra.mrb[0].mxu0 %v1841
        %v3487 = vpop.f32.mrb[0].mxu0
        %v3488 = vadd.f32 %v3405, %v3487
        %v3489 = vpop.f32.mrb[0].mxu0
        %v3490 = vadd.f32 %v3407, %v3489
        %v3491 = vpop.f32.mrb[0].mxu0
        %v3492 = vadd.f32 %v3409, %v3491
        %v3493 = vpop.f32.mrb[0].mxu0
        %v3494 = vadd.f32 %v3411, %v3493
        %3495 = vdwg.mxu0
        %3496 = vmatprep.subr.bf16.mxu0 %v2657
        %3497 = vmatpush1.bf16.msra.mxu0 %v2656
        %3498 = vmatprep.subr.bf16.mxu0 %v2665
        %3499 = vmatpush1.bf16.msra.mxu0 %v2664
        %3500 = vmatprep.subr.bf16.mxu0 %v2673
        %3501 = vmatpush1.bf16.msra.mxu0 %v2672
        %3502 = vmatprep.subr.bf16.mxu0 %v2681
        %3503 = vmatpush1.bf16.msra.mxu0 %v2680
        %3504 = vmatprep.subr.bf16.mxu0 %v2689
        %3505 = vmatpush1.bf16.msra.mxu0 %v2688
        %3506 = vmatprep.subr.bf16.mxu0 %v2697
        %3507 = vmatpush1.bf16.msra.mxu0 %v2696
        %3508 = vmatprep.subr.bf16.mxu0 %v2705
        %3509 = vmatpush1.bf16.msra.mxu0 %v2704
        %3510 = vmatprep.subr.bf16.mxu0 %v2713
        %3511 = vmatpush1.bf16.msra.mxu0 %v2712
        %3512 = vmatprep.subr.bf16.mxu0 %v2721
        %3513 = vmatpush1.bf16.msra.mxu0 %v2720
        %3514 = vmatprep.subr.bf16.mxu0 %v2729
        %3515 = vmatpush1.bf16.msra.mxu0 %v2728
        %3516 = vmatprep.subr.bf16.mxu0 %v2737
        %3517 = vmatpush1.bf16.msra.mxu0 %v2736
        %3518 = vmatprep.subr.bf16.mxu0 %v2745
        %3519 = vmatpush1.bf16.msra.mxu0 %v2744
        %3520 = vmatprep.subr.bf16.mxu0 %v2753
        %3521 = vmatpush1.bf16.msra.mxu0 %v2752
        %3522 = vmatprep.subr.bf16.mxu0 %v2761
        %3523 = vmatpush1.bf16.msra.mxu0 %v2760
        %3524 = vmatprep.subr.bf16.mxu0 %v2769
        %3525 = vmatpush1.bf16.msra.mxu0 %v2768
        %3526 = vmatprep.subr.bf16.mxu0 %v2777
        %3527 = vmatpush1.bf16.msra.mxu0 %v2776
        %3528 = vmatprep.mubr.bf16.mxu0 %v1824
        %3529 = vmatmul.mubr.bf16.gmra.mrb[0].mxu0 %v1823
        %v3530 = vpop.f32.mrb[0].mxu0
        %v3531 = vadd.f32 %v1863, %v3530
        %v3532 = vpop.f32.mrb[0].mxu0
        %v3533 = vadd.f32 %v1867, %v3532
        %v3534 = vpop.f32.mrb[0].mxu0
        %v3535 = vadd.f32 %v1863, %v3534
        %v3536 = vpop.f32.mrb[0].mxu0
        %v3537 = vadd.f32 %v1867, %v3536
        %3538 = vmatprep.mubr.bf16.mxu0 %v1828
        %3539 = vmatmul.mubr.bf16.gmra.mrb[0].mxu0 %v1827
        %v3540 = vpop.f32.mrb[0].mxu0
        %v3541 = vadd.f32 %v1863, %v3540
        %v3542 = vpop.f32.mrb[0].mxu0
        %v3543 = vadd.f32 %v1867, %v3542
        %v3544 = vpop.f32.mrb[0].mxu0
        %v3545 = vadd.f32 %v1863, %v3544
        %v3546 = vpop.f32.mrb[0].mxu0
        %v3547 = vadd.f32 %v1867, %v3546
        %3548 = vmatprep.mubr.bf16.mxu0 %v1832
        %3549 = vmatmul.mubr.bf16.gmra.mrb[0].mxu0 %v1831
        %v3550 = vpop.f32.mrb[0].mxu0
        %v3551 = vadd.f32 %v1863, %v3550
        %v3552 = vpop.f32.mrb[0].mxu0
        %v3553 = vadd.f32 %v1867, %v3552
        %v3554 = vpop.f32.mrb[0].mxu0
        %v3555 = vadd.f32 %v1863, %v3554
        %v3556 = vpop.f32.mrb[0].mxu0
        %v3557 = vadd.f32 %v1867, %v3556
        %3558 = vmatprep.mubr.bf16.mxu0 %v1836
        %3559 = vmatmul.mubr.bf16.gmra.mrb[0].mxu0 %v1835
        %v3560 = vpop.f32.mrb[0].mxu0
        %v3561 = vadd.f32 %v1863, %v3560
        %v3562 = vpop.f32.mrb[0].mxu0
        %v3563 = vadd.f32 %v1867, %v3562
        %v3564 = vpop.f32.mrb[0].mxu0
        %v3565 = vadd.f32 %v1863, %v3564
        %v3566 = vpop.f32.mrb[0].mxu0
        %v3567 = vadd.f32 %v1867, %v3566
        %3568 = vmatprep.mubr.bf16.mxu0 %v1840
        %3569 = vmatmul.mubr.bf16.gmra.mrb[0].mxu0 %v1839
        %v3570 = vpop.f32.mrb[0].mxu0
        %v3571 = vadd.f32 %v1863, %v3570
        %v3572 = vpop.f32.mrb[0].mxu0
        %v3573 = vadd.f32 %v1867, %v3572
        %v3574 = vpop.f32.mrb[0].mxu0
        %v3575 = vadd.f32 %v1863, %v3574
        %v3576 = vpop.f32.mrb[0].mxu0
        %v3577 = vadd.f32 %v1867, %v3576
        %3578 = vdwg.mxu0
        %3579 = vmatprep.subr.bf16.mxu0 %v2785
        %3580 = vmatpush1.bf16.msra.mxu0 %v2784
        %3581 = vmatprep.subr.bf16.mxu0 %v2793
        %3582 = vmatpush1.bf16.msra.mxu0 %v2792
        %3583 = vmatprep.subr.bf16.mxu0 %v2801
        %3584 = vmatpush1.bf16.msra.mxu0 %v2800
        %3585 = vmatprep.subr.bf16.mxu0 %v2809
        %3586 = vmatpush1.bf16.msra.mxu0 %v2808
        %3587 = vmatprep.subr.bf16.mxu0 %v2817
        %3588 = vmatpush1.bf16.msra.mxu0 %v2816
        %3589 = vmatprep.subr.bf16.mxu0 %v2825
        %3590 = vmatpush1.bf16.msra.mxu0 %v2824
        %3591 = vmatprep.subr.bf16.mxu0 %v2833
        %3592 = vmatpush1.bf16.msra.mxu0 %v2832
        %3593 = vmatprep.subr.bf16.mxu0 %v2841
        %3594 = vmatpush1.bf16.msra.mxu0 %v2840
        %3595 = vmatprep.subr.bf16.mxu0 %v2849
        %3596 = vmatpush1.bf16.msra.mxu0 %v2848
        %3597 = vmatprep.subr.bf16.mxu0 %v2857
        %3598 = vmatpush1.bf16.msra.mxu0 %v2856
        %3599 = vmatprep.subr.bf16.mxu0 %v2865
        %3600 = vmatpush1.bf16.msra.mxu0 %v2864
        %3601 = vmatprep.subr.bf16.mxu0 %v2873
        %3602 = vmatpush1.bf16.msra.mxu0 %v2872
        %3603 = vmatprep.subr.bf16.mxu0 %v2881
        %3604 = vmatpush1.bf16.msra.mxu0 %v2880
        %3605 = vmatprep.subr.bf16.mxu0 %v2889
        %3606 = vmatpush1.bf16.msra.mxu0 %v2888
        %3607 = vmatprep.subr.bf16.mxu0 %v2897
        %3608 = vmatpush1.bf16.msra.mxu0 %v2896
        %3609 = vmatprep.subr.bf16.mxu0 %v2905
        %3610 = vmatpush1.bf16.msra.mxu0 %v2904
        %3611 = vmatprep.mubr.bf16.mxu0 %v1826
        %3612 = vmatmul.mubr.bf16.gmra.mrb[0].mxu0 %v1825
        %v3613 = vpop.f32.mrb[0].mxu0
        %v3614 = vadd.f32 %v3531, %v3613
        %v3615 = vpop.f32.mrb[0].mxu0
        %v3616 = vadd.f32 %v3533, %v3615
        %v3617 = vpop.f32.mrb[0].mxu0
        %v3618 = vadd.f32 %v3535, %v3617
        %v3619 = vpop.f32.mrb[0].mxu0
        %v3620 = vadd.f32 %v3537, %v3619
        %3621 = vmatprep.mubr.bf16.mxu0 %v1830
        %3622 = vmatmul.mubr.bf16.gmra.mrb[0].mxu0 %v1829
        %v3623 = vpop.f32.mrb[0].mxu0
        %v3624 = vadd.f32 %v3541, %v3623
        %v3625 = vpop.f32.mrb[0].mxu0
        %v3626 = vadd.f32 %v3543, %v3625
        %v3627 = vpop.f32.mrb[0].mxu0
        %v3628 = vadd.f32 %v3545, %v3627
        %v3629 = vpop.f32.mrb[0].mxu0
        %v3630 = vadd.f32 %v3547, %v3629
        %3631 = vmatprep.mubr.bf16.mxu0 %v1834
        %3632 = vmatmul.mubr.bf16.gmra.mrb[0].mxu0 %v1833
        %v3633 = vpop.f32.mrb[0].mxu0
        %v3634 = vadd.f32 %v3551, %v3633
        %v3635 = vpop.f32.mrb[0].mxu0
        %v3636 = vadd.f32 %v3553, %v3635
        %v3637 = vpop.f32.mrb[0].mxu0
        %v3638 = vadd.f32 %v3555, %v3637
        %v3639 = vpop.f32.mrb[0].mxu0
        %v3640 = vadd.f32 %v3557, %v3639
        %3641 = vmatprep.mubr.bf16.mxu0 %v1838
        %3642 = vmatmul.mubr.bf16.gmra.mrb[0].mxu0 %v1837
        %v3643 = vpop.f32.mrb[0].mxu0
        %v3644 = vadd.f32 %v3561, %v3643
        %v3645 = vpop.f32.mrb[0].mxu0
        %v3646 = vadd.f32 %v3563, %v3645
        %v3647 = vpop.f32.mrb[0].mxu0
        %v3648 = vadd.f32 %v3565, %v3647
        %v3649 = vpop.f32.mrb[0].mxu0
        %v3650 = vadd.f32 %v3567, %v3649
        %3651 = vmatprep.mubr.bf16.mxu0 %v1842
        %3652 = vmatmul.mubr.bf16.gmra.mrb[0].mxu0 %v1841
        %v3653 = vpop.f32.mrb[0].mxu0
        %v3654 = vadd.f32 %v3571, %v3653
        %v3655 = vpop.f32.mrb[0].mxu0
        %v3656 = vadd.f32 %v3573, %v3655
        %v3657 = vpop.f32.mrb[0].mxu0
        %v3658 = vadd.f32 %v3575, %v3657
        %v3659 = vpop.f32.mrb[0].mxu0
        %v3660 = vadd.f32 %v3577, %v3659
        %3661 = vdwg.mxu0
        %3662 = vmatprep.subr.bf16.mxu0 %v2659
        %3663 = vmatpush1.bf16.msra.mxu0 %v2658
        %3664 = vmatprep.subr.bf16.mxu0 %v2667
        %3665 = vmatpush1.bf16.msra.mxu0 %v2666
        %3666 = vmatprep.subr.bf16.mxu0 %v2675
        %3667 = vmatpush1.bf16.msra.mxu0 %v2674
        %3668 = vmatprep.subr.bf16.mxu0 %v2683
        %3669 = vmatpush1.bf16.msra.mxu0 %v2682
        %3670 = vmatprep.subr.bf16.mxu0 %v2691
        %3671 = vmatpush1.bf16.msra.mxu0 %v2690
        %3672 = vmatprep.subr.bf16.mxu0 %v2699
        %3673 = vmatpush1.bf16.msra.mxu0 %v2698
        %3674 = vmatprep.subr.bf16.mxu0 %v2707
        %3675 = vmatpush1.bf16.msra.mxu0 %v2706
        %3676 = vmatprep.subr.bf16.mxu0 %v2715
        %3677 = vmatpush1.bf16.msra.mxu0 %v2714
        %3678 = vmatprep.subr.bf16.mxu0 %v2723
        %3679 = vmatpush1.bf16.msra.mxu0 %v2722
        %3680 = vmatprep.subr.bf16.mxu0 %v2731
        %3681 = vmatpush1.bf16.msra.mxu0 %v2730
        %3682 = vmatprep.subr.bf16.mxu0 %v2739
        %3683 = vmatpush1.bf16.msra.mxu0 %v2738
        %3684 = vmatprep.subr.bf16.mxu0 %v2747
        %3685 = vmatpush1.bf16.msra.mxu0 %v2746
        %3686 = vmatprep.subr.bf16.mxu0 %v2755
        %3687 = vmatpush1.bf16.msra.mxu0 %v2754
        %3688 = vmatprep.subr.bf16.mxu0 %v2763
        %3689 = vmatpush1.bf16.msra.mxu0 %v2762
        %3690 = vmatprep.subr.bf16.mxu0 %v2771
        %3691 = vmatpush1.bf16.msra.mxu0 %v2770
        %3692 = vmatprep.subr.bf16.mxu0 %v2779
        %3693 = vmatpush1.bf16.msra.mxu0 %v2778
        %3694 = vmatprep.mubr.bf16.mxu0 %v1824
        %3695 = vmatmul.mubr.bf16.gmra.mrb[0].mxu0 %v1823
        %v3696 = vpop.f32.mrb[0].mxu0
        %v3697 = vadd.f32 %v1871, %v3696
        %v3698 = vpop.f32.mrb[0].mxu0
        %v3699 = vadd.f32 %v1875, %v3698
        %v3700 = vpop.f32.mrb[0].mxu0
        %v3701 = vadd.f32 %v1871, %v3700
        %v3702 = vpop.f32.mrb[0].mxu0
        %v3703 = vadd.f32 %v1875, %v3702
        %3704 = vmatprep.mubr.bf16.mxu0 %v1828
        %3705 = vmatmul.mubr.bf16.gmra.mrb[0].mxu0 %v1827
        %v3706 = vpop.f32.mrb[0].mxu0
        %v3707 = vadd.f32 %v1871, %v3706
        %v3708 = vpop.f32.mrb[0].mxu0
        %v3709 = vadd.f32 %v1875, %v3708
        %v3710 = vpop.f32.mrb[0].mxu0
        %v3711 = vadd.f32 %v1871, %v3710
        %v3712 = vpop.f32.mrb[0].mxu0
        %v3713 = vadd.f32 %v1875, %v3712
        %3714 = vmatprep.mubr.bf16.mxu0 %v1832
        %3715 = vmatmul.mubr.bf16.gmra.mrb[0].mxu0 %v1831
        %v3716 = vpop.f32.mrb[0].mxu0
        %v3717 = vadd.f32 %v1871, %v3716
        %v3718 = vpop.f32.mrb[0].mxu0
        %v3719 = vadd.f32 %v1875, %v3718
        %v3720 = vpop.f32.mrb[0].mxu0
        %v3721 = vadd.f32 %v1871, %v3720
        %v3722 = vpop.f32.mrb[0].mxu0
        %v3723 = vadd.f32 %v1875, %v3722
        %3724 = vmatprep.mubr.bf16.mxu0 %v1836
        %3725 = vmatmul.mubr.bf16.gmra.mrb[0].mxu0 %v1835
        %v3726 = vpop.f32.mrb[0].mxu0
        %v3727 = vadd.f32 %v1871, %v3726
        %v3728 = vpop.f32.mrb[0].mxu0
        %v3729 = vadd.f32 %v1875, %v3728
        %v3730 = vpop.f32.mrb[0].mxu0
        %v3731 = vadd.f32 %v1871, %v3730
        %v3732 = vpop.f32.mrb[0].mxu0
        %v3733 = vadd.f32 %v1875, %v3732
        %3734 = vmatprep.mubr.bf16.mxu0 %v1840
        %3735 = vmatmul.mubr.bf16.gmra.mrb[0].mxu0 %v1839
        %v3736 = vpop.f32.mrb[0].mxu0
        %v3737 = vadd.f32 %v1871, %v3736
        %v3738 = vpop.f32.mrb[0].mxu0
        %v3739 = vadd.f32 %v1875, %v3738
        %v3740 = vpop.f32.mrb[0].mxu0
        %v3741 = vadd.f32 %v1871, %v3740
        %v3742 = vpop.f32.mrb[0].mxu0
        %v3743 = vadd.f32 %v1875, %v3742
        %3744 = vdwg.mxu0
        %3745 = vmatprep.subr.bf16.mxu0 %v2787
        %3746 = vmatpush1.bf16.msra.mxu0 %v2786
        %3747 = vmatprep.subr.bf16.mxu0 %v2795
        %3748 = vmatpush1.bf16.msra.mxu0 %v2794
        %3749 = vmatprep.subr.bf16.mxu0 %v2803
        %3750 = vmatpush1.bf16.msra.mxu0 %v2802
        %3751 = vmatprep.subr.bf16.mxu0 %v2811
        %3752 = vmatpush1.bf16.msra.mxu0 %v2810
        %3753 = vmatprep.subr.bf16.mxu0 %v2819
        %3754 = vmatpush1.bf16.msra.mxu0 %v2818
        %3755 = vmatprep.subr.bf16.mxu0 %v2827
        %3756 = vmatpush1.bf16.msra.mxu0 %v2826
        %3757 = vmatprep.subr.bf16.mxu0 %v2835
        %3758 = vmatpush1.bf16.msra.mxu0 %v2834
        %3759 = vmatprep.subr.bf16.mxu0 %v2843
        %3760 = vmatpush1.bf16.msra.mxu0 %v2842
        %3761 = vmatprep.subr.bf16.mxu0 %v2851
        %3762 = vmatpush1.bf16.msra.mxu0 %v2850
        %3763 = vmatprep.subr.bf16.mxu0 %v2859
        %3764 = vmatpush1.bf16.msra.mxu0 %v2858
        %3765 = vmatprep.subr.bf16.mxu0 %v2867
        %3766 = vmatpush1.bf16.msra.mxu0 %v2866
        %3767 = vmatprep.subr.bf16.mxu0 %v2875
        %3768 = vmatpush1.bf16.msra.mxu0 %v2874
        %3769 = vmatprep.subr.bf16.mxu0 %v2883
        %3770 = vmatpush1.bf16.msra.mxu0 %v2882
        %3771 = vmatprep.subr.bf16.mxu0 %v2891
        %3772 = vmatpush1.bf16.msra.mxu0 %v2890
        %3773 = vmatprep.subr.bf16.mxu0 %v2899
        %3774 = vmatpush1.bf16.msra.mxu0 %v2898
        %3775 = vmatprep.subr.bf16.mxu0 %v2907
        %3776 = vmatpush1.bf16.msra.mxu0 %v2906
        %3777 = vmatprep.mubr.bf16.mxu0 %v1826
        %3778 = vmatmul.mubr.bf16.gmra.mrb[0].mxu0 %v1825
        %v3779 = vpop.f32.mrb[0].mxu0
        %v3780 = vadd.f32 %v3697, %v3779
        %v3781 = vpop.f32.mrb[0].mxu0
        %v3782 = vadd.f32 %v3699, %v3781
        %v3783 = vpop.f32.mrb[0].mxu0
        %v3784 = vadd.f32 %v3701, %v3783
        %v3785 = vpop.f32.mrb[0].mxu0
        %v3786 = vadd.f32 %v3703, %v3785
        %3787 = vmatprep.mubr.bf16.mxu0 %v1830
        %3788 = vmatmul.mubr.bf16.gmra.mrb[0].mxu0 %v1829
        %v3789 = vpop.f32.mrb[0].mxu0
        %v3790 = vadd.f32 %v3707, %v3789
        %v3791 = vpop.f32.mrb[0].mxu0
        %v3792 = vadd.f32 %v3709, %v3791
        %v3793 = vpop.f32.mrb[0].mxu0
        %v3794 = vadd.f32 %v3711, %v3793
        %v3795 = vpop.f32.mrb[0].mxu0
        %v3796 = vadd.f32 %v3713, %v3795
        %3797 = vmatprep.mubr.bf16.mxu0 %v1834
        %3798 = vmatmul.mubr.bf16.gmra.mrb[0].mxu0 %v1833
        %v3799 = vpop.f32.mrb[0].mxu0
        %v3800 = vadd.f32 %v3717, %v3799
        %v3801 = vpop.f32.mrb[0].mxu0
        %v3802 = vadd.f32 %v3719, %v3801
        %v3803 = vpop.f32.mrb[0].mxu0
        %v3804 = vadd.f32 %v3721, %v3803
        %v3805 = vpop.f32.mrb[0].mxu0
        %v3806 = vadd.f32 %v3723, %v3805
        %3807 = vmatprep.mubr.bf16.mxu0 %v1838
        %3808 = vmatmul.mubr.bf16.gmra.mrb[0].mxu0 %v1837
        %v3809 = vpop.f32.mrb[0].mxu0
        %v3810 = vadd.f32 %v3727, %v3809
        %v3811 = vpop.f32.mrb[0].mxu0
        %v3812 = vadd.f32 %v3729, %v3811
        %v3813 = vpop.f32.mrb[0].mxu0
        %v3814 = vadd.f32 %v3731, %v3813
        %v3815 = vpop.f32.mrb[0].mxu0
        %v3816 = vadd.f32 %v3733, %v3815
        %3817 = vmatprep.mubr.bf16.mxu0 %v1842
        %3818 = vmatmul.mubr.bf16.gmra.mrb[0].mxu0 %v1841
        %v3819 = vpop.f32.mrb[0].mxu0
        %v3820 = vadd.f32 %v3737, %v3819
        %v3821 = vpop.f32.mrb[0].mxu0
        %v3822 = vadd.f32 %v3739, %v3821
        %v3823 = vpop.f32.mrb[0].mxu0
        %v3824 = vadd.f32 %v3741, %v3823
        %v3825 = vpop.f32.mrb[0].mxu0
        %v3826 = vadd.f32 %v3743, %v3825
        %3827 = vdwg.mxu0
        %v3828 = vmax.f32 %v3282, 0.0
        %v3829 = vmax.f32 %v3284, 0.0
        %v3830 = vmax.f32 %v3448, 0.0
        %v3831 = vmax.f32 %v3450, 0.0
        %v3832 = vmax.f32 %v3614, 0.0
        %v3833 = vmax.f32 %v3616, 0.0
        %v3834 = vmax.f32 %v3780, 0.0
        %v3835 = vmax.f32 %v3782, 0.0
        %v3836 = vmax.f32 %v3286, 0.0
        %v3837 = vmax.f32 %v3288, 0.0
        %v3838 = vmax.f32 %v3452, 0.0
        %v3839 = vmax.f32 %v3454, 0.0
        %v3840 = vmax.f32 %v3618, 0.0
        %v3841 = vmax.f32 %v3620, 0.0
        %v3842 = vmax.f32 %v3784, 0.0
        %v3843 = vmax.f32 %v3786, 0.0
        %v3844 = vmax.f32 %v3292, 0.0
        %v3845 = vmax.f32 %v3294, 0.0
        %v3846 = vmax.f32 %v3458, 0.0
        %v3847 = vmax.f32 %v3460, 0.0
        %v3848 = vmax.f32 %v3624, 0.0
        %v3849 = vmax.f32 %v3626, 0.0
        %v3850 = vmax.f32 %v3790, 0.0
        %v3851 = vmax.f32 %v3792, 0.0
        %v3852 = vmax.f32 %v3296, 0.0
        %v3853 = vmax.f32 %v3298, 0.0
        %v3854 = vmax.f32 %v3462, 0.0
        %v3855 = vmax.f32 %v3464, 0.0
        %v3856 = vmax.f32 %v3628, 0.0
        %v3857 = vmax.f32 %v3630, 0.0
        %v3858 = vmax.f32 %v3794, 0.0
        %v3859 = vmax.f32 %v3796, 0.0
        %v3860 = vmax.f32 %v3302, 0.0
        %v3861 = vmax.f32 %v3304, 0.0
        %v3862 = vmax.f32 %v3468, 0.0
        %v3863 = vmax.f32 %v3470, 0.0
        %v3864 = vmax.f32 %v3634, 0.0
        %v3865 = vmax.f32 %v3636, 0.0
        %v3866 = vmax.f32 %v3800, 0.0
        %v3867 = vmax.f32 %v3802, 0.0
        %v3868 = vmax.f32 %v3306, 0.0
        %v3869 = vmax.f32 %v3308, 0.0
        %v3870 = vmax.f32 %v3472, 0.0
        %v3871 = vmax.f32 %v3474, 0.0
        %v3872 = vmax.f32 %v3638, 0.0
        %v3873 = vmax.f32 %v3640, 0.0
        %v3874 = vmax.f32 %v3804, 0.0
        %v3875 = vmax.f32 %v3806, 0.0
        %v3876 = vmax.f32 %v3312, 0.0
        %v3877 = vmax.f32 %v3314, 0.0
        %v3878 = vmax.f32 %v3478, 0.0
        %v3879 = vmax.f32 %v3480, 0.0
        %v3880 = vmax.f32 %v3644, 0.0
        %v3881 = vmax.f32 %v3646, 0.0
        %v3882 = vmax.f32 %v3810, 0.0
        %v3883 = vmax.f32 %v3812, 0.0
        %v3884 = vmax.f32 %v3316, 0.0
        %v3885 = vmax.f32 %v3318, 0.0
        %v3886 = vmax.f32 %v3482, 0.0
        %v3887 = vmax.f32 %v3484, 0.0
        %v3888 = vmax.f32 %v3648, 0.0
        %v3889 = vmax.f32 %v3650, 0.0
        %v3890 = vmax.f32 %v3814, 0.0
        %v3891 = vmax.f32 %v3816, 0.0
        %v3892 = vmax.f32 %v3322, 0.0
        %v3893 = vmax.f32 %v3324, 0.0
        %v3894 = vmax.f32 %v3488, 0.0
        %v3895 = vmax.f32 %v3490, 0.0
        %v3896 = vmax.f32 %v3654, 0.0
        %v3897 = vmax.f32 %v3656, 0.0
        %v3898 = vmax.f32 %v3820, 0.0
        %v3899 = vmax.f32 %v3822, 0.0
        %v3900 = vmax.f32 %v3326, 0.0
        %v3901 = vmax.f32 %v3328, 0.0
        %v3902 = vmax.f32 %v3492, 0.0
        %v3903 = vmax.f32 %v3494, 0.0
        %v3904 = vmax.f32 %v3658, 0.0
        %v3905 = vmax.f32 %v3660, 0.0
        %v3906 = vmax.f32 %v3824, 0.0
        %v3907 = vmax.f32 %v3826, 0.0
        %v3908 = vpack.c.bf16 %v3836, %v3828
        %v3909 = vpack.c.bf16 %v3837, %v3829
        %v3910 = vpack.c.bf16 %v3838, %v3830
        %v3911 = vpack.c.bf16 %v3839, %v3831
        %v3912 = vpack.c.bf16 %v3840, %v3832
        %v3913 = vpack.c.bf16 %v3841, %v3833
        %v3914 = vpack.c.bf16 %v3842, %v3834
        %v3915 = vpack.c.bf16 %v3843, %v3835
        %v3916 = vpack.c.bf16 %v3852, %v3844
        %v3917 = vpack.c.bf16 %v3853, %v3845
        %v3918 = vpack.c.bf16 %v3854, %v3846
        %v3919 = vpack.c.bf16 %v3855, %v3847
        %v3920 = vpack.c.bf16 %v3856, %v3848
        %v3921 = vpack.c.bf16 %v3857, %v3849
        %v3922 = vpack.c.bf16 %v3858, %v3850
        %v3923 = vpack.c.bf16 %v3859, %v3851
        %v3924 = vpack.c.bf16 %v3868, %v3860
        %v3925 = vpack.c.bf16 %v3869, %v3861
        %v3926 = vpack.c.bf16 %v3870, %v3862
        %v3927 = vpack.c.bf16 %v3871, %v3863
        %v3928 = vpack.c.bf16 %v3872, %v3864
        %v3929 = vpack.c.bf16 %v3873, %v3865
        %v3930 = vpack.c.bf16 %v3874, %v3866
        %v3931 = vpack.c.bf16 %v3875, %v3867
        %v3932 = vpack.c.bf16 %v3884, %v3876
        %v3933 = vpack.c.bf16 %v3885, %v3877
        %v3934 = vpack.c.bf16 %v3886, %v3878
        %v3935 = vpack.c.bf16 %v3887, %v3879
        %v3936 = vpack.c.bf16 %v3888, %v3880
        %v3937 = vpack.c.bf16 %v3889, %v3881
        %v3938 = vpack.c.bf16 %v3890, %v3882
        %v3939 = vpack.c.bf16 %v3891, %v3883
        %v3940 = vpack.c.bf16 %v3900, %v3892
        %v3941 = vpack.c.bf16 %v3901, %v3893
        %v3942 = vpack.c.bf16 %v3902, %v3894
        %v3943 = vpack.c.bf16 %v3903, %v3895
        %v3944 = vpack.c.bf16 %v3904, %v3896
        %v3945 = vpack.c.bf16 %v3905, %v3897
        %v3946 = vpack.c.bf16 %v3906, %v3898
        %v3947 = vpack.c.bf16 %v3907, %v3899
        %v3949 = vlaneseq
        %v3950 = vshrl.u32 %v3949, 7
        %v3951 = vsub.s32 0, %v3950
        %v3952 = vrot.slane %v1071, %v3951
        %v3953 = vlaneseq
        %v3954 = vshrl.u32 %v3953, 7
        %v3955 = vsub.s32 1, %v3954
        %v3956 = vrot.slane %v1071, %v3955
        %v3957 = vlaneseq
        %v3958 = vshrl.u32 %v3957, 7
        %v3959 = vsub.s32 2, %v3958
        %v3960 = vrot.slane %v1071, %v3959
        %v3961 = vlaneseq
        %v3962 = vshrl.u32 %v3961, 7
        %v3963 = vsub.s32 3, %v3962
        %v3964 = vrot.slane %v1071, %v3963
        %v4225 = vunpack.c.l.b16 %v749
        %v4226 = vunpack.c.h.b16 %v749
        %v4227 = vunpack.c.l.b16 %v750
        %v4228 = vunpack.c.h.b16 %v750
        %v4229 = vunpack.c.l.b16 %v751
        %v4230 = vunpack.c.h.b16 %v751
        %v4231 = vunpack.c.l.b16 %v752
        %v4232 = vunpack.c.h.b16 %v752
        %v4233 = vunpack.c.l.b16 %v753
        %v4234 = vunpack.c.h.b16 %v753
        %v4235 = vunpack.c.l.b16 %v754
        %v4236 = vunpack.c.h.b16 %v754
        %v4237 = vunpack.c.l.b16 %v755
        %v4238 = vunpack.c.h.b16 %v755
        %v4239 = vunpack.c.l.b16 %v756
        %v4240 = vunpack.c.h.b16 %v756
        %v4241 = vunpack.c.l.b16 %v757
        %v4242 = vunpack.c.h.b16 %v757
        %v4243 = vunpack.c.l.b16 %v758
        %v4244 = vunpack.c.h.b16 %v758
        %v4245 = vunpack.c.l.b16 %v759
        %v4246 = vunpack.c.h.b16 %v759
        %v4247 = vunpack.c.l.b16 %v760
        %v4248 = vunpack.c.h.b16 %v760
        %v4249 = vunpack.c.l.b16 %v761
        %v4250 = vunpack.c.h.b16 %v761
        %v4251 = vunpack.c.l.b16 %v762
        %v4252 = vunpack.c.h.b16 %v762
        %v4253 = vunpack.c.l.b16 %v763
        %v4254 = vunpack.c.h.b16 %v763
        %v4255 = vunpack.c.l.b16 %v764
        %v4256 = vunpack.c.h.b16 %v764
        %v4257 = vunpack.c.l.b16 %v765
        %v4258 = vunpack.c.h.b16 %v765
        %v4259 = vunpack.c.l.b16 %v766
        %v4260 = vunpack.c.h.b16 %v766
        %v4261 = vunpack.c.l.b16 %v767
        %v4262 = vunpack.c.h.b16 %v767
        %v4263 = vunpack.c.l.b16 %v768
        %v4264 = vunpack.c.h.b16 %v768
        %v4265 = vunpack.c.l.b16 %v769
        %v4266 = vunpack.c.h.b16 %v769
        %v4267 = vunpack.c.l.b16 %v770
        %v4268 = vunpack.c.h.b16 %v770
        %v4269 = vunpack.c.l.b16 %v771
        %v4270 = vunpack.c.h.b16 %v771
        %v4271 = vunpack.c.l.b16 %v772
        %v4272 = vunpack.c.h.b16 %v772
        %v4273 = vunpack.c.l.b16 %v773
        %v4274 = vunpack.c.h.b16 %v773
        %v4275 = vunpack.c.l.b16 %v774
        %v4276 = vunpack.c.h.b16 %v774
        %v4277 = vunpack.c.l.b16 %v775
        %v4278 = vunpack.c.h.b16 %v775
        %v4279 = vunpack.c.l.b16 %v776
        %v4280 = vunpack.c.h.b16 %v776
        %v4281 = vunpack.c.l.b16 %v777
        %v4282 = vunpack.c.h.b16 %v777
        %v4283 = vunpack.c.l.b16 %v778
        %v4284 = vunpack.c.h.b16 %v778
        %v4285 = vunpack.c.l.b16 %v779
        %v4286 = vunpack.c.h.b16 %v779
        %v4287 = vunpack.c.l.b16 %v780
        %v4288 = vunpack.c.h.b16 %v780
        %v4289 = vunpack.c.l.b16 %v781
        %v4290 = vunpack.c.h.b16 %v781
        %v4291 = vunpack.c.l.b16 %v782
        %v4292 = vunpack.c.h.b16 %v782
        %v4293 = vunpack.c.l.b16 %v783
        %v4294 = vunpack.c.h.b16 %v783
        %v4295 = vunpack.c.l.b16 %v784
        %v4296 = vunpack.c.h.b16 %v784
        %v4297 = vunpack.c.l.b16 %v785
        %v4298 = vunpack.c.h.b16 %v785
        %v4299 = vunpack.c.l.b16 %v786
        %v4300 = vunpack.c.h.b16 %v786
        %v4301 = vunpack.c.l.b16 %v787
        %v4302 = vunpack.c.h.b16 %v787
        %v4303 = vunpack.c.l.b16 %v788
        %v4304 = vunpack.c.h.b16 %v788
        %v4305 = vunpack.c.l.b16 %v789
        %v4306 = vunpack.c.h.b16 %v789
        %v4307 = vunpack.c.l.b16 %v790
        %v4308 = vunpack.c.h.b16 %v790
        %v4309 = vunpack.c.l.b16 %v791
        %v4310 = vunpack.c.h.b16 %v791
        %v4311 = vunpack.c.l.b16 %v792
        %v4312 = vunpack.c.h.b16 %v792
        %v4313 = vunpack.c.l.b16 %v793
        %v4314 = vunpack.c.h.b16 %v793
        %v4315 = vunpack.c.l.b16 %v794
        %v4316 = vunpack.c.h.b16 %v794
        %v4317 = vunpack.c.l.b16 %v795
        %v4318 = vunpack.c.h.b16 %v795
        %v4319 = vunpack.c.l.b16 %v796
        %v4320 = vunpack.c.h.b16 %v796
        %v4321 = vunpack.c.l.b16 %v797
        %v4322 = vunpack.c.h.b16 %v797
        %v4323 = vunpack.c.l.b16 %v798
        %v4324 = vunpack.c.h.b16 %v798
        %v4325 = vunpack.c.l.b16 %v799
        %v4326 = vunpack.c.h.b16 %v799
        %v4327 = vunpack.c.l.b16 %v800
        %v4328 = vunpack.c.h.b16 %v800
        %v4329 = vunpack.c.l.b16 %v801
        %v4330 = vunpack.c.h.b16 %v801
        %v4331 = vunpack.c.l.b16 %v802
        %v4332 = vunpack.c.h.b16 %v802
        %v4333 = vunpack.c.l.b16 %v803
        %v4334 = vunpack.c.h.b16 %v803
        %v4335 = vunpack.c.l.b16 %v804
        %v4336 = vunpack.c.h.b16 %v804
        %v4337 = vunpack.c.l.b16 %v805
        %v4338 = vunpack.c.h.b16 %v805
        %v4339 = vunpack.c.l.b16 %v806
        %v4340 = vunpack.c.h.b16 %v806
        %v4341 = vunpack.c.l.b16 %v807
        %v4342 = vunpack.c.h.b16 %v807
        %v4343 = vunpack.c.l.b16 %v808
        %v4344 = vunpack.c.h.b16 %v808
        %v4345 = vunpack.c.l.b16 %v809
        %v4346 = vunpack.c.h.b16 %v809
        %v4347 = vunpack.c.l.b16 %v810
        %v4348 = vunpack.c.h.b16 %v810
        %v4349 = vunpack.c.l.b16 %v811
        %v4350 = vunpack.c.h.b16 %v811
        %v4351 = vunpack.c.l.b16 %v812
        %v4352 = vunpack.c.h.b16 %v812
        %v4353 = vunpack.c.l.b16 %v813
        %v4354 = vunpack.c.h.b16 %v813
        %v4355 = vunpack.c.l.b16 %v814
        %v4356 = vunpack.c.h.b16 %v814
        %v4357 = vunpack.c.l.b16 %v815
        %v4358 = vunpack.c.h.b16 %v815
        %v4359 = vunpack.c.l.b16 %v816
        %v4360 = vunpack.c.h.b16 %v816
        %v4361 = vunpack.c.l.b16 %v817
        %v4362 = vunpack.c.h.b16 %v817
        %v4363 = vunpack.c.l.b16 %v818
        %v4364 = vunpack.c.h.b16 %v818
        %v4365 = vunpack.c.l.b16 %v819
        %v4366 = vunpack.c.h.b16 %v819
        %v4367 = vunpack.c.l.b16 %v820
        %v4368 = vunpack.c.h.b16 %v820
        %v4369 = vunpack.c.l.b16 %v821
        %v4370 = vunpack.c.h.b16 %v821
        %v4371 = vunpack.c.l.b16 %v822
        %v4372 = vunpack.c.h.b16 %v822
        %v4373 = vunpack.c.l.b16 %v823
        %v4374 = vunpack.c.h.b16 %v823
        %v4375 = vunpack.c.l.b16 %v824
        %v4376 = vunpack.c.h.b16 %v824
        %v4377 = vunpack.c.l.b16 %v825
        %v4378 = vunpack.c.h.b16 %v825
        %v4379 = vunpack.c.l.b16 %v826
        %v4380 = vunpack.c.h.b16 %v826
        %v4381 = vunpack.c.l.b16 %v827
        %v4382 = vunpack.c.h.b16 %v827
        %v4383 = vunpack.c.l.b16 %v828
        %v4384 = vunpack.c.h.b16 %v828
        %v4385 = vunpack.c.l.b16 %v829
        %v4386 = vunpack.c.h.b16 %v829
        %v4387 = vunpack.c.l.b16 %v830
        %v4388 = vunpack.c.h.b16 %v830
        %v4389 = vunpack.c.l.b16 %v831
        %v4390 = vunpack.c.h.b16 %v831
        %v4391 = vunpack.c.l.b16 %v832
        %v4392 = vunpack.c.h.b16 %v832
        %v4393 = vunpack.c.l.b16 %v833
        %v4394 = vunpack.c.h.b16 %v833
        %v4395 = vunpack.c.l.b16 %v834
        %v4396 = vunpack.c.h.b16 %v834
        %v4397 = vunpack.c.l.b16 %v835
        %v4398 = vunpack.c.h.b16 %v835
        %v4399 = vunpack.c.l.b16 %v836
        %v4400 = vunpack.c.h.b16 %v836
        %v4401 = vunpack.c.l.b16 %v837
        %v4402 = vunpack.c.h.b16 %v837
        %v4403 = vunpack.c.l.b16 %v838
        %v4404 = vunpack.c.h.b16 %v838
        %v4405 = vunpack.c.l.b16 %v839
        %v4406 = vunpack.c.h.b16 %v839
        %v4407 = vunpack.c.l.b16 %v840
        %v4408 = vunpack.c.h.b16 %v840
        %v4409 = vunpack.c.l.b16 %v841
        %v4410 = vunpack.c.h.b16 %v841
        %v4411 = vunpack.c.l.b16 %v842
        %v4412 = vunpack.c.h.b16 %v842
        %v4413 = vunpack.c.l.b16 %v843
        %v4414 = vunpack.c.h.b16 %v843
        %v4415 = vunpack.c.l.b16 %v844
        %v4416 = vunpack.c.h.b16 %v844
        %v4417 = vunpack.c.l.b16 %v845
        %v4418 = vunpack.c.h.b16 %v845
        %v4419 = vunpack.c.l.b16 %v846
        %v4420 = vunpack.c.h.b16 %v846
        %v4421 = vunpack.c.l.b16 %v847
        %v4422 = vunpack.c.h.b16 %v847
        %v4423 = vunpack.c.l.b16 %v848
        %v4424 = vunpack.c.h.b16 %v848
        %v4425 = vunpack.c.l.b16 %v849
        %v4426 = vunpack.c.h.b16 %v849
        %v4427 = vunpack.c.l.b16 %v850
        %v4428 = vunpack.c.h.b16 %v850
        %v4429 = vunpack.c.l.b16 %v851
        %v4430 = vunpack.c.h.b16 %v851
        %v4431 = vunpack.c.l.b16 %v852
        %v4432 = vunpack.c.h.b16 %v852
        %v4433 = vunpack.c.l.b16 %v853
        %v4434 = vunpack.c.h.b16 %v853
        %v4435 = vunpack.c.l.b16 %v854
        %v4436 = vunpack.c.h.b16 %v854
        %v4437 = vunpack.c.l.b16 %v855
        %v4438 = vunpack.c.h.b16 %v855
        %v4439 = vunpack.c.l.b16 %v856
        %v4440 = vunpack.c.h.b16 %v856
        %v4441 = vunpack.c.l.b16 %v857
        %v4442 = vunpack.c.h.b16 %v857
        %v4443 = vunpack.c.l.b16 %v858
        %v4444 = vunpack.c.h.b16 %v858
        %v4445 = vunpack.c.l.b16 %v859
        %v4446 = vunpack.c.h.b16 %v859
        %v4447 = vunpack.c.l.b16 %v860
        %v4448 = vunpack.c.h.b16 %v860
        %v4449 = vunpack.c.l.b16 %v861
        %v4450 = vunpack.c.h.b16 %v861
        %v4451 = vunpack.c.l.b16 %v862
        %v4452 = vunpack.c.h.b16 %v862
        %v4453 = vunpack.c.l.b16 %v863
        %v4454 = vunpack.c.h.b16 %v863
        %v4455 = vunpack.c.l.b16 %v864
        %v4456 = vunpack.c.h.b16 %v864
        %v4457 = vunpack.c.l.b16 %v865
        %v4458 = vunpack.c.h.b16 %v865
        %v4459 = vunpack.c.l.b16 %v866
        %v4460 = vunpack.c.h.b16 %v866
        %v4461 = vunpack.c.l.b16 %v867
        %v4462 = vunpack.c.h.b16 %v867
        %v4463 = vunpack.c.l.b16 %v868
        %v4464 = vunpack.c.h.b16 %v868
        %v4465 = vunpack.c.l.b16 %v869
        %v4466 = vunpack.c.h.b16 %v869
        %v4467 = vunpack.c.l.b16 %v870
        %v4468 = vunpack.c.h.b16 %v870
        %v4469 = vunpack.c.l.b16 %v871
        %v4470 = vunpack.c.h.b16 %v871
        %v4471 = vunpack.c.l.b16 %v872
        %v4472 = vunpack.c.h.b16 %v872
        %v4473 = vunpack.c.l.b16 %v873
        %v4474 = vunpack.c.h.b16 %v873
        %v4475 = vunpack.c.l.b16 %v874
        %v4476 = vunpack.c.h.b16 %v874
        %v4477 = vunpack.c.l.b16 %v875
        %v4478 = vunpack.c.h.b16 %v875
        %v4479 = vunpack.c.l.b16 %v876
        %v4480 = vunpack.c.h.b16 %v876
        %v4481 = vunpack.c.l.b16 %v877
        %v4482 = vunpack.c.h.b16 %v877
        %v4483 = vunpack.c.l.b16 %v878
        %v4484 = vunpack.c.h.b16 %v878
        %v4485 = vunpack.c.l.b16 %v879
        %v4486 = vunpack.c.h.b16 %v879
        %v4487 = vunpack.c.l.b16 %v880
        %v4488 = vunpack.c.h.b16 %v880
        %v4489 = vunpack.c.l.b16 %v881
        %v4490 = vunpack.c.h.b16 %v881
        %v4491 = vunpack.c.l.b16 %v882
        %v4492 = vunpack.c.h.b16 %v882
        %v4493 = vunpack.c.l.b16 %v883
        %v4494 = vunpack.c.h.b16 %v883
        %v4495 = vunpack.c.l.b16 %v884
        %v4496 = vunpack.c.h.b16 %v884
        %v4497 = vunpack.c.l.b16 %v885
        %v4498 = vunpack.c.h.b16 %v885
        %v4499 = vunpack.c.l.b16 %v886
        %v4500 = vunpack.c.h.b16 %v886
        %v4501 = vunpack.c.l.b16 %v887
        %v4502 = vunpack.c.h.b16 %v887
        %v4503 = vunpack.c.l.b16 %v888
        %v4504 = vunpack.c.h.b16 %v888
        %v4505 = vunpack.c.l.b16 %v889
        %v4506 = vunpack.c.h.b16 %v889
        %v4507 = vunpack.c.l.b16 %v890
        %v4508 = vunpack.c.h.b16 %v890
        %v4509 = vunpack.c.l.b16 %v891
        %v4510 = vunpack.c.h.b16 %v891
        %v4511 = vunpack.c.l.b16 %v892
        %v4512 = vunpack.c.h.b16 %v892
        %v4513 = vunpack.c.l.b16 %v893
        %v4514 = vunpack.c.h.b16 %v893
        %v4515 = vunpack.c.l.b16 %v894
        %v4516 = vunpack.c.h.b16 %v894
        %v4517 = vunpack.c.l.b16 %v895
        %v4518 = vunpack.c.h.b16 %v895
        %v4519 = vunpack.c.l.b16 %v896
        %v4520 = vunpack.c.h.b16 %v896
        %v4521 = vunpack.c.l.b16 %v897
        %v4522 = vunpack.c.h.b16 %v897
        %v4523 = vunpack.c.l.b16 %v898
        %v4524 = vunpack.c.h.b16 %v898
        %v4525 = vunpack.c.l.b16 %v899
        %v4526 = vunpack.c.h.b16 %v899
        %v4527 = vunpack.c.l.b16 %v900
        %v4528 = vunpack.c.h.b16 %v900
        %v4529 = vunpack.c.l.b16 %v901
        %v4530 = vunpack.c.h.b16 %v901
        %v4531 = vunpack.c.l.b16 %v902
        %v4532 = vunpack.c.h.b16 %v902
        %v4533 = vunpack.c.l.b16 %v903
        %v4534 = vunpack.c.h.b16 %v903
        %v4535 = vunpack.c.l.b16 %v904
        %v4536 = vunpack.c.h.b16 %v904
        %v4537 = vunpack.c.l.b16 %v905
        %v4538 = vunpack.c.h.b16 %v905
        %v4539 = vunpack.c.l.b16 %v906
        %v4540 = vunpack.c.h.b16 %v906
        %v4541 = vunpack.c.l.b16 %v907
        %v4542 = vunpack.c.h.b16 %v907
        %v4543 = vunpack.c.l.b16 %v908
        %v4544 = vunpack.c.h.b16 %v908
        %v4545 = vunpack.c.l.b16 %v909
        %v4546 = vunpack.c.h.b16 %v909
        %v4547 = vunpack.c.l.b16 %v910
        %v4548 = vunpack.c.h.b16 %v910
        %v4549 = vunpack.c.l.b16 %v911
        %v4550 = vunpack.c.h.b16 %v911
        %v4551 = vunpack.c.l.b16 %v912
        %v4552 = vunpack.c.h.b16 %v912
        %v4553 = vunpack.c.l.b16 %v913
        %v4554 = vunpack.c.h.b16 %v913
        %v4555 = vunpack.c.l.b16 %v914
        %v4556 = vunpack.c.h.b16 %v914
        %v4557 = vunpack.c.l.b16 %v915
        %v4558 = vunpack.c.h.b16 %v915
        %v4559 = vunpack.c.l.b16 %v916
        %v4560 = vunpack.c.h.b16 %v916
        %v4561 = vunpack.c.l.b16 %v917
        %v4562 = vunpack.c.h.b16 %v917
        %v4563 = vunpack.c.l.b16 %v918
        %v4564 = vunpack.c.h.b16 %v918
        %v4565 = vunpack.c.l.b16 %v919
        %v4566 = vunpack.c.h.b16 %v919
        %v4567 = vunpack.c.l.b16 %v920
        %v4568 = vunpack.c.h.b16 %v920
        %v4569 = vunpack.c.l.b16 %v921
        %v4570 = vunpack.c.h.b16 %v921
        %v4571 = vunpack.c.l.b16 %v922
        %v4572 = vunpack.c.h.b16 %v922
        %v4573 = vunpack.c.l.b16 %v923
        %v4574 = vunpack.c.h.b16 %v923
        %v4575 = vunpack.c.l.b16 %v924
        %v4576 = vunpack.c.h.b16 %v924
        %v4577 = vunpack.c.l.b16 %v925
        %v4578 = vunpack.c.h.b16 %v925
        %v4579 = vunpack.c.l.b16 %v926
        %v4580 = vunpack.c.h.b16 %v926
        %v4581 = vunpack.c.l.b16 %v927
        %v4582 = vunpack.c.h.b16 %v927
        %v4583 = vunpack.c.l.b16 %v928
        %v4584 = vunpack.c.h.b16 %v928
        %v4585 = vunpack.c.l.b16 %v929
        %v4586 = vunpack.c.h.b16 %v929
        %v4587 = vunpack.c.l.b16 %v930
        %v4588 = vunpack.c.h.b16 %v930
        %v4589 = vunpack.c.l.b16 %v931
        %v4590 = vunpack.c.h.b16 %v931
        %v4591 = vunpack.c.l.b16 %v932
        %v4592 = vunpack.c.h.b16 %v932
        %v4593 = vunpack.c.l.b16 %v933
        %v4594 = vunpack.c.h.b16 %v933
        %v4595 = vunpack.c.l.b16 %v934
        %v4596 = vunpack.c.h.b16 %v934
        %v4597 = vunpack.c.l.b16 %v935
        %v4598 = vunpack.c.h.b16 %v935
        %v4599 = vunpack.c.l.b16 %v936
        %v4600 = vunpack.c.h.b16 %v936
        %v4601 = vunpack.c.l.b16 %v937
        %v4602 = vunpack.c.h.b16 %v937
        %v4603 = vunpack.c.l.b16 %v938
        %v4604 = vunpack.c.h.b16 %v938
        %v4605 = vunpack.c.l.b16 %v939
        %v4606 = vunpack.c.h.b16 %v939
        %v4607 = vunpack.c.l.b16 %v940
        %v4608 = vunpack.c.h.b16 %v940
        %v4609 = vunpack.c.l.b16 %v941
        %v4610 = vunpack.c.h.b16 %v941
        %v4611 = vunpack.c.l.b16 %v942
        %v4612 = vunpack.c.h.b16 %v942
        %v4613 = vunpack.c.l.b16 %v943
        %v4614 = vunpack.c.h.b16 %v943
        %v4615 = vunpack.c.l.b16 %v944
        %v4616 = vunpack.c.h.b16 %v944
        %v4617 = vunpack.c.l.b16 %v945
        %v4618 = vunpack.c.h.b16 %v945
        %v4619 = vunpack.c.l.b16 %v946
        %v4620 = vunpack.c.h.b16 %v946
        %v4621 = vunpack.c.l.b16 %v947
        %v4622 = vunpack.c.h.b16 %v947
        %v4623 = vunpack.c.l.b16 %v948
        %v4624 = vunpack.c.h.b16 %v948
        %v4625 = vunpack.c.l.b16 %v949
        %v4626 = vunpack.c.h.b16 %v949
        %v4627 = vunpack.c.l.b16 %v950
        %v4628 = vunpack.c.h.b16 %v950
        %v4629 = vunpack.c.l.b16 %v951
        %v4630 = vunpack.c.h.b16 %v951
        %v4631 = vunpack.c.l.b16 %v952
        %v4632 = vunpack.c.h.b16 %v952
        %v4633 = vunpack.c.l.b16 %v953
        %v4634 = vunpack.c.h.b16 %v953
        %v4635 = vunpack.c.l.b16 %v954
        %v4636 = vunpack.c.h.b16 %v954
        %v4637 = vunpack.c.l.b16 %v955
        %v4638 = vunpack.c.h.b16 %v955
        %v4639 = vunpack.c.l.b16 %v956
        %v4640 = vunpack.c.h.b16 %v956
        %v4641 = vunpack.c.l.b16 %v957
        %v4642 = vunpack.c.h.b16 %v957
        %v4643 = vunpack.c.l.b16 %v958
        %v4644 = vunpack.c.h.b16 %v958
        %v4645 = vunpack.c.l.b16 %v959
        %v4646 = vunpack.c.h.b16 %v959
        %v4647 = vunpack.c.l.b16 %v960
        %v4648 = vunpack.c.h.b16 %v960
        %v4649 = vunpack.c.l.b16 %v961
        %v4650 = vunpack.c.h.b16 %v961
        %v4651 = vunpack.c.l.b16 %v962
        %v4652 = vunpack.c.h.b16 %v962
        %v4653 = vunpack.c.l.b16 %v963
        %v4654 = vunpack.c.h.b16 %v963
        %v4655 = vunpack.c.l.b16 %v964
        %v4656 = vunpack.c.h.b16 %v964
        %v4657 = vunpack.c.l.b16 %v965
        %v4658 = vunpack.c.h.b16 %v965
        %v4659 = vunpack.c.l.b16 %v966
        %v4660 = vunpack.c.h.b16 %v966
        %v4661 = vunpack.c.l.b16 %v967
        %v4662 = vunpack.c.h.b16 %v967
        %v4663 = vunpack.c.l.b16 %v968
        %v4664 = vunpack.c.h.b16 %v968
        %v4665 = vunpack.c.l.b16 %v969
        %v4666 = vunpack.c.h.b16 %v969
        %v4667 = vunpack.c.l.b16 %v970
        %v4668 = vunpack.c.h.b16 %v970
        %v4669 = vunpack.c.l.b16 %v971
        %v4670 = vunpack.c.h.b16 %v971
        %v4671 = vunpack.c.l.b16 %v972
        %v4672 = vunpack.c.h.b16 %v972
        %v4673 = vunpack.c.l.b16 %v973
        %v4674 = vunpack.c.h.b16 %v973
        %v4675 = vunpack.c.l.b16 %v974
        %v4676 = vunpack.c.h.b16 %v974
        %v4677 = vunpack.c.l.b16 %v975
        %v4678 = vunpack.c.h.b16 %v975
        %v4679 = vunpack.c.l.b16 %v976
        %v4680 = vunpack.c.h.b16 %v976
        %v4681 = vunpack.c.l.b16 %v977
        %v4682 = vunpack.c.h.b16 %v977
        %v4683 = vunpack.c.l.b16 %v978
        %v4684 = vunpack.c.h.b16 %v978
        %v4685 = vunpack.c.l.b16 %v979
        %v4686 = vunpack.c.h.b16 %v979
        %v4687 = vunpack.c.l.b16 %v980
        %v4688 = vunpack.c.h.b16 %v980
        %v4689 = vunpack.c.l.b16 %v981
        %v4690 = vunpack.c.h.b16 %v981
        %v4691 = vunpack.c.l.b16 %v982
        %v4692 = vunpack.c.h.b16 %v982
        %v4693 = vunpack.c.l.b16 %v983
        %v4694 = vunpack.c.h.b16 %v983
        %v4695 = vunpack.c.l.b16 %v984
        %v4696 = vunpack.c.h.b16 %v984
        %v4697 = vunpack.c.l.b16 %v985
        %v4698 = vunpack.c.h.b16 %v985
        %v4699 = vunpack.c.l.b16 %v986
        %v4700 = vunpack.c.h.b16 %v986
        %v4701 = vunpack.c.l.b16 %v987
        %v4702 = vunpack.c.h.b16 %v987
        %v4703 = vunpack.c.l.b16 %v988
        %v4704 = vunpack.c.h.b16 %v988
        %v4705 = vunpack.c.l.b16 %v989
        %v4706 = vunpack.c.h.b16 %v989
        %v4707 = vunpack.c.l.b16 %v990
        %v4708 = vunpack.c.h.b16 %v990
        %v4709 = vunpack.c.l.b16 %v991
        %v4710 = vunpack.c.h.b16 %v991
        %v4711 = vunpack.c.l.b16 %v992
        %v4712 = vunpack.c.h.b16 %v992
        %v4713 = vunpack.c.l.b16 %v993
        %v4714 = vunpack.c.h.b16 %v993
        %v4715 = vunpack.c.l.b16 %v994
        %v4716 = vunpack.c.h.b16 %v994
        %v4717 = vunpack.c.l.b16 %v995
        %v4718 = vunpack.c.h.b16 %v995
        %v4719 = vunpack.c.l.b16 %v996
        %v4720 = vunpack.c.h.b16 %v996
        %v4721 = vunpack.c.l.b16 %v997
        %v4722 = vunpack.c.h.b16 %v997
        %v4723 = vunpack.c.l.b16 %v998
        %v4724 = vunpack.c.h.b16 %v998
        %v4725 = vunpack.c.l.b16 %v999
        %v4726 = vunpack.c.h.b16 %v999
        %v4727 = vunpack.c.l.b16 %v1000
        %v4728 = vunpack.c.h.b16 %v1000
        %v4729 = vunpack.c.l.b16 %v1001
        %v4730 = vunpack.c.h.b16 %v1001
        %v4731 = vunpack.c.l.b16 %v1002
        %v4732 = vunpack.c.h.b16 %v1002
        %v4733 = vunpack.c.l.b16 %v1003
        %v4734 = vunpack.c.h.b16 %v1003
        %v4735 = vunpack.c.l.b16 %v1004
        %v4736 = vunpack.c.h.b16 %v1004
        %v4737 = vpack.c.b16 %v4229, %v4225
        %v4738 = vpack.c.b16 %v4230, %v4226
        %v4739 = vpack.c.b16 %v4231, %v4227
        %v4740 = vpack.c.b16 %v4232, %v4228
        %v4741 = vpack.c.b16 %v4237, %v4233
        %v4742 = vpack.c.b16 %v4238, %v4234
        %v4743 = vpack.c.b16 %v4239, %v4235
        %v4744 = vpack.c.b16 %v4240, %v4236
        %v4745 = vpack.c.b16 %v4245, %v4241
        %v4746 = vpack.c.b16 %v4246, %v4242
        %v4747 = vpack.c.b16 %v4247, %v4243
        %v4748 = vpack.c.b16 %v4248, %v4244
        %v4749 = vpack.c.b16 %v4253, %v4249
        %v4750 = vpack.c.b16 %v4254, %v4250
        %v4751 = vpack.c.b16 %v4255, %v4251
        %v4752 = vpack.c.b16 %v4256, %v4252
        %v4753 = vpack.c.b16 %v4261, %v4257
        %v4754 = vpack.c.b16 %v4262, %v4258
        %v4755 = vpack.c.b16 %v4263, %v4259
        %v4756 = vpack.c.b16 %v4264, %v4260
        %v4757 = vpack.c.b16 %v4269, %v4265
        %v4758 = vpack.c.b16 %v4270, %v4266
        %v4759 = vpack.c.b16 %v4271, %v4267
        %v4760 = vpack.c.b16 %v4272, %v4268
        %v4761 = vpack.c.b16 %v4277, %v4273
        %v4762 = vpack.c.b16 %v4278, %v4274
        %v4763 = vpack.c.b16 %v4279, %v4275
        %v4764 = vpack.c.b16 %v4280, %v4276
        %v4765 = vpack.c.b16 %v4285, %v4281
        %v4766 = vpack.c.b16 %v4286, %v4282
        %v4767 = vpack.c.b16 %v4287, %v4283
        %v4768 = vpack.c.b16 %v4288, %v4284
        %v4769 = vpack.c.b16 %v4293, %v4289
        %v4770 = vpack.c.b16 %v4294, %v4290
        %v4771 = vpack.c.b16 %v4295, %v4291
        %v4772 = vpack.c.b16 %v4296, %v4292
        %v4773 = vpack.c.b16 %v4301, %v4297
        %v4774 = vpack.c.b16 %v4302, %v4298
        %v4775 = vpack.c.b16 %v4303, %v4299
        %v4776 = vpack.c.b16 %v4304, %v4300
        %v4777 = vpack.c.b16 %v4309, %v4305
        %v4778 = vpack.c.b16 %v4310, %v4306
        %v4779 = vpack.c.b16 %v4311, %v4307
        %v4780 = vpack.c.b16 %v4312, %v4308
        %v4781 = vpack.c.b16 %v4317, %v4313
        %v4782 = vpack.c.b16 %v4318, %v4314
        %v4783 = vpack.c.b16 %v4319, %v4315
        %v4784 = vpack.c.b16 %v4320, %v4316
        %v4785 = vpack.c.b16 %v4325, %v4321
        %v4786 = vpack.c.b16 %v4326, %v4322
        %v4787 = vpack.c.b16 %v4327, %v4323
        %v4788 = vpack.c.b16 %v4328, %v4324
        %v4789 = vpack.c.b16 %v4333, %v4329
        %v4790 = vpack.c.b16 %v4334, %v4330
        %v4791 = vpack.c.b16 %v4335, %v4331
        %v4792 = vpack.c.b16 %v4336, %v4332
        %v4793 = vpack.c.b16 %v4341, %v4337
        %v4794 = vpack.c.b16 %v4342, %v4338
        %v4795 = vpack.c.b16 %v4343, %v4339
        %v4796 = vpack.c.b16 %v4344, %v4340
        %v4797 = vpack.c.b16 %v4349, %v4345
        %v4798 = vpack.c.b16 %v4350, %v4346
        %v4799 = vpack.c.b16 %v4351, %v4347
        %v4800 = vpack.c.b16 %v4352, %v4348
        %v4801 = vpack.c.b16 %v4357, %v4353
        %v4802 = vpack.c.b16 %v4358, %v4354
        %v4803 = vpack.c.b16 %v4359, %v4355
        %v4804 = vpack.c.b16 %v4360, %v4356
        %v4805 = vpack.c.b16 %v4365, %v4361
        %v4806 = vpack.c.b16 %v4366, %v4362
        %v4807 = vpack.c.b16 %v4367, %v4363
        %v4808 = vpack.c.b16 %v4368, %v4364
        %v4809 = vpack.c.b16 %v4373, %v4369
        %v4810 = vpack.c.b16 %v4374, %v4370
        %v4811 = vpack.c.b16 %v4375, %v4371
        %v4812 = vpack.c.b16 %v4376, %v4372
        %v4813 = vpack.c.b16 %v4381, %v4377
        %v4814 = vpack.c.b16 %v4382, %v4378
        %v4815 = vpack.c.b16 %v4383, %v4379
        %v4816 = vpack.c.b16 %v4384, %v4380
        %v4817 = vpack.c.b16 %v4389, %v4385
        %v4818 = vpack.c.b16 %v4390, %v4386
        %v4819 = vpack.c.b16 %v4391, %v4387
        %v4820 = vpack.c.b16 %v4392, %v4388
        %v4821 = vpack.c.b16 %v4397, %v4393
        %v4822 = vpack.c.b16 %v4398, %v4394
        %v4823 = vpack.c.b16 %v4399, %v4395
        %v4824 = vpack.c.b16 %v4400, %v4396
        %v4825 = vpack.c.b16 %v4405, %v4401
        %v4826 = vpack.c.b16 %v4406, %v4402
        %v4827 = vpack.c.b16 %v4407, %v4403
        %v4828 = vpack.c.b16 %v4408, %v4404
        %v4829 = vpack.c.b16 %v4413, %v4409
        %v4830 = vpack.c.b16 %v4414, %v4410
        %v4831 = vpack.c.b16 %v4415, %v4411
        %v4832 = vpack.c.b16 %v4416, %v4412
        %v4833 = vpack.c.b16 %v4421, %v4417
        %v4834 = vpack.c.b16 %v4422, %v4418
        %v4835 = vpack.c.b16 %v4423, %v4419
        %v4836 = vpack.c.b16 %v4424, %v4420
        %v4837 = vpack.c.b16 %v4429, %v4425
        %v4838 = vpack.c.b16 %v4430, %v4426
        %v4839 = vpack.c.b16 %v4431, %v4427
        %v4840 = vpack.c.b16 %v4432, %v4428
        %v4841 = vpack.c.b16 %v4437, %v4433
        %v4842 = vpack.c.b16 %v4438, %v4434
        %v4843 = vpack.c.b16 %v4439, %v4435
        %v4844 = vpack.c.b16 %v4440, %v4436
        %v4845 = vpack.c.b16 %v4445, %v4441
        %v4846 = vpack.c.b16 %v4446, %v4442
        %v4847 = vpack.c.b16 %v4447, %v4443
        %v4848 = vpack.c.b16 %v4448, %v4444
        %v4849 = vpack.c.b16 %v4453, %v4449
        %v4850 = vpack.c.b16 %v4454, %v4450
        %v4851 = vpack.c.b16 %v4455, %v4451
        %v4852 = vpack.c.b16 %v4456, %v4452
        %v4853 = vpack.c.b16 %v4461, %v4457
        %v4854 = vpack.c.b16 %v4462, %v4458
        %v4855 = vpack.c.b16 %v4463, %v4459
        %v4856 = vpack.c.b16 %v4464, %v4460
        %v4857 = vpack.c.b16 %v4469, %v4465
        %v4858 = vpack.c.b16 %v4470, %v4466
        %v4859 = vpack.c.b16 %v4471, %v4467
        %v4860 = vpack.c.b16 %v4472, %v4468
        %v4861 = vpack.c.b16 %v4477, %v4473
        %v4862 = vpack.c.b16 %v4478, %v4474
        %v4863 = vpack.c.b16 %v4479, %v4475
        %v4864 = vpack.c.b16 %v4480, %v4476
        %v4865 = vpack.c.b16 %v4485, %v4481
        %v4866 = vpack.c.b16 %v4486, %v4482
        %v4867 = vpack.c.b16 %v4487, %v4483
        %v4868 = vpack.c.b16 %v4488, %v4484
        %v4869 = vpack.c.b16 %v4493, %v4489
        %v4870 = vpack.c.b16 %v4494, %v4490
        %v4871 = vpack.c.b16 %v4495, %v4491
        %v4872 = vpack.c.b16 %v4496, %v4492
        %v4873 = vpack.c.b16 %v4501, %v4497
        %v4874 = vpack.c.b16 %v4502, %v4498
        %v4875 = vpack.c.b16 %v4503, %v4499
        %v4876 = vpack.c.b16 %v4504, %v4500
        %v4877 = vpack.c.b16 %v4509, %v4505
        %v4878 = vpack.c.b16 %v4510, %v4506
        %v4879 = vpack.c.b16 %v4511, %v4507
        %v4880 = vpack.c.b16 %v4512, %v4508
        %v4881 = vpack.c.b16 %v4517, %v4513
        %v4882 = vpack.c.b16 %v4518, %v4514
        %v4883 = vpack.c.b16 %v4519, %v4515
        %v4884 = vpack.c.b16 %v4520, %v4516
        %v4885 = vpack.c.b16 %v4525, %v4521
        %v4886 = vpack.c.b16 %v4526, %v4522
        %v4887 = vpack.c.b16 %v4527, %v4523
        %v4888 = vpack.c.b16 %v4528, %v4524
        %v4889 = vpack.c.b16 %v4533, %v4529
        %v4890 = vpack.c.b16 %v4534, %v4530
        %v4891 = vpack.c.b16 %v4535, %v4531
        %v4892 = vpack.c.b16 %v4536, %v4532
        %v4893 = vpack.c.b16 %v4541, %v4537
        %v4894 = vpack.c.b16 %v4542, %v4538
        %v4895 = vpack.c.b16 %v4543, %v4539
        %v4896 = vpack.c.b16 %v4544, %v4540
        %v4897 = vpack.c.b16 %v4549, %v4545
        %v4898 = vpack.c.b16 %v4550, %v4546
        %v4899 = vpack.c.b16 %v4551, %v4547
        %v4900 = vpack.c.b16 %v4552, %v4548
        %v4901 = vpack.c.b16 %v4557, %v4553
        %v4902 = vpack.c.b16 %v4558, %v4554
        %v4903 = vpack.c.b16 %v4559, %v4555
        %v4904 = vpack.c.b16 %v4560, %v4556
        %v4905 = vpack.c.b16 %v4565, %v4561
        %v4906 = vpack.c.b16 %v4566, %v4562
        %v4907 = vpack.c.b16 %v4567, %v4563
        %v4908 = vpack.c.b16 %v4568, %v4564
        %v4909 = vpack.c.b16 %v4573, %v4569
        %v4910 = vpack.c.b16 %v4574, %v4570
        %v4911 = vpack.c.b16 %v4575, %v4571
        %v4912 = vpack.c.b16 %v4576, %v4572
        %v4913 = vpack.c.b16 %v4581, %v4577
        %v4914 = vpack.c.b16 %v4582, %v4578
        %v4915 = vpack.c.b16 %v4583, %v4579
        %v4916 = vpack.c.b16 %v4584, %v4580
        %v4917 = vpack.c.b16 %v4589, %v4585
        %v4918 = vpack.c.b16 %v4590, %v4586
        %v4919 = vpack.c.b16 %v4591, %v4587
        %v4920 = vpack.c.b16 %v4592, %v4588
        %v4921 = vpack.c.b16 %v4597, %v4593
        %v4922 = vpack.c.b16 %v4598, %v4594
        %v4923 = vpack.c.b16 %v4599, %v4595
        %v4924 = vpack.c.b16 %v4600, %v4596
        %v4925 = vpack.c.b16 %v4605, %v4601
        %v4926 = vpack.c.b16 %v4606, %v4602
        %v4927 = vpack.c.b16 %v4607, %v4603
        %v4928 = vpack.c.b16 %v4608, %v4604
        %v4929 = vpack.c.b16 %v4613, %v4609
        %v4930 = vpack.c.b16 %v4614, %v4610
        %v4931 = vpack.c.b16 %v4615, %v4611
        %v4932 = vpack.c.b16 %v4616, %v4612
        %v4933 = vpack.c.b16 %v4621, %v4617
        %v4934 = vpack.c.b16 %v4622, %v4618
        %v4935 = vpack.c.b16 %v4623, %v4619
        %v4936 = vpack.c.b16 %v4624, %v4620
        %v4937 = vpack.c.b16 %v4629, %v4625
        %v4938 = vpack.c.b16 %v4630, %v4626
        %v4939 = vpack.c.b16 %v4631, %v4627
        %v4940 = vpack.c.b16 %v4632, %v4628
        %v4941 = vpack.c.b16 %v4637, %v4633
        %v4942 = vpack.c.b16 %v4638, %v4634
        %v4943 = vpack.c.b16 %v4639, %v4635
        %v4944 = vpack.c.b16 %v4640, %v4636
        %v4945 = vpack.c.b16 %v4645, %v4641
        %v4946 = vpack.c.b16 %v4646, %v4642
        %v4947 = vpack.c.b16 %v4647, %v4643
        %v4948 = vpack.c.b16 %v4648, %v4644
        %v4949 = vpack.c.b16 %v4653, %v4649
        %v4950 = vpack.c.b16 %v4654, %v4650
        %v4951 = vpack.c.b16 %v4655, %v4651
        %v4952 = vpack.c.b16 %v4656, %v4652
        %v4953 = vpack.c.b16 %v4661, %v4657
        %v4954 = vpack.c.b16 %v4662, %v4658
        %v4955 = vpack.c.b16 %v4663, %v4659
        %v4956 = vpack.c.b16 %v4664, %v4660
        %v4957 = vpack.c.b16 %v4669, %v4665
        %v4958 = vpack.c.b16 %v4670, %v4666
        %v4959 = vpack.c.b16 %v4671, %v4667
        %v4960 = vpack.c.b16 %v4672, %v4668
        %v4961 = vpack.c.b16 %v4677, %v4673
        %v4962 = vpack.c.b16 %v4678, %v4674
        %v4963 = vpack.c.b16 %v4679, %v4675
        %v4964 = vpack.c.b16 %v4680, %v4676
        %v4965 = vpack.c.b16 %v4685, %v4681
        %v4966 = vpack.c.b16 %v4686, %v4682
        %v4967 = vpack.c.b16 %v4687, %v4683
        %v4968 = vpack.c.b16 %v4688, %v4684
        %v4969 = vpack.c.b16 %v4693, %v4689
        %v4970 = vpack.c.b16 %v4694, %v4690
        %v4971 = vpack.c.b16 %v4695, %v4691
        %v4972 = vpack.c.b16 %v4696, %v4692
        %v4973 = vpack.c.b16 %v4701, %v4697
        %v4974 = vpack.c.b16 %v4702, %v4698
        %v4975 = vpack.c.b16 %v4703, %v4699
        %v4976 = vpack.c.b16 %v4704, %v4700
        %v4977 = vpack.c.b16 %v4709, %v4705
        %v4978 = vpack.c.b16 %v4710, %v4706
        %v4979 = vpack.c.b16 %v4711, %v4707
        %v4980 = vpack.c.b16 %v4712, %v4708
        %v4981 = vpack.c.b16 %v4717, %v4713
        %v4982 = vpack.c.b16 %v4718, %v4714
        %v4983 = vpack.c.b16 %v4719, %v4715
        %v4984 = vpack.c.b16 %v4720, %v4716
        %v4985 = vpack.c.b16 %v4725, %v4721
        %v4986 = vpack.c.b16 %v4726, %v4722
        %v4987 = vpack.c.b16 %v4727, %v4723
        %v4988 = vpack.c.b16 %v4728, %v4724
        %v4989 = vpack.c.b16 %v4733, %v4729
        %v4990 = vpack.c.b16 %v4734, %v4730
        %v4991 = vpack.c.b16 %v4735, %v4731
        %v4992 = vpack.c.b16 %v4736, %v4732
        %5249 = vmatprep.subr.bf16.mxu0 %v4738
        %5250 = vmatpush1.bf16.msra.mxu0 %v4737
        %5251 = vmatprep.subr.bf16.mxu0 %v4742
        %5252 = vmatpush1.bf16.msra.mxu0 %v4741
        %5253 = vmatprep.subr.bf16.mxu0 %v4746
        %5254 = vmatpush1.bf16.msra.mxu0 %v4745
        %5255 = vmatprep.subr.bf16.mxu0 %v4750
        %5256 = vmatpush1.bf16.msra.mxu0 %v4749
        %5257 = vmatprep.subr.bf16.mxu0 %v4754
        %5258 = vmatpush1.bf16.msra.mxu0 %v4753
        %5259 = vmatprep.subr.bf16.mxu0 %v4758
        %5260 = vmatpush1.bf16.msra.mxu0 %v4757
        %5261 = vmatprep.subr.bf16.mxu0 %v4762
        %5262 = vmatpush1.bf16.msra.mxu0 %v4761
        %5263 = vmatprep.subr.bf16.mxu0 %v4766
        %5264 = vmatpush1.bf16.msra.mxu0 %v4765
        %5265 = vmatprep.subr.bf16.mxu0 %v4770
        %5266 = vmatpush1.bf16.msra.mxu0 %v4769
        %5267 = vmatprep.subr.bf16.mxu0 %v4774
        %5268 = vmatpush1.bf16.msra.mxu0 %v4773
        %5269 = vmatprep.subr.bf16.mxu0 %v4778
        %5270 = vmatpush1.bf16.msra.mxu0 %v4777
        %5271 = vmatprep.subr.bf16.mxu0 %v4782
        %5272 = vmatpush1.bf16.msra.mxu0 %v4781
        %5273 = vmatprep.subr.bf16.mxu0 %v4786
        %5274 = vmatpush1.bf16.msra.mxu0 %v4785
        %5275 = vmatprep.subr.bf16.mxu0 %v4790
        %5276 = vmatpush1.bf16.msra.mxu0 %v4789
        %5277 = vmatprep.subr.bf16.mxu0 %v4794
        %5278 = vmatpush1.bf16.msra.mxu0 %v4793
        %5279 = vmatprep.subr.bf16.mxu0 %v4798
        %5280 = vmatpush1.bf16.msra.mxu0 %v4797
        %5281 = vmatprep.mubr.bf16.mxu0 %v3909
        %5282 = vmatmul.mubr.bf16.gmra.mrb[0].mxu0 %v3908
        %v5283 = vpop.f32.mrb[0].mxu0
        %v5284 = vadd.f32 %v3952, %v5283
        %v5285 = vpop.f32.mrb[0].mxu0
        %v5286 = vadd.f32 %v3956, %v5285
        %v5287 = vpop.f32.mrb[0].mxu0
        %v5288 = vadd.f32 %v3952, %v5287
        %v5289 = vpop.f32.mrb[0].mxu0
        %v5290 = vadd.f32 %v3956, %v5289
        %5291 = vmatprep.mubr.bf16.mxu0 %v3917
        %5292 = vmatmul.mubr.bf16.gmra.mrb[0].mxu0 %v3916
        %v5293 = vpop.f32.mrb[0].mxu0
        %v5294 = vadd.f32 %v3952, %v5293
        %v5295 = vpop.f32.mrb[0].mxu0
        %v5296 = vadd.f32 %v3956, %v5295
        %v5297 = vpop.f32.mrb[0].mxu0
        %v5298 = vadd.f32 %v3952, %v5297
        %v5299 = vpop.f32.mrb[0].mxu0
        %v5300 = vadd.f32 %v3956, %v5299
        %5301 = vmatprep.mubr.bf16.mxu0 %v3925
        %5302 = vmatmul.mubr.bf16.gmra.mrb[0].mxu0 %v3924
        %v5303 = vpop.f32.mrb[0].mxu0
        %v5304 = vadd.f32 %v3952, %v5303
        %v5305 = vpop.f32.mrb[0].mxu0
        %v5306 = vadd.f32 %v3956, %v5305
        %v5307 = vpop.f32.mrb[0].mxu0
        %v5308 = vadd.f32 %v3952, %v5307
        %v5309 = vpop.f32.mrb[0].mxu0
        %v5310 = vadd.f32 %v3956, %v5309
        %5311 = vmatprep.mubr.bf16.mxu0 %v3933
        %5312 = vmatmul.mubr.bf16.gmra.mrb[0].mxu0 %v3932
        %v5313 = vpop.f32.mrb[0].mxu0
        %v5314 = vadd.f32 %v3952, %v5313
        %v5315 = vpop.f32.mrb[0].mxu0
        %v5316 = vadd.f32 %v3956, %v5315
        %v5317 = vpop.f32.mrb[0].mxu0
        %v5318 = vadd.f32 %v3952, %v5317
        %v5319 = vpop.f32.mrb[0].mxu0
        %v5320 = vadd.f32 %v3956, %v5319
        %5321 = vmatprep.mubr.bf16.mxu0 %v3941
        %5322 = vmatmul.mubr.bf16.gmra.mrb[0].mxu0 %v3940
        %v5323 = vpop.f32.mrb[0].mxu0
        %v5324 = vadd.f32 %v3952, %v5323
        %v5325 = vpop.f32.mrb[0].mxu0
        %v5326 = vadd.f32 %v3956, %v5325
        %v5327 = vpop.f32.mrb[0].mxu0
        %v5328 = vadd.f32 %v3952, %v5327
        %v5329 = vpop.f32.mrb[0].mxu0
        %v5330 = vadd.f32 %v3956, %v5329
        %5331 = vdwg.mxu0
        %5332 = vmatprep.subr.bf16.mxu0 %v4802
        %5333 = vmatpush1.bf16.msra.mxu0 %v4801
        %5334 = vmatprep.subr.bf16.mxu0 %v4806
        %5335 = vmatpush1.bf16.msra.mxu0 %v4805
        %5336 = vmatprep.subr.bf16.mxu0 %v4810
        %5337 = vmatpush1.bf16.msra.mxu0 %v4809
        %5338 = vmatprep.subr.bf16.mxu0 %v4814
        %5339 = vmatpush1.bf16.msra.mxu0 %v4813
        %5340 = vmatprep.subr.bf16.mxu0 %v4818
        %5341 = vmatpush1.bf16.msra.mxu0 %v4817
        %5342 = vmatprep.subr.bf16.mxu0 %v4822
        %5343 = vmatpush1.bf16.msra.mxu0 %v4821
        %5344 = vmatprep.subr.bf16.mxu0 %v4826
        %5345 = vmatpush1.bf16.msra.mxu0 %v4825
        %5346 = vmatprep.subr.bf16.mxu0 %v4830
        %5347 = vmatpush1.bf16.msra.mxu0 %v4829
        %5348 = vmatprep.subr.bf16.mxu0 %v4834
        %5349 = vmatpush1.bf16.msra.mxu0 %v4833
        %5350 = vmatprep.subr.bf16.mxu0 %v4838
        %5351 = vmatpush1.bf16.msra.mxu0 %v4837
        %5352 = vmatprep.subr.bf16.mxu0 %v4842
        %5353 = vmatpush1.bf16.msra.mxu0 %v4841
        %5354 = vmatprep.subr.bf16.mxu0 %v4846
        %5355 = vmatpush1.bf16.msra.mxu0 %v4845
        %5356 = vmatprep.subr.bf16.mxu0 %v4850
        %5357 = vmatpush1.bf16.msra.mxu0 %v4849
        %5358 = vmatprep.subr.bf16.mxu0 %v4854
        %5359 = vmatpush1.bf16.msra.mxu0 %v4853
        %5360 = vmatprep.subr.bf16.mxu0 %v4858
        %5361 = vmatpush1.bf16.msra.mxu0 %v4857
        %5362 = vmatprep.subr.bf16.mxu0 %v4862
        %5363 = vmatpush1.bf16.msra.mxu0 %v4861
        %5364 = vmatprep.mubr.bf16.mxu0 %v3911
        %5365 = vmatmul.mubr.bf16.gmra.mrb[0].mxu0 %v3910
        %v5366 = vpop.f32.mrb[0].mxu0
        %v5367 = vadd.f32 %v5284, %v5366
        %v5368 = vpop.f32.mrb[0].mxu0
        %v5369 = vadd.f32 %v5286, %v5368
        %v5370 = vpop.f32.mrb[0].mxu0
        %v5371 = vadd.f32 %v5288, %v5370
        %v5372 = vpop.f32.mrb[0].mxu0
        %v5373 = vadd.f32 %v5290, %v5372
        %5374 = vmatprep.mubr.bf16.mxu0 %v3919
        %5375 = vmatmul.mubr.bf16.gmra.mrb[0].mxu0 %v3918
        %v5376 = vpop.f32.mrb[0].mxu0
        %v5377 = vadd.f32 %v5294, %v5376
        %v5378 = vpop.f32.mrb[0].mxu0
        %v5379 = vadd.f32 %v5296, %v5378
        %v5380 = vpop.f32.mrb[0].mxu0
        %v5381 = vadd.f32 %v5298, %v5380
        %v5382 = vpop.f32.mrb[0].mxu0
        %v5383 = vadd.f32 %v5300, %v5382
        %5384 = vmatprep.mubr.bf16.mxu0 %v3927
        %5385 = vmatmul.mubr.bf16.gmra.mrb[0].mxu0 %v3926
        %v5386 = vpop.f32.mrb[0].mxu0
        %v5387 = vadd.f32 %v5304, %v5386
        %v5388 = vpop.f32.mrb[0].mxu0
        %v5389 = vadd.f32 %v5306, %v5388
        %v5390 = vpop.f32.mrb[0].mxu0
        %v5391 = vadd.f32 %v5308, %v5390
        %v5392 = vpop.f32.mrb[0].mxu0
        %v5393 = vadd.f32 %v5310, %v5392
        %5394 = vmatprep.mubr.bf16.mxu0 %v3935
        %5395 = vmatmul.mubr.bf16.gmra.mrb[0].mxu0 %v3934
        %v5396 = vpop.f32.mrb[0].mxu0
        %v5397 = vadd.f32 %v5314, %v5396
        %v5398 = vpop.f32.mrb[0].mxu0
        %v5399 = vadd.f32 %v5316, %v5398
        %v5400 = vpop.f32.mrb[0].mxu0
        %v5401 = vadd.f32 %v5318, %v5400
        %v5402 = vpop.f32.mrb[0].mxu0
        %v5403 = vadd.f32 %v5320, %v5402
        %5404 = vmatprep.mubr.bf16.mxu0 %v3943
        %5405 = vmatmul.mubr.bf16.gmra.mrb[0].mxu0 %v3942
        %v5406 = vpop.f32.mrb[0].mxu0
        %v5407 = vadd.f32 %v5324, %v5406
        %v5408 = vpop.f32.mrb[0].mxu0
        %v5409 = vadd.f32 %v5326, %v5408
        %v5410 = vpop.f32.mrb[0].mxu0
        %v5411 = vadd.f32 %v5328, %v5410
        %v5412 = vpop.f32.mrb[0].mxu0
        %v5413 = vadd.f32 %v5330, %v5412
        %5414 = vdwg.mxu0
        %5415 = vmatprep.subr.bf16.mxu0 %v4866
        %5416 = vmatpush1.bf16.msra.mxu0 %v4865
        %5417 = vmatprep.subr.bf16.mxu0 %v4870
        %5418 = vmatpush1.bf16.msra.mxu0 %v4869
        %5419 = vmatprep.subr.bf16.mxu0 %v4874
        %5420 = vmatpush1.bf16.msra.mxu0 %v4873
        %5421 = vmatprep.subr.bf16.mxu0 %v4878
        %5422 = vmatpush1.bf16.msra.mxu0 %v4877
        %5423 = vmatprep.subr.bf16.mxu0 %v4882
        %5424 = vmatpush1.bf16.msra.mxu0 %v4881
        %5425 = vmatprep.subr.bf16.mxu0 %v4886
        %5426 = vmatpush1.bf16.msra.mxu0 %v4885
        %5427 = vmatprep.subr.bf16.mxu0 %v4890
        %5428 = vmatpush1.bf16.msra.mxu0 %v4889
        %5429 = vmatprep.subr.bf16.mxu0 %v4894
        %5430 = vmatpush1.bf16.msra.mxu0 %v4893
        %5431 = vmatprep.subr.bf16.mxu0 %v4898
        %5432 = vmatpush1.bf16.msra.mxu0 %v4897
        %5433 = vmatprep.subr.bf16.mxu0 %v4902
        %5434 = vmatpush1.bf16.msra.mxu0 %v4901
        %5435 = vmatprep.subr.bf16.mxu0 %v4906
        %5436 = vmatpush1.bf16.msra.mxu0 %v4905
        %5437 = vmatprep.subr.bf16.mxu0 %v4910
        %5438 = vmatpush1.bf16.msra.mxu0 %v4909
        %5439 = vmatprep.subr.bf16.mxu0 %v4914
        %5440 = vmatpush1.bf16.msra.mxu0 %v4913
        %5441 = vmatprep.subr.bf16.mxu0 %v4918
        %5442 = vmatpush1.bf16.msra.mxu0 %v4917
        %5443 = vmatprep.subr.bf16.mxu0 %v4922
        %5444 = vmatpush1.bf16.msra.mxu0 %v4921
        %5445 = vmatprep.subr.bf16.mxu0 %v4926
        %5446 = vmatpush1.bf16.msra.mxu0 %v4925
        %5447 = vmatprep.mubr.bf16.mxu0 %v3913
        %5448 = vmatmul.mubr.bf16.gmra.mrb[0].mxu0 %v3912
        %v5449 = vpop.f32.mrb[0].mxu0
        %v5450 = vadd.f32 %v5367, %v5449
        %v5451 = vpop.f32.mrb[0].mxu0
        %v5452 = vadd.f32 %v5369, %v5451
        %v5453 = vpop.f32.mrb[0].mxu0
        %v5454 = vadd.f32 %v5371, %v5453
        %v5455 = vpop.f32.mrb[0].mxu0
        %v5456 = vadd.f32 %v5373, %v5455
        %5457 = vmatprep.mubr.bf16.mxu0 %v3921
        %5458 = vmatmul.mubr.bf16.gmra.mrb[0].mxu0 %v3920
        %v5459 = vpop.f32.mrb[0].mxu0
        %v5460 = vadd.f32 %v5377, %v5459
        %v5461 = vpop.f32.mrb[0].mxu0
        %v5462 = vadd.f32 %v5379, %v5461
        %v5463 = vpop.f32.mrb[0].mxu0
        %v5464 = vadd.f32 %v5381, %v5463
        %v5465 = vpop.f32.mrb[0].mxu0
        %v5466 = vadd.f32 %v5383, %v5465
        %5467 = vmatprep.mubr.bf16.mxu0 %v3929
        %5468 = vmatmul.mubr.bf16.gmra.mrb[0].mxu0 %v3928
        %v5469 = vpop.f32.mrb[0].mxu0
        %v5470 = vadd.f32 %v5387, %v5469
        %v5471 = vpop.f32.mrb[0].mxu0
        %v5472 = vadd.f32 %v5389, %v5471
        %v5473 = vpop.f32.mrb[0].mxu0
        %v5474 = vadd.f32 %v5391, %v5473
        %v5475 = vpop.f32.mrb[0].mxu0
        %v5476 = vadd.f32 %v5393, %v5475
        %5477 = vmatprep.mubr.bf16.mxu0 %v3937
        %5478 = vmatmul.mubr.bf16.gmra.mrb[0].mxu0 %v3936
        %v5479 = vpop.f32.mrb[0].mxu0
        %v5480 = vadd.f32 %v5397, %v5479
        %v5481 = vpop.f32.mrb[0].mxu0
        %v5482 = vadd.f32 %v5399, %v5481
        %v5483 = vpop.f32.mrb[0].mxu0
        %v5484 = vadd.f32 %v5401, %v5483
        %v5485 = vpop.f32.mrb[0].mxu0
        %v5486 = vadd.f32 %v5403, %v5485
        %5487 = vmatprep.mubr.bf16.mxu0 %v3945
        %5488 = vmatmul.mubr.bf16.gmra.mrb[0].mxu0 %v3944
        %v5489 = vpop.f32.mrb[0].mxu0
        %v5490 = vadd.f32 %v5407, %v5489
        %v5491 = vpop.f32.mrb[0].mxu0
        %v5492 = vadd.f32 %v5409, %v5491
        %v5493 = vpop.f32.mrb[0].mxu0
        %v5494 = vadd.f32 %v5411, %v5493
        %v5495 = vpop.f32.mrb[0].mxu0
        %v5496 = vadd.f32 %v5413, %v5495
        %5497 = vdwg.mxu0
        %5498 = vmatprep.subr.bf16.mxu0 %v4930
        %5499 = vmatpush1.bf16.msra.mxu0 %v4929
        %5500 = vmatprep.subr.bf16.mxu0 %v4934
        %5501 = vmatpush1.bf16.msra.mxu0 %v4933
        %5502 = vmatprep.subr.bf16.mxu0 %v4938
        %5503 = vmatpush1.bf16.msra.mxu0 %v4937
        %5504 = vmatprep.subr.bf16.mxu0 %v4942
        %5505 = vmatpush1.bf16.msra.mxu0 %v4941
        %5506 = vmatprep.subr.bf16.mxu0 %v4946
        %5507 = vmatpush1.bf16.msra.mxu0 %v4945
        %5508 = vmatprep.subr.bf16.mxu0 %v4950
        %5509 = vmatpush1.bf16.msra.mxu0 %v4949
        %5510 = vmatprep.subr.bf16.mxu0 %v4954
        %5511 = vmatpush1.bf16.msra.mxu0 %v4953
        %5512 = vmatprep.subr.bf16.mxu0 %v4958
        %5513 = vmatpush1.bf16.msra.mxu0 %v4957
        %5514 = vmatprep.subr.bf16.mxu0 %v4962
        %5515 = vmatpush1.bf16.msra.mxu0 %v4961
        %5516 = vmatprep.subr.bf16.mxu0 %v4966
        %5517 = vmatpush1.bf16.msra.mxu0 %v4965
        %5518 = vmatprep.subr.bf16.mxu0 %v4970
        %5519 = vmatpush1.bf16.msra.mxu0 %v4969
        %5520 = vmatprep.subr.bf16.mxu0 %v4974
        %5521 = vmatpush1.bf16.msra.mxu0 %v4973
        %5522 = vmatprep.subr.bf16.mxu0 %v4978
        %5523 = vmatpush1.bf16.msra.mxu0 %v4977
        %5524 = vmatprep.subr.bf16.mxu0 %v4982
        %5525 = vmatpush1.bf16.msra.mxu0 %v4981
        %5526 = vmatprep.subr.bf16.mxu0 %v4986
        %5527 = vmatpush1.bf16.msra.mxu0 %v4985
        %5528 = vmatprep.subr.bf16.mxu0 %v4990
        %5529 = vmatpush1.bf16.msra.mxu0 %v4989
        %5530 = vmatprep.mubr.bf16.mxu0 %v3915
        %5531 = vmatmul.mubr.bf16.gmra.mrb[0].mxu0 %v3914
        %v5532 = vpop.f32.mrb[0].mxu0
        %v5533 = vadd.f32 %v5450, %v5532
        %v5534 = vpop.f32.mrb[0].mxu0
        %v5535 = vadd.f32 %v5452, %v5534
        %v5536 = vpop.f32.mrb[0].mxu0
        %v5537 = vadd.f32 %v5454, %v5536
        %v5538 = vpop.f32.mrb[0].mxu0
        %v5539 = vadd.f32 %v5456, %v5538
        %5540 = vmatprep.mubr.bf16.mxu0 %v3923
        %5541 = vmatmul.mubr.bf16.gmra.mrb[0].mxu0 %v3922
        %v5542 = vpop.f32.mrb[0].mxu0
        %v5543 = vadd.f32 %v5460, %v5542
        %v5544 = vpop.f32.mrb[0].mxu0
        %v5545 = vadd.f32 %v5462, %v5544
        %v5546 = vpop.f32.mrb[0].mxu0
        %v5547 = vadd.f32 %v5464, %v5546
        %v5548 = vpop.f32.mrb[0].mxu0
        %v5549 = vadd.f32 %v5466, %v5548
        %5550 = vmatprep.mubr.bf16.mxu0 %v3931
        %5551 = vmatmul.mubr.bf16.gmra.mrb[0].mxu0 %v3930
        %v5552 = vpop.f32.mrb[0].mxu0
        %v5553 = vadd.f32 %v5470, %v5552
        %v5554 = vpop.f32.mrb[0].mxu0
        %v5555 = vadd.f32 %v5472, %v5554
        %v5556 = vpop.f32.mrb[0].mxu0
        %v5557 = vadd.f32 %v5474, %v5556
        %v5558 = vpop.f32.mrb[0].mxu0
        %v5559 = vadd.f32 %v5476, %v5558
        %5560 = vmatprep.mubr.bf16.mxu0 %v3939
        %5561 = vmatmul.mubr.bf16.gmra.mrb[0].mxu0 %v3938
        %v5562 = vpop.f32.mrb[0].mxu0
        %v5563 = vadd.f32 %v5480, %v5562
        %v5564 = vpop.f32.mrb[0].mxu0
        %v5565 = vadd.f32 %v5482, %v5564
        %v5566 = vpop.f32.mrb[0].mxu0
        %v5567 = vadd.f32 %v5484, %v5566
        %v5568 = vpop.f32.mrb[0].mxu0
        %v5569 = vadd.f32 %v5486, %v5568
        %5570 = vmatprep.mubr.bf16.mxu0 %v3947
        %5571 = vmatmul.mubr.bf16.gmra.mrb[0].mxu0 %v3946
        %v5572 = vpop.f32.mrb[0].mxu0
        %v5573 = vadd.f32 %v5490, %v5572
        %v5574 = vpop.f32.mrb[0].mxu0
        %v5575 = vadd.f32 %v5492, %v5574
        %v5576 = vpop.f32.mrb[0].mxu0
        %v5577 = vadd.f32 %v5494, %v5576
        %v5578 = vpop.f32.mrb[0].mxu0
        %v5579 = vadd.f32 %v5496, %v5578
        %5580 = vdwg.mxu0
        %5581 = vmatprep.subr.bf16.mxu0 %v4740
        %5582 = vmatpush1.bf16.msra.mxu0 %v4739
        %5583 = vmatprep.subr.bf16.mxu0 %v4744
        %5584 = vmatpush1.bf16.msra.mxu0 %v4743
        %5585 = vmatprep.subr.bf16.mxu0 %v4748
        %5586 = vmatpush1.bf16.msra.mxu0 %v4747
        %5587 = vmatprep.subr.bf16.mxu0 %v4752
        %5588 = vmatpush1.bf16.msra.mxu0 %v4751
        %5589 = vmatprep.subr.bf16.mxu0 %v4756
        %5590 = vmatpush1.bf16.msra.mxu0 %v4755
        %5591 = vmatprep.subr.bf16.mxu0 %v4760
        %5592 = vmatpush1.bf16.msra.mxu0 %v4759
        %5593 = vmatprep.subr.bf16.mxu0 %v4764
        %5594 = vmatpush1.bf16.msra.mxu0 %v4763
        %5595 = vmatprep.subr.bf16.mxu0 %v4768
        %5596 = vmatpush1.bf16.msra.mxu0 %v4767
        %5597 = vmatprep.subr.bf16.mxu0 %v4772
        %5598 = vmatpush1.bf16.msra.mxu0 %v4771
        %5599 = vmatprep.subr.bf16.mxu0 %v4776
        %5600 = vmatpush1.bf16.msra.mxu0 %v4775
        %5601 = vmatprep.subr.bf16.mxu0 %v4780
        %5602 = vmatpush1.bf16.msra.mxu0 %v4779
        %5603 = vmatprep.subr.bf16.mxu0 %v4784
        %5604 = vmatpush1.bf16.msra.mxu0 %v4783
        %5605 = vmatprep.subr.bf16.mxu0 %v4788
        %5606 = vmatpush1.bf16.msra.mxu0 %v4787
        %5607 = vmatprep.subr.bf16.mxu0 %v4792
        %5608 = vmatpush1.bf16.msra.mxu0 %v4791
        %5609 = vmatprep.subr.bf16.mxu0 %v4796
        %5610 = vmatpush1.bf16.msra.mxu0 %v4795
        %5611 = vmatprep.subr.bf16.mxu0 %v4800
        %5612 = vmatpush1.bf16.msra.mxu0 %v4799
        %5613 = vmatprep.mubr.bf16.mxu0 %v3909
        %5614 = vmatmul.mubr.bf16.gmra.mrb[0].mxu0 %v3908
        %v5615 = vpop.f32.mrb[0].mxu0
        %v5616 = vadd.f32 %v3960, %v5615
        %v5617 = vpop.f32.mrb[0].mxu0
        %v5618 = vadd.f32 %v3964, %v5617
        %v5619 = vpop.f32.mrb[0].mxu0
        %v5620 = vadd.f32 %v3960, %v5619
        %v5621 = vpop.f32.mrb[0].mxu0
        %v5622 = vadd.f32 %v3964, %v5621
        %5623 = vmatprep.mubr.bf16.mxu0 %v3917
        %5624 = vmatmul.mubr.bf16.gmra.mrb[0].mxu0 %v3916
        %v5625 = vpop.f32.mrb[0].mxu0
        %v5626 = vadd.f32 %v3960, %v5625
        %v5627 = vpop.f32.mrb[0].mxu0
        %v5628 = vadd.f32 %v3964, %v5627
        %v5629 = vpop.f32.mrb[0].mxu0
        %v5630 = vadd.f32 %v3960, %v5629
        %v5631 = vpop.f32.mrb[0].mxu0
        %v5632 = vadd.f32 %v3964, %v5631
        %5633 = vmatprep.mubr.bf16.mxu0 %v3925
        %5634 = vmatmul.mubr.bf16.gmra.mrb[0].mxu0 %v3924
        %v5635 = vpop.f32.mrb[0].mxu0
        %v5636 = vadd.f32 %v3960, %v5635
        %v5637 = vpop.f32.mrb[0].mxu0
        %v5638 = vadd.f32 %v3964, %v5637
        %v5639 = vpop.f32.mrb[0].mxu0
        %v5640 = vadd.f32 %v3960, %v5639
        %v5641 = vpop.f32.mrb[0].mxu0
        %v5642 = vadd.f32 %v3964, %v5641
        %5643 = vmatprep.mubr.bf16.mxu0 %v3933
        %5644 = vmatmul.mubr.bf16.gmra.mrb[0].mxu0 %v3932
        %v5645 = vpop.f32.mrb[0].mxu0
        %v5646 = vadd.f32 %v3960, %v5645
        %v5647 = vpop.f32.mrb[0].mxu0
        %v5648 = vadd.f32 %v3964, %v5647
        %v5649 = vpop.f32.mrb[0].mxu0
        %v5650 = vadd.f32 %v3960, %v5649
        %v5651 = vpop.f32.mrb[0].mxu0
        %v5652 = vadd.f32 %v3964, %v5651
        %5653 = vmatprep.mubr.bf16.mxu0 %v3941
        %5654 = vmatmul.mubr.bf16.gmra.mrb[0].mxu0 %v3940
        %v5655 = vpop.f32.mrb[0].mxu0
        %v5656 = vadd.f32 %v3960, %v5655
        %v5657 = vpop.f32.mrb[0].mxu0
        %v5658 = vadd.f32 %v3964, %v5657
        %v5659 = vpop.f32.mrb[0].mxu0
        %v5660 = vadd.f32 %v3960, %v5659
        %v5661 = vpop.f32.mrb[0].mxu0
        %v5662 = vadd.f32 %v3964, %v5661
        %5663 = vdwg.mxu0
        %5664 = vmatprep.subr.bf16.mxu0 %v4804
        %5665 = vmatpush1.bf16.msra.mxu0 %v4803
        %5666 = vmatprep.subr.bf16.mxu0 %v4808
        %5667 = vmatpush1.bf16.msra.mxu0 %v4807
        %5668 = vmatprep.subr.bf16.mxu0 %v4812
        %5669 = vmatpush1.bf16.msra.mxu0 %v4811
        %5670 = vmatprep.subr.bf16.mxu0 %v4816
        %5671 = vmatpush1.bf16.msra.mxu0 %v4815
        %5672 = vmatprep.subr.bf16.mxu0 %v4820
        %5673 = vmatpush1.bf16.msra.mxu0 %v4819
        %5674 = vmatprep.subr.bf16.mxu0 %v4824
        %5675 = vmatpush1.bf16.msra.mxu0 %v4823
        %5676 = vmatprep.subr.bf16.mxu0 %v4828
        %5677 = vmatpush1.bf16.msra.mxu0 %v4827
        %5678 = vmatprep.subr.bf16.mxu0 %v4832
        %5679 = vmatpush1.bf16.msra.mxu0 %v4831
        %5680 = vmatprep.subr.bf16.mxu0 %v4836
        %5681 = vmatpush1.bf16.msra.mxu0 %v4835
        %5682 = vmatprep.subr.bf16.mxu0 %v4840
        %5683 = vmatpush1.bf16.msra.mxu0 %v4839
        %5684 = vmatprep.subr.bf16.mxu0 %v4844
        %5685 = vmatpush1.bf16.msra.mxu0 %v4843
        %5686 = vmatprep.subr.bf16.mxu0 %v4848
        %5687 = vmatpush1.bf16.msra.mxu0 %v4847
        %5688 = vmatprep.subr.bf16.mxu0 %v4852
        %5689 = vmatpush1.bf16.msra.mxu0 %v4851
        %5690 = vmatprep.subr.bf16.mxu0 %v4856
        %5691 = vmatpush1.bf16.msra.mxu0 %v4855
        %5692 = vmatprep.subr.bf16.mxu0 %v4860
        %5693 = vmatpush1.bf16.msra.mxu0 %v4859
        %5694 = vmatprep.subr.bf16.mxu0 %v4864
        %5695 = vmatpush1.bf16.msra.mxu0 %v4863
        %5696 = vmatprep.mubr.bf16.mxu0 %v3911
        %5697 = vmatmul.mubr.bf16.gmra.mrb[0].mxu0 %v3910
        %v5698 = vpop.f32.mrb[0].mxu0
        %v5699 = vadd.f32 %v5616, %v5698
        %v5700 = vpop.f32.mrb[0].mxu0
        %v5701 = vadd.f32 %v5618, %v5700
        %v5702 = vpop.f32.mrb[0].mxu0
        %v5703 = vadd.f32 %v5620, %v5702
        %v5704 = vpop.f32.mrb[0].mxu0
        %v5705 = vadd.f32 %v5622, %v5704
        %5706 = vmatprep.mubr.bf16.mxu0 %v3919
        %5707 = vmatmul.mubr.bf16.gmra.mrb[0].mxu0 %v3918
        %v5708 = vpop.f32.mrb[0].mxu0
        %v5709 = vadd.f32 %v5626, %v5708
        %v5710 = vpop.f32.mrb[0].mxu0
        %v5711 = vadd.f32 %v5628, %v5710
        %v5712 = vpop.f32.mrb[0].mxu0
        %v5713 = vadd.f32 %v5630, %v5712
        %v5714 = vpop.f32.mrb[0].mxu0
        %v5715 = vadd.f32 %v5632, %v5714
        %5716 = vmatprep.mubr.bf16.mxu0 %v3927
        %5717 = vmatmul.mubr.bf16.gmra.mrb[0].mxu0 %v3926
        %v5718 = vpop.f32.mrb[0].mxu0
        %v5719 = vadd.f32 %v5636, %v5718
        %v5720 = vpop.f32.mrb[0].mxu0
        %v5721 = vadd.f32 %v5638, %v5720
        %v5722 = vpop.f32.mrb[0].mxu0
        %v5723 = vadd.f32 %v5640, %v5722
        %v5724 = vpop.f32.mrb[0].mxu0
        %v5725 = vadd.f32 %v5642, %v5724
        %5726 = vmatprep.mubr.bf16.mxu0 %v3935
        %5727 = vmatmul.mubr.bf16.gmra.mrb[0].mxu0 %v3934
        %v5728 = vpop.f32.mrb[0].mxu0
        %v5729 = vadd.f32 %v5646, %v5728
        %v5730 = vpop.f32.mrb[0].mxu0
        %v5731 = vadd.f32 %v5648, %v5730
        %v5732 = vpop.f32.mrb[0].mxu0
        %v5733 = vadd.f32 %v5650, %v5732
        %v5734 = vpop.f32.mrb[0].mxu0
        %v5735 = vadd.f32 %v5652, %v5734
        %5736 = vmatprep.mubr.bf16.mxu0 %v3943
        %5737 = vmatmul.mubr.bf16.gmra.mrb[0].mxu0 %v3942
        %v5738 = vpop.f32.mrb[0].mxu0
        %v5739 = vadd.f32 %v5656, %v5738
        %v5740 = vpop.f32.mrb[0].mxu0
        %v5741 = vadd.f32 %v5658, %v5740
        %v5742 = vpop.f32.mrb[0].mxu0
        %v5743 = vadd.f32 %v5660, %v5742
        %v5744 = vpop.f32.mrb[0].mxu0
        %v5745 = vadd.f32 %v5662, %v5744
        %5746 = vdwg.mxu0
        %5747 = vmatprep.subr.bf16.mxu0 %v4868
        %5748 = vmatpush1.bf16.msra.mxu0 %v4867
        %5749 = vmatprep.subr.bf16.mxu0 %v4872
        %5750 = vmatpush1.bf16.msra.mxu0 %v4871
        %5751 = vmatprep.subr.bf16.mxu0 %v4876
        %5752 = vmatpush1.bf16.msra.mxu0 %v4875
        %5753 = vmatprep.subr.bf16.mxu0 %v4880
        %5754 = vmatpush1.bf16.msra.mxu0 %v4879
        %5755 = vmatprep.subr.bf16.mxu0 %v4884
        %5756 = vmatpush1.bf16.msra.mxu0 %v4883
        %5757 = vmatprep.subr.bf16.mxu0 %v4888
        %5758 = vmatpush1.bf16.msra.mxu0 %v4887
        %5759 = vmatprep.subr.bf16.mxu0 %v4892
        %5760 = vmatpush1.bf16.msra.mxu0 %v4891
        %5761 = vmatprep.subr.bf16.mxu0 %v4896
        %5762 = vmatpush1.bf16.msra.mxu0 %v4895
        %5763 = vmatprep.subr.bf16.mxu0 %v4900
        %5764 = vmatpush1.bf16.msra.mxu0 %v4899
        %5765 = vmatprep.subr.bf16.mxu0 %v4904
        %5766 = vmatpush1.bf16.msra.mxu0 %v4903
        %5767 = vmatprep.subr.bf16.mxu0 %v4908
        %5768 = vmatpush1.bf16.msra.mxu0 %v4907
        %5769 = vmatprep.subr.bf16.mxu0 %v4912
        %5770 = vmatpush1.bf16.msra.mxu0 %v4911
        %5771 = vmatprep.subr.bf16.mxu0 %v4916
        %5772 = vmatpush1.bf16.msra.mxu0 %v4915
        %5773 = vmatprep.subr.bf16.mxu0 %v4920
        %5774 = vmatpush1.bf16.msra.mxu0 %v4919
        %5775 = vmatprep.subr.bf16.mxu0 %v4924
        %5776 = vmatpush1.bf16.msra.mxu0 %v4923
        %5777 = vmatprep.subr.bf16.mxu0 %v4928
        %5778 = vmatpush1.bf16.msra.mxu0 %v4927
        %5779 = vmatprep.mubr.bf16.mxu0 %v3913
        %5780 = vmatmul.mubr.bf16.gmra.mrb[0].mxu0 %v3912
        %v5781 = vpop.f32.mrb[0].mxu0
        %v5782 = vadd.f32 %v5699, %v5781
        %v5783 = vpop.f32.mrb[0].mxu0
        %v5784 = vadd.f32 %v5701, %v5783
        %v5785 = vpop.f32.mrb[0].mxu0
        %v5786 = vadd.f32 %v5703, %v5785
        %v5787 = vpop.f32.mrb[0].mxu0
        %v5788 = vadd.f32 %v5705, %v5787
        %5789 = vmatprep.mubr.bf16.mxu0 %v3921
        %5790 = vmatmul.mubr.bf16.gmra.mrb[0].mxu0 %v3920
        %v5791 = vpop.f32.mrb[0].mxu0
        %v5792 = vadd.f32 %v5709, %v5791
        %v5793 = vpop.f32.mrb[0].mxu0
        %v5794 = vadd.f32 %v5711, %v5793
        %v5795 = vpop.f32.mrb[0].mxu0
        %v5796 = vadd.f32 %v5713, %v5795
        %v5797 = vpop.f32.mrb[0].mxu0
        %v5798 = vadd.f32 %v5715, %v5797
        %5799 = vmatprep.mubr.bf16.mxu0 %v3929
        %5800 = vmatmul.mubr.bf16.gmra.mrb[0].mxu0 %v3928
        %v5801 = vpop.f32.mrb[0].mxu0
        %v5802 = vadd.f32 %v5719, %v5801
        %v5803 = vpop.f32.mrb[0].mxu0
        %v5804 = vadd.f32 %v5721, %v5803
        %v5805 = vpop.f32.mrb[0].mxu0
        %v5806 = vadd.f32 %v5723, %v5805
        %v5807 = vpop.f32.mrb[0].mxu0
        %v5808 = vadd.f32 %v5725, %v5807
        %5809 = vmatprep.mubr.bf16.mxu0 %v3937
        %5810 = vmatmul.mubr.bf16.gmra.mrb[0].mxu0 %v3936
        %v5811 = vpop.f32.mrb[0].mxu0
        %v5812 = vadd.f32 %v5729, %v5811
        %v5813 = vpop.f32.mrb[0].mxu0
        %v5814 = vadd.f32 %v5731, %v5813
        %v5815 = vpop.f32.mrb[0].mxu0
        %v5816 = vadd.f32 %v5733, %v5815
        %v5817 = vpop.f32.mrb[0].mxu0
        %v5818 = vadd.f32 %v5735, %v5817
        %5819 = vmatprep.mubr.bf16.mxu0 %v3945
        %5820 = vmatmul.mubr.bf16.gmra.mrb[0].mxu0 %v3944
        %v5821 = vpop.f32.mrb[0].mxu0
        %v5822 = vadd.f32 %v5739, %v5821
        %v5823 = vpop.f32.mrb[0].mxu0
        %v5824 = vadd.f32 %v5741, %v5823
        %v5825 = vpop.f32.mrb[0].mxu0
        %v5826 = vadd.f32 %v5743, %v5825
        %v5827 = vpop.f32.mrb[0].mxu0
        %v5828 = vadd.f32 %v5745, %v5827
        %5829 = vdwg.mxu0
        %5830 = vmatprep.subr.bf16.mxu0 %v4932
        %5831 = vmatpush1.bf16.msra.mxu0 %v4931
        %5832 = vmatprep.subr.bf16.mxu0 %v4936
        %5833 = vmatpush1.bf16.msra.mxu0 %v4935
        %5834 = vmatprep.subr.bf16.mxu0 %v4940
        %5835 = vmatpush1.bf16.msra.mxu0 %v4939
        %5836 = vmatprep.subr.bf16.mxu0 %v4944
        %5837 = vmatpush1.bf16.msra.mxu0 %v4943
        %5838 = vmatprep.subr.bf16.mxu0 %v4948
        %5839 = vmatpush1.bf16.msra.mxu0 %v4947
        %5840 = vmatprep.subr.bf16.mxu0 %v4952
        %5841 = vmatpush1.bf16.msra.mxu0 %v4951
        %5842 = vmatprep.subr.bf16.mxu0 %v4956
        %5843 = vmatpush1.bf16.msra.mxu0 %v4955
        %5844 = vmatprep.subr.bf16.mxu0 %v4960
        %5845 = vmatpush1.bf16.msra.mxu0 %v4959
        %5846 = vmatprep.subr.bf16.mxu0 %v4964
        %5847 = vmatpush1.bf16.msra.mxu0 %v4963
        %5848 = vmatprep.subr.bf16.mxu0 %v4968
        %5849 = vmatpush1.bf16.msra.mxu0 %v4967
        %5850 = vmatprep.subr.bf16.mxu0 %v4972
        %5851 = vmatpush1.bf16.msra.mxu0 %v4971
        %5852 = vmatprep.subr.bf16.mxu0 %v4976
        %5853 = vmatpush1.bf16.msra.mxu0 %v4975
        %5854 = vmatprep.subr.bf16.mxu0 %v4980
        %5855 = vmatpush1.bf16.msra.mxu0 %v4979
        %5856 = vmatprep.subr.bf16.mxu0 %v4984
        %5857 = vmatpush1.bf16.msra.mxu0 %v4983
        %5858 = vmatprep.subr.bf16.mxu0 %v4988
        %5859 = vmatpush1.bf16.msra.mxu0 %v4987
        %5860 = vmatprep.subr.bf16.mxu0 %v4992
        %5861 = vmatpush1.bf16.msra.mxu0 %v4991
        %5862 = vmatprep.mubr.bf16.mxu0 %v3915
        %5863 = vmatmul.mubr.bf16.gmra.mrb[0].mxu0 %v3914
        %v5864 = vpop.f32.mrb[0].mxu0
        %v5865 = vadd.f32 %v5782, %v5864
        %v5866 = vpop.f32.mrb[0].mxu0
        %v5867 = vadd.f32 %v5784, %v5866
        %v5868 = vpop.f32.mrb[0].mxu0
        %v5869 = vadd.f32 %v5786, %v5868
        %v5870 = vpop.f32.mrb[0].mxu0
        %v5871 = vadd.f32 %v5788, %v5870
        %5872 = vmatprep.mubr.bf16.mxu0 %v3923
        %5873 = vmatmul.mubr.bf16.gmra.mrb[0].mxu0 %v3922
        %v5874 = vpop.f32.mrb[0].mxu0
        %v5875 = vadd.f32 %v5792, %v5874
        %v5876 = vpop.f32.mrb[0].mxu0
        %v5877 = vadd.f32 %v5794, %v5876
        %v5878 = vpop.f32.mrb[0].mxu0
        %v5879 = vadd.f32 %v5796, %v5878
        %v5880 = vpop.f32.mrb[0].mxu0
        %v5881 = vadd.f32 %v5798, %v5880
        %5882 = vmatprep.mubr.bf16.mxu0 %v3931
        %5883 = vmatmul.mubr.bf16.gmra.mrb[0].mxu0 %v3930
        %v5884 = vpop.f32.mrb[0].mxu0
        %v5885 = vadd.f32 %v5802, %v5884
        %v5886 = vpop.f32.mrb[0].mxu0
        %v5887 = vadd.f32 %v5804, %v5886
        %v5888 = vpop.f32.mrb[0].mxu0
        %v5889 = vadd.f32 %v5806, %v5888
        %v5890 = vpop.f32.mrb[0].mxu0
        %v5891 = vadd.f32 %v5808, %v5890
        %5892 = vmatprep.mubr.bf16.mxu0 %v3939
        %5893 = vmatmul.mubr.bf16.gmra.mrb[0].mxu0 %v3938
        %v5894 = vpop.f32.mrb[0].mxu0
        %v5895 = vadd.f32 %v5812, %v5894
        %v5896 = vpop.f32.mrb[0].mxu0
        %v5897 = vadd.f32 %v5814, %v5896
        %v5898 = vpop.f32.mrb[0].mxu0
        %v5899 = vadd.f32 %v5816, %v5898
        %v5900 = vpop.f32.mrb[0].mxu0
        %v5901 = vadd.f32 %v5818, %v5900
        %5902 = vmatprep.mubr.bf16.mxu0 %v3947
        %5903 = vmatmul.mubr.bf16.gmra.mrb[0].mxu0 %v3946
        %v5904 = vpop.f32.mrb[0].mxu0
        %v5905 = vadd.f32 %v5822, %v5904
        %v5906 = vpop.f32.mrb[0].mxu0
        %v5907 = vadd.f32 %v5824, %v5906
        %v5908 = vpop.f32.mrb[0].mxu0
        %v5909 = vadd.f32 %v5826, %v5908
        %v5910 = vpop.f32.mrb[0].mxu0
        %v5911 = vadd.f32 %v5828, %v5910
        %5912 = vdwg.mxu0
        %v5913 = vmax.f32 %v5533, 0.0
        %v5914 = vmax.f32 %v5535, 0.0
        %v5915 = vmax.f32 %v5865, 0.0
        %v5916 = vmax.f32 %v5867, 0.0
        %v5917 = vmax.f32 %v5537, 0.0
        %v5918 = vmax.f32 %v5539, 0.0
        %v5919 = vmax.f32 %v5869, 0.0
        %v5920 = vmax.f32 %v5871, 0.0
        %v5921 = vmax.f32 %v5543, 0.0
        %v5922 = vmax.f32 %v5545, 0.0
        %v5923 = vmax.f32 %v5875, 0.0
        %v5924 = vmax.f32 %v5877, 0.0
        %v5925 = vmax.f32 %v5547, 0.0
        %v5926 = vmax.f32 %v5549, 0.0
        %v5927 = vmax.f32 %v5879, 0.0
        %v5928 = vmax.f32 %v5881, 0.0
        %v5929 = vmax.f32 %v5553, 0.0
        %v5930 = vmax.f32 %v5555, 0.0
        %v5931 = vmax.f32 %v5885, 0.0
        %v5932 = vmax.f32 %v5887, 0.0
        %v5933 = vmax.f32 %v5557, 0.0
        %v5934 = vmax.f32 %v5559, 0.0
        %v5935 = vmax.f32 %v5889, 0.0
        %v5936 = vmax.f32 %v5891, 0.0
        %v5937 = vmax.f32 %v5563, 0.0
        %v5938 = vmax.f32 %v5565, 0.0
        %v5939 = vmax.f32 %v5895, 0.0
        %v5940 = vmax.f32 %v5897, 0.0
        %v5941 = vmax.f32 %v5567, 0.0
        %v5942 = vmax.f32 %v5569, 0.0
        %v5943 = vmax.f32 %v5899, 0.0
        %v5944 = vmax.f32 %v5901, 0.0
        %v5945 = vmax.f32 %v5573, 0.0
        %v5946 = vmax.f32 %v5575, 0.0
        %v5947 = vmax.f32 %v5905, 0.0
        %v5948 = vmax.f32 %v5907, 0.0
        %v5949 = vmax.f32 %v5577, 0.0
        %v5950 = vmax.f32 %v5579, 0.0
        %v5951 = vmax.f32 %v5909, 0.0
        %v5952 = vmax.f32 %v5911, 0.0
        %v5953 = vpack.c.bf16 %v5917, %v5913
        %v5954 = vpack.c.bf16 %v5918, %v5914
        %v5955 = vpack.c.bf16 %v5919, %v5915
        %v5956 = vpack.c.bf16 %v5920, %v5916
        %v5957 = vpack.c.bf16 %v5925, %v5921
        %v5958 = vpack.c.bf16 %v5926, %v5922
        %v5959 = vpack.c.bf16 %v5927, %v5923
        %v5960 = vpack.c.bf16 %v5928, %v5924
        %v5961 = vpack.c.bf16 %v5933, %v5929
        %v5962 = vpack.c.bf16 %v5934, %v5930
        %v5963 = vpack.c.bf16 %v5935, %v5931
        %v5964 = vpack.c.bf16 %v5936, %v5932
        %v5965 = vpack.c.bf16 %v5941, %v5937
        %v5966 = vpack.c.bf16 %v5942, %v5938
        %v5967 = vpack.c.bf16 %v5943, %v5939
        %v5968 = vpack.c.bf16 %v5944, %v5940
        %v5969 = vpack.c.bf16 %v5949, %v5945
        %v5970 = vpack.c.bf16 %v5950, %v5946
        %v5971 = vpack.c.bf16 %v5951, %v5947
        %v5972 = vpack.c.bf16 %v5952, %v5948
        %v5974 = vlaneseq
        %v5975 = vshrl.u32 %v5974, 7
        %v5976 = vsub.s32 0, %v5975
        %v5977 = vrot.slane %v1072, %v5976
        %v5978 = vlaneseq
        %v5979 = vshrl.u32 %v5978, 7
        %v5980 = vsub.s32 1, %v5979
        %v5981 = vrot.slane %v1072, %v5980
        %v6048 = vunpack.c.l.b16 %v1005
        %v6049 = vunpack.c.h.b16 %v1005
        %v6050 = vunpack.c.l.b16 %v1006
        %v6051 = vunpack.c.h.b16 %v1006
        %v6052 = vunpack.c.l.b16 %v1007
        %v6053 = vunpack.c.h.b16 %v1007
        %v6054 = vunpack.c.l.b16 %v1008
        %v6055 = vunpack.c.h.b16 %v1008
        %v6056 = vunpack.c.l.b16 %v1009
        %v6057 = vunpack.c.h.b16 %v1009
        %v6058 = vunpack.c.l.b16 %v1010
        %v6059 = vunpack.c.h.b16 %v1010
        %v6060 = vunpack.c.l.b16 %v1011
        %v6061 = vunpack.c.h.b16 %v1011
        %v6062 = vunpack.c.l.b16 %v1012
        %v6063 = vunpack.c.h.b16 %v1012
        %v6064 = vunpack.c.l.b16 %v1013
        %v6065 = vunpack.c.h.b16 %v1013
        %v6066 = vunpack.c.l.b16 %v1014
        %v6067 = vunpack.c.h.b16 %v1014
        %v6068 = vunpack.c.l.b16 %v1015
        %v6069 = vunpack.c.h.b16 %v1015
        %v6070 = vunpack.c.l.b16 %v1016
        %v6071 = vunpack.c.h.b16 %v1016
        %v6072 = vunpack.c.l.b16 %v1017
        %v6073 = vunpack.c.h.b16 %v1017
        %v6074 = vunpack.c.l.b16 %v1018
        %v6075 = vunpack.c.h.b16 %v1018
        %v6076 = vunpack.c.l.b16 %v1019
        %v6077 = vunpack.c.h.b16 %v1019
        %v6078 = vunpack.c.l.b16 %v1020
        %v6079 = vunpack.c.h.b16 %v1020
        %v6080 = vunpack.c.l.b16 %v1021
        %v6081 = vunpack.c.h.b16 %v1021
        %v6082 = vunpack.c.l.b16 %v1022
        %v6083 = vunpack.c.h.b16 %v1022
        %v6084 = vunpack.c.l.b16 %v1023
        %v6085 = vunpack.c.h.b16 %v1023
        %v6086 = vunpack.c.l.b16 %v1024
        %v6087 = vunpack.c.h.b16 %v1024
        %v6088 = vunpack.c.l.b16 %v1025
        %v6089 = vunpack.c.h.b16 %v1025
        %v6090 = vunpack.c.l.b16 %v1026
        %v6091 = vunpack.c.h.b16 %v1026
        %v6092 = vunpack.c.l.b16 %v1027
        %v6093 = vunpack.c.h.b16 %v1027
        %v6094 = vunpack.c.l.b16 %v1028
        %v6095 = vunpack.c.h.b16 %v1028
        %v6096 = vunpack.c.l.b16 %v1029
        %v6097 = vunpack.c.h.b16 %v1029
        %v6098 = vunpack.c.l.b16 %v1030
        %v6099 = vunpack.c.h.b16 %v1030
        %v6100 = vunpack.c.l.b16 %v1031
        %v6101 = vunpack.c.h.b16 %v1031
        %v6102 = vunpack.c.l.b16 %v1032
        %v6103 = vunpack.c.h.b16 %v1032
        %v6104 = vunpack.c.l.b16 %v1033
        %v6105 = vunpack.c.h.b16 %v1033
        %v6106 = vunpack.c.l.b16 %v1034
        %v6107 = vunpack.c.h.b16 %v1034
        %v6108 = vunpack.c.l.b16 %v1035
        %v6109 = vunpack.c.h.b16 %v1035
        %v6110 = vunpack.c.l.b16 %v1036
        %v6111 = vunpack.c.h.b16 %v1036
        %v6112 = vunpack.c.l.b16 %v1037
        %v6113 = vunpack.c.h.b16 %v1037
        %v6114 = vunpack.c.l.b16 %v1038
        %v6115 = vunpack.c.h.b16 %v1038
        %v6116 = vunpack.c.l.b16 %v1039
        %v6117 = vunpack.c.h.b16 %v1039
        %v6118 = vunpack.c.l.b16 %v1040
        %v6119 = vunpack.c.h.b16 %v1040
        %v6120 = vunpack.c.l.b16 %v1041
        %v6121 = vunpack.c.h.b16 %v1041
        %v6122 = vunpack.c.l.b16 %v1042
        %v6123 = vunpack.c.h.b16 %v1042
        %v6124 = vunpack.c.l.b16 %v1043
        %v6125 = vunpack.c.h.b16 %v1043
        %v6126 = vunpack.c.l.b16 %v1044
        %v6127 = vunpack.c.h.b16 %v1044
        %v6128 = vunpack.c.l.b16 %v1045
        %v6129 = vunpack.c.h.b16 %v1045
        %v6130 = vunpack.c.l.b16 %v1046
        %v6131 = vunpack.c.h.b16 %v1046
        %v6132 = vunpack.c.l.b16 %v1047
        %v6133 = vunpack.c.h.b16 %v1047
        %v6134 = vunpack.c.l.b16 %v1048
        %v6135 = vunpack.c.h.b16 %v1048
        %v6136 = vunpack.c.l.b16 %v1049
        %v6137 = vunpack.c.h.b16 %v1049
        %v6138 = vunpack.c.l.b16 %v1050
        %v6139 = vunpack.c.h.b16 %v1050
        %v6140 = vunpack.c.l.b16 %v1051
        %v6141 = vunpack.c.h.b16 %v1051
        %v6142 = vunpack.c.l.b16 %v1052
        %v6143 = vunpack.c.h.b16 %v1052
        %v6144 = vunpack.c.l.b16 %v1053
        %v6145 = vunpack.c.h.b16 %v1053
        %v6146 = vunpack.c.l.b16 %v1054
        %v6147 = vunpack.c.h.b16 %v1054
        %v6148 = vunpack.c.l.b16 %v1055
        %v6149 = vunpack.c.h.b16 %v1055
        %v6150 = vunpack.c.l.b16 %v1056
        %v6151 = vunpack.c.h.b16 %v1056
        %v6152 = vunpack.c.l.b16 %v1057
        %v6153 = vunpack.c.h.b16 %v1057
        %v6154 = vunpack.c.l.b16 %v1058
        %v6155 = vunpack.c.h.b16 %v1058
        %v6156 = vunpack.c.l.b16 %v1059
        %v6157 = vunpack.c.h.b16 %v1059
        %v6158 = vunpack.c.l.b16 %v1060
        %v6159 = vunpack.c.h.b16 %v1060
        %v6160 = vunpack.c.l.b16 %v1061
        %v6161 = vunpack.c.h.b16 %v1061
        %v6162 = vunpack.c.l.b16 %v1062
        %v6163 = vunpack.c.h.b16 %v1062
        %v6164 = vunpack.c.l.b16 %v1063
        %v6165 = vunpack.c.h.b16 %v1063
        %v6166 = vunpack.c.l.b16 %v1064
        %v6167 = vunpack.c.h.b16 %v1064
        %v6168 = vunpack.c.l.b16 %v1065
        %v6169 = vunpack.c.h.b16 %v1065
        %v6170 = vunpack.c.l.b16 %v1066
        %v6171 = vunpack.c.h.b16 %v1066
        %v6172 = vunpack.c.l.b16 %v1067
        %v6173 = vunpack.c.h.b16 %v1067
        %v6174 = vunpack.c.l.b16 %v1068
        %v6175 = vunpack.c.h.b16 %v1068
        %v6176 = vpack.c.b16 %v6050, %v6048
        %v6177 = vpack.c.b16 %v6051, %v6049
        %v6178 = vpack.c.b16 %v6054, %v6052
        %v6179 = vpack.c.b16 %v6055, %v6053
        %v6180 = vpack.c.b16 %v6058, %v6056
        %v6181 = vpack.c.b16 %v6059, %v6057
        %v6182 = vpack.c.b16 %v6062, %v6060
        %v6183 = vpack.c.b16 %v6063, %v6061
        %v6184 = vpack.c.b16 %v6066, %v6064
        %v6185 = vpack.c.b16 %v6067, %v6065
        %v6186 = vpack.c.b16 %v6070, %v6068
        %v6187 = vpack.c.b16 %v6071, %v6069
        %v6188 = vpack.c.b16 %v6074, %v6072
        %v6189 = vpack.c.b16 %v6075, %v6073
        %v6190 = vpack.c.b16 %v6078, %v6076
        %v6191 = vpack.c.b16 %v6079, %v6077
        %v6192 = vpack.c.b16 %v6082, %v6080
        %v6193 = vpack.c.b16 %v6083, %v6081
        %v6194 = vpack.c.b16 %v6086, %v6084
        %v6195 = vpack.c.b16 %v6087, %v6085
        %v6196 = vpack.c.b16 %v6090, %v6088
        %v6197 = vpack.c.b16 %v6091, %v6089
        %v6198 = vpack.c.b16 %v6094, %v6092
        %v6199 = vpack.c.b16 %v6095, %v6093
        %v6200 = vpack.c.b16 %v6098, %v6096
        %v6201 = vpack.c.b16 %v6099, %v6097
        %v6202 = vpack.c.b16 %v6102, %v6100
        %v6203 = vpack.c.b16 %v6103, %v6101
        %v6204 = vpack.c.b16 %v6106, %v6104
        %v6205 = vpack.c.b16 %v6107, %v6105
        %v6206 = vpack.c.b16 %v6110, %v6108
        %v6207 = vpack.c.b16 %v6111, %v6109
        %v6208 = vpack.c.b16 %v6114, %v6112
        %v6209 = vpack.c.b16 %v6115, %v6113
        %v6210 = vpack.c.b16 %v6118, %v6116
        %v6211 = vpack.c.b16 %v6119, %v6117
        %v6212 = vpack.c.b16 %v6122, %v6120
        %v6213 = vpack.c.b16 %v6123, %v6121
        %v6214 = vpack.c.b16 %v6126, %v6124
        %v6215 = vpack.c.b16 %v6127, %v6125
        %v6216 = vpack.c.b16 %v6130, %v6128
        %v6217 = vpack.c.b16 %v6131, %v6129
        %v6218 = vpack.c.b16 %v6134, %v6132
        %v6219 = vpack.c.b16 %v6135, %v6133
        %v6220 = vpack.c.b16 %v6138, %v6136
        %v6221 = vpack.c.b16 %v6139, %v6137
        %v6222 = vpack.c.b16 %v6142, %v6140
        %v6223 = vpack.c.b16 %v6143, %v6141
        %v6224 = vpack.c.b16 %v6146, %v6144
        %v6225 = vpack.c.b16 %v6147, %v6145
        %v6226 = vpack.c.b16 %v6150, %v6148
        %v6227 = vpack.c.b16 %v6151, %v6149
        %v6228 = vpack.c.b16 %v6154, %v6152
        %v6229 = vpack.c.b16 %v6155, %v6153
        %v6230 = vpack.c.b16 %v6158, %v6156
        %v6231 = vpack.c.b16 %v6159, %v6157
        %v6232 = vpack.c.b16 %v6162, %v6160
        %v6233 = vpack.c.b16 %v6163, %v6161
        %v6234 = vpack.c.b16 %v6166, %v6164
        %v6235 = vpack.c.b16 %v6167, %v6165
        %v6236 = vpack.c.b16 %v6170, %v6168
        %v6237 = vpack.c.b16 %v6171, %v6169
        %v6238 = vpack.c.b16 %v6174, %v6172
        %v6239 = vpack.c.b16 %v6175, %v6173
        %6304 = vmatprep.subr.bf16.mxu0 %v6177
        %6305 = vmatpush1.bf16.msra.mxu0 %v6176
        %6306 = vmatprep.subr.bf16.mxu0 %v6179
        %6307 = vmatpush1.bf16.msra.mxu0 %v6178
        %6308 = vmatprep.subr.bf16.mxu0 %v6181
        %6309 = vmatpush1.bf16.msra.mxu0 %v6180
        %6310 = vmatprep.subr.bf16.mxu0 %v6183
        %6311 = vmatpush1.bf16.msra.mxu0 %v6182
        %6312 = vmatprep.subr.bf16.mxu0 %v6185
        %6313 = vmatpush1.bf16.msra.mxu0 %v6184
        %6314 = vmatprep.subr.bf16.mxu0 %v6187
        %6315 = vmatpush1.bf16.msra.mxu0 %v6186
        %6316 = vmatprep.subr.bf16.mxu0 %v6189
        %6317 = vmatpush1.bf16.msra.mxu0 %v6188
        %6318 = vmatprep.subr.bf16.mxu0 %v6191
        %6319 = vmatpush1.bf16.msra.mxu0 %v6190
        %6320 = vmatprep.subr.bf16.mxu0 %v6193
        %6321 = vmatpush1.bf16.msra.mxu0 %v6192
        %6322 = vmatprep.subr.bf16.mxu0 %v6195
        %6323 = vmatpush1.bf16.msra.mxu0 %v6194
        %6324 = vmatprep.subr.bf16.mxu0 %v6197
        %6325 = vmatpush1.bf16.msra.mxu0 %v6196
        %6326 = vmatprep.subr.bf16.mxu0 %v6199
        %6327 = vmatpush1.bf16.msra.mxu0 %v6198
        %6328 = vmatprep.subr.bf16.mxu0 %v6201
        %6329 = vmatpush1.bf16.msra.mxu0 %v6200
        %6330 = vmatprep.subr.bf16.mxu0 %v6203
        %6331 = vmatpush1.bf16.msra.mxu0 %v6202
        %6332 = vmatprep.subr.bf16.mxu0 %v6205
        %6333 = vmatpush1.bf16.msra.mxu0 %v6204
        %6334 = vmatprep.subr.bf16.mxu0 %v6207
        %6335 = vmatpush1.bf16.msra.mxu0 %v6206
        %6336 = vmatprep.mubr.bf16.mxu0 %v5954
        %6337 = vmatmul.mubr.bf16.gmra.mrb[0].mxu0 %v5953
        %v6338 = vpop.f32.mrb[0].mxu0
        %v6339 = vadd.f32 %v5977, %v6338
        %v6340 = vpop.f32.mrb[0].mxu0
        %v6341 = vadd.f32 %v5981, %v6340
        %v6342 = vpop.f32.mrb[0].mxu0
        %v6343 = vadd.f32 %v5977, %v6342
        %v6344 = vpop.f32.mrb[0].mxu0
        %v6345 = vadd.f32 %v5981, %v6344
        %6346 = vmatprep.mubr.bf16.mxu0 %v5958
        %6347 = vmatmul.mubr.bf16.gmra.mrb[0].mxu0 %v5957
        %v6348 = vpop.f32.mrb[0].mxu0
        %v6349 = vadd.f32 %v5977, %v6348
        %v6350 = vpop.f32.mrb[0].mxu0
        %v6351 = vadd.f32 %v5981, %v6350
        %v6352 = vpop.f32.mrb[0].mxu0
        %v6353 = vadd.f32 %v5977, %v6352
        %v6354 = vpop.f32.mrb[0].mxu0
        %v6355 = vadd.f32 %v5981, %v6354
        %6356 = vmatprep.mubr.bf16.mxu0 %v5962
        %6357 = vmatmul.mubr.bf16.gmra.mrb[0].mxu0 %v5961
        %v6358 = vpop.f32.mrb[0].mxu0
        %v6359 = vadd.f32 %v5977, %v6358
        %v6360 = vpop.f32.mrb[0].mxu0
        %v6361 = vadd.f32 %v5981, %v6360
        %v6362 = vpop.f32.mrb[0].mxu0
        %v6363 = vadd.f32 %v5977, %v6362
        %v6364 = vpop.f32.mrb[0].mxu0
        %v6365 = vadd.f32 %v5981, %v6364
        %6366 = vmatprep.mubr.bf16.mxu0 %v5966
        %6367 = vmatmul.mubr.bf16.gmra.mrb[0].mxu0 %v5965
        %v6368 = vpop.f32.mrb[0].mxu0
        %v6369 = vadd.f32 %v5977, %v6368
        %v6370 = vpop.f32.mrb[0].mxu0
        %v6371 = vadd.f32 %v5981, %v6370
        %v6372 = vpop.f32.mrb[0].mxu0
        %v6373 = vadd.f32 %v5977, %v6372
        %v6374 = vpop.f32.mrb[0].mxu0
        %v6375 = vadd.f32 %v5981, %v6374
        %6376 = vmatprep.mubr.bf16.mxu0 %v5970
        %6377 = vmatmul.mubr.bf16.gmra.mrb[0].mxu0 %v5969
        %v6378 = vpop.f32.mrb[0].mxu0
        %v6379 = vadd.f32 %v5977, %v6378
        %v6380 = vpop.f32.mrb[0].mxu0
        %v6381 = vadd.f32 %v5981, %v6380
        %v6382 = vpop.f32.mrb[0].mxu0
        %v6383 = vadd.f32 %v5977, %v6382
        %v6384 = vpop.f32.mrb[0].mxu0
        %v6385 = vadd.f32 %v5981, %v6384
        %6386 = vdwg.mxu0
        %6387 = vmatprep.subr.bf16.mxu0 %v6209
        %6388 = vmatpush1.bf16.msra.mxu0 %v6208
        %6389 = vmatprep.subr.bf16.mxu0 %v6211
        %6390 = vmatpush1.bf16.msra.mxu0 %v6210
        %6391 = vmatprep.subr.bf16.mxu0 %v6213
        %6392 = vmatpush1.bf16.msra.mxu0 %v6212
        %6393 = vmatprep.subr.bf16.mxu0 %v6215
        %6394 = vmatpush1.bf16.msra.mxu0 %v6214
        %6395 = vmatprep.subr.bf16.mxu0 %v6217
        %6396 = vmatpush1.bf16.msra.mxu0 %v6216
        %6397 = vmatprep.subr.bf16.mxu0 %v6219
        %6398 = vmatpush1.bf16.msra.mxu0 %v6218
        %6399 = vmatprep.subr.bf16.mxu0 %v6221
        %6400 = vmatpush1.bf16.msra.mxu0 %v6220
        %6401 = vmatprep.subr.bf16.mxu0 %v6223
        %6402 = vmatpush1.bf16.msra.mxu0 %v6222
        %6403 = vmatprep.subr.bf16.mxu0 %v6225
        %6404 = vmatpush1.bf16.msra.mxu0 %v6224
        %6405 = vmatprep.subr.bf16.mxu0 %v6227
        %6406 = vmatpush1.bf16.msra.mxu0 %v6226
        %6407 = vmatprep.subr.bf16.mxu0 %v6229
        %6408 = vmatpush1.bf16.msra.mxu0 %v6228
        %6409 = vmatprep.subr.bf16.mxu0 %v6231
        %6410 = vmatpush1.bf16.msra.mxu0 %v6230
        %6411 = vmatprep.subr.bf16.mxu0 %v6233
        %6412 = vmatpush1.bf16.msra.mxu0 %v6232
        %6413 = vmatprep.subr.bf16.mxu0 %v6235
        %6414 = vmatpush1.bf16.msra.mxu0 %v6234
        %6415 = vmatprep.subr.bf16.mxu0 %v6237
        %6416 = vmatpush1.bf16.msra.mxu0 %v6236
        %6417 = vmatprep.subr.bf16.mxu0 %v6239
        %6418 = vmatpush1.bf16.msra.mxu0 %v6238
        %6419 = vmatprep.mubr.bf16.mxu0 %v5956
        %6420 = vmatmul.mubr.bf16.gmra.mrb[0].mxu0 %v5955
        %v6421 = vpop.f32.mrb[0].mxu0
        %v6422 = vadd.f32 %v6339, %v6421
        %v6423 = vpop.f32.mrb[0].mxu0
        %v6424 = vadd.f32 %v6341, %v6423
        %v6425 = vpop.f32.mrb[0].mxu0
        %v6426 = vadd.f32 %v6343, %v6425
        %v6427 = vpop.f32.mrb[0].mxu0
        %v6428 = vadd.f32 %v6345, %v6427
        %6429 = vmatprep.mubr.bf16.mxu0 %v5960
        %6430 = vmatmul.mubr.bf16.gmra.mrb[0].mxu0 %v5959
        %v6431 = vpop.f32.mrb[0].mxu0
        %v6432 = vadd.f32 %v6349, %v6431
        %v6433 = vpop.f32.mrb[0].mxu0
        %v6434 = vadd.f32 %v6351, %v6433
        %v6435 = vpop.f32.mrb[0].mxu0
        %v6436 = vadd.f32 %v6353, %v6435
        %v6437 = vpop.f32.mrb[0].mxu0
        %v6438 = vadd.f32 %v6355, %v6437
        %6439 = vmatprep.mubr.bf16.mxu0 %v5964
        %6440 = vmatmul.mubr.bf16.gmra.mrb[0].mxu0 %v5963
        %v6441 = vpop.f32.mrb[0].mxu0
        %v6442 = vadd.f32 %v6359, %v6441
        %v6443 = vpop.f32.mrb[0].mxu0
        %v6444 = vadd.f32 %v6361, %v6443
        %v6445 = vpop.f32.mrb[0].mxu0
        %v6446 = vadd.f32 %v6363, %v6445
        %v6447 = vpop.f32.mrb[0].mxu0
        %v6448 = vadd.f32 %v6365, %v6447
        %6449 = vmatprep.mubr.bf16.mxu0 %v5968
        %6450 = vmatmul.mubr.bf16.gmra.mrb[0].mxu0 %v5967
        %v6451 = vpop.f32.mrb[0].mxu0
        %v6452 = vadd.f32 %v6369, %v6451
        %v6453 = vpop.f32.mrb[0].mxu0
        %v6454 = vadd.f32 %v6371, %v6453
        %v6455 = vpop.f32.mrb[0].mxu0
        %v6456 = vadd.f32 %v6373, %v6455
        %v6457 = vpop.f32.mrb[0].mxu0
        %v6458 = vadd.f32 %v6375, %v6457
        %6459 = vmatprep.mubr.bf16.mxu0 %v5972
        %6460 = vmatmul.mubr.bf16.gmra.mrb[0].mxu0 %v5971
        %v6461 = vpop.f32.mrb[0].mxu0
        %v6462 = vadd.f32 %v6379, %v6461
        %v6463 = vpop.f32.mrb[0].mxu0
        %v6464 = vadd.f32 %v6381, %v6463
        %v6465 = vpop.f32.mrb[0].mxu0
        %v6466 = vadd.f32 %v6383, %v6465
        %v6467 = vpop.f32.mrb[0].mxu0
        %v6468 = vadd.f32 %v6385, %v6467
        %6469 = vdwg.mxu0
        %v6470 = vmax.f32 %v6422, 0.0
        %v6471 = vmax.f32 %v6424, 0.0
        %v6472 = vmax.f32 %v6426, 0.0
        %v6473 = vmax.f32 %v6428, 0.0
        %v6474 = vmax.f32 %v6432, 0.0
        %v6475 = vmax.f32 %v6434, 0.0
        %v6476 = vmax.f32 %v6436, 0.0
        %v6477 = vmax.f32 %v6438, 0.0
        %v6478 = vmax.f32 %v6442, 0.0
        %v6479 = vmax.f32 %v6444, 0.0
        %v6480 = vmax.f32 %v6446, 0.0
        %v6481 = vmax.f32 %v6448, 0.0
        %v6482 = vmax.f32 %v6452, 0.0
        %v6483 = vmax.f32 %v6454, 0.0
        %v6484 = vmax.f32 %v6456, 0.0
        %v6485 = vmax.f32 %v6458, 0.0
        %v6486 = vmax.f32 %v6462, 0.0
        %v6487 = vmax.f32 %v6464, 0.0
        %v6488 = vmax.f32 %v6466, 0.0
        %v6489 = vmax.f32 %v6468, 0.0
        %6490 = vst [vmem:[%s416] sm:$0xff] %v6470
        %6491 = vst [vmem:[%s416 + $0x8] sm:$0xff] %v6471
        %6492 = vst [vmem:[%s416 + $0x10] sm:$0xff] %v6472
        %6493 = vst [vmem:[%s416 + $0x18] sm:$0xff] %v6473
        %6494 = vst [vmem:[%s416 + $0x20] sm:$0xff] %v6474
        %6495 = vst [vmem:[%s416 + $0x28] sm:$0xff] %v6475
        %6496 = vst [vmem:[%s416 + $0x30] sm:$0xff] %v6476
        %6497 = vst [vmem:[%s416 + $0x38] sm:$0xff] %v6477
        %6498 = vst [vmem:[%s416 + $0x40] sm:$0xff] %v6478
        %6499 = vst [vmem:[%s416 + $0x48] sm:$0xff] %v6479
        %6500 = vst [vmem:[%s416 + $0x50] sm:$0xff] %v6480
        %6501 = vst [vmem:[%s416 + $0x58] sm:$0xff] %v6481
        %6502 = vst [vmem:[%s416 + $0x60] sm:$0xff] %v6482
        %6503 = vst [vmem:[%s416 + $0x68] sm:$0xff] %v6483
        %6504 = vst [vmem:[%s416 + $0x70] sm:$0xff] %v6484
        %6505 = vst [vmem:[%s416 + $0x78] sm:$0xff] %v6485
        %6506 = vst [vmem:[%s416 + $0x80] sm:$0xff] %v6486
        %6507 = vst [vmem:[%s416 + $0x88] sm:$0xff] %v6487
        %6508 = vst [vmem:[%s416 + $0x90] sm:$0xff] %v6488
        %6509 = vst [vmem:[%s416 + $0x98] sm:$0xff] %v6489
        %6510 = vmatprep.subr.bf16.mxu0 %v1490
        %6511 = vmatpush1.bf16.msra.mxu0 %v1489
        %6512 = vmatprep.subr.bf16.mxu0 %v1494
        %6513 = vmatpush1.bf16.msra.mxu0 %v1493
        %6514 = vmatprep.subr.bf16.mxu0 %v1498
        %6515 = vmatpush1.bf16.msra.mxu0 %v1497
        %6516 = vmatprep.subr.bf16.mxu0 %v1502
        %6517 = vmatpush1.bf16.msra.mxu0 %v1501
        %6518 = vmatprep.subr.bf16.mxu0 %v1506
        %6519 = vmatpush1.bf16.msra.mxu0 %v1505
        %6520 = vmatprep.subr.bf16.mxu0 %v1510
        %6521 = vmatpush1.bf16.msra.mxu0 %v1509
        %6522 = vmatprep.subr.bf16.mxu0 %v1514
        %6523 = vmatpush1.bf16.msra.mxu0 %v1513
        %6524 = vmatprep.subr.bf16.mxu0 %v1518
        %6525 = vmatpush1.bf16.msra.mxu0 %v1517
        %6526 = vmatprep.subr.bf16.mxu0 %v1522
        %6527 = vmatpush1.bf16.msra.mxu0 %v1521
        %6528 = vmatprep.subr.bf16.mxu0 %v1526
        %6529 = vmatpush1.bf16.msra.mxu0 %v1525
        %6530 = vmatprep.subr.bf16.mxu0 %v1530
        %6531 = vmatpush1.bf16.msra.mxu0 %v1529
        %6532 = vmatprep.subr.bf16.mxu0 %v1534
        %6533 = vmatpush1.bf16.msra.mxu0 %v1533
        %6534 = vmatprep.subr.bf16.mxu0 %v1538
        %6535 = vmatpush1.bf16.msra.mxu0 %v1537
        %6536 = vmatprep.subr.bf16.mxu0 %v1542
        %6537 = vmatpush1.bf16.msra.mxu0 %v1541
        %6538 = vmatprep.subr.bf16.mxu0 %v1546
        %6539 = vmatpush1.bf16.msra.mxu0 %v1545
        %6540 = vmatprep.subr.bf16.mxu0 %v1550
        %6541 = vmatpush1.bf16.msra.mxu0 %v1549
        %6542 = vmatprep.mubr.bf16.mxu0 %v1267
        %6543 = vmatmul.mubr.bf16.gmra.mrb[0].mxu0 %v1266
        %v6544 = vpop.f32.mrb[0].mxu0
        %v6545 = vadd.f32 %v1280, %v6544
        %v6546 = vpop.f32.mrb[0].mxu0
        %v6547 = vadd.f32 %v1284, %v6546
        %v6548 = vpop.f32.mrb[0].mxu0
        %v6549 = vadd.f32 %v1280, %v6548
        %v6550 = vpop.f32.mrb[0].mxu0
        %v6551 = vadd.f32 %v1284, %v6550
        %6552 = vmatprep.mubr.bf16.mxu0 %v1269
        %6553 = vmatmul.mubr.bf16.gmra.mrb[0].mxu0 %v1268
        %v6554 = vpop.f32.mrb[0].mxu0
        %v6555 = vadd.f32 %v1280, %v6554
        %v6556 = vpop.f32.mrb[0].mxu0
        %v6557 = vadd.f32 %v1284, %v6556
        %v6558 = vpop.f32.mrb[0].mxu0
        %v6559 = vadd.f32 %v1280, %v6558
        %v6560 = vpop.f32.mrb[0].mxu0
        %v6561 = vadd.f32 %v1284, %v6560
        %6562 = vmatprep.mubr.bf16.mxu0 %v1271
        %6563 = vmatmul.mubr.bf16.gmra.mrb[0].mxu0 %v1270
        %v6564 = vpop.f32.mrb[0].mxu0
        %v6565 = vadd.f32 %v1280, %v6564
        %v6566 = vpop.f32.mrb[0].mxu0
        %v6567 = vadd.f32 %v1284, %v6566
        %v6568 = vpop.f32.mrb[0].mxu0
        %v6569 = vadd.f32 %v1280, %v6568
        %v6570 = vpop.f32.mrb[0].mxu0
        %v6571 = vadd.f32 %v1284, %v6570
        %6572 = vmatprep.mubr.bf16.mxu0 %v1273
        %6573 = vmatmul.mubr.bf16.gmra.mrb[0].mxu0 %v1272
        %v6574 = vpop.f32.mrb[0].mxu0
        %v6575 = vadd.f32 %v1280, %v6574
        %v6576 = vpop.f32.mrb[0].mxu0
        %v6577 = vadd.f32 %v1284, %v6576
        %v6578 = vpop.f32.mrb[0].mxu0
        %v6579 = vadd.f32 %v1280, %v6578
        %v6580 = vpop.f32.mrb[0].mxu0
        %v6581 = vadd.f32 %v1284, %v6580
        %6582 = vmatprep.mubr.bf16.mxu0 %v1275
        %6583 = vmatmul.mubr.bf16.gmra.mrb[0].mxu0 %v1274
        %v6584 = vpop.f32.mrb[0].mxu0
        %v6585 = vadd.f32 %v1280, %v6584
        %v6586 = vpop.f32.mrb[0].mxu0
        %v6587 = vadd.f32 %v1284, %v6586
        %v6588 = vpop.f32.mrb[0].mxu0
        %v6589 = vadd.f32 %v1280, %v6588
        %v6590 = vpop.f32.mrb[0].mxu0
        %v6591 = vadd.f32 %v1284, %v6590
        %6592 = vdwg.mxu0
        %6593 = vmatprep.subr.bf16.mxu0 %v1492
        %6594 = vmatpush1.bf16.msra.mxu0 %v1491
        %6595 = vmatprep.subr.bf16.mxu0 %v1496
        %6596 = vmatpush1.bf16.msra.mxu0 %v1495
        %6597 = vmatprep.subr.bf16.mxu0 %v1500
        %6598 = vmatpush1.bf16.msra.mxu0 %v1499
        %6599 = vmatprep.subr.bf16.mxu0 %v1504
        %6600 = vmatpush1.bf16.msra.mxu0 %v1503
        %6601 = vmatprep.subr.bf16.mxu0 %v1508
        %6602 = vmatpush1.bf16.msra.mxu0 %v1507
        %6603 = vmatprep.subr.bf16.mxu0 %v1512
        %6604 = vmatpush1.bf16.msra.mxu0 %v1511
        %6605 = vmatprep.subr.bf16.mxu0 %v1516
        %6606 = vmatpush1.bf16.msra.mxu0 %v1515
        %6607 = vmatprep.subr.bf16.mxu0 %v1520
        %6608 = vmatpush1.bf16.msra.mxu0 %v1519
        %6609 = vmatprep.subr.bf16.mxu0 %v1524
        %6610 = vmatpush1.bf16.msra.mxu0 %v1523
        %6611 = vmatprep.subr.bf16.mxu0 %v1528
        %6612 = vmatpush1.bf16.msra.mxu0 %v1527
        %6613 = vmatprep.subr.bf16.mxu0 %v1532
        %6614 = vmatpush1.bf16.msra.mxu0 %v1531
        %6615 = vmatprep.subr.bf16.mxu0 %v1536
        %6616 = vmatpush1.bf16.msra.mxu0 %v1535
        %6617 = vmatprep.subr.bf16.mxu0 %v1540
        %6618 = vmatpush1.bf16.msra.mxu0 %v1539
        %6619 = vmatprep.subr.bf16.mxu0 %v1544
        %6620 = vmatpush1.bf16.msra.mxu0 %v1543
        %6621 = vmatprep.subr.bf16.mxu0 %v1548
        %6622 = vmatpush1.bf16.msra.mxu0 %v1547
        %6623 = vmatprep.subr.bf16.mxu0 %v1552
        %6624 = vmatpush1.bf16.msra.mxu0 %v1551
        %6625 = vmatprep.mubr.bf16.mxu0 %v1267
        %6626 = vmatmul.mubr.bf16.gmra.mrb[0].mxu0 %v1266
        %v6627 = vpop.f32.mrb[0].mxu0
        %v6628 = vadd.f32 %v1288, %v6627
        %v6629 = vpop.f32.mrb[0].mxu0
        %v6630 = vadd.f32 %v1292, %v6629
        %v6631 = vpop.f32.mrb[0].mxu0
        %v6632 = vadd.f32 %v1288, %v6631
        %v6633 = vpop.f32.mrb[0].mxu0
        %v6634 = vadd.f32 %v1292, %v6633
        %6635 = vmatprep.mubr.bf16.mxu0 %v1269
        %6636 = vmatmul.mubr.bf16.gmra.mrb[0].mxu0 %v1268
        %v6637 = vpop.f32.mrb[0].mxu0
        %v6638 = vadd.f32 %v1288, %v6637
        %v6639 = vpop.f32.mrb[0].mxu0
        %v6640 = vadd.f32 %v1292, %v6639
        %v6641 = vpop.f32.mrb[0].mxu0
        %v6642 = vadd.f32 %v1288, %v6641
        %v6643 = vpop.f32.mrb[0].mxu0
        %v6644 = vadd.f32 %v1292, %v6643
        %6645 = vmatprep.mubr.bf16.mxu0 %v1271
        %6646 = vmatmul.mubr.bf16.gmra.mrb[0].mxu0 %v1270
        %v6647 = vpop.f32.mrb[0].mxu0
        %v6648 = vadd.f32 %v1288, %v6647
        %v6649 = vpop.f32.mrb[0].mxu0
        %v6650 = vadd.f32 %v1292, %v6649
        %v6651 = vpop.f32.mrb[0].mxu0
        %v6652 = vadd.f32 %v1288, %v6651
        %v6653 = vpop.f32.mrb[0].mxu0
        %v6654 = vadd.f32 %v1292, %v6653
        %6655 = vmatprep.mubr.bf16.mxu0 %v1273
        %6656 = vmatmul.mubr.bf16.gmra.mrb[0].mxu0 %v1272
        %v6657 = vpop.f32.mrb[0].mxu0
        %v6658 = vadd.f32 %v1288, %v6657
        %v6659 = vpop.f32.mrb[0].mxu0
        %v6660 = vadd.f32 %v1292, %v6659
        %v6661 = vpop.f32.mrb[0].mxu0
        %v6662 = vadd.f32 %v1288, %v6661
        %v6663 = vpop.f32.mrb[0].mxu0
        %v6664 = vadd.f32 %v1292, %v6663
        %6665 = vmatprep.mubr.bf16.mxu0 %v1275
        %6666 = vmatmul.mubr.bf16.gmra.mrb[0].mxu0 %v1274
        %v6667 = vpop.f32.mrb[0].mxu0
        %v6668 = vadd.f32 %v1288, %v6667
        %v6669 = vpop.f32.mrb[0].mxu0
        %v6670 = vadd.f32 %v1292, %v6669
        %v6671 = vpop.f32.mrb[0].mxu0
        %v6672 = vadd.f32 %v1288, %v6671
        %v6673 = vpop.f32.mrb[0].mxu0
        %v6674 = vadd.f32 %v1292, %v6673
        %6675 = vdwg.mxu0
        %v6676 = vmax.f32 %v6545, 0.0
        %v6677 = vmax.f32 %v6547, 0.0
        %v6678 = vmax.f32 %v6628, 0.0
        %v6679 = vmax.f32 %v6630, 0.0
        %v6680 = vmax.f32 %v6549, 0.0
        %v6681 = vmax.f32 %v6551, 0.0
        %v6682 = vmax.f32 %v6632, 0.0
        %v6683 = vmax.f32 %v6634, 0.0
        %v6684 = vmax.f32 %v6555, 0.0
        %v6685 = vmax.f32 %v6557, 0.0
        %v6686 = vmax.f32 %v6638, 0.0
        %v6687 = vmax.f32 %v6640, 0.0
        %v6688 = vmax.f32 %v6559, 0.0
        %v6689 = vmax.f32 %v6561, 0.0
        %v6690 = vmax.f32 %v6642, 0.0
        %v6691 = vmax.f32 %v6644, 0.0
        %v6692 = vmax.f32 %v6565, 0.0
        %v6693 = vmax.f32 %v6567, 0.0
        %v6694 = vmax.f32 %v6648, 0.0
        %v6695 = vmax.f32 %v6650, 0.0
        %v6696 = vmax.f32 %v6569, 0.0
        %v6697 = vmax.f32 %v6571, 0.0
        %v6698 = vmax.f32 %v6652, 0.0
        %v6699 = vmax.f32 %v6654, 0.0
        %v6700 = vmax.f32 %v6575, 0.0
        %v6701 = vmax.f32 %v6577, 0.0
        %v6702 = vmax.f32 %v6658, 0.0
        %v6703 = vmax.f32 %v6660, 0.0
        %v6704 = vmax.f32 %v6579, 0.0
        %v6705 = vmax.f32 %v6581, 0.0
        %v6706 = vmax.f32 %v6662, 0.0
        %v6707 = vmax.f32 %v6664, 0.0
        %v6708 = vmax.f32 %v6585, 0.0
        %v6709 = vmax.f32 %v6587, 0.0
        %v6710 = vmax.f32 %v6668, 0.0
        %v6711 = vmax.f32 %v6670, 0.0
        %v6712 = vmax.f32 %v6589, 0.0
        %v6713 = vmax.f32 %v6591, 0.0
        %v6714 = vmax.f32 %v6672, 0.0
        %v6715 = vmax.f32 %v6674, 0.0
        %v6716 = vpack.c.bf16 %v6680, %v6676
        %v6717 = vpack.c.bf16 %v6681, %v6677
        %v6718 = vpack.c.bf16 %v6682, %v6678
        %v6719 = vpack.c.bf16 %v6683, %v6679
        %v6720 = vpack.c.bf16 %v6688, %v6684
        %v6721 = vpack.c.bf16 %v6689, %v6685
        %v6722 = vpack.c.bf16 %v6690, %v6686
        %v6723 = vpack.c.bf16 %v6691, %v6687
        %v6724 = vpack.c.bf16 %v6696, %v6692
        %v6725 = vpack.c.bf16 %v6697, %v6693
        %v6726 = vpack.c.bf16 %v6698, %v6694
        %v6727 = vpack.c.bf16 %v6699, %v6695
        %v6728 = vpack.c.bf16 %v6704, %v6700
        %v6729 = vpack.c.bf16 %v6705, %v6701
        %v6730 = vpack.c.bf16 %v6706, %v6702
        %v6731 = vpack.c.bf16 %v6707, %v6703
        %v6732 = vpack.c.bf16 %v6712, %v6708
        %v6733 = vpack.c.bf16 %v6713, %v6709
        %v6734 = vpack.c.bf16 %v6714, %v6710
        %v6735 = vpack.c.bf16 %v6715, %v6711
        %6736 = vmatprep.subr.bf16.mxu0 %v2653
        %6737 = vmatpush1.bf16.msra.mxu0 %v2652
        %6738 = vmatprep.subr.bf16.mxu0 %v2661
        %6739 = vmatpush1.bf16.msra.mxu0 %v2660
        %6740 = vmatprep.subr.bf16.mxu0 %v2669
        %6741 = vmatpush1.bf16.msra.mxu0 %v2668
        %6742 = vmatprep.subr.bf16.mxu0 %v2677
        %6743 = vmatpush1.bf16.msra.mxu0 %v2676
        %6744 = vmatprep.subr.bf16.mxu0 %v2685
        %6745 = vmatpush1.bf16.msra.mxu0 %v2684
        %6746 = vmatprep.subr.bf16.mxu0 %v2693
        %6747 = vmatpush1.bf16.msra.mxu0 %v2692
        %6748 = vmatprep.subr.bf16.mxu0 %v2701
        %6749 = vmatpush1.bf16.msra.mxu0 %v2700
        %6750 = vmatprep.subr.bf16.mxu0 %v2709
        %6751 = vmatpush1.bf16.msra.mxu0 %v2708
        %6752 = vmatprep.subr.bf16.mxu0 %v2717
        %6753 = vmatpush1.bf16.msra.mxu0 %v2716
        %6754 = vmatprep.subr.bf16.mxu0 %v2725
        %6755 = vmatpush1.bf16.msra.mxu0 %v2724
        %6756 = vmatprep.subr.bf16.mxu0 %v2733
        %6757 = vmatpush1.bf16.msra.mxu0 %v2732
        %6758 = vmatprep.subr.bf16.mxu0 %v2741
        %6759 = vmatpush1.bf16.msra.mxu0 %v2740
        %6760 = vmatprep.subr.bf16.mxu0 %v2749
        %6761 = vmatpush1.bf16.msra.mxu0 %v2748
        %6762 = vmatprep.subr.bf16.mxu0 %v2757
        %6763 = vmatpush1.bf16.msra.mxu0 %v2756
        %6764 = vmatprep.subr.bf16.mxu0 %v2765
        %6765 = vmatpush1.bf16.msra.mxu0 %v2764
        %6766 = vmatprep.subr.bf16.mxu0 %v2773
        %6767 = vmatpush1.bf16.msra.mxu0 %v2772
        %6768 = vmatprep.mubr.bf16.mxu0 %v6717
        %6769 = vmatmul.mubr.bf16.gmra.mrb[0].mxu0 %v6716
        %v6770 = vpop.f32.mrb[0].mxu0
        %v6771 = vadd.f32 %v1847, %v6770
        %v6772 = vpop.f32.mrb[0].mxu0
        %v6773 = vadd.f32 %v1851, %v6772
        %v6774 = vpop.f32.mrb[0].mxu0
        %v6775 = vadd.f32 %v1847, %v6774
        %v6776 = vpop.f32.mrb[0].mxu0
        %v6777 = vadd.f32 %v1851, %v6776
        %6778 = vmatprep.mubr.bf16.mxu0 %v6721
        %6779 = vmatmul.mubr.bf16.gmra.mrb[0].mxu0 %v6720
        %v6780 = vpop.f32.mrb[0].mxu0
        %v6781 = vadd.f32 %v1847, %v6780
        %v6782 = vpop.f32.mrb[0].mxu0
        %v6783 = vadd.f32 %v1851, %v6782
        %v6784 = vpop.f32.mrb[0].mxu0
        %v6785 = vadd.f32 %v1847, %v6784
        %v6786 = vpop.f32.mrb[0].mxu0
        %v6787 = vadd.f32 %v1851, %v6786
        %6788 = vmatprep.mubr.bf16.mxu0 %v6725
        %6789 = vmatmul.mubr.bf16.gmra.mrb[0].mxu0 %v6724
        %v6790 = vpop.f32.mrb[0].mxu0
        %v6791 = vadd.f32 %v1847, %v6790
        %v6792 = vpop.f32.mrb[0].mxu0
        %v6793 = vadd.f32 %v1851, %v6792
        %v6794 = vpop.f32.mrb[0].mxu0
        %v6795 = vadd.f32 %v1847, %v6794
        %v6796 = vpop.f32.mrb[0].mxu0
        %v6797 = vadd.f32 %v1851, %v6796
        %6798 = vmatprep.mubr.bf16.mxu0 %v6729
        %6799 = vmatmul.mubr.bf16.gmra.mrb[0].mxu0 %v6728
        %v6800 = vpop.f32.mrb[0].mxu0
        %v6801 = vadd.f32 %v1847, %v6800
        %v6802 = vpop.f32.mrb[0].mxu0
        %v6803 = vadd.f32 %v1851, %v6802
        %v6804 = vpop.f32.mrb[0].mxu0
        %v6805 = vadd.f32 %v1847, %v6804
        %v6806 = vpop.f32.mrb[0].mxu0
        %v6807 = vadd.f32 %v1851, %v6806
        %6808 = vmatprep.mubr.bf16.mxu0 %v6733
        %6809 = vmatmul.mubr.bf16.gmra.mrb[0].mxu0 %v6732
        %v6810 = vpop.f32.mrb[0].mxu0
        %v6811 = vadd.f32 %v1847, %v6810
        %v6812 = vpop.f32.mrb[0].mxu0
        %v6813 = vadd.f32 %v1851, %v6812
        %v6814 = vpop.f32.mrb[0].mxu0
        %v6815 = vadd.f32 %v1847, %v6814
        %v6816 = vpop.f32.mrb[0].mxu0
        %v6817 = vadd.f32 %v1851, %v6816
        %6818 = vdwg.mxu0
        %6819 = vmatprep.subr.bf16.mxu0 %v2781
        %6820 = vmatpush1.bf16.msra.mxu0 %v2780
        %6821 = vmatprep.subr.bf16.mxu0 %v2789
        %6822 = vmatpush1.bf16.msra.mxu0 %v2788
        %6823 = vmatprep.subr.bf16.mxu0 %v2797
        %6824 = vmatpush1.bf16.msra.mxu0 %v2796
        %6825 = vmatprep.subr.bf16.mxu0 %v2805
        %6826 = vmatpush1.bf16.msra.mxu0 %v2804
        %6827 = vmatprep.subr.bf16.mxu0 %v2813
        %6828 = vmatpush1.bf16.msra.mxu0 %v2812
        %6829 = vmatprep.subr.bf16.mxu0 %v2821
        %6830 = vmatpush1.bf16.msra.mxu0 %v2820
        %6831 = vmatprep.subr.bf16.mxu0 %v2829
        %6832 = vmatpush1.bf16.msra.mxu0 %v2828
        %6833 = vmatprep.subr.bf16.mxu0 %v2837
        %6834 = vmatpush1.bf16.msra.mxu0 %v2836
        %6835 = vmatprep.subr.bf16.mxu0 %v2845
        %6836 = vmatpush1.bf16.msra.mxu0 %v2844
        %6837 = vmatprep.subr.bf16.mxu0 %v2853
        %6838 = vmatpush1.bf16.msra.mxu0 %v2852
        %6839 = vmatprep.subr.bf16.mxu0 %v2861
        %6840 = vmatpush1.bf16.msra.mxu0 %v2860
        %6841 = vmatprep.subr.bf16.mxu0 %v2869
        %6842 = vmatpush1.bf16.msra.mxu0 %v2868
        %6843 = vmatprep.subr.bf16.mxu0 %v2877
        %6844 = vmatpush1.bf16.msra.mxu0 %v2876
        %6845 = vmatprep.subr.bf16.mxu0 %v2885
        %6846 = vmatpush1.bf16.msra.mxu0 %v2884
        %6847 = vmatprep.subr.bf16.mxu0 %v2893
        %6848 = vmatpush1.bf16.msra.mxu0 %v2892
        %6849 = vmatprep.subr.bf16.mxu0 %v2901
        %6850 = vmatpush1.bf16.msra.mxu0 %v2900
        %6851 = vmatprep.mubr.bf16.mxu0 %v6719
        %6852 = vmatmul.mubr.bf16.gmra.mrb[0].mxu0 %v6718
        %v6853 = vpop.f32.mrb[0].mxu0
        %v6854 = vadd.f32 %v6771, %v6853
        %v6855 = vpop.f32.mrb[0].mxu0
        %v6856 = vadd.f32 %v6773, %v6855
        %v6857 = vpop.f32.mrb[0].mxu0
        %v6858 = vadd.f32 %v6775, %v6857
        %v6859 = vpop.f32.mrb[0].mxu0
        %v6860 = vadd.f32 %v6777, %v6859
        %6861 = vmatprep.mubr.bf16.mxu0 %v6723
        %6862 = vmatmul.mubr.bf16.gmra.mrb[0].mxu0 %v6722
        %v6863 = vpop.f32.mrb[0].mxu0
        %v6864 = vadd.f32 %v6781, %v6863
        %v6865 = vpop.f32.mrb[0].mxu0
        %v6866 = vadd.f32 %v6783, %v6865
        %v6867 = vpop.f32.mrb[0].mxu0
        %v6868 = vadd.f32 %v6785, %v6867
        %v6869 = vpop.f32.mrb[0].mxu0
        %v6870 = vadd.f32 %v6787, %v6869
        %6871 = vmatprep.mubr.bf16.mxu0 %v6727
        %6872 = vmatmul.mubr.bf16.gmra.mrb[0].mxu0 %v6726
        %v6873 = vpop.f32.mrb[0].mxu0
        %v6874 = vadd.f32 %v6791, %v6873
        %v6875 = vpop.f32.mrb[0].mxu0
        %v6876 = vadd.f32 %v6793, %v6875
        %v6877 = vpop.f32.mrb[0].mxu0
        %v6878 = vadd.f32 %v6795, %v6877
        %v6879 = vpop.f32.mrb[0].mxu0
        %v6880 = vadd.f32 %v6797, %v6879
        %6881 = vmatprep.mubr.bf16.mxu0 %v6731
        %6882 = vmatmul.mubr.bf16.gmra.mrb[0].mxu0 %v6730
        %v6883 = vpop.f32.mrb[0].mxu0
        %v6884 = vadd.f32 %v6801, %v6883
        %v6885 = vpop.f32.mrb[0].mxu0
        %v6886 = vadd.f32 %v6803, %v6885
        %v6887 = vpop.f32.mrb[0].mxu0
        %v6888 = vadd.f32 %v6805, %v6887
        %v6889 = vpop.f32.mrb[0].mxu0
        %v6890 = vadd.f32 %v6807, %v6889
        %6891 = vmatprep.mubr.bf16.mxu0 %v6735
        %6892 = vmatmul.mubr.bf16.gmra.mrb[0].mxu0 %v6734
        %v6893 = vpop.f32.mrb[0].mxu0
        %v6894 = vadd.f32 %v6811, %v6893
        %v6895 = vpop.f32.mrb[0].mxu0
        %v6896 = vadd.f32 %v6813, %v6895
        %v6897 = vpop.f32.mrb[0].mxu0
        %v6898 = vadd.f32 %v6815, %v6897
        %v6899 = vpop.f32.mrb[0].mxu0
        %v6900 = vadd.f32 %v6817, %v6899
        %6901 = vdwg.mxu0
        %6902 = vmatprep.subr.bf16.mxu0 %v2655
        %6903 = vmatpush1.bf16.msra.mxu0 %v2654
        %6904 = vmatprep.subr.bf16.mxu0 %v2663
        %6905 = vmatpush1.bf16.msra.mxu0 %v2662
        %6906 = vmatprep.subr.bf16.mxu0 %v2671
        %6907 = vmatpush1.bf16.msra.mxu0 %v2670
        %6908 = vmatprep.subr.bf16.mxu0 %v2679
        %6909 = vmatpush1.bf16.msra.mxu0 %v2678
        %6910 = vmatprep.subr.bf16.mxu0 %v2687
        %6911 = vmatpush1.bf16.msra.mxu0 %v2686
        %6912 = vmatprep.subr.bf16.mxu0 %v2695
        %6913 = vmatpush1.bf16.msra.mxu0 %v2694
        %6914 = vmatprep.subr.bf16.mxu0 %v2703
        %6915 = vmatpush1.bf16.msra.mxu0 %v2702
        %6916 = vmatprep.subr.bf16.mxu0 %v2711
        %6917 = vmatpush1.bf16.msra.mxu0 %v2710
        %6918 = vmatprep.subr.bf16.mxu0 %v2719
        %6919 = vmatpush1.bf16.msra.mxu0 %v2718
        %6920 = vmatprep.subr.bf16.mxu0 %v2727
        %6921 = vmatpush1.bf16.msra.mxu0 %v2726
        %6922 = vmatprep.subr.bf16.mxu0 %v2735
        %6923 = vmatpush1.bf16.msra.mxu0 %v2734
        %6924 = vmatprep.subr.bf16.mxu0 %v2743
        %6925 = vmatpush1.bf16.msra.mxu0 %v2742
        %6926 = vmatprep.subr.bf16.mxu0 %v2751
        %6927 = vmatpush1.bf16.msra.mxu0 %v2750
        %6928 = vmatprep.subr.bf16.mxu0 %v2759
        %6929 = vmatpush1.bf16.msra.mxu0 %v2758
        %6930 = vmatprep.subr.bf16.mxu0 %v2767
        %6931 = vmatpush1.bf16.msra.mxu0 %v2766
        %6932 = vmatprep.subr.bf16.mxu0 %v2775
        %6933 = vmatpush1.bf16.msra.mxu0 %v2774
        %6934 = vmatprep.mubr.bf16.mxu0 %v6717
        %6935 = vmatmul.mubr.bf16.gmra.mrb[0].mxu0 %v6716
        %v6936 = vpop.f32.mrb[0].mxu0
        %v6937 = vadd.f32 %v1855, %v6936
        %v6938 = vpop.f32.mrb[0].mxu0
        %v6939 = vadd.f32 %v1859, %v6938
        %v6940 = vpop.f32.mrb[0].mxu0
        %v6941 = vadd.f32 %v1855, %v6940
        %v6942 = vpop.f32.mrb[0].mxu0
        %v6943 = vadd.f32 %v1859, %v6942
        %6944 = vmatprep.mubr.bf16.mxu0 %v6721
        %6945 = vmatmul.mubr.bf16.gmra.mrb[0].mxu0 %v6720
        %v6946 = vpop.f32.mrb[0].mxu0
        %v6947 = vadd.f32 %v1855, %v6946
        %v6948 = vpop.f32.mrb[0].mxu0
        %v6949 = vadd.f32 %v1859, %v6948
        %v6950 = vpop.f32.mrb[0].mxu0
        %v6951 = vadd.f32 %v1855, %v6950
        %v6952 = vpop.f32.mrb[0].mxu0
        %v6953 = vadd.f32 %v1859, %v6952
        %6954 = vmatprep.mubr.bf16.mxu0 %v6725
        %6955 = vmatmul.mubr.bf16.gmra.mrb[0].mxu0 %v6724
        %v6956 = vpop.f32.mrb[0].mxu0
        %v6957 = vadd.f32 %v1855, %v6956
        %v6958 = vpop.f32.mrb[0].mxu0
        %v6959 = vadd.f32 %v1859, %v6958
        %v6960 = vpop.f32.mrb[0].mxu0
        %v6961 = vadd.f32 %v1855, %v6960
        %v6962 = vpop.f32.mrb[0].mxu0
        %v6963 = vadd.f32 %v1859, %v6962
        %6964 = vmatprep.mubr.bf16.mxu0 %v6729
        %6965 = vmatmul.mubr.bf16.gmra.mrb[0].mxu0 %v6728
        %v6966 = vpop.f32.mrb[0].mxu0
        %v6967 = vadd.f32 %v1855, %v6966
        %v6968 = vpop.f32.mrb[0].mxu0
        %v6969 = vadd.f32 %v1859, %v6968
        %v6970 = vpop.f32.mrb[0].mxu0
        %v6971 = vadd.f32 %v1855, %v6970
        %v6972 = vpop.f32.mrb[0].mxu0
        %v6973 = vadd.f32 %v1859, %v6972
        %6974 = vmatprep.mubr.bf16.mxu0 %v6733
        %6975 = vmatmul.mubr.bf16.gmra.mrb[0].mxu0 %v6732
        %v6976 = vpop.f32.mrb[0].mxu0
        %v6977 = vadd.f32 %v1855, %v6976
        %v6978 = vpop.f32.mrb[0].mxu0
        %v6979 = vadd.f32 %v1859, %v6978
        %v6980 = vpop.f32.mrb[0].mxu0
        %v6981 = vadd.f32 %v1855, %v6980
        %v6982 = vpop.f32.mrb[0].mxu0
        %v6983 = vadd.f32 %v1859, %v6982
        %6984 = vdwg.mxu0
        %6985 = vmatprep.subr.bf16.mxu0 %v2783
        %6986 = vmatpush1.bf16.msra.mxu0 %v2782
        %6987 = vmatprep.subr.bf16.mxu0 %v2791
        %6988 = vmatpush1.bf16.msra.mxu0 %v2790
        %6989 = vmatprep.subr.bf16.mxu0 %v2799
        %6990 = vmatpush1.bf16.msra.mxu0 %v2798
        %6991 = vmatprep.subr.bf16.mxu0 %v2807
        %6992 = vmatpush1.bf16.msra.mxu0 %v2806
        %6993 = vmatprep.subr.bf16.mxu0 %v2815
        %6994 = vmatpush1.bf16.msra.mxu0 %v2814
        %6995 = vmatprep.subr.bf16.mxu0 %v2823
        %6996 = vmatpush1.bf16.msra.mxu0 %v2822
        %6997 = vmatprep.subr.bf16.mxu0 %v2831
        %6998 = vmatpush1.bf16.msra.mxu0 %v2830
        %6999 = vmatprep.subr.bf16.mxu0 %v2839
        %7000 = vmatpush1.bf16.msra.mxu0 %v2838
        %7001 = vmatprep.subr.bf16.mxu0 %v2847
        %7002 = vmatpush1.bf16.msra.mxu0 %v2846
        %7003 = vmatprep.subr.bf16.mxu0 %v2855
        %7004 = vmatpush1.bf16.msra.mxu0 %v2854
        %7005 = vmatprep.subr.bf16.mxu0 %v2863
        %7006 = vmatpush1.bf16.msra.mxu0 %v2862
        %7007 = vmatprep.subr.bf16.mxu0 %v2871
        %7008 = vmatpush1.bf16.msra.mxu0 %v2870
        %7009 = vmatprep.subr.bf16.mxu0 %v2879
        %7010 = vmatpush1.bf16.msra.mxu0 %v2878
        %7011 = vmatprep.subr.bf16.mxu0 %v2887
        %7012 = vmatpush1.bf16.msra.mxu0 %v2886
        %7013 = vmatprep.subr.bf16.mxu0 %v2895
        %7014 = vmatpush1.bf16.msra.mxu0 %v2894
        %7015 = vmatprep.subr.bf16.mxu0 %v2903
        %7016 = vmatpush1.bf16.msra.mxu0 %v2902
        %7017 = vmatprep.mubr.bf16.mxu0 %v6719
        %7018 = vmatmul.mubr.bf16.gmra.mrb[0].mxu0 %v6718
        %v7019 = vpop.f32.mrb[0].mxu0
        %v7020 = vadd.f32 %v6937, %v7019
        %v7021 = vpop.f32.mrb[0].mxu0
        %v7022 = vadd.f32 %v6939, %v7021
        %v7023 = vpop.f32.mrb[0].mxu0
        %v7024 = vadd.f32 %v6941, %v7023
        %v7025 = vpop.f32.mrb[0].mxu0
        %v7026 = vadd.f32 %v6943, %v7025
        %7027 = vmatprep.mubr.bf16.mxu0 %v6723
        %7028 = vmatmul.mubr.bf16.gmra.mrb[0].mxu0 %v6722
        %v7029 = vpop.f32.mrb[0].mxu0
        %v7030 = vadd.f32 %v6947, %v7029
        %v7031 = vpop.f32.mrb[0].mxu0
        %v7032 = vadd.f32 %v6949, %v7031
        %v7033 = vpop.f32.mrb[0].mxu0
        %v7034 = vadd.f32 %v6951, %v7033
        %v7035 = vpop.f32.mrb[0].mxu0
        %v7036 = vadd.f32 %v6953, %v7035
        %7037 = vmatprep.mubr.bf16.mxu0 %v6727
        %7038 = vmatmul.mubr.bf16.gmra.mrb[0].mxu0 %v6726
        %v7039 = vpop.f32.mrb[0].mxu0
        %v7040 = vadd.f32 %v6957, %v7039
        %v7041 = vpop.f32.mrb[0].mxu0
        %v7042 = vadd.f32 %v6959, %v7041
        %v7043 = vpop.f32.mrb[0].mxu0
        %v7044 = vadd.f32 %v6961, %v7043
        %v7045 = vpop.f32.mrb[0].mxu0
        %v7046 = vadd.f32 %v6963, %v7045
        %7047 = vmatprep.mubr.bf16.mxu0 %v6731
        %7048 = vmatmul.mubr.bf16.gmra.mrb[0].mxu0 %v6730
        %v7049 = vpop.f32.mrb[0].mxu0
        %v7050 = vadd.f32 %v6967, %v7049
        %v7051 = vpop.f32.mrb[0].mxu0
        %v7052 = vadd.f32 %v6969, %v7051
        %v7053 = vpop.f32.mrb[0].mxu0
        %v7054 = vadd.f32 %v6971, %v7053
        %v7055 = vpop.f32.mrb[0].mxu0
        %v7056 = vadd.f32 %v6973, %v7055
        %7057 = vmatprep.mubr.bf16.mxu0 %v6735
        %7058 = vmatmul.mubr.bf16.gmra.mrb[0].mxu0 %v6734
        %v7059 = vpop.f32.mrb[0].mxu0
        %v7060 = vadd.f32 %v6977, %v7059
        %v7061 = vpop.f32.mrb[0].mxu0
        %v7062 = vadd.f32 %v6979, %v7061
        %v7063 = vpop.f32.mrb[0].mxu0
        %v7064 = vadd.f32 %v6981, %v7063
        %v7065 = vpop.f32.mrb[0].mxu0
        %v7066 = vadd.f32 %v6983, %v7065
        %7067 = vdwg.mxu0
        %7068 = vmatprep.subr.bf16.mxu0 %v2657
        %7069 = vmatpush1.bf16.msra.mxu0 %v2656
        %7070 = vmatprep.subr.bf16.mxu0 %v2665
        %7071 = vmatpush1.bf16.msra.mxu0 %v2664
        %7072 = vmatprep.subr.bf16.mxu0 %v2673
        %7073 = vmatpush1.bf16.msra.mxu0 %v2672
        %7074 = vmatprep.subr.bf16.mxu0 %v2681
        %7075 = vmatpush1.bf16.msra.mxu0 %v2680
        %7076 = vmatprep.subr.bf16.mxu0 %v2689
        %7077 = vmatpush1.bf16.msra.mxu0 %v2688
        %7078 = vmatprep.subr.bf16.mxu0 %v2697
        %7079 = vmatpush1.bf16.msra.mxu0 %v2696
        %7080 = vmatprep.subr.bf16.mxu0 %v2705
        %7081 = vmatpush1.bf16.msra.mxu0 %v2704
        %7082 = vmatprep.subr.bf16.mxu0 %v2713
        %7083 = vmatpush1.bf16.msra.mxu0 %v2712
        %7084 = vmatprep.subr.bf16.mxu0 %v2721
        %7085 = vmatpush1.bf16.msra.mxu0 %v2720
        %7086 = vmatprep.subr.bf16.mxu0 %v2729
        %7087 = vmatpush1.bf16.msra.mxu0 %v2728
        %7088 = vmatprep.subr.bf16.mxu0 %v2737
        %7089 = vmatpush1.bf16.msra.mxu0 %v2736
        %7090 = vmatprep.subr.bf16.mxu0 %v2745
        %7091 = vmatpush1.bf16.msra.mxu0 %v2744
        %7092 = vmatprep.subr.bf16.mxu0 %v2753
        %7093 = vmatpush1.bf16.msra.mxu0 %v2752
        %7094 = vmatprep.subr.bf16.mxu0 %v2761
        %7095 = vmatpush1.bf16.msra.mxu0 %v2760
        %7096 = vmatprep.subr.bf16.mxu0 %v2769
        %7097 = vmatpush1.bf16.msra.mxu0 %v2768
        %7098 = vmatprep.subr.bf16.mxu0 %v2777
        %7099 = vmatpush1.bf16.msra.mxu0 %v2776
        %7100 = vmatprep.mubr.bf16.mxu0 %v6717
        %7101 = vmatmul.mubr.bf16.gmra.mrb[0].mxu0 %v6716
        %v7102 = vpop.f32.mrb[0].mxu0
        %v7103 = vadd.f32 %v1863, %v7102
        %v7104 = vpop.f32.mrb[0].mxu0
        %v7105 = vadd.f32 %v1867, %v7104
        %v7106 = vpop.f32.mrb[0].mxu0
        %v7107 = vadd.f32 %v1863, %v7106
        %v7108 = vpop.f32.mrb[0].mxu0
        %v7109 = vadd.f32 %v1867, %v7108
        %7110 = vmatprep.mubr.bf16.mxu0 %v6721
        %7111 = vmatmul.mubr.bf16.gmra.mrb[0].mxu0 %v6720
        %v7112 = vpop.f32.mrb[0].mxu0
        %v7113 = vadd.f32 %v1863, %v7112
        %v7114 = vpop.f32.mrb[0].mxu0
        %v7115 = vadd.f32 %v1867, %v7114
        %v7116 = vpop.f32.mrb[0].mxu0
        %v7117 = vadd.f32 %v1863, %v7116
        %v7118 = vpop.f32.mrb[0].mxu0
        %v7119 = vadd.f32 %v1867, %v7118
        %7120 = vmatprep.mubr.bf16.mxu0 %v6725
        %7121 = vmatmul.mubr.bf16.gmra.mrb[0].mxu0 %v6724
        %v7122 = vpop.f32.mrb[0].mxu0
        %v7123 = vadd.f32 %v1863, %v7122
        %v7124 = vpop.f32.mrb[0].mxu0
        %v7125 = vadd.f32 %v1867, %v7124
        %v7126 = vpop.f32.mrb[0].mxu0
        %v7127 = vadd.f32 %v1863, %v7126
        %v7128 = vpop.f32.mrb[0].mxu0
        %v7129 = vadd.f32 %v1867, %v7128
        %7130 = vmatprep.mubr.bf16.mxu0 %v6729
        %7131 = vmatmul.mubr.bf16.gmra.mrb[0].mxu0 %v6728
        %v7132 = vpop.f32.mrb[0].mxu0
        %v7133 = vadd.f32 %v1863, %v7132
        %v7134 = vpop.f32.mrb[0].mxu0
        %v7135 = vadd.f32 %v1867, %v7134
        %v7136 = vpop.f32.mrb[0].mxu0
        %v7137 = vadd.f32 %v1863, %v7136
        %v7138 = vpop.f32.mrb[0].mxu0
        %v7139 = vadd.f32 %v1867, %v7138
        %7140 = vmatprep.mubr.bf16.mxu0 %v6733
        %7141 = vmatmul.mubr.bf16.gmra.mrb[0].mxu0 %v6732
        %v7142 = vpop.f32.mrb[0].mxu0
        %v7143 = vadd.f32 %v1863, %v7142
        %v7144 = vpop.f32.mrb[0].mxu0
        %v7145 = vadd.f32 %v1867, %v7144
        %v7146 = vpop.f32.mrb[0].mxu0
        %v7147 = vadd.f32 %v1863, %v7146
        %v7148 = vpop.f32.mrb[0].mxu0
        %v7149 = vadd.f32 %v1867, %v7148
        %7150 = vdwg.mxu0
        %7151 = vmatprep.subr.bf16.mxu0 %v2785
        %7152 = vmatpush1.bf16.msra.mxu0 %v2784
        %7153 = vmatprep.subr.bf16.mxu0 %v2793
        %7154 = vmatpush1.bf16.msra.mxu0 %v2792
        %7155 = vmatprep.subr.bf16.mxu0 %v2801
        %7156 = vmatpush1.bf16.msra.mxu0 %v2800
        %7157 = vmatprep.subr.bf16.mxu0 %v2809
        %7158 = vmatpush1.bf16.msra.mxu0 %v2808
        %7159 = vmatprep.subr.bf16.mxu0 %v2817
        %7160 = vmatpush1.bf16.msra.mxu0 %v2816
        %7161 = vmatprep.subr.bf16.mxu0 %v2825
        %7162 = vmatpush1.bf16.msra.mxu0 %v2824
        %7163 = vmatprep.subr.bf16.mxu0 %v2833
        %7164 = vmatpush1.bf16.msra.mxu0 %v2832
        %7165 = vmatprep.subr.bf16.mxu0 %v2841
        %7166 = vmatpush1.bf16.msra.mxu0 %v2840
        %7167 = vmatprep.subr.bf16.mxu0 %v2849
        %7168 = vmatpush1.bf16.msra.mxu0 %v2848
        %7169 = vmatprep.subr.bf16.mxu0 %v2857
        %7170 = vmatpush1.bf16.msra.mxu0 %v2856
        %7171 = vmatprep.subr.bf16.mxu0 %v2865
        %7172 = vmatpush1.bf16.msra.mxu0 %v2864
        %7173 = vmatprep.subr.bf16.mxu0 %v2873
        %7174 = vmatpush1.bf16.msra.mxu0 %v2872
        %7175 = vmatprep.subr.bf16.mxu0 %v2881
        %7176 = vmatpush1.bf16.msra.mxu0 %v2880
        %7177 = vmatprep.subr.bf16.mxu0 %v2889
        %7178 = vmatpush1.bf16.msra.mxu0 %v2888
        %7179 = vmatprep.subr.bf16.mxu0 %v2897
        %7180 = vmatpush1.bf16.msra.mxu0 %v2896
        %7181 = vmatprep.subr.bf16.mxu0 %v2905
        %7182 = vmatpush1.bf16.msra.mxu0 %v2904
        %7183 = vmatprep.mubr.bf16.mxu0 %v6719
        %7184 = vmatmul.mubr.bf16.gmra.mrb[0].mxu0 %v6718
        %v7185 = vpop.f32.mrb[0].mxu0
        %v7186 = vadd.f32 %v7103, %v7185
        %v7187 = vpop.f32.mrb[0].mxu0
        %v7188 = vadd.f32 %v7105, %v7187
        %v7189 = vpop.f32.mrb[0].mxu0
        %v7190 = vadd.f32 %v7107, %v7189
        %v7191 = vpop.f32.mrb[0].mxu0
        %v7192 = vadd.f32 %v7109, %v7191
        %7193 = vmatprep.mubr.bf16.mxu0 %v6723
        %7194 = vmatmul.mubr.bf16.gmra.mrb[0].mxu0 %v6722
        %v7195 = vpop.f32.mrb[0].mxu0
        %v7196 = vadd.f32 %v7113, %v7195
        %v7197 = vpop.f32.mrb[0].mxu0
        %v7198 = vadd.f32 %v7115, %v7197
        %v7199 = vpop.f32.mrb[0].mxu0
        %v7200 = vadd.f32 %v7117, %v7199
        %v7201 = vpop.f32.mrb[0].mxu0
        %v7202 = vadd.f32 %v7119, %v7201
        %7203 = vmatprep.mubr.bf16.mxu0 %v6727
        %7204 = vmatmul.mubr.bf16.gmra.mrb[0].mxu0 %v6726
        %v7205 = vpop.f32.mrb[0].mxu0
        %v7206 = vadd.f32 %v7123, %v7205
        %v7207 = vpop.f32.mrb[0].mxu0
        %v7208 = vadd.f32 %v7125, %v7207
        %v7209 = vpop.f32.mrb[0].mxu0
        %v7210 = vadd.f32 %v7127, %v7209
        %v7211 = vpop.f32.mrb[0].mxu0
        %v7212 = vadd.f32 %v7129, %v7211
        %7213 = vmatprep.mubr.bf16.mxu0 %v6731
        %7214 = vmatmul.mubr.bf16.gmra.mrb[0].mxu0 %v6730
        %v7215 = vpop.f32.mrb[0].mxu0
        %v7216 = vadd.f32 %v7133, %v7215
        %v7217 = vpop.f32.mrb[0].mxu0
        %v7218 = vadd.f32 %v7135, %v7217
        %v7219 = vpop.f32.mrb[0].mxu0
        %v7220 = vadd.f32 %v7137, %v7219
        %v7221 = vpop.f32.mrb[0].mxu0
        %v7222 = vadd.f32 %v7139, %v7221
        %7223 = vmatprep.mubr.bf16.mxu0 %v6735
        %7224 = vmatmul.mubr.bf16.gmra.mrb[0].mxu0 %v6734
        %v7225 = vpop.f32.mrb[0].mxu0
        %v7226 = vadd.f32 %v7143, %v7225
        %v7227 = vpop.f32.mrb[0].mxu0
        %v7228 = vadd.f32 %v7145, %v7227
        %v7229 = vpop.f32.mrb[0].mxu0
        %v7230 = vadd.f32 %v7147, %v7229
        %v7231 = vpop.f32.mrb[0].mxu0
        %v7232 = vadd.f32 %v7149, %v7231
        %7233 = vdwg.mxu0
        %7234 = vmatprep.subr.bf16.mxu0 %v2659
        %7235 = vmatpush1.bf16.msra.mxu0 %v2658
        %7236 = vmatprep.subr.bf16.mxu0 %v2667
        %7237 = vmatpush1.bf16.msra.mxu0 %v2666
        %7238 = vmatprep.subr.bf16.mxu0 %v2675
        %7239 = vmatpush1.bf16.msra.mxu0 %v2674
        %7240 = vmatprep.subr.bf16.mxu0 %v2683
        %7241 = vmatpush1.bf16.msra.mxu0 %v2682
        %7242 = vmatprep.subr.bf16.mxu0 %v2691
        %7243 = vmatpush1.bf16.msra.mxu0 %v2690
        %7244 = vmatprep.subr.bf16.mxu0 %v2699
        %7245 = vmatpush1.bf16.msra.mxu0 %v2698
        %7246 = vmatprep.subr.bf16.mxu0 %v2707
        %7247 = vmatpush1.bf16.msra.mxu0 %v2706
        %7248 = vmatprep.subr.bf16.mxu0 %v2715
        %7249 = vmatpush1.bf16.msra.mxu0 %v2714
        %7250 = vmatprep.subr.bf16.mxu0 %v2723
        %7251 = vmatpush1.bf16.msra.mxu0 %v2722
        %7252 = vmatprep.subr.bf16.mxu0 %v2731
        %7253 = vmatpush1.bf16.msra.mxu0 %v2730
        %7254 = vmatprep.subr.bf16.mxu0 %v2739
        %7255 = vmatpush1.bf16.msra.mxu0 %v2738
        %7256 = vmatprep.subr.bf16.mxu0 %v2747
        %7257 = vmatpush1.bf16.msra.mxu0 %v2746
        %7258 = vmatprep.subr.bf16.mxu0 %v2755
        %7259 = vmatpush1.bf16.msra.mxu0 %v2754
        %7260 = vmatprep.subr.bf16.mxu0 %v2763
        %7261 = vmatpush1.bf16.msra.mxu0 %v2762
        %7262 = vmatprep.subr.bf16.mxu0 %v2771
        %7263 = vmatpush1.bf16.msra.mxu0 %v2770
        %7264 = vmatprep.subr.bf16.mxu0 %v2779
        %7265 = vmatpush1.bf16.msra.mxu0 %v2778
        %7266 = vmatprep.mubr.bf16.mxu0 %v6717
        %7267 = vmatmul.mubr.bf16.gmra.mrb[0].mxu0 %v6716
        %v7268 = vpop.f32.mrb[0].mxu0
        %v7269 = vadd.f32 %v1871, %v7268
        %v7270 = vpop.f32.mrb[0].mxu0
        %v7271 = vadd.f32 %v1875, %v7270
        %v7272 = vpop.f32.mrb[0].mxu0
        %v7273 = vadd.f32 %v1871, %v7272
        %v7274 = vpop.f32.mrb[0].mxu0
        %v7275 = vadd.f32 %v1875, %v7274
        %7276 = vmatprep.mubr.bf16.mxu0 %v6721
        %7277 = vmatmul.mubr.bf16.gmra.mrb[0].mxu0 %v6720
        %v7278 = vpop.f32.mrb[0].mxu0
        %v7279 = vadd.f32 %v1871, %v7278
        %v7280 = vpop.f32.mrb[0].mxu0
        %v7281 = vadd.f32 %v1875, %v7280
        %v7282 = vpop.f32.mrb[0].mxu0
        %v7283 = vadd.f32 %v1871, %v7282
        %v7284 = vpop.f32.mrb[0].mxu0
        %v7285 = vadd.f32 %v1875, %v7284
        %7286 = vmatprep.mubr.bf16.mxu0 %v6725
        %7287 = vmatmul.mubr.bf16.gmra.mrb[0].mxu0 %v6724
        %v7288 = vpop.f32.mrb[0].mxu0
        %v7289 = vadd.f32 %v1871, %v7288
        %v7290 = vpop.f32.mrb[0].mxu0
        %v7291 = vadd.f32 %v1875, %v7290
        %v7292 = vpop.f32.mrb[0].mxu0
        %v7293 = vadd.f32 %v1871, %v7292
        %v7294 = vpop.f32.mrb[0].mxu0
        %v7295 = vadd.f32 %v1875, %v7294
        %7296 = vmatprep.mubr.bf16.mxu0 %v6729
        %7297 = vmatmul.mubr.bf16.gmra.mrb[0].mxu0 %v6728
        %v7298 = vpop.f32.mrb[0].mxu0
        %v7299 = vadd.f32 %v1871, %v7298
        %v7300 = vpop.f32.mrb[0].mxu0
        %v7301 = vadd.f32 %v1875, %v7300
        %v7302 = vpop.f32.mrb[0].mxu0
        %v7303 = vadd.f32 %v1871, %v7302
        %v7304 = vpop.f32.mrb[0].mxu0
        %v7305 = vadd.f32 %v1875, %v7304
        %7306 = vmatprep.mubr.bf16.mxu0 %v6733
        %7307 = vmatmul.mubr.bf16.gmra.mrb[0].mxu0 %v6732
        %v7308 = vpop.f32.mrb[0].mxu0
        %v7309 = vadd.f32 %v1871, %v7308
        %v7310 = vpop.f32.mrb[0].mxu0
        %v7311 = vadd.f32 %v1875, %v7310
        %v7312 = vpop.f32.mrb[0].mxu0
        %v7313 = vadd.f32 %v1871, %v7312
        %v7314 = vpop.f32.mrb[0].mxu0
        %v7315 = vadd.f32 %v1875, %v7314
        %7316 = vdwg.mxu0
        %7317 = vmatprep.subr.bf16.mxu0 %v2787
        %7318 = vmatpush1.bf16.msra.mxu0 %v2786
        %7319 = vmatprep.subr.bf16.mxu0 %v2795
        %7320 = vmatpush1.bf16.msra.mxu0 %v2794
        %7321 = vmatprep.subr.bf16.mxu0 %v2803
        %7322 = vmatpush1.bf16.msra.mxu0 %v2802
        %7323 = vmatprep.subr.bf16.mxu0 %v2811
        %7324 = vmatpush1.bf16.msra.mxu0 %v2810
        %7325 = vmatprep.subr.bf16.mxu0 %v2819
        %7326 = vmatpush1.bf16.msra.mxu0 %v2818
        %7327 = vmatprep.subr.bf16.mxu0 %v2827
        %7328 = vmatpush1.bf16.msra.mxu0 %v2826
        %7329 = vmatprep.subr.bf16.mxu0 %v2835
        %7330 = vmatpush1.bf16.msra.mxu0 %v2834
        %7331 = vmatprep.subr.bf16.mxu0 %v2843
        %7332 = vmatpush1.bf16.msra.mxu0 %v2842
        %7333 = vmatprep.subr.bf16.mxu0 %v2851
        %7334 = vmatpush1.bf16.msra.mxu0 %v2850
        %7335 = vmatprep.subr.bf16.mxu0 %v2859
        %7336 = vmatpush1.bf16.msra.mxu0 %v2858
        %7337 = vmatprep.subr.bf16.mxu0 %v2867
        %7338 = vmatpush1.bf16.msra.mxu0 %v2866
        %7339 = vmatprep.subr.bf16.mxu0 %v2875
        %7340 = vmatpush1.bf16.msra.mxu0 %v2874
        %7341 = vmatprep.subr.bf16.mxu0 %v2883
        %7342 = vmatpush1.bf16.msra.mxu0 %v2882
        %7343 = vmatprep.subr.bf16.mxu0 %v2891
        %7344 = vmatpush1.bf16.msra.mxu0 %v2890
        %7345 = vmatprep.subr.bf16.mxu0 %v2899
        %7346 = vmatpush1.bf16.msra.mxu0 %v2898
        %7347 = vmatprep.subr.bf16.mxu0 %v2907
        %7348 = vmatpush1.bf16.msra.mxu0 %v2906
        %7349 = vmatprep.mubr.bf16.mxu0 %v6719
        %7350 = vmatmul.mubr.bf16.gmra.mrb[0].mxu0 %v6718
        %v7351 = vpop.f32.mrb[0].mxu0
        %v7352 = vadd.f32 %v7269, %v7351
        %v7353 = vpop.f32.mrb[0].mxu0
        %v7354 = vadd.f32 %v7271, %v7353
        %v7355 = vpop.f32.mrb[0].mxu0
        %v7356 = vadd.f32 %v7273, %v7355
        %v7357 = vpop.f32.mrb[0].mxu0
        %v7358 = vadd.f32 %v7275, %v7357
        %7359 = vmatprep.mubr.bf16.mxu0 %v6723
        %7360 = vmatmul.mubr.bf16.gmra.mrb[0].mxu0 %v6722
        %v7361 = vpop.f32.mrb[0].mxu0
        %v7362 = vadd.f32 %v7279, %v7361
        %v7363 = vpop.f32.mrb[0].mxu0
        %v7364 = vadd.f32 %v7281, %v7363
        %v7365 = vpop.f32.mrb[0].mxu0
        %v7366 = vadd.f32 %v7283, %v7365
        %v7367 = vpop.f32.mrb[0].mxu0
        %v7368 = vadd.f32 %v7285, %v7367
        %7369 = vmatprep.mubr.bf16.mxu0 %v6727
        %7370 = vmatmul.mubr.bf16.gmra.mrb[0].mxu0 %v6726
        %v7371 = vpop.f32.mrb[0].mxu0
        %v7372 = vadd.f32 %v7289, %v7371
        %v7373 = vpop.f32.mrb[0].mxu0
        %v7374 = vadd.f32 %v7291, %v7373
        %v7375 = vpop.f32.mrb[0].mxu0
        %v7376 = vadd.f32 %v7293, %v7375
        %v7377 = vpop.f32.mrb[0].mxu0
        %v7378 = vadd.f32 %v7295, %v7377
        %7379 = vmatprep.mubr.bf16.mxu0 %v6731
        %7380 = vmatmul.mubr.bf16.gmra.mrb[0].mxu0 %v6730
        %v7381 = vpop.f32.mrb[0].mxu0
        %v7382 = vadd.f32 %v7299, %v7381
        %v7383 = vpop.f32.mrb[0].mxu0
        %v7384 = vadd.f32 %v7301, %v7383
        %v7385 = vpop.f32.mrb[0].mxu0
        %v7386 = vadd.f32 %v7303, %v7385
        %v7387 = vpop.f32.mrb[0].mxu0
        %v7388 = vadd.f32 %v7305, %v7387
        %7389 = vmatprep.mubr.bf16.mxu0 %v6735
        %7390 = vmatmul.mubr.bf16.gmra.mrb[0].mxu0 %v6734
        %v7391 = vpop.f32.mrb[0].mxu0
        %v7392 = vadd.f32 %v7309, %v7391
        %v7393 = vpop.f32.mrb[0].mxu0
        %v7394 = vadd.f32 %v7311, %v7393
        %v7395 = vpop.f32.mrb[0].mxu0
        %v7396 = vadd.f32 %v7313, %v7395
        %v7397 = vpop.f32.mrb[0].mxu0
        %v7398 = vadd.f32 %v7315, %v7397
        %7399 = vdwg.mxu0
        %v7400 = vmax.f32 %v6854, 0.0
        %v7401 = vmax.f32 %v6856, 0.0
        %v7402 = vmax.f32 %v7020, 0.0
        %v7403 = vmax.f32 %v7022, 0.0
        %v7404 = vmax.f32 %v7186, 0.0
        %v7405 = vmax.f32 %v7188, 0.0
        %v7406 = vmax.f32 %v7352, 0.0
        %v7407 = vmax.f32 %v7354, 0.0
        %v7408 = vmax.f32 %v6858, 0.0
        %v7409 = vmax.f32 %v6860, 0.0
        %v7410 = vmax.f32 %v7024, 0.0
        %v7411 = vmax.f32 %v7026, 0.0
        %v7412 = vmax.f32 %v7190, 0.0
        %v7413 = vmax.f32 %v7192, 0.0
        %v7414 = vmax.f32 %v7356, 0.0
        %v7415 = vmax.f32 %v7358, 0.0
        %v7416 = vmax.f32 %v6864, 0.0
        %v7417 = vmax.f32 %v6866, 0.0
        %v7418 = vmax.f32 %v7030, 0.0
        %v7419 = vmax.f32 %v7032, 0.0
        %v7420 = vmax.f32 %v7196, 0.0
        %v7421 = vmax.f32 %v7198, 0.0
        %v7422 = vmax.f32 %v7362, 0.0
        %v7423 = vmax.f32 %v7364, 0.0
        %v7424 = vmax.f32 %v6868, 0.0
        %v7425 = vmax.f32 %v6870, 0.0
        %v7426 = vmax.f32 %v7034, 0.0
        %v7427 = vmax.f32 %v7036, 0.0
        %v7428 = vmax.f32 %v7200, 0.0
        %v7429 = vmax.f32 %v7202, 0.0
        %v7430 = vmax.f32 %v7366, 0.0
        %v7431 = vmax.f32 %v7368, 0.0
        %v7432 = vmax.f32 %v6874, 0.0
        %v7433 = vmax.f32 %v6876, 0.0
        %v7434 = vmax.f32 %v7040, 0.0
        %v7435 = vmax.f32 %v7042, 0.0
        %v7436 = vmax.f32 %v7206, 0.0
        %v7437 = vmax.f32 %v7208, 0.0
        %v7438 = vmax.f32 %v7372, 0.0
        %v7439 = vmax.f32 %v7374, 0.0
        %v7440 = vmax.f32 %v6878, 0.0
        %v7441 = vmax.f32 %v6880, 0.0
        %v7442 = vmax.f32 %v7044, 0.0
        %v7443 = vmax.f32 %v7046, 0.0
        %v7444 = vmax.f32 %v7210, 0.0
        %v7445 = vmax.f32 %v7212, 0.0
        %v7446 = vmax.f32 %v7376, 0.0
        %v7447 = vmax.f32 %v7378, 0.0
        %v7448 = vmax.f32 %v6884, 0.0
        %v7449 = vmax.f32 %v6886, 0.0
        %v7450 = vmax.f32 %v7050, 0.0
        %v7451 = vmax.f32 %v7052, 0.0
        %v7452 = vmax.f32 %v7216, 0.0
        %v7453 = vmax.f32 %v7218, 0.0
        %v7454 = vmax.f32 %v7382, 0.0
        %v7455 = vmax.f32 %v7384, 0.0
        %v7456 = vmax.f32 %v6888, 0.0
        %v7457 = vmax.f32 %v6890, 0.0
        %v7458 = vmax.f32 %v7054, 0.0
        %v7459 = vmax.f32 %v7056, 0.0
        %v7460 = vmax.f32 %v7220, 0.0
        %v7461 = vmax.f32 %v7222, 0.0
        %v7462 = vmax.f32 %v7386, 0.0
        %v7463 = vmax.f32 %v7388, 0.0
        %v7464 = vmax.f32 %v6894, 0.0
        %v7465 = vmax.f32 %v6896, 0.0
        %v7466 = vmax.f32 %v7060, 0.0
        %v7467 = vmax.f32 %v7062, 0.0
        %v7468 = vmax.f32 %v7226, 0.0
        %v7469 = vmax.f32 %v7228, 0.0
        %v7470 = vmax.f32 %v7392, 0.0
        %v7471 = vmax.f32 %v7394, 0.0
        %v7472 = vmax.f32 %v6898, 0.0
        %v7473 = vmax.f32 %v6900, 0.0
        %v7474 = vmax.f32 %v7064, 0.0
        %v7475 = vmax.f32 %v7066, 0.0
        %v7476 = vmax.f32 %v7230, 0.0
        %v7477 = vmax.f32 %v7232, 0.0
        %v7478 = vmax.f32 %v7396, 0.0
        %v7479 = vmax.f32 %v7398, 0.0
        %v7480 = vpack.c.bf16 %v7408, %v7400
        %v7481 = vpack.c.bf16 %v7409, %v7401
        %v7482 = vpack.c.bf16 %v7410, %v7402
        %v7483 = vpack.c.bf16 %v7411, %v7403
        %v7484 = vpack.c.bf16 %v7412, %v7404
        %v7485 = vpack.c.bf16 %v7413, %v7405
        %v7486 = vpack.c.bf16 %v7414, %v7406
        %v7487 = vpack.c.bf16 %v7415, %v7407
        %v7488 = vpack.c.bf16 %v7424, %v7416
        %v7489 = vpack.c.bf16 %v7425, %v7417
        %v7490 = vpack.c.bf16 %v7426, %v7418
        %v7491 = vpack.c.bf16 %v7427, %v7419
        %v7492 = vpack.c.bf16 %v7428, %v7420
        %v7493 = vpack.c.bf16 %v7429, %v7421
        %v7494 = vpack.c.bf16 %v7430, %v7422
        %v7495 = vpack.c.bf16 %v7431, %v7423
        %v7496 = vpack.c.bf16 %v7440, %v7432
        %v7497 = vpack.c.bf16 %v7441, %v7433
        %v7498 = vpack.c.bf16 %v7442, %v7434
        %v7499 = vpack.c.bf16 %v7443, %v7435
        %v7500 = vpack.c.bf16 %v7444, %v7436
        %v7501 = vpack.c.bf16 %v7445, %v7437
        %v7502 = vpack.c.bf16 %v7446, %v7438
        %v7503 = vpack.c.bf16 %v7447, %v7439
        %v7504 = vpack.c.bf16 %v7456, %v7448
        %v7505 = vpack.c.bf16 %v7457, %v7449
        %v7506 = vpack.c.bf16 %v7458, %v7450
        %v7507 = vpack.c.bf16 %v7459, %v7451
        %v7508 = vpack.c.bf16 %v7460, %v7452
        %v7509 = vpack.c.bf16 %v7461, %v7453
        %v7510 = vpack.c.bf16 %v7462, %v7454
        %v7511 = vpack.c.bf16 %v7463, %v7455
        %v7512 = vpack.c.bf16 %v7472, %v7464
        %v7513 = vpack.c.bf16 %v7473, %v7465
        %v7514 = vpack.c.bf16 %v7474, %v7466
        %v7515 = vpack.c.bf16 %v7475, %v7467
        %v7516 = vpack.c.bf16 %v7476, %v7468
        %v7517 = vpack.c.bf16 %v7477, %v7469
        %v7518 = vpack.c.bf16 %v7478, %v7470
        %v7519 = vpack.c.bf16 %v7479, %v7471
        %7520 = vmatprep.subr.bf16.mxu0 %v4738
        %7521 = vmatpush1.bf16.msra.mxu0 %v4737
        %7522 = vmatprep.subr.bf16.mxu0 %v4742
        %7523 = vmatpush1.bf16.msra.mxu0 %v4741
        %7524 = vmatprep.subr.bf16.mxu0 %v4746
        %7525 = vmatpush1.bf16.msra.mxu0 %v4745
        %7526 = vmatprep.subr.bf16.mxu0 %v4750
        %7527 = vmatpush1.bf16.msra.mxu0 %v4749
        %7528 = vmatprep.subr.bf16.mxu0 %v4754
        %7529 = vmatpush1.bf16.msra.mxu0 %v4753
        %7530 = vmatprep.subr.bf16.mxu0 %v4758
        %7531 = vmatpush1.bf16.msra.mxu0 %v4757
        %7532 = vmatprep.subr.bf16.mxu0 %v4762
        %7533 = vmatpush1.bf16.msra.mxu0 %v4761
        %7534 = vmatprep.subr.bf16.mxu0 %v4766
        %7535 = vmatpush1.bf16.msra.mxu0 %v4765
        %7536 = vmatprep.subr.bf16.mxu0 %v4770
        %7537 = vmatpush1.bf16.msra.mxu0 %v4769
        %7538 = vmatprep.subr.bf16.mxu0 %v4774
        %7539 = vmatpush1.bf16.msra.mxu0 %v4773
        %7540 = vmatprep.subr.bf16.mxu0 %v4778
        %7541 = vmatpush1.bf16.msra.mxu0 %v4777
        %7542 = vmatprep.subr.bf16.mxu0 %v4782
        %7543 = vmatpush1.bf16.msra.mxu0 %v4781
        %7544 = vmatprep.subr.bf16.mxu0 %v4786
        %7545 = vmatpush1.bf16.msra.mxu0 %v4785
        %7546 = vmatprep.subr.bf16.mxu0 %v4790
        %7547 = vmatpush1.bf16.msra.mxu0 %v4789
        %7548 = vmatprep.subr.bf16.mxu0 %v4794
        %7549 = vmatpush1.bf16.msra.mxu0 %v4793
        %7550 = vmatprep.subr.bf16.mxu0 %v4798
        %7551 = vmatpush1.bf16.msra.mxu0 %v4797
        %7552 = vmatprep.mubr.bf16.mxu0 %v7481
        %7553 = vmatmul.mubr.bf16.gmra.mrb[0].mxu0 %v7480
        %v7554 = vpop.f32.mrb[0].mxu0
        %v7555 = vadd.f32 %v3952, %v7554
        %v7556 = vpop.f32.mrb[0].mxu0
        %v7557 = vadd.f32 %v3956, %v7556
        %v7558 = vpop.f32.mrb[0].mxu0
        %v7559 = vadd.f32 %v3952, %v7558
        %v7560 = vpop.f32.mrb[0].mxu0
        %v7561 = vadd.f32 %v3956, %v7560
        %7562 = vmatprep.mubr.bf16.mxu0 %v7489
        %7563 = vmatmul.mubr.bf16.gmra.mrb[0].mxu0 %v7488
        %v7564 = vpop.f32.mrb[0].mxu0
        %v7565 = vadd.f32 %v3952, %v7564
        %v7566 = vpop.f32.mrb[0].mxu0
        %v7567 = vadd.f32 %v3956, %v7566
        %v7568 = vpop.f32.mrb[0].mxu0
        %v7569 = vadd.f32 %v3952, %v7568
        %v7570 = vpop.f32.mrb[0].mxu0
        %v7571 = vadd.f32 %v3956, %v7570
        %7572 = vmatprep.mubr.bf16.mxu0 %v7497
        %7573 = vmatmul.mubr.bf16.gmra.mrb[0].mxu0 %v7496
        %v7574 = vpop.f32.mrb[0].mxu0
        %v7575 = vadd.f32 %v3952, %v7574
        %v7576 = vpop.f32.mrb[0].mxu0
        %v7577 = vadd.f32 %v3956, %v7576
        %v7578 = vpop.f32.mrb[0].mxu0
        %v7579 = vadd.f32 %v3952, %v7578
        %v7580 = vpop.f32.mrb[0].mxu0
        %v7581 = vadd.f32 %v3956, %v7580
        %7582 = vmatprep.mubr.bf16.mxu0 %v7505
        %7583 = vmatmul.mubr.bf16.gmra.mrb[0].mxu0 %v7504
        %v7584 = vpop.f32.mrb[0].mxu0
        %v7585 = vadd.f32 %v3952, %v7584
        %v7586 = vpop.f32.mrb[0].mxu0
        %v7587 = vadd.f32 %v3956, %v7586
        %v7588 = vpop.f32.mrb[0].mxu0
        %v7589 = vadd.f32 %v3952, %v7588
        %v7590 = vpop.f32.mrb[0].mxu0
        %v7591 = vadd.f32 %v3956, %v7590
        %7592 = vmatprep.mubr.bf16.mxu0 %v7513
        %7593 = vmatmul.mubr.bf16.gmra.mrb[0].mxu0 %v7512
        %v7594 = vpop.f32.mrb[0].mxu0
        %v7595 = vadd.f32 %v3952, %v7594
        %v7596 = vpop.f32.mrb[0].mxu0
        %v7597 = vadd.f32 %v3956, %v7596
        %v7598 = vpop.f32.mrb[0].mxu0
        %v7599 = vadd.f32 %v3952, %v7598
        %v7600 = vpop.f32.mrb[0].mxu0
        %v7601 = vadd.f32 %v3956, %v7600
        %7602 = vdwg.mxu0
        %7603 = vmatprep.subr.bf16.mxu0 %v4802
        %7604 = vmatpush1.bf16.msra.mxu0 %v4801
        %7605 = vmatprep.subr.bf16.mxu0 %v4806
        %7606 = vmatpush1.bf16.msra.mxu0 %v4805
        %7607 = vmatprep.subr.bf16.mxu0 %v4810
        %7608 = vmatpush1.bf16.msra.mxu0 %v4809
        %7609 = vmatprep.subr.bf16.mxu0 %v4814
        %7610 = vmatpush1.bf16.msra.mxu0 %v4813
        %7611 = vmatprep.subr.bf16.mxu0 %v4818
        %7612 = vmatpush1.bf16.msra.mxu0 %v4817
        %7613 = vmatprep.subr.bf16.mxu0 %v4822
        %7614 = vmatpush1.bf16.msra.mxu0 %v4821
        %7615 = vmatprep.subr.bf16.mxu0 %v4826
        %7616 = vmatpush1.bf16.msra.mxu0 %v4825
        %7617 = vmatprep.subr.bf16.mxu0 %v4830
        %7618 = vmatpush1.bf16.msra.mxu0 %v4829
        %7619 = vmatprep.subr.bf16.mxu0 %v4834
        %7620 = vmatpush1.bf16.msra.mxu0 %v4833
        %7621 = vmatprep.subr.bf16.mxu0 %v4838
        %7622 = vmatpush1.bf16.msra.mxu0 %v4837
        %7623 = vmatprep.subr.bf16.mxu0 %v4842
        %7624 = vmatpush1.bf16.msra.mxu0 %v4841
        %7625 = vmatprep.subr.bf16.mxu0 %v4846
        %7626 = vmatpush1.bf16.msra.mxu0 %v4845
        %7627 = vmatprep.subr.bf16.mxu0 %v4850
        %7628 = vmatpush1.bf16.msra.mxu0 %v4849
        %7629 = vmatprep.subr.bf16.mxu0 %v4854
        %7630 = vmatpush1.bf16.msra.mxu0 %v4853
        %7631 = vmatprep.subr.bf16.mxu0 %v4858
        %7632 = vmatpush1.bf16.msra.mxu0 %v4857
        %7633 = vmatprep.subr.bf16.mxu0 %v4862
        %7634 = vmatpush1.bf16.msra.mxu0 %v4861
        %7635 = vmatprep.mubr.bf16.mxu0 %v7483
        %7636 = vmatmul.mubr.bf16.gmra.mrb[0].mxu0 %v7482
        %v7637 = vpop.f32.mrb[0].mxu0
        %v7638 = vadd.f32 %v7555, %v7637
        %v7639 = vpop.f32.mrb[0].mxu0
        %v7640 = vadd.f32 %v7557, %v7639
        %v7641 = vpop.f32.mrb[0].mxu0
        %v7642 = vadd.f32 %v7559, %v7641
        %v7643 = vpop.f32.mrb[0].mxu0
        %v7644 = vadd.f32 %v7561, %v7643
        %7645 = vmatprep.mubr.bf16.mxu0 %v7491
        %7646 = vmatmul.mubr.bf16.gmra.mrb[0].mxu0 %v7490
        %v7647 = vpop.f32.mrb[0].mxu0
        %v7648 = vadd.f32 %v7565, %v7647
        %v7649 = vpop.f32.mrb[0].mxu0
        %v7650 = vadd.f32 %v7567, %v7649
        %v7651 = vpop.f32.mrb[0].mxu0
        %v7652 = vadd.f32 %v7569, %v7651
        %v7653 = vpop.f32.mrb[0].mxu0
        %v7654 = vadd.f32 %v7571, %v7653
        %7655 = vmatprep.mubr.bf16.mxu0 %v7499
        %7656 = vmatmul.mubr.bf16.gmra.mrb[0].mxu0 %v7498
        %v7657 = vpop.f32.mrb[0].mxu0
        %v7658 = vadd.f32 %v7575, %v7657
        %v7659 = vpop.f32.mrb[0].mxu0
        %v7660 = vadd.f32 %v7577, %v7659
        %v7661 = vpop.f32.mrb[0].mxu0
        %v7662 = vadd.f32 %v7579, %v7661
        %v7663 = vpop.f32.mrb[0].mxu0
        %v7664 = vadd.f32 %v7581, %v7663
        %7665 = vmatprep.mubr.bf16.mxu0 %v7507
        %7666 = vmatmul.mubr.bf16.gmra.mrb[0].mxu0 %v7506
        %v7667 = vpop.f32.mrb[0].mxu0
        %v7668 = vadd.f32 %v7585, %v7667
        %v7669 = vpop.f32.mrb[0].mxu0
        %v7670 = vadd.f32 %v7587, %v7669
        %v7671 = vpop.f32.mrb[0].mxu0
        %v7672 = vadd.f32 %v7589, %v7671
        %v7673 = vpop.f32.mrb[0].mxu0
        %v7674 = vadd.f32 %v7591, %v7673
        %7675 = vmatprep.mubr.bf16.mxu0 %v7515
        %7676 = vmatmul.mubr.bf16.gmra.mrb[0].mxu0 %v7514
        %v7677 = vpop.f32.mrb[0].mxu0
        %v7678 = vadd.f32 %v7595, %v7677
        %v7679 = vpop.f32.mrb[0].mxu0
        %v7680 = vadd.f32 %v7597, %v7679
        %v7681 = vpop.f32.mrb[0].mxu0
        %v7682 = vadd.f32 %v7599, %v7681
        %v7683 = vpop.f32.mrb[0].mxu0
        %v7684 = vadd.f32 %v7601, %v7683
        %7685 = vdwg.mxu0
        %7686 = vmatprep.subr.bf16.mxu0 %v4866
        %7687 = vmatpush1.bf16.msra.mxu0 %v4865
        %7688 = vmatprep.subr.bf16.mxu0 %v4870
        %7689 = vmatpush1.bf16.msra.mxu0 %v4869
        %7690 = vmatprep.subr.bf16.mxu0 %v4874
        %7691 = vmatpush1.bf16.msra.mxu0 %v4873
        %7692 = vmatprep.subr.bf16.mxu0 %v4878
        %7693 = vmatpush1.bf16.msra.mxu0 %v4877
        %7694 = vmatprep.subr.bf16.mxu0 %v4882
        %7695 = vmatpush1.bf16.msra.mxu0 %v4881
        %7696 = vmatprep.subr.bf16.mxu0 %v4886
        %7697 = vmatpush1.bf16.msra.mxu0 %v4885
        %7698 = vmatprep.subr.bf16.mxu0 %v4890
        %7699 = vmatpush1.bf16.msra.mxu0 %v4889
        %7700 = vmatprep.subr.bf16.mxu0 %v4894
        %7701 = vmatpush1.bf16.msra.mxu0 %v4893
        %7702 = vmatprep.subr.bf16.mxu0 %v4898
        %7703 = vmatpush1.bf16.msra.mxu0 %v4897
        %7704 = vmatprep.subr.bf16.mxu0 %v4902
        %7705 = vmatpush1.bf16.msra.mxu0 %v4901
        %7706 = vmatprep.subr.bf16.mxu0 %v4906
        %7707 = vmatpush1.bf16.msra.mxu0 %v4905
        %7708 = vmatprep.subr.bf16.mxu0 %v4910
        %7709 = vmatpush1.bf16.msra.mxu0 %v4909
        %7710 = vmatprep.subr.bf16.mxu0 %v4914
        %7711 = vmatpush1.bf16.msra.mxu0 %v4913
        %7712 = vmatprep.subr.bf16.mxu0 %v4918
        %7713 = vmatpush1.bf16.msra.mxu0 %v4917
        %7714 = vmatprep.subr.bf16.mxu0 %v4922
        %7715 = vmatpush1.bf16.msra.mxu0 %v4921
        %7716 = vmatprep.subr.bf16.mxu0 %v4926
        %7717 = vmatpush1.bf16.msra.mxu0 %v4925
        %7718 = vmatprep.mubr.bf16.mxu0 %v7485
        %7719 = vmatmul.mubr.bf16.gmra.mrb[0].mxu0 %v7484
        %v7720 = vpop.f32.mrb[0].mxu0
        %v7721 = vadd.f32 %v7638, %v7720
        %v7722 = vpop.f32.mrb[0].mxu0
        %v7723 = vadd.f32 %v7640, %v7722
        %v7724 = vpop.f32.mrb[0].mxu0
        %v7725 = vadd.f32 %v7642, %v7724
        %v7726 = vpop.f32.mrb[0].mxu0
        %v7727 = vadd.f32 %v7644, %v7726
        %7728 = vmatprep.mubr.bf16.mxu0 %v7493
        %7729 = vmatmul.mubr.bf16.gmra.mrb[0].mxu0 %v7492
        %v7730 = vpop.f32.mrb[0].mxu0
        %v7731 = vadd.f32 %v7648, %v7730
        %v7732 = vpop.f32.mrb[0].mxu0
        %v7733 = vadd.f32 %v7650, %v7732
        %v7734 = vpop.f32.mrb[0].mxu0
        %v7735 = vadd.f32 %v7652, %v7734
        %v7736 = vpop.f32.mrb[0].mxu0
        %v7737 = vadd.f32 %v7654, %v7736
        %7738 = vmatprep.mubr.bf16.mxu0 %v7501
        %7739 = vmatmul.mubr.bf16.gmra.mrb[0].mxu0 %v7500
        %v7740 = vpop.f32.mrb[0].mxu0
        %v7741 = vadd.f32 %v7658, %v7740
        %v7742 = vpop.f32.mrb[0].mxu0
        %v7743 = vadd.f32 %v7660, %v7742
        %v7744 = vpop.f32.mrb[0].mxu0
        %v7745 = vadd.f32 %v7662, %v7744
        %v7746 = vpop.f32.mrb[0].mxu0
        %v7747 = vadd.f32 %v7664, %v7746
        %7748 = vmatprep.mubr.bf16.mxu0 %v7509
        %7749 = vmatmul.mubr.bf16.gmra.mrb[0].mxu0 %v7508
        %v7750 = vpop.f32.mrb[0].mxu0
        %v7751 = vadd.f32 %v7668, %v7750
        %v7752 = vpop.f32.mrb[0].mxu0
        %v7753 = vadd.f32 %v7670, %v7752
        %v7754 = vpop.f32.mrb[0].mxu0
        %v7755 = vadd.f32 %v7672, %v7754
        %v7756 = vpop.f32.mrb[0].mxu0
        %v7757 = vadd.f32 %v7674, %v7756
        %7758 = vmatprep.mubr.bf16.mxu0 %v7517
        %7759 = vmatmul.mubr.bf16.gmra.mrb[0].mxu0 %v7516
        %v7760 = vpop.f32.mrb[0].mxu0
        %v7761 = vadd.f32 %v7678, %v7760
        %v7762 = vpop.f32.mrb[0].mxu0
        %v7763 = vadd.f32 %v7680, %v7762
        %v7764 = vpop.f32.mrb[0].mxu0
        %v7765 = vadd.f32 %v7682, %v7764
        %v7766 = vpop.f32.mrb[0].mxu0
        %v7767 = vadd.f32 %v7684, %v7766
        %7768 = vdwg.mxu0
        %7769 = vmatprep.subr.bf16.mxu0 %v4930
        %7770 = vmatpush1.bf16.msra.mxu0 %v4929
        %7771 = vmatprep.subr.bf16.mxu0 %v4934
        %7772 = vmatpush1.bf16.msra.mxu0 %v4933
        %7773 = vmatprep.subr.bf16.mxu0 %v4938
        %7774 = vmatpush1.bf16.msra.mxu0 %v4937
        %7775 = vmatprep.subr.bf16.mxu0 %v4942
        %7776 = vmatpush1.bf16.msra.mxu0 %v4941
        %7777 = vmatprep.subr.bf16.mxu0 %v4946
        %7778 = vmatpush1.bf16.msra.mxu0 %v4945
        %7779 = vmatprep.subr.bf16.mxu0 %v4950
        %7780 = vmatpush1.bf16.msra.mxu0 %v4949
        %7781 = vmatprep.subr.bf16.mxu0 %v4954
        %7782 = vmatpush1.bf16.msra.mxu0 %v4953
        %7783 = vmatprep.subr.bf16.mxu0 %v4958
        %7784 = vmatpush1.bf16.msra.mxu0 %v4957
        %7785 = vmatprep.subr.bf16.mxu0 %v4962
        %7786 = vmatpush1.bf16.msra.mxu0 %v4961
        %7787 = vmatprep.subr.bf16.mxu0 %v4966
        %7788 = vmatpush1.bf16.msra.mxu0 %v4965
        %7789 = vmatprep.subr.bf16.mxu0 %v4970
        %7790 = vmatpush1.bf16.msra.mxu0 %v4969
        %7791 = vmatprep.subr.bf16.mxu0 %v4974
        %7792 = vmatpush1.bf16.msra.mxu0 %v4973
        %7793 = vmatprep.subr.bf16.mxu0 %v4978
        %7794 = vmatpush1.bf16.msra.mxu0 %v4977
        %7795 = vmatprep.subr.bf16.mxu0 %v4982
        %7796 = vmatpush1.bf16.msra.mxu0 %v4981
        %7797 = vmatprep.subr.bf16.mxu0 %v4986
        %7798 = vmatpush1.bf16.msra.mxu0 %v4985
        %7799 = vmatprep.subr.bf16.mxu0 %v4990
        %7800 = vmatpush1.bf16.msra.mxu0 %v4989
        %7801 = vmatprep.mubr.bf16.mxu0 %v7487
        %7802 = vmatmul.mubr.bf16.gmra.mrb[0].mxu0 %v7486
        %v7803 = vpop.f32.mrb[0].mxu0
        %v7804 = vadd.f32 %v7721, %v7803
        %v7805 = vpop.f32.mrb[0].mxu0
        %v7806 = vadd.f32 %v7723, %v7805
        %v7807 = vpop.f32.mrb[0].mxu0
        %v7808 = vadd.f32 %v7725, %v7807
        %v7809 = vpop.f32.mrb[0].mxu0
        %v7810 = vadd.f32 %v7727, %v7809
        %7811 = vmatprep.mubr.bf16.mxu0 %v7495
        %7812 = vmatmul.mubr.bf16.gmra.mrb[0].mxu0 %v7494
        %v7813 = vpop.f32.mrb[0].mxu0
        %v7814 = vadd.f32 %v7731, %v7813
        %v7815 = vpop.f32.mrb[0].mxu0
        %v7816 = vadd.f32 %v7733, %v7815
        %v7817 = vpop.f32.mrb[0].mxu0
        %v7818 = vadd.f32 %v7735, %v7817
        %v7819 = vpop.f32.mrb[0].mxu0
        %v7820 = vadd.f32 %v7737, %v7819
        %7821 = vmatprep.mubr.bf16.mxu0 %v7503
        %7822 = vmatmul.mubr.bf16.gmra.mrb[0].mxu0 %v7502
        %v7823 = vpop.f32.mrb[0].mxu0
        %v7824 = vadd.f32 %v7741, %v7823
        %v7825 = vpop.f32.mrb[0].mxu0
        %v7826 = vadd.f32 %v7743, %v7825
        %v7827 = vpop.f32.mrb[0].mxu0
        %v7828 = vadd.f32 %v7745, %v7827
        %v7829 = vpop.f32.mrb[0].mxu0
        %v7830 = vadd.f32 %v7747, %v7829
        %7831 = vmatprep.mubr.bf16.mxu0 %v7511
        %7832 = vmatmul.mubr.bf16.gmra.mrb[0].mxu0 %v7510
        %v7833 = vpop.f32.mrb[0].mxu0
        %v7834 = vadd.f32 %v7751, %v7833
        %v7835 = vpop.f32.mrb[0].mxu0
        %v7836 = vadd.f32 %v7753, %v7835
        %v7837 = vpop.f32.mrb[0].mxu0
        %v7838 = vadd.f32 %v7755, %v7837
        %v7839 = vpop.f32.mrb[0].mxu0
        %v7840 = vadd.f32 %v7757, %v7839
        %7841 = vmatprep.mubr.bf16.mxu0 %v7519
        %7842 = vmatmul.mubr.bf16.gmra.mrb[0].mxu0 %v7518
        %v7843 = vpop.f32.mrb[0].mxu0
        %v7844 = vadd.f32 %v7761, %v7843
        %v7845 = vpop.f32.mrb[0].mxu0
        %v7846 = vadd.f32 %v7763, %v7845
        %v7847 = vpop.f32.mrb[0].mxu0
        %v7848 = vadd.f32 %v7765, %v7847
        %v7849 = vpop.f32.mrb[0].mxu0
        %v7850 = vadd.f32 %v7767, %v7849
        %7851 = vdwg.mxu0
        %7852 = vmatprep.subr.bf16.mxu0 %v4740
        %7853 = vmatpush1.bf16.msra.mxu0 %v4739
        %7854 = vmatprep.subr.bf16.mxu0 %v4744
        %7855 = vmatpush1.bf16.msra.mxu0 %v4743
        %7856 = vmatprep.subr.bf16.mxu0 %v4748
        %7857 = vmatpush1.bf16.msra.mxu0 %v4747
        %7858 = vmatprep.subr.bf16.mxu0 %v4752
        %7859 = vmatpush1.bf16.msra.mxu0 %v4751
        %7860 = vmatprep.subr.bf16.mxu0 %v4756
        %7861 = vmatpush1.bf16.msra.mxu0 %v4755
        %7862 = vmatprep.subr.bf16.mxu0 %v4760
        %7863 = vmatpush1.bf16.msra.mxu0 %v4759
        %7864 = vmatprep.subr.bf16.mxu0 %v4764
        %7865 = vmatpush1.bf16.msra.mxu0 %v4763
        %7866 = vmatprep.subr.bf16.mxu0 %v4768
        %7867 = vmatpush1.bf16.msra.mxu0 %v4767
        %7868 = vmatprep.subr.bf16.mxu0 %v4772
        %7869 = vmatpush1.bf16.msra.mxu0 %v4771
        %7870 = vmatprep.subr.bf16.mxu0 %v4776
        %7871 = vmatpush1.bf16.msra.mxu0 %v4775
        %7872 = vmatprep.subr.bf16.mxu0 %v4780
        %7873 = vmatpush1.bf16.msra.mxu0 %v4779
        %7874 = vmatprep.subr.bf16.mxu0 %v4784
        %7875 = vmatpush1.bf16.msra.mxu0 %v4783
        %7876 = vmatprep.subr.bf16.mxu0 %v4788
        %7877 = vmatpush1.bf16.msra.mxu0 %v4787
        %7878 = vmatprep.subr.bf16.mxu0 %v4792
        %7879 = vmatpush1.bf16.msra.mxu0 %v4791
        %7880 = vmatprep.subr.bf16.mxu0 %v4796
        %7881 = vmatpush1.bf16.msra.mxu0 %v4795
        %7882 = vmatprep.subr.bf16.mxu0 %v4800
        %7883 = vmatpush1.bf16.msra.mxu0 %v4799
        %7884 = vmatprep.mubr.bf16.mxu0 %v7481
        %7885 = vmatmul.mubr.bf16.gmra.mrb[0].mxu0 %v7480
        %v7886 = vpop.f32.mrb[0].mxu0
        %v7887 = vadd.f32 %v3960, %v7886
        %v7888 = vpop.f32.mrb[0].mxu0
        %v7889 = vadd.f32 %v3964, %v7888
        %v7890 = vpop.f32.mrb[0].mxu0
        %v7891 = vadd.f32 %v3960, %v7890
        %v7892 = vpop.f32.mrb[0].mxu0
        %v7893 = vadd.f32 %v3964, %v7892
        %7894 = vmatprep.mubr.bf16.mxu0 %v7489
        %7895 = vmatmul.mubr.bf16.gmra.mrb[0].mxu0 %v7488
        %v7896 = vpop.f32.mrb[0].mxu0
        %v7897 = vadd.f32 %v3960, %v7896
        %v7898 = vpop.f32.mrb[0].mxu0
        %v7899 = vadd.f32 %v3964, %v7898
        %v7900 = vpop.f32.mrb[0].mxu0
        %v7901 = vadd.f32 %v3960, %v7900
        %v7902 = vpop.f32.mrb[0].mxu0
        %v7903 = vadd.f32 %v3964, %v7902
        %7904 = vmatprep.mubr.bf16.mxu0 %v7497
        %7905 = vmatmul.mubr.bf16.gmra.mrb[0].mxu0 %v7496
        %v7906 = vpop.f32.mrb[0].mxu0
        %v7907 = vadd.f32 %v3960, %v7906
        %v7908 = vpop.f32.mrb[0].mxu0
        %v7909 = vadd.f32 %v3964, %v7908
        %v7910 = vpop.f32.mrb[0].mxu0
        %v7911 = vadd.f32 %v3960, %v7910
        %v7912 = vpop.f32.mrb[0].mxu0
        %v7913 = vadd.f32 %v3964, %v7912
        %7914 = vmatprep.mubr.bf16.mxu0 %v7505
        %7915 = vmatmul.mubr.bf16.gmra.mrb[0].mxu0 %v7504
        %v7916 = vpop.f32.mrb[0].mxu0
        %v7917 = vadd.f32 %v3960, %v7916
        %v7918 = vpop.f32.mrb[0].mxu0
        %v7919 = vadd.f32 %v3964, %v7918
        %v7920 = vpop.f32.mrb[0].mxu0
        %v7921 = vadd.f32 %v3960, %v7920
        %v7922 = vpop.f32.mrb[0].mxu0
        %v7923 = vadd.f32 %v3964, %v7922
        %7924 = vmatprep.mubr.bf16.mxu0 %v7513
        %7925 = vmatmul.mubr.bf16.gmra.mrb[0].mxu0 %v7512
        %v7926 = vpop.f32.mrb[0].mxu0
        %v7927 = vadd.f32 %v3960, %v7926
        %v7928 = vpop.f32.mrb[0].mxu0
        %v7929 = vadd.f32 %v3964, %v7928
        %v7930 = vpop.f32.mrb[0].mxu0
        %v7931 = vadd.f32 %v3960, %v7930
        %v7932 = vpop.f32.mrb[0].mxu0
        %v7933 = vadd.f32 %v3964, %v7932
        %7934 = vdwg.mxu0
        %7935 = vmatprep.subr.bf16.mxu0 %v4804
        %7936 = vmatpush1.bf16.msra.mxu0 %v4803
        %7937 = vmatprep.subr.bf16.mxu0 %v4808
        %7938 = vmatpush1.bf16.msra.mxu0 %v4807
        %7939 = vmatprep.subr.bf16.mxu0 %v4812
        %7940 = vmatpush1.bf16.msra.mxu0 %v4811
        %7941 = vmatprep.subr.bf16.mxu0 %v4816
        %7942 = vmatpush1.bf16.msra.mxu0 %v4815
        %7943 = vmatprep.subr.bf16.mxu0 %v4820
        %7944 = vmatpush1.bf16.msra.mxu0 %v4819
        %7945 = vmatprep.subr.bf16.mxu0 %v4824
        %7946 = vmatpush1.bf16.msra.mxu0 %v4823
        %7947 = vmatprep.subr.bf16.mxu0 %v4828
        %7948 = vmatpush1.bf16.msra.mxu0 %v4827
        %7949 = vmatprep.subr.bf16.mxu0 %v4832
        %7950 = vmatpush1.bf16.msra.mxu0 %v4831
        %7951 = vmatprep.subr.bf16.mxu0 %v4836
        %7952 = vmatpush1.bf16.msra.mxu0 %v4835
        %7953 = vmatprep.subr.bf16.mxu0 %v4840
        %7954 = vmatpush1.bf16.msra.mxu0 %v4839
        %7955 = vmatprep.subr.bf16.mxu0 %v4844
        %7956 = vmatpush1.bf16.msra.mxu0 %v4843
        %7957 = vmatprep.subr.bf16.mxu0 %v4848
        %7958 = vmatpush1.bf16.msra.mxu0 %v4847
        %7959 = vmatprep.subr.bf16.mxu0 %v4852
        %7960 = vmatpush1.bf16.msra.mxu0 %v4851
        %7961 = vmatprep.subr.bf16.mxu0 %v4856
        %7962 = vmatpush1.bf16.msra.mxu0 %v4855
        %7963 = vmatprep.subr.bf16.mxu0 %v4860
        %7964 = vmatpush1.bf16.msra.mxu0 %v4859
        %7965 = vmatprep.subr.bf16.mxu0 %v4864
        %7966 = vmatpush1.bf16.msra.mxu0 %v4863
        %7967 = vmatprep.mubr.bf16.mxu0 %v7483
        %7968 = vmatmul.mubr.bf16.gmra.mrb[0].mxu0 %v7482
        %v7969 = vpop.f32.mrb[0].mxu0
        %v7970 = vadd.f32 %v7887, %v7969
        %v7971 = vpop.f32.mrb[0].mxu0
        %v7972 = vadd.f32 %v7889, %v7971
        %v7973 = vpop.f32.mrb[0].mxu0
        %v7974 = vadd.f32 %v7891, %v7973
        %v7975 = vpop.f32.mrb[0].mxu0
        %v7976 = vadd.f32 %v7893, %v7975
        %7977 = vmatprep.mubr.bf16.mxu0 %v7491
        %7978 = vmatmul.mubr.bf16.gmra.mrb[0].mxu0 %v7490
        %v7979 = vpop.f32.mrb[0].mxu0
        %v7980 = vadd.f32 %v7897, %v7979
        %v7981 = vpop.f32.mrb[0].mxu0
        %v7982 = vadd.f32 %v7899, %v7981
        %v7983 = vpop.f32.mrb[0].mxu0
        %v7984 = vadd.f32 %v7901, %v7983
        %v7985 = vpop.f32.mrb[0].mxu0
        %v7986 = vadd.f32 %v7903, %v7985
        %7987 = vmatprep.mubr.bf16.mxu0 %v7499
        %7988 = vmatmul.mubr.bf16.gmra.mrb[0].mxu0 %v7498
        %v7989 = vpop.f32.mrb[0].mxu0
        %v7990 = vadd.f32 %v7907, %v7989
        %v7991 = vpop.f32.mrb[0].mxu0
        %v7992 = vadd.f32 %v7909, %v7991
        %v7993 = vpop.f32.mrb[0].mxu0
        %v7994 = vadd.f32 %v7911, %v7993
        %v7995 = vpop.f32.mrb[0].mxu0
        %v7996 = vadd.f32 %v7913, %v7995
        %7997 = vmatprep.mubr.bf16.mxu0 %v7507
        %7998 = vmatmul.mubr.bf16.gmra.mrb[0].mxu0 %v7506
        %v7999 = vpop.f32.mrb[0].mxu0
        %v8000 = vadd.f32 %v7917, %v7999
        %v8001 = vpop.f32.mrb[0].mxu0
        %v8002 = vadd.f32 %v7919, %v8001
        %v8003 = vpop.f32.mrb[0].mxu0
        %v8004 = vadd.f32 %v7921, %v8003
        %v8005 = vpop.f32.mrb[0].mxu0
        %v8006 = vadd.f32 %v7923, %v8005
        %8007 = vmatprep.mubr.bf16.mxu0 %v7515
        %8008 = vmatmul.mubr.bf16.gmra.mrb[0].mxu0 %v7514
        %v8009 = vpop.f32.mrb[0].mxu0
        %v8010 = vadd.f32 %v7927, %v8009
        %v8011 = vpop.f32.mrb[0].mxu0
        %v8012 = vadd.f32 %v7929, %v8011
        %v8013 = vpop.f32.mrb[0].mxu0
        %v8014 = vadd.f32 %v7931, %v8013
        %v8015 = vpop.f32.mrb[0].mxu0
        %v8016 = vadd.f32 %v7933, %v8015
        %8017 = vdwg.mxu0
        %8018 = vmatprep.subr.bf16.mxu0 %v4868
        %8019 = vmatpush1.bf16.msra.mxu0 %v4867
        %8020 = vmatprep.subr.bf16.mxu0 %v4872
        %8021 = vmatpush1.bf16.msra.mxu0 %v4871
        %8022 = vmatprep.subr.bf16.mxu0 %v4876
        %8023 = vmatpush1.bf16.msra.mxu0 %v4875
        %8024 = vmatprep.subr.bf16.mxu0 %v4880
        %8025 = vmatpush1.bf16.msra.mxu0 %v4879
        %8026 = vmatprep.subr.bf16.mxu0 %v4884
        %8027 = vmatpush1.bf16.msra.mxu0 %v4883
        %8028 = vmatprep.subr.bf16.mxu0 %v4888
        %8029 = vmatpush1.bf16.msra.mxu0 %v4887
        %8030 = vmatprep.subr.bf16.mxu0 %v4892
        %8031 = vmatpush1.bf16.msra.mxu0 %v4891
        %8032 = vmatprep.subr.bf16.mxu0 %v4896
        %8033 = vmatpush1.bf16.msra.mxu0 %v4895
        %8034 = vmatprep.subr.bf16.mxu0 %v4900
        %8035 = vmatpush1.bf16.msra.mxu0 %v4899
        %8036 = vmatprep.subr.bf16.mxu0 %v4904
        %8037 = vmatpush1.bf16.msra.mxu0 %v4903
        %8038 = vmatprep.subr.bf16.mxu0 %v4908
        %8039 = vmatpush1.bf16.msra.mxu0 %v4907
        %8040 = vmatprep.subr.bf16.mxu0 %v4912
        %8041 = vmatpush1.bf16.msra.mxu0 %v4911
        %8042 = vmatprep.subr.bf16.mxu0 %v4916
        %8043 = vmatpush1.bf16.msra.mxu0 %v4915
        %8044 = vmatprep.subr.bf16.mxu0 %v4920
        %8045 = vmatpush1.bf16.msra.mxu0 %v4919
        %8046 = vmatprep.subr.bf16.mxu0 %v4924
        %8047 = vmatpush1.bf16.msra.mxu0 %v4923
        %8048 = vmatprep.subr.bf16.mxu0 %v4928
        %8049 = vmatpush1.bf16.msra.mxu0 %v4927
        %8050 = vmatprep.mubr.bf16.mxu0 %v7485
        %8051 = vmatmul.mubr.bf16.gmra.mrb[0].mxu0 %v7484
        %v8052 = vpop.f32.mrb[0].mxu0
        %v8053 = vadd.f32 %v7970, %v8052
        %v8054 = vpop.f32.mrb[0].mxu0
        %v8055 = vadd.f32 %v7972, %v8054
        %v8056 = vpop.f32.mrb[0].mxu0
        %v8057 = vadd.f32 %v7974, %v8056
        %v8058 = vpop.f32.mrb[0].mxu0
        %v8059 = vadd.f32 %v7976, %v8058
        %8060 = vmatprep.mubr.bf16.mxu0 %v7493
        %8061 = vmatmul.mubr.bf16.gmra.mrb[0].mxu0 %v7492
        %v8062 = vpop.f32.mrb[0].mxu0
        %v8063 = vadd.f32 %v7980, %v8062
        %v8064 = vpop.f32.mrb[0].mxu0
        %v8065 = vadd.f32 %v7982, %v8064
        %v8066 = vpop.f32.mrb[0].mxu0
        %v8067 = vadd.f32 %v7984, %v8066
        %v8068 = vpop.f32.mrb[0].mxu0
        %v8069 = vadd.f32 %v7986, %v8068
        %8070 = vmatprep.mubr.bf16.mxu0 %v7501
        %8071 = vmatmul.mubr.bf16.gmra.mrb[0].mxu0 %v7500
        %v8072 = vpop.f32.mrb[0].mxu0
        %v8073 = vadd.f32 %v7990, %v8072
        %v8074 = vpop.f32.mrb[0].mxu0
        %v8075 = vadd.f32 %v7992, %v8074
        %v8076 = vpop.f32.mrb[0].mxu0
        %v8077 = vadd.f32 %v7994, %v8076
        %v8078 = vpop.f32.mrb[0].mxu0
        %v8079 = vadd.f32 %v7996, %v8078
        %8080 = vmatprep.mubr.bf16.mxu0 %v7509
        %8081 = vmatmul.mubr.bf16.gmra.mrb[0].mxu0 %v7508
        %v8082 = vpop.f32.mrb[0].mxu0
        %v8083 = vadd.f32 %v8000, %v8082
        %v8084 = vpop.f32.mrb[0].mxu0
        %v8085 = vadd.f32 %v8002, %v8084
        %v8086 = vpop.f32.mrb[0].mxu0
        %v8087 = vadd.f32 %v8004, %v8086
        %v8088 = vpop.f32.mrb[0].mxu0
        %v8089 = vadd.f32 %v8006, %v8088
        %8090 = vmatprep.mubr.bf16.mxu0 %v7517
        %8091 = vmatmul.mubr.bf16.gmra.mrb[0].mxu0 %v7516
        %v8092 = vpop.f32.mrb[0].mxu0
        %v8093 = vadd.f32 %v8010, %v8092
        %v8094 = vpop.f32.mrb[0].mxu0
        %v8095 = vadd.f32 %v8012, %v8094
        %v8096 = vpop.f32.mrb[0].mxu0
        %v8097 = vadd.f32 %v8014, %v8096
        %v8098 = vpop.f32.mrb[0].mxu0
        %v8099 = vadd.f32 %v8016, %v8098
        %8100 = vdwg.mxu0
        %8101 = vmatprep.subr.bf16.mxu0 %v4932
        %8102 = vmatpush1.bf16.msra.mxu0 %v4931
        %8103 = vmatprep.subr.bf16.mxu0 %v4936
        %8104 = vmatpush1.bf16.msra.mxu0 %v4935
        %8105 = vmatprep.subr.bf16.mxu0 %v4940
        %8106 = vmatpush1.bf16.msra.mxu0 %v4939
        %8107 = vmatprep.subr.bf16.mxu0 %v4944
        %8108 = vmatpush1.bf16.msra.mxu0 %v4943
        %8109 = vmatprep.subr.bf16.mxu0 %v4948
        %8110 = vmatpush1.bf16.msra.mxu0 %v4947
        %8111 = vmatprep.subr.bf16.mxu0 %v4952
        %8112 = vmatpush1.bf16.msra.mxu0 %v4951
        %8113 = vmatprep.subr.bf16.mxu0 %v4956
        %8114 = vmatpush1.bf16.msra.mxu0 %v4955
        %8115 = vmatprep.subr.bf16.mxu0 %v4960
        %8116 = vmatpush1.bf16.msra.mxu0 %v4959
        %8117 = vmatprep.subr.bf16.mxu0 %v4964
        %8118 = vmatpush1.bf16.msra.mxu0 %v4963
        %8119 = vmatprep.subr.bf16.mxu0 %v4968
        %8120 = vmatpush1.bf16.msra.mxu0 %v4967
        %8121 = vmatprep.subr.bf16.mxu0 %v4972
        %8122 = vmatpush1.bf16.msra.mxu0 %v4971
        %8123 = vmatprep.subr.bf16.mxu0 %v4976
        %8124 = vmatpush1.bf16.msra.mxu0 %v4975
        %8125 = vmatprep.subr.bf16.mxu0 %v4980
        %8126 = vmatpush1.bf16.msra.mxu0 %v4979
        %8127 = vmatprep.subr.bf16.mxu0 %v4984
        %8128 = vmatpush1.bf16.msra.mxu0 %v4983
        %8129 = vmatprep.subr.bf16.mxu0 %v4988
        %8130 = vmatpush1.bf16.msra.mxu0 %v4987
        %8131 = vmatprep.subr.bf16.mxu0 %v4992
        %8132 = vmatpush1.bf16.msra.mxu0 %v4991
        %8133 = vmatprep.mubr.bf16.mxu0 %v7487
        %8134 = vmatmul.mubr.bf16.gmra.mrb[0].mxu0 %v7486
        %v8135 = vpop.f32.mrb[0].mxu0
        %v8136 = vadd.f32 %v8053, %v8135
        %v8137 = vpop.f32.mrb[0].mxu0
        %v8138 = vadd.f32 %v8055, %v8137
        %v8139 = vpop.f32.mrb[0].mxu0
        %v8140 = vadd.f32 %v8057, %v8139
        %v8141 = vpop.f32.mrb[0].mxu0
        %v8142 = vadd.f32 %v8059, %v8141
        %8143 = vmatprep.mubr.bf16.mxu0 %v7495
        %8144 = vmatmul.mubr.bf16.gmra.mrb[0].mxu0 %v7494
        %v8145 = vpop.f32.mrb[0].mxu0
        %v8146 = vadd.f32 %v8063, %v8145
        %v8147 = vpop.f32.mrb[0].mxu0
        %v8148 = vadd.f32 %v8065, %v8147
        %v8149 = vpop.f32.mrb[0].mxu0
        %v8150 = vadd.f32 %v8067, %v8149
        %v8151 = vpop.f32.mrb[0].mxu0
        %v8152 = vadd.f32 %v8069, %v8151
        %8153 = vmatprep.mubr.bf16.mxu0 %v7503
        %8154 = vmatmul.mubr.bf16.gmra.mrb[0].mxu0 %v7502
        %v8155 = vpop.f32.mrb[0].mxu0
        %v8156 = vadd.f32 %v8073, %v8155
        %v8157 = vpop.f32.mrb[0].mxu0
        %v8158 = vadd.f32 %v8075, %v8157
        %v8159 = vpop.f32.mrb[0].mxu0
        %v8160 = vadd.f32 %v8077, %v8159
        %v8161 = vpop.f32.mrb[0].mxu0
        %v8162 = vadd.f32 %v8079, %v8161
        %8163 = vmatprep.mubr.bf16.mxu0 %v7511
        %8164 = vmatmul.mubr.bf16.gmra.mrb[0].mxu0 %v7510
        %v8165 = vpop.f32.mrb[0].mxu0
        %v8166 = vadd.f32 %v8083, %v8165
        %v8167 = vpop.f32.mrb[0].mxu0
        %v8168 = vadd.f32 %v8085, %v8167
        %v8169 = vpop.f32.mrb[0].mxu0
        %v8170 = vadd.f32 %v8087, %v8169
        %v8171 = vpop.f32.mrb[0].mxu0
        %v8172 = vadd.f32 %v8089, %v8171
        %8173 = vmatprep.mubr.bf16.mxu0 %v7519
        %8174 = vmatmul.mubr.bf16.gmra.mrb[0].mxu0 %v7518
        %v8175 = vpop.f32.mrb[0].mxu0
        %v8176 = vadd.f32 %v8093, %v8175
        %v8177 = vpop.f32.mrb[0].mxu0
        %v8178 = vadd.f32 %v8095, %v8177
        %v8179 = vpop.f32.mrb[0].mxu0
        %v8180 = vadd.f32 %v8097, %v8179
        %v8181 = vpop.f32.mrb[0].mxu0
        %v8182 = vadd.f32 %v8099, %v8181
        %8183 = vdwg.mxu0
        %v8184 = vmax.f32 %v7804, 0.0
        %v8185 = vmax.f32 %v7806, 0.0
        %v8186 = vmax.f32 %v8136, 0.0
        %v8187 = vmax.f32 %v8138, 0.0
        %v8188 = vmax.f32 %v7808, 0.0
        %v8189 = vmax.f32 %v7810, 0.0
        %v8190 = vmax.f32 %v8140, 0.0
        %v8191 = vmax.f32 %v8142, 0.0
        %v8192 = vmax.f32 %v7814, 0.0
        %v8193 = vmax.f32 %v7816, 0.0
        %v8194 = vmax.f32 %v8146, 0.0
        %v8195 = vmax.f32 %v8148, 0.0
        %v8196 = vmax.f32 %v7818, 0.0
        %v8197 = vmax.f32 %v7820, 0.0
        %v8198 = vmax.f32 %v8150, 0.0
        %v8199 = vmax.f32 %v8152, 0.0
        %v8200 = vmax.f32 %v7824, 0.0
        %v8201 = vmax.f32 %v7826, 0.0
        %v8202 = vmax.f32 %v8156, 0.0
        %v8203 = vmax.f32 %v8158, 0.0
        %v8204 = vmax.f32 %v7828, 0.0
        %v8205 = vmax.f32 %v7830, 0.0
        %v8206 = vmax.f32 %v8160, 0.0
        %v8207 = vmax.f32 %v8162, 0.0
        %v8208 = vmax.f32 %v7834, 0.0
        %v8209 = vmax.f32 %v7836, 0.0
        %v8210 = vmax.f32 %v8166, 0.0
        %v8211 = vmax.f32 %v8168, 0.0
        %v8212 = vmax.f32 %v7838, 0.0
        %v8213 = vmax.f32 %v7840, 0.0
        %v8214 = vmax.f32 %v8170, 0.0
        %v8215 = vmax.f32 %v8172, 0.0
        %v8216 = vmax.f32 %v7844, 0.0
        %v8217 = vmax.f32 %v7846, 0.0
        %v8218 = vmax.f32 %v8176, 0.0
        %v8219 = vmax.f32 %v8178, 0.0
        %v8220 = vmax.f32 %v7848, 0.0
        %v8221 = vmax.f32 %v7850, 0.0
        %v8222 = vmax.f32 %v8180, 0.0
        %v8223 = vmax.f32 %v8182, 0.0
        %v8224 = vpack.c.bf16 %v8188, %v8184
        %v8225 = vpack.c.bf16 %v8189, %v8185
        %v8226 = vpack.c.bf16 %v8190, %v8186
        %v8227 = vpack.c.bf16 %v8191, %v8187
        %v8228 = vpack.c.bf16 %v8196, %v8192
        %v8229 = vpack.c.bf16 %v8197, %v8193
        %v8230 = vpack.c.bf16 %v8198, %v8194
        %v8231 = vpack.c.bf16 %v8199, %v8195
        %v8232 = vpack.c.bf16 %v8204, %v8200
        %v8233 = vpack.c.bf16 %v8205, %v8201
        %v8234 = vpack.c.bf16 %v8206, %v8202
        %v8235 = vpack.c.bf16 %v8207, %v8203
        %v8236 = vpack.c.bf16 %v8212, %v8208
        %v8237 = vpack.c.bf16 %v8213, %v8209
        %v8238 = vpack.c.bf16 %v8214, %v8210
        %v8239 = vpack.c.bf16 %v8215, %v8211
        %v8240 = vpack.c.bf16 %v8220, %v8216
        %v8241 = vpack.c.bf16 %v8221, %v8217
        %v8242 = vpack.c.bf16 %v8222, %v8218
        %v8243 = vpack.c.bf16 %v8223, %v8219
        %8244 = vmatprep.subr.bf16.mxu0 %v6177
        %8245 = vmatpush1.bf16.msra.mxu0 %v6176
        %8246 = vmatprep.subr.bf16.mxu0 %v6179
        %8247 = vmatpush1.bf16.msra.mxu0 %v6178
        %8248 = vmatprep.subr.bf16.mxu0 %v6181
        %8249 = vmatpush1.bf16.msra.mxu0 %v6180
        %8250 = vmatprep.subr.bf16.mxu0 %v6183
        %8251 = vmatpush1.bf16.msra.mxu0 %v6182
        %8252 = vmatprep.subr.bf16.mxu0 %v6185
        %8253 = vmatpush1.bf16.msra.mxu0 %v6184
        %8254 = vmatprep.subr.bf16.mxu0 %v6187
        %8255 = vmatpush1.bf16.msra.mxu0 %v6186
        %8256 = vmatprep.subr.bf16.mxu0 %v6189
        %8257 = vmatpush1.bf16.msra.mxu0 %v6188
        %8258 = vmatprep.subr.bf16.mxu0 %v6191
        %8259 = vmatpush1.bf16.msra.mxu0 %v6190
        %8260 = vmatprep.subr.bf16.mxu0 %v6193
        %8261 = vmatpush1.bf16.msra.mxu0 %v6192
        %8262 = vmatprep.subr.bf16.mxu0 %v6195
        %8263 = vmatpush1.bf16.msra.mxu0 %v6194
        %8264 = vmatprep.subr.bf16.mxu0 %v6197
        %8265 = vmatpush1.bf16.msra.mxu0 %v6196
        %8266 = vmatprep.subr.bf16.mxu0 %v6199
        %8267 = vmatpush1.bf16.msra.mxu0 %v6198
        %8268 = vmatprep.subr.bf16.mxu0 %v6201
        %8269 = vmatpush1.bf16.msra.mxu0 %v6200
        %8270 = vmatprep.subr.bf16.mxu0 %v6203
        %8271 = vmatpush1.bf16.msra.mxu0 %v6202
        %8272 = vmatprep.subr.bf16.mxu0 %v6205
        %8273 = vmatpush1.bf16.msra.mxu0 %v6204
        %8274 = vmatprep.subr.bf16.mxu0 %v6207
        %8275 = vmatpush1.bf16.msra.mxu0 %v6206
        %8276 = vmatprep.mubr.bf16.mxu0 %v8225
        %8277 = vmatmul.mubr.bf16.gmra.mrb[0].mxu0 %v8224
        %v8278 = vpop.f32.mrb[0].mxu0
        %v8279 = vadd.f32 %v5977, %v8278
        %v8280 = vpop.f32.mrb[0].mxu0
        %v8281 = vadd.f32 %v5981, %v8280
        %v8282 = vpop.f32.mrb[0].mxu0
        %v8283 = vadd.f32 %v5977, %v8282
        %v8284 = vpop.f32.mrb[0].mxu0
        %v8285 = vadd.f32 %v5981, %v8284
        %8286 = vmatprep.mubr.bf16.mxu0 %v8229
        %8287 = vmatmul.mubr.bf16.gmra.mrb[0].mxu0 %v8228
        %v8288 = vpop.f32.mrb[0].mxu0
        %v8289 = vadd.f32 %v5977, %v8288
        %v8290 = vpop.f32.mrb[0].mxu0
        %v8291 = vadd.f32 %v5981, %v8290
        %v8292 = vpop.f32.mrb[0].mxu0
        %v8293 = vadd.f32 %v5977, %v8292
        %v8294 = vpop.f32.mrb[0].mxu0
        %v8295 = vadd.f32 %v5981, %v8294
        %8296 = vmatprep.mubr.bf16.mxu0 %v8233
        %8297 = vmatmul.mubr.bf16.gmra.mrb[0].mxu0 %v8232
        %v8298 = vpop.f32.mrb[0].mxu0
        %v8299 = vadd.f32 %v5977, %v8298
        %v8300 = vpop.f32.mrb[0].mxu0
        %v8301 = vadd.f32 %v5981, %v8300
        %v8302 = vpop.f32.mrb[0].mxu0
        %v8303 = vadd.f32 %v5977, %v8302
        %v8304 = vpop.f32.mrb[0].mxu0
        %v8305 = vadd.f32 %v5981, %v8304
        %8306 = vmatprep.mubr.bf16.mxu0 %v8237
        %8307 = vmatmul.mubr.bf16.gmra.mrb[0].mxu0 %v8236
        %v8308 = vpop.f32.mrb[0].mxu0
        %v8309 = vadd.f32 %v5977, %v8308
        %v8310 = vpop.f32.mrb[0].mxu0
        %v8311 = vadd.f32 %v5981, %v8310
        %v8312 = vpop.f32.mrb[0].mxu0
        %v8313 = vadd.f32 %v5977, %v8312
        %v8314 = vpop.f32.mrb[0].mxu0
        %v8315 = vadd.f32 %v5981, %v8314
        %8316 = vmatprep.mubr.bf16.mxu0 %v8241
        %8317 = vmatmul.mubr.bf16.gmra.mrb[0].mxu0 %v8240
        %v8318 = vpop.f32.mrb[0].mxu0
        %v8319 = vadd.f32 %v5977, %v8318
        %v8320 = vpop.f32.mrb[0].mxu0
        %v8321 = vadd.f32 %v5981, %v8320
        %v8322 = vpop.f32.mrb[0].mxu0
        %v8323 = vadd.f32 %v5977, %v8322
        %v8324 = vpop.f32.mrb[0].mxu0
        %v8325 = vadd.f32 %v5981, %v8324
        %8326 = vdwg.mxu0
        %8327 = vmatprep.subr.bf16.mxu0 %v6209
        %8328 = vmatpush1.bf16.msra.mxu0 %v6208
        %8329 = vmatprep.subr.bf16.mxu0 %v6211
        %8330 = vmatpush1.bf16.msra.mxu0 %v6210
        %8331 = vmatprep.subr.bf16.mxu0 %v6213
        %8332 = vmatpush1.bf16.msra.mxu0 %v6212
        %8333 = vmatprep.subr.bf16.mxu0 %v6215
        %8334 = vmatpush1.bf16.msra.mxu0 %v6214
        %8335 = vmatprep.subr.bf16.mxu0 %v6217
        %8336 = vmatpush1.bf16.msra.mxu0 %v6216
        %8337 = vmatprep.subr.bf16.mxu0 %v6219
        %8338 = vmatpush1.bf16.msra.mxu0 %v6218
        %8339 = vmatprep.subr.bf16.mxu0 %v6221
        %8340 = vmatpush1.bf16.msra.mxu0 %v6220
        %8341 = vmatprep.subr.bf16.mxu0 %v6223
        %8342 = vmatpush1.bf16.msra.mxu0 %v6222
        %8343 = vmatprep.subr.bf16.mxu0 %v6225
        %8344 = vmatpush1.bf16.msra.mxu0 %v6224
        %8345 = vmatprep.subr.bf16.mxu0 %v6227
        %8346 = vmatpush1.bf16.msra.mxu0 %v6226
        %8347 = vmatprep.subr.bf16.mxu0 %v6229
        %8348 = vmatpush1.bf16.msra.mxu0 %v6228
        %8349 = vmatprep.subr.bf16.mxu0 %v6231
        %8350 = vmatpush1.bf16.msra.mxu0 %v6230
        %8351 = vmatprep.subr.bf16.mxu0 %v6233
        %8352 = vmatpush1.bf16.msra.mxu0 %v6232
        %8353 = vmatprep.subr.bf16.mxu0 %v6235
        %8354 = vmatpush1.bf16.msra.mxu0 %v6234
        %8355 = vmatprep.subr.bf16.mxu0 %v6237
        %8356 = vmatpush1.bf16.msra.mxu0 %v6236
        %8357 = vmatprep.subr.bf16.mxu0 %v6239
        %8358 = vmatpush1.bf16.msra.mxu0 %v6238
        %8359 = vmatprep.mubr.bf16.mxu0 %v8227
        %8360 = vmatmul.mubr.bf16.gmra.mrb[0].mxu0 %v8226
        %v8361 = vpop.f32.mrb[0].mxu0
        %v8362 = vadd.f32 %v8279, %v8361
        %v8363 = vpop.f32.mrb[0].mxu0
        %v8364 = vadd.f32 %v8281, %v8363
        %v8365 = vpop.f32.mrb[0].mxu0
        %v8366 = vadd.f32 %v8283, %v8365
        %v8367 = vpop.f32.mrb[0].mxu0
        %v8368 = vadd.f32 %v8285, %v8367
        %8369 = vmatprep.mubr.bf16.mxu0 %v8231
        %8370 = vmatmul.mubr.bf16.gmra.mrb[0].mxu0 %v8230
        %v8371 = vpop.f32.mrb[0].mxu0
        %v8372 = vadd.f32 %v8289, %v8371
        %v8373 = vpop.f32.mrb[0].mxu0
        %v8374 = vadd.f32 %v8291, %v8373
        %v8375 = vpop.f32.mrb[0].mxu0
        %v8376 = vadd.f32 %v8293, %v8375
        %v8377 = vpop.f32.mrb[0].mxu0
        %v8378 = vadd.f32 %v8295, %v8377
        %8379 = vmatprep.mubr.bf16.mxu0 %v8235
        %8380 = vmatmul.mubr.bf16.gmra.mrb[0].mxu0 %v8234
        %v8381 = vpop.f32.mrb[0].mxu0
        %v8382 = vadd.f32 %v8299, %v8381
        %v8383 = vpop.f32.mrb[0].mxu0
        %v8384 = vadd.f32 %v8301, %v8383
        %v8385 = vpop.f32.mrb[0].mxu0
        %v8386 = vadd.f32 %v8303, %v8385
        %v8387 = vpop.f32.mrb[0].mxu0
        %v8388 = vadd.f32 %v8305, %v8387
        %8389 = vmatprep.mubr.bf16.mxu0 %v8239
        %8390 = vmatmul.mubr.bf16.gmra.mrb[0].mxu0 %v8238
        %v8391 = vpop.f32.mrb[0].mxu0
        %v8392 = vadd.f32 %v8309, %v8391
        %v8393 = vpop.f32.mrb[0].mxu0
        %v8394 = vadd.f32 %v8311, %v8393
        %v8395 = vpop.f32.mrb[0].mxu0
        %v8396 = vadd.f32 %v8313, %v8395
        %v8397 = vpop.f32.mrb[0].mxu0
        %v8398 = vadd.f32 %v8315, %v8397
        %8399 = vmatprep.mubr.bf16.mxu0 %v8243
        %8400 = vmatmul.mubr.bf16.gmra.mrb[0].mxu0 %v8242
        %v8401 = vpop.f32.mrb[0].mxu0
        %v8402 = vadd.f32 %v8319, %v8401
        %v8403 = vpop.f32.mrb[0].mxu0
        %v8404 = vadd.f32 %v8321, %v8403
        %v8405 = vpop.f32.mrb[0].mxu0
        %v8406 = vadd.f32 %v8323, %v8405
        %v8407 = vpop.f32.mrb[0].mxu0
        %v8408 = vadd.f32 %v8325, %v8407
        %8409 = vdwg.mxu0
        %v8410 = vmax.f32 %v8362, 0.0
        %v8411 = vmax.f32 %v8364, 0.0
        %v8412 = vmax.f32 %v8366, 0.0
        %v8413 = vmax.f32 %v8368, 0.0
        %v8414 = vmax.f32 %v8372, 0.0
        %v8415 = vmax.f32 %v8374, 0.0
        %v8416 = vmax.f32 %v8376, 0.0
        %v8417 = vmax.f32 %v8378, 0.0
        %v8418 = vmax.f32 %v8382, 0.0
        %v8419 = vmax.f32 %v8384, 0.0
        %v8420 = vmax.f32 %v8386, 0.0
        %v8421 = vmax.f32 %v8388, 0.0
        %v8422 = vmax.f32 %v8392, 0.0
        %v8423 = vmax.f32 %v8394, 0.0
        %v8424 = vmax.f32 %v8396, 0.0
        %v8425 = vmax.f32 %v8398, 0.0
        %v8426 = vmax.f32 %v8402, 0.0
        %v8427 = vmax.f32 %v8404, 0.0
        %v8428 = vmax.f32 %v8406, 0.0
        %v8429 = vmax.f32 %v8408, 0.0
        %8430 = vst [vmem:[%s416 + $0xa0] sm:$0xff] %v8410
        %8431 = vst [vmem:[%s416 + $0xa8] sm:$0xff] %v8411
        %8432 = vst [vmem:[%s416 + $0xb0] sm:$0xff] %v8412
        %8433 = vst [vmem:[%s416 + $0xb8] sm:$0xff] %v8413
        %8434 = vst [vmem:[%s416 + $0xc0] sm:$0xff] %v8414
        %8435 = vst [vmem:[%s416 + $0xc8] sm:$0xff] %v8415
        %8436 = vst [vmem:[%s416 + $0xd0] sm:$0xff] %v8416
        %8437 = vst [vmem:[%s416 + $0xd8] sm:$0xff] %v8417
        %8438 = vst [vmem:[%s416 + $0xe0] sm:$0xff] %v8418
        %8439 = vst [vmem:[%s416 + $0xe8] sm:$0xff] %v8419
        %8440 = vst [vmem:[%s416 + $0xf0] sm:$0xff] %v8420
        %8441 = vst [vmem:[%s416 + $0xf8] sm:$0xff] %v8421
        %8442 = vst [vmem:[%s416 + $0x100] sm:$0xff] %v8422
        %8443 = vst [vmem:[%s416 + $0x108] sm:$0xff] %v8423
        %8444 = vst [vmem:[%s416 + $0x110] sm:$0xff] %v8424
        %8445 = vst [vmem:[%s416 + $0x118] sm:$0xff] %v8425
        %8446 = vst [vmem:[%s416 + $0x120] sm:$0xff] %v8426
        %8447 = vst [vmem:[%s416 + $0x128] sm:$0xff] %v8427
        %8448 = vst [vmem:[%s416 + $0x130] sm:$0xff] %v8428
        %8449 = vst [vmem:[%s416 + $0x138] sm:$0xff] %v8429
        %s8450 = sand.u32 %s230, 1
        %s8451 = scalar_lea.sflag [#allocation4], %s8450
        %s8452 = sand.u32 %s230, 1
        %s8453 = smul.addr %s8452, 320
        %s8454 = scalar_lea.vmem [#allocation11], %s8453
        // Predicated region
        $region77: #{mlp_encoder.1} parent=55 // pred_check
          %p8455 = pneg %p240
        $region78: #{mlp_encoder.1} parent=55 // pred_check_branch
          %8457 = sbr.rel (%p8455) target = $region80
        $region79: #{mlp_encoder.1} parent=55 // pred_region
          %s8458 = smul.u32 20, %s28
          %s8459 = ssub.s32 38, %s8458
          %p8460 = scmp.lt.s32.totalorder %s8459, 20
          %s8461 = scalar_select %p8460, %s8459, 20
          %s8462 = smul.u32 128, %s8461
          %s8463 = smul.u32 %s8462, 2
          %s8465 = ssub.s32 5120, %s8463
          %8466 = vsyncadd %s8451, %s8465
          %p8467 = scmp.ne.s32.totalorder 0, %s8463
          %s8468 = smul.addr %s8458, 2
          %s8469 = smul.addr %s8468, 128
          %s8470 = scalar_lea.hbm %s9, %s8469
          %s8471 = smul.u32 16, %s8461
          %s8472 = sshll.u32 %s8454, 4
          %s8473 = int_to_ptr.vmem [resolvable:$true] %s8472
          %s8474 = sshll.u32 %s8471, 4
          %8478 = dma.vmem_to_hbm [thread:$0]  (%p8467), %s8473, %s8474, %s8470, %s8451, 256, 256, 16
        $region80: #{mlp_encoder.1} parent=55 // pred_fallthru
          _
      $region56: #{mlp_encoder.1} parent=5 // pred_fallthru
        _
      %p8479 = scmp.le.s32.totalorder 2, %s23
      // Predicated region
      $region81: #{mlp_encoder.1} parent=5 // pred_check
        %p8480 = pneg %p8479
      $region82: #{mlp_encoder.1} parent=5 // pred_check_branch
        %8482 = sbr.rel (%p8480) target = $region84
      $region83: #{mlp_encoder.1} parent=5 // pred_region
        %s8483 = ssub.s32 %s23, 2
        // Predicated region
        $region85: #{mlp_encoder.1} parent=83 // pred_check
          %p8484 = pneg %p246
        $region86: #{mlp_encoder.1} parent=83 // pred_check_branch
          %8486 = sbr.rel (%p8484) target = $region88
        $region87: #{mlp_encoder.1} parent=83 // pred_region
          %s8487 = sand.u32 %s231, 1
          %s8488 = scalar_lea.sflag [#allocation4], %s8487
          %s8489 = sand.u32 %s231, 1
          %s8490 = smul.addr %s8489, 320
          %s8491 = scalar_lea.vmem [#allocation11], %s8490
          %8492 = dma.done %s8488, 5120
        $region88: #{mlp_encoder.1} parent=83 // pred_fallthru
          _
      $region84: #{mlp_encoder.1} parent=5 // pred_fallthru
        _
    $region6: #{mlp_encoder.1} parent=1 // loop_footer
      %s27 = sadd.s32 1, %s23
    $region7: #{mlp_encoder.1} parent=1 // loop_footer_branch
      %22 = sbr.rel target = $region3
    $region8: #{mlp_encoder.1} parent=1 // loop_exit
      _
    %8493 = vsyncpa [#allocation3], 1
    %s8494 = scalar_lea.sflag [#allocation3], 1
    %8495 = vsyncpa %s8494, 1
    %8496 = vsyncpa [#allocation6], 1
    %8497 = vsyncpa [#allocation9], 1
    %8498 = vsyncpa [#allocation4], 1
    %s8499 = scalar_lea.sflag [#allocation4], 1
    %8500 = vsyncpa %s8499, 1

</llo_original>
